<compile_context>
chip_gen: v7x
topology: tpu7x:2x2x1
jax: 0.10.0
libtpu: 0.0.40
codegen_flags: <defaults>
</compile_context>

<pallas_src>
import jax
import jax.numpy as jnp
from jax.experimental import pallas as pl
from jax.experimental.pallas import tpu as pltpu

# Logical (PyTorch) dims of the standard MNIST VAE implied by generate()'s
# torch.randn(N, 20): 784 -> 400 -> 20 -> 400 -> 784.
IN_DIM = 784
HIDDEN = 400
LATENT = 20

# Lane-aligned padded dims used inside the kernel (weights are zero-padded).
HID_PAD = 512           # 4 * 128
LAT_PAD = 64            # mu / logvar each padded to 64 lanes
MULV_PAD = 2 * LAT_PAD  # fused (mu | logvar) head -> one 128-wide output


def _round_up(x, m):
    return ((x + m - 1) // m) * m


def _cdiv(a, b):
    return (a + b - 1) // b


def _vae_kernel(x_ref, eps_ref,
                w1_ref, b1_ref,
                wml_ref, bml_ref,
                w3_ref, b3_ref,
                w4_ref, b4_ref,
                recon_ref, mulv_ref):
    # ---- encoder ----
    x = x_ref[...].astype(jnp.bfloat16)                                # (T, 784)
    h1 = jnp.dot(x, w1_ref[...], preferred_element_type=jnp.float32) + b1_ref[...]
    h1 = jnp.maximum(h1, 0.0)                                          # (T, 512) f32

    # fused fc_mu | fc_logvar head: one MXU pass, lane-dense 128-wide result
    mulv = jnp.dot(h1.astype(jnp.bfloat16), wml_ref[...],
                   preferred_element_type=jnp.float32) + bml_ref[...]  # (T, 128)

    mu_p = mulv[:, :LAT_PAD]           # (T, 64); lanes >= 20 are exactly 0
    lv_p = mulv[:, LAT_PAD:]           # (T, 64); lanes >= 20 are exactly 0

    # ---- reparameterization: z = mu + eps * exp(0.5 * logvar) ----
    # Padded lanes stay 0 (mu=0, eps=0), and the decoder's padded weight rows
    # are zero anyway, so the padded math equals the unpadded math exactly.
    z = mu_p + eps_ref[...] * jnp.exp(0.5 * lv_p)                      # (T, 64) f32

    # ---- decoder ----
    h3 = jnp.dot(z.astype(jnp.bfloat16), w3_ref[...],
                 preferred_element_type=jnp.float32) + b3_ref[...]
    h3 = jnp.maximum(h3, 0.0)                                          # (T, 512) f32

    logits = jnp.dot(h3.astype(jnp.bfloat16), w4_ref[...],
                     preferred_element_type=jnp.float32) + b4_ref[...]  # (T, 784)

    # sigmoid: exp on EUP + approximate reciprocal on EUP (VALU slot stays free);
    # emit bf16 to halve the dominant HBM writeback stream.
    recon_ref[...] = pl.reciprocal(1.0 + jnp.exp(-logits),
                                   approx=True).astype(jnp.bfloat16)
    mulv_ref[...] = mulv


def init_params(key):
    """Deterministic synthetic parameters in the natural (in, out) layout."""
    ks = jax.random.split(key, 5)

    def linear(k, fan_in, fan_out):
        scale = 1.0 / jnp.sqrt(fan_in)
        w = jax.random.uniform(k, (fan_in, fan_out), jnp.float32, -scale, scale)
        b = jnp.zeros((1, fan_out), jnp.float32)
        return w, b

    w1, b1 = linear(ks[0], IN_DIM, HIDDEN)     # encoder fc1
    wmu, bmu = linear(ks[1], HIDDEN, LATENT)   # encoder fc_mu
    wlv, blv = linear(ks[2], HIDDEN, LATENT)   # encoder fc_logvar
    w3, b3 = linear(ks[3], LATENT, HIDDEN)     # decoder fc3
    w4, b4 = linear(ks[4], HIDDEN, IN_DIM)     # decoder fc4
    return (w1, b1, wmu, bmu, wlv, blv, w3, b3, w4, b4)


def pack_params(params):
    """Zero-pad hidden/latent dims to lane multiples, fuse mu|logvar head,
    cast weights to bf16.  Input (784) and output (784) dims stay unpadded so
    the kernel can consume/produce full-width 784 blocks directly."""
    (w1, b1, wmu, bmu, wlv, blv, w3, b3, w4, b4) = params

    w1p = jnp.zeros((IN_DIM, HID_PAD), jnp.float32).at[:, :HIDDEN].set(w1)
    b1p = jnp.zeros((1, HID_PAD), jnp.float32).at[:, :HIDDEN].set(b1)

    wml = jnp.zeros((HID_PAD, MULV_PAD), jnp.float32)
    wml = wml.at[:HIDDEN, :LATENT].set(wmu)
    wml = wml.at[:HIDDEN, LAT_PAD:LAT_PAD + LATENT].set(wlv)
    bml = jnp.zeros((1, MULV_PAD), jnp.float32)
    bml = bml.at[:, :LATENT].set(bmu)
    bml = bml.at[:, LAT_PAD:LAT_PAD + LATENT].set(blv)

    w3p = jnp.zeros((LAT_PAD, HID_PAD), jnp.float32).at[:LATENT, :HIDDEN].set(w3)
    b3p = jnp.zeros((1, HID_PAD), jnp.float32).at[:, :HIDDEN].set(b3)

    w4p = jnp.zeros((HID_PAD, IN_DIM), jnp.float32).at[:HIDDEN, :].set(w4)
    b4p = b4  # (1, 784) f32, already full width

    bf = jnp.bfloat16
    return (w1p.astype(bf), b1p, wml.astype(bf), bml,
            w3p.astype(bf), b3p, w4p.astype(bf), b4p)


def vae_forward(image_nchw, eps, packed, *, tile_b=1024):
    """image_nchw: (B, 1, 28, 28) f32; eps: (B, 20) f32; packed = pack_params(...).

    Returns (recon bf16 (B, 784), mu f32 (B, 20), logvar f32 (B, 20))."""
    B = image_nchw.shape[0]

    # ---- tile / grid selection ----
    # Minimize batch padding (tb = ceil(B / n_steps) rounded to the 8-row
    # sublane) instead of always snapping to tile_b, and give the "parallel"
    # batch axis an even number of >=2 steps when B is large enough that both
    # v7x TensorCores get a useful amount of work.
    n_steps = _cdiv(B, tile_b)
    if B >= 256:
        n_steps = max(n_steps, 2)
        if n_steps % 2:
            n_steps += 1
    tb = _round_up(_cdiv(B, n_steps), 8)
    b_pad = n_steps * tb

    # x goes in as f32 at full width 784 (== full last dim, so the (8,128)
    # BlockSpec rule is satisfied); the bf16 cast happens inside the kernel.
    # Batch rows are only padded when b_pad != B.
    x = image_nchw.reshape(B, IN_DIM).astype(jnp.float32)
    if b_pad != B:
        x = jnp.pad(x, ((0, b_pad - B), (0, 0)))
    eps_p = jnp.pad(eps.astype(jnp.float32),
                    ((0, b_pad - B), (0, LAT_PAD - LATENT)))   # tiny stream

    batch_spec = lambda width: pl.BlockSpec((tb, width), lambda i: (i, 0))

    def run(single_buffer_weights):
        if single_buffer_weights:
            # Constant index_map -> never refetched; one buffer is enough.
            resident = lambda arr: pl.BlockSpec(arr.shape, lambda i: (0, 0),
                                                pipeline_mode=pl.Buffered(1))
        else:
            resident = lambda arr: pl.BlockSpec(arr.shape, lambda i: (0, 0))
        return pl.pallas_call(
            _vae_kernel,
            grid=(n_steps,),
            out_shape=(
                jax.ShapeDtypeStruct((b_pad, IN_DIM), jnp.bfloat16),
                jax.ShapeDtypeStruct((b_pad, MULV_PAD), jnp.float32),
            ),
            in_specs=[batch_spec(IN_DIM), batch_spec(LAT_PAD)]
                     + [resident(p) for p in packed],
            out_specs=(batch_spec(IN_DIM), batch_spec(MULV_PAD)),
            compiler_params=pltpu.CompilerParams(
                dimension_semantics=("parallel",),        # 2 TCs on v7x
                vmem_limit_bytes=32 * 1024 * 1024),       # big tiles fit on v5e too
        )(x, eps_p, *packed)

    try:
        recon_p, mulv = run(True)
    except Exception:
        # pipeline_mode=pl.Buffered(1) not supported on this jax version:
        # fall back to default double-buffered weights (~2 MiB extra VMEM,
        # still well within the 32 MiB limit).
        recon_p, mulv = run(False)

    recon = recon_p if b_pad == B else recon_p[:B]   # already 784 wide, bf16
    mu = mulv[:B, :LATENT]
    logvar = mulv[:B, LAT_PAD:LAT_PAD + LATENT]
    return recon, mu, logvar


def vae_forward_ref(image_nchw, eps, packed):
    """Pure-JAX reference using the same packed bf16 weights / f32 accumulation."""
    (w1, b1, wml, bml, w3, b3, w4, b4) = packed
    B = image_nchw.shape[0]
    x = image_nchw.reshape(B, IN_DIM).astype(jnp.bfloat16)
    eps_p = jnp.pad(eps.astype(jnp.float32), ((0, 0), (0, LAT_PAD - LATENT)))

    h1 = jnp.maximum(jnp.dot(x, w1, preferred_element_type=jnp.float32) + b1, 0.0)
    mulv = jnp.dot(h1.astype(jnp.bfloat16), wml,
                   preferred_element_type=jnp.float32) + bml
    mu_p, lv_p = mulv[:, :LAT_PAD], mulv[:, LAT_PAD:]
    z = mu_p + eps_p * jnp.exp(0.5 * lv_p)
    h3 = jnp.maximum(jnp.dot(z.astype(jnp.bfloat16), w3,
                             preferred_element_type=jnp.float32) + b3, 0.0)
    logits = jnp.dot(h3.astype(jnp.bfloat16), w4,
                     preferred_element_type=jnp.float32) + b4
    recon = jax.nn.sigmoid(logits)
    return recon, mulv[:, :LATENT], mulv[:, LAT_PAD:LAT_PAD + LATENT]


if __name__ == "__main__":
    key = jax.random.PRNGKey(0)
    k_img, k_eps, k_par = jax.random.split(key, 3)

    B = 2
    image = jax.random.uniform(k_img, (B, 1, 28, 28), jnp.float32)  # MNIST-like NCHW
    eps = jax.random.normal(k_eps, (B, LATENT), jnp.float32)        # reparam noise
    # TODO(synk): eps could be generated in-kernel with pltpu.prng_seed/_random_bits;
    # kept as an input so the forward is deterministic and checkable.
    packed = pack_params(init_params(k_par))

    recon, mu, logvar = jax.block_until_ready(vae_forward(image, eps, packed))

    recon_r, mu_r, logvar_r = vae_forward_ref(image, eps, packed)
    assert recon.shape == (B, IN_DIM) and recon.dtype == jnp.bfloat16
    assert mu.shape == (B, LATENT) and logvar.shape == (B, LATENT)
    assert jnp.allclose(mu, mu_r, atol=2e-3, rtol=2e-3)
    assert jnp.allclose(logvar, logvar_r, atol=2e-3, rtol=2e-3)
    # tolerance allows for the approximate EUP reciprocal + bf16 recon output
    assert jnp.allclose(recon.astype(jnp.float32), recon_r, atol=1e-2)

    print("KERNEL_OK")
</pallas_src>

<mosaic_0001>
module attributes {stable_mosaic.version = 11 : i64} {
  func.func @_vae_kernel(%arg0: i32, %arg1: memref<8x784xf32, #tpu.memory_space<vmem>>, %arg2: memref<8x64xf32, #tpu.memory_space<vmem>>, %arg3: memref<784x512xbf16, #tpu.memory_space<vmem>>, %arg4: memref<1x512xf32, #tpu.memory_space<vmem>>, %arg5: memref<512x128xbf16, #tpu.memory_space<vmem>>, %arg6: memref<1x128xf32, #tpu.memory_space<vmem>>, %arg7: memref<64x512xbf16, #tpu.memory_space<vmem>>, %arg8: memref<1x512xf32, #tpu.memory_space<vmem>>, %arg9: memref<512x784xbf16, #tpu.memory_space<vmem>>, %arg10: memref<1x784xf32, #tpu.memory_space<vmem>>, %arg11: memref<8x784xbf16, #tpu.memory_space<vmem>>, %arg12: memref<8x128xf32, #tpu.memory_space<vmem>>) attributes {dimension_semantics = [#tpu.dimension_semantics<parallel>], iteration_bounds = array<i64: 1>, scalar_prefetch = 0 : i64, scratch_operands = 0 : i64, tpu.core_type = #tpu.core_type<tc>, window_params = [{transform_indices = @transform_0, window_bounds = array<i64: 8, 784>}, {transform_indices = @transform_1, window_bounds = array<i64: 8, 64>}, {pipeline_mode = #tpu.pipeline_mode<synchronous>, transform_indices = @transform_2, window_bounds = array<i64: 784, 512>}, {pipeline_mode = #tpu.pipeline_mode<synchronous>, transform_indices = @transform_3, window_bounds = array<i64: 1, 512>}, {pipeline_mode = #tpu.pipeline_mode<synchronous>, transform_indices = @transform_4, window_bounds = array<i64: 512, 128>}, {pipeline_mode = #tpu.pipeline_mode<synchronous>, transform_indices = @transform_5, window_bounds = array<i64: 1, 128>}, {pipeline_mode = #tpu.pipeline_mode<synchronous>, transform_indices = @transform_6, window_bounds = array<i64: 64, 512>}, {pipeline_mode = #tpu.pipeline_mode<synchronous>, transform_indices = @transform_7, window_bounds = array<i64: 1, 512>}, {pipeline_mode = #tpu.pipeline_mode<synchronous>, transform_indices = @transform_8, window_bounds = array<i64: 512, 784>}, {pipeline_mode = #tpu.pipeline_mode<synchronous>, transform_indices = @transform_9, window_bounds = array<i64: 1, 784>}, {transform_indices = @transform_10, window_bounds = array<i64: 8, 784>}, {transform_indices = @transform_11, window_bounds = array<i64: 8, 128>}]} {
    %c0 = arith.constant 0 : index
    %c0_0 = arith.constant 0 : index
    %0 = vector.load %arg1[%c0, %c0_0] : memref<8x784xf32, #tpu.memory_space<vmem>>, vector<8x784xf32>
    %1 = arith.truncf %0 : vector<8x784xf32> to vector<8x784xbf16>
    %c0_1 = arith.constant 0 : index
    %c0_2 = arith.constant 0 : index
    %2 = vector.load %arg3[%c0_1, %c0_2] : memref<784x512xbf16, #tpu.memory_space<vmem>>, vector<784x512xbf16>
    %cst = arith.constant dense<0.000000e+00> : vector<8x512xf32>
    %3 = tpu.matmul %1, %2, %cst {dimension_numbers = #tpu.dot_dimension_numbers<[1], [0], [0], [1], [0, 0, 1, 1], [], []>} : vector<8x784xbf16>, vector<784x512xbf16>, vector<8x512xf32> -> vector<8x512xf32>
    %c0_3 = arith.constant 0 : index
    %c0_4 = arith.constant 0 : index
    %4 = vector.load %arg4[%c0_3, %c0_4] : memref<1x512xf32, #tpu.memory_space<vmem>>, vector<1x512xf32>
    %5 = vector.broadcast %4 : vector<1x512xf32> to vector<8x512xf32>
    %6 = arith.addf %3, %5 : vector<8x512xf32>
    %cst_5 = arith.constant 0.000000e+00 : f32
    %7 = vector.broadcast %cst_5 : f32 to vector<8x512xf32>
    %8 = arith.maximumf %6, %7 : vector<8x512xf32>
    %9 = arith.truncf %8 : vector<8x512xf32> to vector<8x512xbf16>
    %c0_6 = arith.constant 0 : index
    %c0_7 = arith.constant 0 : index
    %10 = vector.load %arg5[%c0_6, %c0_7] : memref<512x128xbf16, #tpu.memory_space<vmem>>, vector<512x128xbf16>
    %cst_8 = arith.constant dense<0.000000e+00> : vector<8x128xf32>
    %11 = tpu.matmul %9, %10, %cst_8 {dimension_numbers = #tpu.dot_dimension_numbers<[1], [0], [0], [1], [0, 0, 1, 1], [], []>} : vector<8x512xbf16>, vector<512x128xbf16>, vector<8x128xf32> -> vector<8x128xf32>
    %c0_9 = arith.constant 0 : index
    %c0_10 = arith.constant 0 : index
    %12 = vector.load %arg6[%c0_9, %c0_10] : memref<1x128xf32, #tpu.memory_space<vmem>>, vector<1x128xf32>
    %13 = vector.broadcast %12 : vector<1x128xf32> to vector<8x128xf32>
    %14 = arith.addf %11, %13 : vector<8x128xf32>
    %15 = vector.extract_strided_slice %14 {offsets = [0, 0], sizes = [8, 64], strides = [1, 1]} : vector<8x128xf32> to vector<8x64xf32>
    %16 = vector.extract_strided_slice %14 {offsets = [0, 64], sizes = [8, 64], strides = [1, 1]} : vector<8x128xf32> to vector<8x64xf32>
    %c0_11 = arith.constant 0 : index
    %c0_12 = arith.constant 0 : index
    %17 = vector.load %arg2[%c0_11, %c0_12] : memref<8x64xf32, #tpu.memory_space<vmem>>, vector<8x64xf32>
    %cst_13 = arith.constant 5.000000e-01 : f32
    %18 = vector.broadcast %cst_13 : f32 to vector<8x64xf32>
    %19 = arith.mulf %18, %16 : vector<8x64xf32>
    %20 = math.exp %19 : vector<8x64xf32>
    %21 = arith.mulf %17, %20 : vector<8x64xf32>
    %22 = arith.addf %15, %21 : vector<8x64xf32>
    %23 = arith.truncf %22 : vector<8x64xf32> to vector<8x64xbf16>
    %c0_14 = arith.constant 0 : index
    %c0_15 = arith.constant 0 : index
    %24 = vector.load %arg7[%c0_14, %c0_15] : memref<64x512xbf16, #tpu.memory_space<vmem>>, vector<64x512xbf16>
    %cst_16 = arith.constant dense<0.000000e+00> : vector<8x512xf32>
    %25 = tpu.matmul %23, %24, %cst_16 {dimension_numbers = #tpu.dot_dimension_numbers<[1], [0], [0], [1], [0, 0, 1, 1], [], []>} : vector<8x64xbf16>, vector<64x512xbf16>, vector<8x512xf32> -> vector<8x512xf32>
    %c0_17 = arith.constant 0 : index
    %c0_18 = arith.constant 0 : index
    %26 = vector.load %arg8[%c0_17, %c0_18] : memref<1x512xf32, #tpu.memory_space<vmem>>, vector<1x512xf32>
    %27 = vector.broadcast %26 : vector<1x512xf32> to vector<8x512xf32>
    %28 = arith.addf %25, %27 : vector<8x512xf32>
    %cst_19 = arith.constant 0.000000e+00 : f32
    %29 = vector.broadcast %cst_19 : f32 to vector<8x512xf32>
    %30 = arith.maximumf %28, %29 : vector<8x512xf32>
    %31 = arith.truncf %30 : vector<8x512xf32> to vector<8x512xbf16>
    %c0_20 = arith.constant 0 : index
    %c0_21 = arith.constant 0 : index
    %32 = vector.load %arg9[%c0_20, %c0_21] : memref<512x784xbf16, #tpu.memory_space<vmem>>, vector<512x784xbf16>
    %cst_22 = arith.constant dense<0.000000e+00> : vector<8x784xf32>
    %33 = tpu.matmul %31, %32, %cst_22 {dimension_numbers = #tpu.dot_dimension_numbers<[1], [0], [0], [1], [0, 0, 1, 1], [], []>} : vector<8x512xbf16>, vector<512x784xbf16>, vector<8x784xf32> -> vector<8x784xf32>
    %c0_23 = arith.constant 0 : index
    %c0_24 = arith.constant 0 : index
    %34 = vector.load %arg10[%c0_23, %c0_24] : memref<1x784xf32, #tpu.memory_space<vmem>>, vector<1x784xf32>
    %35 = vector.broadcast %34 : vector<1x784xf32> to vector<8x784xf32>
    %36 = arith.addf %33, %35 : vector<8x784xf32>
    %cst_25 = arith.constant 0.000000e+00 : f32
    %37 = vector.broadcast %cst_25 : f32 to vector<8x784xf32>
    %38 = arith.subf %37, %36 : vector<8x784xf32>
    %39 = math.exp %38 : vector<8x784xf32>
    %cst_26 = arith.constant 1.000000e+00 : f32
    %40 = vector.broadcast %cst_26 : f32 to vector<8x784xf32>
    %41 = arith.addf %40, %39 : vector<8x784xf32>
    %42 = tpu.reciprocal %41 {approx = true} : vector<8x784xf32> -> vector<8x784xf32>
    %43 = arith.truncf %42 : vector<8x784xf32> to vector<8x784xbf16>
    %c0_27 = arith.constant 0 : index
    %c0_28 = arith.constant 0 : index
    %44 = vector.load %arg11[%c0_27, %c0_28] : memref<8x784xbf16, #tpu.memory_space<vmem>>, vector<8x784xbf16>
    tpu.vector_store %arg11[%c0_27, %c0_28], %43 {strides = array<i32>} : memref<8x784xbf16, #tpu.memory_space<vmem>>, vector<8x784xbf16>,
    %c0_29 = arith.constant 0 : index
    %c0_30 = arith.constant 0 : index
    %45 = vector.load %arg12[%c0_29, %c0_30] : memref<8x128xf32, #tpu.memory_space<vmem>>, vector<8x128xf32>
    tpu.vector_store %arg12[%c0_29, %c0_30], %14 {strides = array<i32>} : memref<8x128xf32, #tpu.memory_space<vmem>>, vector<8x128xf32>,
    return
  }
  func.func @transform_0(%arg0: i32) -> (i32, i32) {
    %c0_i32 = arith.constant 0 : i32
    %c0_i32_0 = arith.constant 0 : i32
    return %arg0, %c0_i32 : i32, i32
  }
  func.func @transform_1(%arg0: i32) -> (i32, i32) {
    %c0_i32 = arith.constant 0 : i32
    %c0_i32_0 = arith.constant 0 : i32
    return %arg0, %c0_i32 : i32, i32
  }
  func.func @transform_2(%arg0: i32) -> (i32, i32) {
    %c0_i32 = arith.constant 0 : i32
    %c0_i32_0 = arith.constant 0 : i32
    %c0_i32_1 = arith.constant 0 : i32
    return %c0_i32, %c0_i32_0 : i32, i32
  }
  func.func @transform_3(%arg0: i32) -> (i32, i32) {
    %c0_i32 = arith.constant 0 : i32
    %c0_i32_0 = arith.constant 0 : i32
    %c0_i32_1 = arith.constant 0 : i32
    return %c0_i32, %c0_i32_0 : i32, i32
  }
  func.func @transform_4(%arg0: i32) -> (i32, i32) {
    %c0_i32 = arith.constant 0 : i32
    %c0_i32_0 = arith.constant 0 : i32
    %c0_i32_1 = arith.constant 0 : i32
    return %c0_i32, %c0_i32_0 : i32, i32
  }
  func.func @transform_5(%arg0: i32) -> (i32, i32) {
    %c0_i32 = arith.constant 0 : i32
    %c0_i32_0 = arith.constant 0 : i32
    %c0_i32_1 = arith.constant 0 : i32
    return %c0_i32, %c0_i32_0 : i32, i32
  }
  func.func @transform_6(%arg0: i32) -> (i32, i32) {
    %c0_i32 = arith.constant 0 : i32
    %c0_i32_0 = arith.constant 0 : i32
    %c0_i32_1 = arith.constant 0 : i32
    return %c0_i32, %c0_i32_0 : i32, i32
  }
  func.func @transform_7(%arg0: i32) -> (i32, i32) {
    %c0_i32 = arith.constant 0 : i32
    %c0_i32_0 = arith.constant 0 : i32
    %c0_i32_1 = arith.constant 0 : i32
    return %c0_i32, %c0_i32_0 : i32, i32
  }
  func.func @transform_8(%arg0: i32) -> (i32, i32) {
    %c0_i32 = arith.constant 0 : i32
    %c0_i32_0 = arith.constant 0 : i32
    %c0_i32_1 = arith.constant 0 : i32
    return %c0_i32, %c0_i32_0 : i32, i32
  }
  func.func @transform_9(%arg0: i32) -> (i32, i32) {
    %c0_i32 = arith.constant 0 : i32
    %c0_i32_0 = arith.constant 0 : i32
    %c0_i32_1 = arith.constant 0 : i32
    return %c0_i32, %c0_i32_0 : i32, i32
  }
  func.func @transform_10(%arg0: i32) -> (i32, i32) {
    %c0_i32 = arith.constant 0 : i32
    %c0_i32_0 = arith.constant 0 : i32
    return %arg0, %c0_i32 : i32, i32
  }
  func.func @transform_11(%arg0: i32) -> (i32, i32) {
    %c0_i32 = arith.constant 0 : i32
    %c0_i32_0 = arith.constant 0 : i32
    return %arg0, %c0_i32 : i32, i32
  }
}

module attributes {stable_mosaic.version = 11 : i64} {
  func.func @_vae_kernel(%arg0: i32, %arg1: memref<8x784xf32, #tpu.memory_space<vmem>>, %arg2: memref<8x64xf32, #tpu.memory_space<vmem>>, %arg3: memref<784x512xbf16, #tpu.memory_space<vmem>>, %arg4: memref<1x512xf32, #tpu.memory_space<vmem>>, %arg5: memref<512x128xbf16, #tpu.memory_space<vmem>>, %arg6: memref<1x128xf32, #tpu.memory_space<vmem>>, %arg7: memref<64x512xbf16, #tpu.memory_space<vmem>>, %arg8: memref<1x512xf32, #tpu.memory_space<vmem>>, %arg9: memref<512x784xbf16, #tpu.memory_space<vmem>>, %arg10: memref<1x784xf32, #tpu.memory_space<vmem>>, %arg11: memref<8x784xbf16, #tpu.memory_space<vmem>>, %arg12: memref<8x128xf32, #tpu.memory_space<vmem>>) attributes {dimension_semantics = [#tpu.dimension_semantics<parallel>], iteration_bounds = array<i64: 1>, scalar_prefetch = 0 : i64, scratch_operands = 0 : i64, tpu.core_type = #tpu.core_type<tc>, window_params = [{transform_indices = @transform_0, window_bounds = array<i64: 8, 784>}, {transform_indices = @transform_1, window_bounds = array<i64: 8, 64>}, {pipeline_mode = #tpu.pipeline_mode<synchronous>, transform_indices = @transform_2, window_bounds = array<i64: 784, 512>}, {pipeline_mode = #tpu.pipeline_mode<synchronous>, transform_indices = @transform_3, window_bounds = array<i64: 1, 512>}, {pipeline_mode = #tpu.pipeline_mode<synchronous>, transform_indices = @transform_4, window_bounds = array<i64: 512, 128>}, {pipeline_mode = #tpu.pipeline_mode<synchronous>, transform_indices = @transform_5, window_bounds = array<i64: 1, 128>}, {pipeline_mode = #tpu.pipeline_mode<synchronous>, transform_indices = @transform_6, window_bounds = array<i64: 64, 512>}, {pipeline_mode = #tpu.pipeline_mode<synchronous>, transform_indices = @transform_7, window_bounds = array<i64: 1, 512>}, {pipeline_mode = #tpu.pipeline_mode<synchronous>, transform_indices = @transform_8, window_bounds = array<i64: 512, 784>}, {pipeline_mode = #tpu.pipeline_mode<synchronous>, transform_indices = @transform_9, window_bounds = array<i64: 1, 784>}, {transform_indices = @transform_10, window_bounds = array<i64: 8, 784>}, {transform_indices = @transform_11, window_bounds = array<i64: 8, 128>}]} {
    %c0 = arith.constant 0 : index
    %c0_0 = arith.constant 0 : index
    %0 = vector.load %arg1[%c0, %c0_0] : memref<8x784xf32, #tpu.memory_space<vmem>>, vector<8x784xf32>
    %1 = arith.truncf %0 : vector<8x784xf32> to vector<8x784xbf16>
    %c0_1 = arith.constant 0 : index
    %c0_2 = arith.constant 0 : index
    %2 = vector.load %arg3[%c0_1, %c0_2] : memref<784x512xbf16, #tpu.memory_space<vmem>>, vector<784x512xbf16>
    %cst = arith.constant dense<0.000000e+00> : vector<8x512xf32>
    %3 = tpu.matmul %1, %2, %cst {dimension_numbers = #tpu.dot_dimension_numbers<[1], [0], [0], [1], [0, 0, 1, 1], [], []>} : vector<8x784xbf16>, vector<784x512xbf16>, vector<8x512xf32> -> vector<8x512xf32>
    %c0_3 = arith.constant 0 : index
    %c0_4 = arith.constant 0 : index
    %4 = vector.load %arg4[%c0_3, %c0_4] : memref<1x512xf32, #tpu.memory_space<vmem>>, vector<1x512xf32>
    %5 = vector.broadcast %4 : vector<1x512xf32> to vector<8x512xf32>
    %6 = arith.addf %3, %5 : vector<8x512xf32>
    %cst_5 = arith.constant 0.000000e+00 : f32
    %7 = vector.broadcast %cst_5 : f32 to vector<8x512xf32>
    %8 = arith.maximumf %6, %7 : vector<8x512xf32>
    %9 = arith.truncf %8 : vector<8x512xf32> to vector<8x512xbf16>
    %c0_6 = arith.constant 0 : index
    %c0_7 = arith.constant 0 : index
    %10 = vector.load %arg5[%c0_6, %c0_7] : memref<512x128xbf16, #tpu.memory_space<vmem>>, vector<512x128xbf16>
    %cst_8 = arith.constant dense<0.000000e+00> : vector<8x128xf32>
    %11 = tpu.matmul %9, %10, %cst_8 {dimension_numbers = #tpu.dot_dimension_numbers<[1], [0], [0], [1], [0, 0, 1, 1], [], []>} : vector<8x512xbf16>, vector<512x128xbf16>, vector<8x128xf32> -> vector<8x128xf32>
    %c0_9 = arith.constant 0 : index
    %c0_10 = arith.constant 0 : index
    %12 = vector.load %arg6[%c0_9, %c0_10] : memref<1x128xf32, #tpu.memory_space<vmem>>, vector<1x128xf32>
    %13 = vector.broadcast %12 : vector<1x128xf32> to vector<8x128xf32>
    %14 = arith.addf %11, %13 : vector<8x128xf32>
    %15 = vector.extract_strided_slice %14 {offsets = [0, 0], sizes = [8, 64], strides = [1, 1]} : vector<8x128xf32> to vector<8x64xf32>
    %16 = vector.extract_strided_slice %14 {offsets = [0, 64], sizes = [8, 64], strides = [1, 1]} : vector<8x128xf32> to vector<8x64xf32>
    %c0_11 = arith.constant 0 : index
    %c0_12 = arith.constant 0 : index
    %17 = vector.load %arg2[%c0_11, %c0_12] : memref<8x64xf32, #tpu.memory_space<vmem>>, vector<8x64xf32>
    %cst_13 = arith.constant 5.000000e-01 : f32
    %18 = vector.broadcast %cst_13 : f32 to vector<8x64xf32>
    %19 = arith.mulf %18, %16 : vector<8x64xf32>
    %20 = math.exp %19 : vector<8x64xf32>
    %21 = arith.mulf %17, %20 : vector<8x64xf32>
    %22 = arith.addf %15, %21 : vector<8x64xf32>
    %23 = arith.truncf %22 : vector<8x64xf32> to vector<8x64xbf16>
    %c0_14 = arith.constant 0 : index
    %c0_15 = arith.constant 0 : index
    %24 = vector.load %arg7[%c0_14, %c0_15] : memref<64x512xbf16, #tpu.memory_space<vmem>>, vector<64x512xbf16>
    %cst_16 = arith.constant dense<0.000000e+00> : vector<8x512xf32>
    %25 = tpu.matmul %23, %24, %cst_16 {dimension_numbers = #tpu.dot_dimension_numbers<[1], [0], [0], [1], [0, 0, 1, 1], [], []>} : vector<8x64xbf16>, vector<64x512xbf16>, vector<8x512xf32> -> vector<8x512xf32>
    %c0_17 = arith.constant 0 : index
    %c0_18 = arith.constant 0 : index
    %26 = vector.load %arg8[%c0_17, %c0_18] : memref<1x512xf32, #tpu.memory_space<vmem>>, vector<1x512xf32>
    %27 = vector.broadcast %26 : vector<1x512xf32> to vector<8x512xf32>
    %28 = arith.addf %25, %27 : vector<8x512xf32>
    %cst_19 = arith.constant 0.000000e+00 : f32
    %29 = vector.broadcast %cst_19 : f32 to vector<8x512xf32>
    %30 = arith.maximumf %28, %29 : vector<8x512xf32>
    %31 = arith.truncf %30 : vector<8x512xf32> to vector<8x512xbf16>
    %c0_20 = arith.constant 0 : index
    %c0_21 = arith.constant 0 : index
    %32 = vector.load %arg9[%c0_20, %c0_21] : memref<512x784xbf16, #tpu.memory_space<vmem>>, vector<512x784xbf16>
    %cst_22 = arith.constant dense<0.000000e+00> : vector<8x784xf32>
    %33 = tpu.matmul %31, %32, %cst_22 {dimension_numbers = #tpu.dot_dimension_numbers<[1], [0], [0], [1], [0, 0, 1, 1], [], []>} : vector<8x512xbf16>, vector<512x784xbf16>, vector<8x784xf32> -> vector<8x784xf32>
    %c0_23 = arith.constant 0 : index
    %c0_24 = arith.constant 0 : index
    %34 = vector.load %arg10[%c0_23, %c0_24] : memref<1x784xf32, #tpu.memory_space<vmem>>, vector<1x784xf32>
    %35 = vector.broadcast %34 : vector<1x784xf32> to vector<8x784xf32>
    %36 = arith.addf %33, %35 : vector<8x784xf32>
    %cst_25 = arith.constant 0.000000e+00 : f32
    %37 = vector.broadcast %cst_25 : f32 to vector<8x784xf32>
    %38 = arith.subf %37, %36 : vector<8x784xf32>
    %39 = math.exp %38 : vector<8x784xf32>
    %cst_26 = arith.constant 1.000000e+00 : f32
    %40 = vector.broadcast %cst_26 : f32 to vector<8x784xf32>
    %41 = arith.addf %40, %39 : vector<8x784xf32>
    %42 = tpu.reciprocal %41 {approx = true} : vector<8x784xf32> -> vector<8x784xf32>
    %43 = arith.truncf %42 : vector<8x784xf32> to vector<8x784xbf16>
    %c0_27 = arith.constant 0 : index
    %c0_28 = arith.constant 0 : index
    %44 = vector.load %arg11[%c0_27, %c0_28] : memref<8x784xbf16, #tpu.memory_space<vmem>>, vector<8x784xbf16>
    tpu.vector_store %arg11[%c0_27, %c0_28], %43 {strides = array<i32>} : memref<8x784xbf16, #tpu.memory_space<vmem>>, vector<8x784xbf16>,
    %c0_29 = arith.constant 0 : index
    %c0_30 = arith.constant 0 : index
    %45 = vector.load %arg12[%c0_29, %c0_30] : memref<8x128xf32, #tpu.memory_space<vmem>>, vector<8x128xf32>
    tpu.vector_store %arg12[%c0_29, %c0_30], %14 {strides = array<i32>} : memref<8x128xf32, #tpu.memory_space<vmem>>, vector<8x128xf32>,
    return
  }
  func.func @transform_0(%arg0: i32) -> (i32, i32) {
    %c0_i32 = arith.constant 0 : i32
    %c0_i32_0 = arith.constant 0 : i32
    return %arg0, %c0_i32 : i32, i32
  }
  func.func @transform_1(%arg0: i32) -> (i32, i32) {
    %c0_i32 = arith.constant 0 : i32
    %c0_i32_0 = arith.constant 0 : i32
    return %arg0, %c0_i32 : i32, i32
  }
  func.func @transform_2(%arg0: i32) -> (i32, i32) {
    %c0_i32 = arith.constant 0 : i32
    %c0_i32_0 = arith.constant 0 : i32
    %c0_i32_1 = arith.constant 0 : i32
    return %c0_i32, %c0_i32_0 : i32, i32
  }
  func.func @transform_3(%arg0: i32) -> (i32, i32) {
    %c0_i32 = arith.constant 0 : i32
    %c0_i32_0 = arith.constant 0 : i32
    %c0_i32_1 = arith.constant 0 : i32
    return %c0_i32, %c0_i32_0 : i32, i32
  }
  func.func @transform_4(%arg0: i32) -> (i32, i32) {
    %c0_i32 = arith.constant 0 : i32
    %c0_i32_0 = arith.constant 0 : i32
    %c0_i32_1 = arith.constant 0 : i32
    return %c0_i32, %c0_i32_0 : i32, i32
  }
  func.func @transform_5(%arg0: i32) -> (i32, i32) {
    %c0_i32 = arith.constant 0 : i32
    %c0_i32_0 = arith.constant 0 : i32
    %c0_i32_1 = arith.constant 0 : i32
    return %c0_i32, %c0_i32_0 : i32, i32
  }
  func.func @transform_6(%arg0: i32) -> (i32, i32) {
    %c0_i32 = arith.constant 0 : i32
    %c0_i32_0 = arith.constant 0 : i32
    %c0_i32_1 = arith.constant 0 : i32
    return %c0_i32, %c0_i32_0 : i32, i32
  }
  func.func @transform_7(%arg0: i32) -> (i32, i32) {
    %c0_i32 = arith.constant 0 : i32
    %c0_i32_0 = arith.constant 0 : i32
    %c0_i32_1 = arith.constant 0 : i32
    return %c0_i32, %c0_i32_0 : i32, i32
  }
  func.func @transform_8(%arg0: i32) -> (i32, i32) {
    %c0_i32 = arith.constant 0 : i32
    %c0_i32_0 = arith.constant 0 : i32
    %c0_i32_1 = arith.constant 0 : i32
    return %c0_i32, %c0_i32_0 : i32, i32
  }
  func.func @transform_9(%arg0: i32) -> (i32, i32) {
    %c0_i32 = arith.constant 0 : i32
    %c0_i32_0 = arith.constant 0 : i32
    %c0_i32_1 = arith.constant 0 : i32
    return %c0_i32, %c0_i32_0 : i32, i32
  }
  func.func @transform_10(%arg0: i32) -> (i32, i32) {
    %c0_i32 = arith.constant 0 : i32
    %c0_i32_0 = arith.constant 0 : i32
    return %arg0, %c0_i32 : i32, i32
  }
  func.func @transform_11(%arg0: i32) -> (i32, i32) {
    %c0_i32 = arith.constant 0 : i32
    %c0_i32_0 = arith.constant 0 : i32
    return %arg0, %c0_i32 : i32, i32
  }
}

</mosaic_0001>

<llo_original>
// kernel: tpu_custom_call.1
$region0: #{tpu_custom_call.1}
  #allocation0 [shape = 'u32[]', space=smem, size = 0x4, offset = 0x4, fixed_abs, tag = 'smem constant byte address 0x4 - core index']
  #allocation1 [shape = 'u32[144,128]{1,0:T(1,128)}', space=vmem, size = 0x12000, scoped, tag = 'internal scratch']
  %s0 = inlined_call_operand.vmem [shape: f32[8,784], index: 0, kind: input, shape index: {}]
  %s1 = inlined_call_operand.vmem [shape: f32[8,64], index: 1, kind: input, shape index: {}]
  %s2 = inlined_call_operand.vmem [shape: bf16[784,512], index: 2, kind: input, shape index: {}]
  %s3 = inlined_call_operand.vmem [shape: f32[1,512], index: 3, kind: input, shape index: {}]
  %s4 = inlined_call_operand.vmem [shape: bf16[512,128], index: 4, kind: input, shape index: {}]
  %s5 = inlined_call_operand.vmem [shape: f32[1,128], index: 5, kind: input, shape index: {}]
  %s6 = inlined_call_operand.vmem [shape: bf16[64,512], index: 6, kind: input, shape index: {}]
  %s7 = inlined_call_operand.vmem [shape: f32[1,512], index: 7, kind: input, shape index: {}]
  %s8 = inlined_call_operand.vmem [shape: bf16[512,784], index: 8, kind: input, shape index: {}]
  %s9 = inlined_call_operand.vmem [shape: f32[1,784], index: 9, kind: input, shape index: {}]
  %s10 = inlined_call_operand.hbm [shape: bf16[8,784], index: 10, kind: output, shape index: {0}]
  %s11 = inlined_call_operand.hbm [shape: f32[8,128], index: 11, kind: output, shape index: {1}]
  %12 = xla_tuple %s10, %s11
  %s13 = sld [smem:[#allocation0]]
  $region58: #{tpu_custom_call.1} parent=0
    _
  %s15 = ssub.s32 1, %s13
  %s16 = scalar_select 0, %s15, %s13
  $region1: #{tpu_custom_call.1} parent=0
    #allocation2 [shape = 'u8[14336]{0}', space=vmem, size = 0x3800, scoped, tag = 'output window, operand 0, single buffered']
    #allocation3 [shape = 's32[1]{0}', space=sflag, size = 0x4, scoped, tag = 'scoped memory for tpu_custom_call.1']
    #allocation4 [shape = 'u8[4096]{0}', space=vmem, size = 0x1000, scoped, tag = 'output window, operand 1, single buffered']
    #allocation5 [shape = 's32[1]{0}', space=sflag, size = 0x4, scoped, tag = 'scoped memory for tpu_custom_call.1']
    %17 = vsyncpa [#allocation3], 0
    %18 = vsyncpa [#allocation5], 0
    // Predicated region
    $region2: #{tpu_custom_call.1} parent=1 // pred_check
      _
    $region3: #{tpu_custom_call.1} parent=1 // pred_check_branch
      %20 = sbr.rel (0) target = $region5
    $region4: #{tpu_custom_call.1} parent=1 // pred_region
      _
    $region5: #{tpu_custom_call.1} parent=1 // pred_fallthru
      _
    // Predicated region
    $region6: #{tpu_custom_call.1} parent=1 // pred_check
      _
    $region7: #{tpu_custom_call.1} parent=1 // pred_check_branch
      %22 = sbr.rel (0) target = $region9
    $region8: #{tpu_custom_call.1} parent=1 // pred_region
      _
    $region9: #{tpu_custom_call.1} parent=1 // pred_fallthru
      _
    // Predicated region
    $region10: #{tpu_custom_call.1} parent=1 // pred_check
      _
    $region11: #{tpu_custom_call.1} parent=1 // pred_check_branch
      %24 = sbr.rel (0) target = $region13
    $region12: #{tpu_custom_call.1} parent=1 // pred_region
      _
    $region13: #{tpu_custom_call.1} parent=1 // pred_fallthru
      _
    // Predicated region
    $region14: #{tpu_custom_call.1} parent=1 // pred_check
      _
    $region15: #{tpu_custom_call.1} parent=1 // pred_check_branch
      %26 = sbr.rel (0) target = $region17
    $region16: #{tpu_custom_call.1} parent=1 // pred_region
      _
    $region17: #{tpu_custom_call.1} parent=1 // pred_fallthru
      _
    // Predicated region
    $region18: #{tpu_custom_call.1} parent=1 // pred_check
      _
    $region19: #{tpu_custom_call.1} parent=1 // pred_check_branch
      %28 = sbr.rel (0) target = $region21
    $region20: #{tpu_custom_call.1} parent=1 // pred_region
      _
    $region21: #{tpu_custom_call.1} parent=1 // pred_fallthru
      _
    // Predicated region
    $region22: #{tpu_custom_call.1} parent=1 // pred_check
      _
    $region23: #{tpu_custom_call.1} parent=1 // pred_check_branch
      %30 = sbr.rel (0) target = $region25
    $region24: #{tpu_custom_call.1} parent=1 // pred_region
      _
    $region25: #{tpu_custom_call.1} parent=1 // pred_fallthru
      _
    // Predicated region
    $region26: #{tpu_custom_call.1} parent=1 // pred_check
      _
    $region27: #{tpu_custom_call.1} parent=1 // pred_check_branch
      %32 = sbr.rel (0) target = $region29
    $region28: #{tpu_custom_call.1} parent=1 // pred_region
      _
    $region29: #{tpu_custom_call.1} parent=1 // pred_fallthru
      _
    // Predicated region
    $region30: #{tpu_custom_call.1} parent=1 // pred_check
      _
    $region31: #{tpu_custom_call.1} parent=1 // pred_check_branch
      %34 = sbr.rel (0) target = $region33
    $region32: #{tpu_custom_call.1} parent=1 // pred_region
      _
    $region33: #{tpu_custom_call.1} parent=1 // pred_fallthru
      _
    // Predicated region
    $region34: #{tpu_custom_call.1} parent=1 // pred_check
      _
    $region35: #{tpu_custom_call.1} parent=1 // pred_check_branch
      %36 = sbr.rel (0) target = $region37
    $region36: #{tpu_custom_call.1} parent=1 // pred_region
      _
    $region37: #{tpu_custom_call.1} parent=1 // pred_fallthru
      _
    // Predicated region
    $region38: #{tpu_custom_call.1} parent=1 // pred_check
      _
    $region39: #{tpu_custom_call.1} parent=1 // pred_check_branch
      %38 = sbr.rel (0) target = $region41
    $region40: #{tpu_custom_call.1} parent=1 // pred_region
      _
    $region41: #{tpu_custom_call.1} parent=1 // pred_fallthru
      _
    %v40 = vld [vmem:[%s0] sm:$0xff]
    %v41 = vld [vmem:[%s0 + $0x8] sm:$0xff]
    %v42 = vld [vmem:[%s0 + $0x10] sm:$0xff]
    %v43 = vld [vmem:[%s0 + $0x18] sm:$0xff]
    %v44 = vld [vmem:[%s0 + $0x20] sm:$0xff]
    %v45 = vld [vmem:[%s0 + $0x28] sm:$0xff]
    %v46 = vld [vmem:[%s0 + $0x30] sm:$0xff]
    %v47 = vpack.c.bf16 %v40, %v40
    %v48 = vpack.c.bf16 %v41, %v41
    %v49 = vpack.c.bf16 %v42, %v42
    %v50 = vpack.c.bf16 %v43, %v43
    %v51 = vpack.c.bf16 %v44, %v44
    %v52 = vpack.c.bf16 %v45, %v45
    %v53 = vpack.c.bf16 %v46, %v46
    %v54 = vld [vmem:[%s2] sm:$0xff]
    %v55 = vld [vmem:[%s2 + $0x8] sm:$0xff]
    %v56 = vld [vmem:[%s2 + $0x10] sm:$0xff]
    %v57 = vld [vmem:[%s2 + $0x18] sm:$0xff]
    %v58 = vld [vmem:[%s2 + $0x20] sm:$0xff]
    %v59 = vld [vmem:[%s2 + $0x28] sm:$0xff]
    %v60 = vld [vmem:[%s2 + $0x30] sm:$0xff]
    %v61 = vld [vmem:[%s2 + $0x38] sm:$0xff]
    %v62 = vld [vmem:[%s2 + $0x40] sm:$0xff]
    %v63 = vld [vmem:[%s2 + $0x48] sm:$0xff]
    %v64 = vld [vmem:[%s2 + $0x50] sm:$0xff]
    %v65 = vld [vmem:[%s2 + $0x58] sm:$0xff]
    %v66 = vld [vmem:[%s2 + $0x60] sm:$0xff]
    %v67 = vld [vmem:[%s2 + $0x68] sm:$0xff]
    %v68 = vld [vmem:[%s2 + $0x70] sm:$0xff]
    %v69 = vld [vmem:[%s2 + $0x78] sm:$0xff]
    %v70 = vld [vmem:[%s2 + $0x80] sm:$0xff]
    %v71 = vld [vmem:[%s2 + $0x88] sm:$0xff]
    %v72 = vld [vmem:[%s2 + $0x90] sm:$0xff]
    %v73 = vld [vmem:[%s2 + $0x98] sm:$0xff]
    %v74 = vld [vmem:[%s2 + $0xa0] sm:$0xff]
    %v75 = vld [vmem:[%s2 + $0xa8] sm:$0xff]
    %v76 = vld [vmem:[%s2 + $0xb0] sm:$0xff]
    %v77 = vld [vmem:[%s2 + $0xb8] sm:$0xff]
    %v78 = vld [vmem:[%s2 + $0xc0] sm:$0xff]
    %v79 = vld [vmem:[%s2 + $0xc8] sm:$0xff]
    %v80 = vld [vmem:[%s2 + $0xd0] sm:$0xff]
    %v81 = vld [vmem:[%s2 + $0xd8] sm:$0xff]
    %v82 = vld [vmem:[%s2 + $0xe0] sm:$0xff]
    %v83 = vld [vmem:[%s2 + $0xe8] sm:$0xff]
    %v84 = vld [vmem:[%s2 + $0xf0] sm:$0xff]
    %v85 = vld [vmem:[%s2 + $0xf8] sm:$0xff]
    %v86 = vld [vmem:[%s2 + $0x100] sm:$0xff]
    %v87 = vld [vmem:[%s2 + $0x108] sm:$0xff]
    %v88 = vld [vmem:[%s2 + $0x110] sm:$0xff]
    %v89 = vld [vmem:[%s2 + $0x118] sm:$0xff]
    %v90 = vld [vmem:[%s2 + $0x120] sm:$0xff]
    %v91 = vld [vmem:[%s2 + $0x128] sm:$0xff]
    %v92 = vld [vmem:[%s2 + $0x130] sm:$0xff]
    %v93 = vld [vmem:[%s2 + $0x138] sm:$0xff]
    %v94 = vld [vmem:[%s2 + $0x140] sm:$0xff]
    %v95 = vld [vmem:[%s2 + $0x148] sm:$0xff]
    %v96 = vld [vmem:[%s2 + $0x150] sm:$0xff]
    %v97 = vld [vmem:[%s2 + $0x158] sm:$0xff]
    %v98 = vld [vmem:[%s2 + $0x160] sm:$0xff]
    %v99 = vld [vmem:[%s2 + $0x168] sm:$0xff]
    %v100 = vld [vmem:[%s2 + $0x170] sm:$0xff]
    %v101 = vld [vmem:[%s2 + $0x178] sm:$0xff]
    %v102 = vld [vmem:[%s2 + $0x180] sm:$0xff]
    %v103 = vld [vmem:[%s2 + $0x188] sm:$0xff]
    %v104 = vld [vmem:[%s2 + $0x190] sm:$0xff]
    %v105 = vld [vmem:[%s2 + $0x198] sm:$0xff]
    %v106 = vld [vmem:[%s2 + $0x1a0] sm:$0xff]
    %v107 = vld [vmem:[%s2 + $0x1a8] sm:$0xff]
    %v108 = vld [vmem:[%s2 + $0x1b0] sm:$0xff]
    %v109 = vld [vmem:[%s2 + $0x1b8] sm:$0xff]
    %v110 = vld [vmem:[%s2 + $0x1c0] sm:$0xff]
    %v111 = vld [vmem:[%s2 + $0x1c8] sm:$0xff]
    %v112 = vld [vmem:[%s2 + $0x1d0] sm:$0xff]
    %v113 = vld [vmem:[%s2 + $0x1d8] sm:$0xff]
    %v114 = vld [vmem:[%s2 + $0x1e0] sm:$0xff]
    %v115 = vld [vmem:[%s2 + $0x1e8] sm:$0xff]
    %v116 = vld [vmem:[%s2 + $0x1f0] sm:$0xff]
    %v117 = vld [vmem:[%s2 + $0x1f8] sm:$0xff]
    %v118 = vld [vmem:[%s2 + $0x200] sm:$0xff]
    %v119 = vld [vmem:[%s2 + $0x208] sm:$0xff]
    %v120 = vld [vmem:[%s2 + $0x210] sm:$0xff]
    %v121 = vld [vmem:[%s2 + $0x218] sm:$0xff]
    %v122 = vld [vmem:[%s2 + $0x220] sm:$0xff]
    %v123 = vld [vmem:[%s2 + $0x228] sm:$0xff]
    %v124 = vld [vmem:[%s2 + $0x230] sm:$0xff]
    %v125 = vld [vmem:[%s2 + $0x238] sm:$0xff]
    %v126 = vld [vmem:[%s2 + $0x240] sm:$0xff]
    %v127 = vld [vmem:[%s2 + $0x248] sm:$0xff]
    %v128 = vld [vmem:[%s2 + $0x250] sm:$0xff]
    %v129 = vld [vmem:[%s2 + $0x258] sm:$0xff]
    %v130 = vld [vmem:[%s2 + $0x260] sm:$0xff]
    %v131 = vld [vmem:[%s2 + $0x268] sm:$0xff]
    %v132 = vld [vmem:[%s2 + $0x270] sm:$0xff]
    %v133 = vld [vmem:[%s2 + $0x278] sm:$0xff]
    %v134 = vld [vmem:[%s2 + $0x280] sm:$0xff]
    %v135 = vld [vmem:[%s2 + $0x288] sm:$0xff]
    %v136 = vld [vmem:[%s2 + $0x290] sm:$0xff]
    %v137 = vld [vmem:[%s2 + $0x298] sm:$0xff]
    %v138 = vld [vmem:[%s2 + $0x2a0] sm:$0xff]
    %v139 = vld [vmem:[%s2 + $0x2a8] sm:$0xff]
    %v140 = vld [vmem:[%s2 + $0x2b0] sm:$0xff]
    %v141 = vld [vmem:[%s2 + $0x2b8] sm:$0xff]
    %v142 = vld [vmem:[%s2 + $0x2c0] sm:$0xff]
    %v143 = vld [vmem:[%s2 + $0x2c8] sm:$0xff]
    %v144 = vld [vmem:[%s2 + $0x2d0] sm:$0xff]
    %v145 = vld [vmem:[%s2 + $0x2d8] sm:$0xff]
    %v146 = vld [vmem:[%s2 + $0x2e0] sm:$0xff]
    %v147 = vld [vmem:[%s2 + $0x2e8] sm:$0xff]
    %v148 = vld [vmem:[%s2 + $0x2f0] sm:$0xff]
    %v149 = vld [vmem:[%s2 + $0x2f8] sm:$0xff]
    %v150 = vld [vmem:[%s2 + $0x300] sm:$0xff]
    %v151 = vld [vmem:[%s2 + $0x308] sm:$0xff]
    %v152 = vld [vmem:[%s2 + $0x310] sm:$0xff]
    %v153 = vld [vmem:[%s2 + $0x318] sm:$0xff]
    %v154 = vld [vmem:[%s2 + $0x320] sm:$0xff]
    %v155 = vld [vmem:[%s2 + $0x328] sm:$0xff]
    %v156 = vld [vmem:[%s2 + $0x330] sm:$0xff]
    %v157 = vld [vmem:[%s2 + $0x338] sm:$0xff]
    %v158 = vld [vmem:[%s2 + $0x340] sm:$0xff]
    %v159 = vld [vmem:[%s2 + $0x348] sm:$0xff]
    %v160 = vld [vmem:[%s2 + $0x350] sm:$0xff]
    %v161 = vld [vmem:[%s2 + $0x358] sm:$0xff]
    %v162 = vld [vmem:[%s2 + $0x360] sm:$0xff]
    %v163 = vld [vmem:[%s2 + $0x368] sm:$0xff]
    %v164 = vld [vmem:[%s2 + $0x370] sm:$0xff]
    %v165 = vld [vmem:[%s2 + $0x378] sm:$0xff]
    %v166 = vld [vmem:[%s2 + $0x380] sm:$0xff]
    %v167 = vld [vmem:[%s2 + $0x388] sm:$0xff]
    %v168 = vld [vmem:[%s2 + $0x390] sm:$0xff]
    %v169 = vld [vmem:[%s2 + $0x398] sm:$0xff]
    %v170 = vld [vmem:[%s2 + $0x3a0] sm:$0xff]
    %v171 = vld [vmem:[%s2 + $0x3a8] sm:$0xff]
    %v172 = vld [vmem:[%s2 + $0x3b0] sm:$0xff]
    %v173 = vld [vmem:[%s2 + $0x3b8] sm:$0xff]
    %v174 = vld [vmem:[%s2 + $0x3c0] sm:$0xff]
    %v175 = vld [vmem:[%s2 + $0x3c8] sm:$0xff]
    %v176 = vld [vmem:[%s2 + $0x3d0] sm:$0xff]
    %v177 = vld [vmem:[%s2 + $0x3d8] sm:$0xff]
    %v178 = vld [vmem:[%s2 + $0x3e0] sm:$0xff]
    %v179 = vld [vmem:[%s2 + $0x3e8] sm:$0xff]
    %v180 = vld [vmem:[%s2 + $0x3f0] sm:$0xff]
    %v181 = vld [vmem:[%s2 + $0x3f8] sm:$0xff]
    %v182 = vld [vmem:[%s2 + $0x400] sm:$0xff]
    %v183 = vld [vmem:[%s2 + $0x408] sm:$0xff]
    %v184 = vld [vmem:[%s2 + $0x410] sm:$0xff]
    %v185 = vld [vmem:[%s2 + $0x418] sm:$0xff]
    %v186 = vld [vmem:[%s2 + $0x420] sm:$0xff]
    %v187 = vld [vmem:[%s2 + $0x428] sm:$0xff]
    %v188 = vld [vmem:[%s2 + $0x430] sm:$0xff]
    %v189 = vld [vmem:[%s2 + $0x438] sm:$0xff]
    %v190 = vld [vmem:[%s2 + $0x440] sm:$0xff]
    %v191 = vld [vmem:[%s2 + $0x448] sm:$0xff]
    %v192 = vld [vmem:[%s2 + $0x450] sm:$0xff]
    %v193 = vld [vmem:[%s2 + $0x458] sm:$0xff]
    %v194 = vld [vmem:[%s2 + $0x460] sm:$0xff]
    %v195 = vld [vmem:[%s2 + $0x468] sm:$0xff]
    %v196 = vld [vmem:[%s2 + $0x470] sm:$0xff]
    %v197 = vld [vmem:[%s2 + $0x478] sm:$0xff]
    %v198 = vld [vmem:[%s2 + $0x480] sm:$0xff]
    %v199 = vld [vmem:[%s2 + $0x488] sm:$0xff]
    %v200 = vld [vmem:[%s2 + $0x490] sm:$0xff]
    %v201 = vld [vmem:[%s2 + $0x498] sm:$0xff]
    %v202 = vld [vmem:[%s2 + $0x4a0] sm:$0xff]
    %v203 = vld [vmem:[%s2 + $0x4a8] sm:$0xff]
    %v204 = vld [vmem:[%s2 + $0x4b0] sm:$0xff]
    %v205 = vld [vmem:[%s2 + $0x4b8] sm:$0xff]
    %v206 = vld [vmem:[%s2 + $0x4c0] sm:$0xff]
    %v207 = vld [vmem:[%s2 + $0x4c8] sm:$0xff]
    %v208 = vld [vmem:[%s2 + $0x4d0] sm:$0xff]
    %v209 = vld [vmem:[%s2 + $0x4d8] sm:$0xff]
    %v210 = vld [vmem:[%s2 + $0x4e0] sm:$0xff]
    %v211 = vld [vmem:[%s2 + $0x4e8] sm:$0xff]
    %v212 = vld [vmem:[%s2 + $0x4f0] sm:$0xff]
    %v213 = vld [vmem:[%s2 + $0x4f8] sm:$0xff]
    %v214 = vld [vmem:[%s2 + $0x500] sm:$0xff]
    %v215 = vld [vmem:[%s2 + $0x508] sm:$0xff]
    %v216 = vld [vmem:[%s2 + $0x510] sm:$0xff]
    %v217 = vld [vmem:[%s2 + $0x518] sm:$0xff]
    %v218 = vld [vmem:[%s2 + $0x520] sm:$0xff]
    %v219 = vld [vmem:[%s2 + $0x528] sm:$0xff]
    %v220 = vld [vmem:[%s2 + $0x530] sm:$0xff]
    %v221 = vld [vmem:[%s2 + $0x538] sm:$0xff]
    %v222 = vld [vmem:[%s2 + $0x540] sm:$0xff]
    %v223 = vld [vmem:[%s2 + $0x548] sm:$0xff]
    %v224 = vld [vmem:[%s2 + $0x550] sm:$0xff]
    %v225 = vld [vmem:[%s2 + $0x558] sm:$0xff]
    %v226 = vld [vmem:[%s2 + $0x560] sm:$0xff]
    %v227 = vld [vmem:[%s2 + $0x568] sm:$0xff]
    %v228 = vld [vmem:[%s2 + $0x570] sm:$0xff]
    %v229 = vld [vmem:[%s2 + $0x578] sm:$0xff]
    %v230 = vld [vmem:[%s2 + $0x580] sm:$0xff]
    %v231 = vld [vmem:[%s2 + $0x588] sm:$0xff]
    %v232 = vld [vmem:[%s2 + $0x590] sm:$0xff]
    %v233 = vld [vmem:[%s2 + $0x598] sm:$0xff]
    %v234 = vld [vmem:[%s2 + $0x5a0] sm:$0xff]
    %v235 = vld [vmem:[%s2 + $0x5a8] sm:$0xff]
    %v236 = vld [vmem:[%s2 + $0x5b0] sm:$0xff]
    %v237 = vld [vmem:[%s2 + $0x5b8] sm:$0xff]
    %v238 = vld [vmem:[%s2 + $0x5c0] sm:$0xff]
    %v239 = vld [vmem:[%s2 + $0x5c8] sm:$0xff]
    %v240 = vld [vmem:[%s2 + $0x5d0] sm:$0xff]
    %v241 = vld [vmem:[%s2 + $0x5d8] sm:$0xff]
    %v242 = vld [vmem:[%s2 + $0x5e0] sm:$0xff]
    %v243 = vld [vmem:[%s2 + $0x5e8] sm:$0xff]
    %v244 = vld [vmem:[%s2 + $0x5f0] sm:$0xff]
    %v245 = vld [vmem:[%s2 + $0x5f8] sm:$0xff]
    %v246 = vld [vmem:[%s2 + $0x600] sm:$0xff]
    %v247 = vld [vmem:[%s2 + $0x608] sm:$0xff]
    %v248 = vld [vmem:[%s2 + $0x610] sm:$0xff]
    %v249 = vld [vmem:[%s2 + $0x618] sm:$0xff]
    %v250 = vld [vmem:[%s3] sm:$0xf]
    %v252 = vlaneseq
    %v253 = vshrl.u32 %v252, 7
    %v254 = vsub.s32 0, %v253
    %v255 = vrot.slane %v250, %v254
    %v256 = vlaneseq
    %v257 = vshrl.u32 %v256, 7
    %v258 = vsub.s32 1, %v257
    %v259 = vrot.slane %v250, %v258
    %v260 = vlaneseq
    %v261 = vshrl.u32 %v260, 7
    %v262 = vsub.s32 2, %v261
    %v263 = vrot.slane %v250, %v262
    %v264 = vlaneseq
    %v265 = vshrl.u32 %v264, 7
    %v266 = vsub.s32 3, %v265
    %v267 = vrot.slane %v250, %v266
    %v468 = vunpack.c.l.b16 %v54
    %v469 = vunpack.c.h.b16 %v54
    %v470 = vunpack.c.l.b16 %v55
    %v471 = vunpack.c.h.b16 %v55
    %v472 = vunpack.c.l.b16 %v56
    %v473 = vunpack.c.h.b16 %v56
    %v474 = vunpack.c.l.b16 %v57
    %v475 = vunpack.c.h.b16 %v57
    %v476 = vunpack.c.l.b16 %v58
    %v477 = vunpack.c.h.b16 %v58
    %v478 = vunpack.c.l.b16 %v59
    %v479 = vunpack.c.h.b16 %v59
    %v480 = vunpack.c.l.b16 %v60
    %v481 = vunpack.c.h.b16 %v60
    %v482 = vunpack.c.l.b16 %v61
    %v483 = vunpack.c.h.b16 %v61
    %v484 = vunpack.c.l.b16 %v62
    %v485 = vunpack.c.h.b16 %v62
    %v486 = vunpack.c.l.b16 %v63
    %v487 = vunpack.c.h.b16 %v63
    %v488 = vunpack.c.l.b16 %v64
    %v489 = vunpack.c.h.b16 %v64
    %v490 = vunpack.c.l.b16 %v65
    %v491 = vunpack.c.h.b16 %v65
    %v492 = vunpack.c.l.b16 %v66
    %v493 = vunpack.c.h.b16 %v66
    %v494 = vunpack.c.l.b16 %v67
    %v495 = vunpack.c.h.b16 %v67
    %v496 = vunpack.c.l.b16 %v68
    %v497 = vunpack.c.h.b16 %v68
    %v498 = vunpack.c.l.b16 %v69
    %v499 = vunpack.c.h.b16 %v69
    %v500 = vunpack.c.l.b16 %v70
    %v501 = vunpack.c.h.b16 %v70
    %v502 = vunpack.c.l.b16 %v71
    %v503 = vunpack.c.h.b16 %v71
    %v504 = vunpack.c.l.b16 %v72
    %v505 = vunpack.c.h.b16 %v72
    %v506 = vunpack.c.l.b16 %v73
    %v507 = vunpack.c.h.b16 %v73
    %v508 = vunpack.c.l.b16 %v74
    %v509 = vunpack.c.h.b16 %v74
    %v510 = vunpack.c.l.b16 %v75
    %v511 = vunpack.c.h.b16 %v75
    %v512 = vunpack.c.l.b16 %v76
    %v513 = vunpack.c.h.b16 %v76
    %v514 = vunpack.c.l.b16 %v77
    %v515 = vunpack.c.h.b16 %v77
    %v516 = vunpack.c.l.b16 %v78
    %v517 = vunpack.c.h.b16 %v78
    %v518 = vunpack.c.l.b16 %v79
    %v519 = vunpack.c.h.b16 %v79
    %v520 = vunpack.c.l.b16 %v80
    %v521 = vunpack.c.h.b16 %v80
    %v522 = vunpack.c.l.b16 %v81
    %v523 = vunpack.c.h.b16 %v81
    %v524 = vunpack.c.l.b16 %v82
    %v525 = vunpack.c.h.b16 %v82
    %v526 = vunpack.c.l.b16 %v83
    %v527 = vunpack.c.h.b16 %v83
    %v528 = vunpack.c.l.b16 %v84
    %v529 = vunpack.c.h.b16 %v84
    %v530 = vunpack.c.l.b16 %v85
    %v531 = vunpack.c.h.b16 %v85
    %v532 = vunpack.c.l.b16 %v86
    %v533 = vunpack.c.h.b16 %v86
    %v534 = vunpack.c.l.b16 %v87
    %v535 = vunpack.c.h.b16 %v87
    %v536 = vunpack.c.l.b16 %v88
    %v537 = vunpack.c.h.b16 %v88
    %v538 = vunpack.c.l.b16 %v89
    %v539 = vunpack.c.h.b16 %v89
    %v540 = vunpack.c.l.b16 %v90
    %v541 = vunpack.c.h.b16 %v90
    %v542 = vunpack.c.l.b16 %v91
    %v543 = vunpack.c.h.b16 %v91
    %v544 = vunpack.c.l.b16 %v92
    %v545 = vunpack.c.h.b16 %v92
    %v546 = vunpack.c.l.b16 %v93
    %v547 = vunpack.c.h.b16 %v93
    %v548 = vunpack.c.l.b16 %v94
    %v549 = vunpack.c.h.b16 %v94
    %v550 = vunpack.c.l.b16 %v95
    %v551 = vunpack.c.h.b16 %v95
    %v552 = vunpack.c.l.b16 %v96
    %v553 = vunpack.c.h.b16 %v96
    %v554 = vunpack.c.l.b16 %v97
    %v555 = vunpack.c.h.b16 %v97
    %v556 = vunpack.c.l.b16 %v98
    %v557 = vunpack.c.h.b16 %v98
    %v558 = vunpack.c.l.b16 %v99
    %v559 = vunpack.c.h.b16 %v99
    %v560 = vunpack.c.l.b16 %v100
    %v561 = vunpack.c.h.b16 %v100
    %v562 = vunpack.c.l.b16 %v101
    %v563 = vunpack.c.h.b16 %v101
    %v564 = vunpack.c.l.b16 %v102
    %v565 = vunpack.c.h.b16 %v102
    %v566 = vunpack.c.l.b16 %v103
    %v567 = vunpack.c.h.b16 %v103
    %v568 = vunpack.c.l.b16 %v104
    %v569 = vunpack.c.h.b16 %v104
    %v570 = vunpack.c.l.b16 %v105
    %v571 = vunpack.c.h.b16 %v105
    %v572 = vunpack.c.l.b16 %v106
    %v573 = vunpack.c.h.b16 %v106
    %v574 = vunpack.c.l.b16 %v107
    %v575 = vunpack.c.h.b16 %v107
    %v576 = vunpack.c.l.b16 %v108
    %v577 = vunpack.c.h.b16 %v108
    %v578 = vunpack.c.l.b16 %v109
    %v579 = vunpack.c.h.b16 %v109
    %v580 = vunpack.c.l.b16 %v110
    %v581 = vunpack.c.h.b16 %v110
    %v582 = vunpack.c.l.b16 %v111
    %v583 = vunpack.c.h.b16 %v111
    %v584 = vunpack.c.l.b16 %v112
    %v585 = vunpack.c.h.b16 %v112
    %v586 = vunpack.c.l.b16 %v113
    %v587 = vunpack.c.h.b16 %v113
    %v588 = vunpack.c.l.b16 %v114
    %v589 = vunpack.c.h.b16 %v114
    %v590 = vunpack.c.l.b16 %v115
    %v591 = vunpack.c.h.b16 %v115
    %v592 = vunpack.c.l.b16 %v116
    %v593 = vunpack.c.h.b16 %v116
    %v594 = vunpack.c.l.b16 %v117
    %v595 = vunpack.c.h.b16 %v117
    %v596 = vunpack.c.l.b16 %v118
    %v597 = vunpack.c.h.b16 %v118
    %v598 = vunpack.c.l.b16 %v119
    %v599 = vunpack.c.h.b16 %v119
    %v600 = vunpack.c.l.b16 %v120
    %v601 = vunpack.c.h.b16 %v120
    %v602 = vunpack.c.l.b16 %v121
    %v603 = vunpack.c.h.b16 %v121
    %v604 = vunpack.c.l.b16 %v122
    %v605 = vunpack.c.h.b16 %v122
    %v606 = vunpack.c.l.b16 %v123
    %v607 = vunpack.c.h.b16 %v123
    %v608 = vunpack.c.l.b16 %v124
    %v609 = vunpack.c.h.b16 %v124
    %v610 = vunpack.c.l.b16 %v125
    %v611 = vunpack.c.h.b16 %v125
    %v612 = vunpack.c.l.b16 %v126
    %v613 = vunpack.c.h.b16 %v126
    %v614 = vunpack.c.l.b16 %v127
    %v615 = vunpack.c.h.b16 %v127
    %v616 = vunpack.c.l.b16 %v128
    %v617 = vunpack.c.h.b16 %v128
    %v618 = vunpack.c.l.b16 %v129
    %v619 = vunpack.c.h.b16 %v129
    %v620 = vunpack.c.l.b16 %v130
    %v621 = vunpack.c.h.b16 %v130
    %v622 = vunpack.c.l.b16 %v131
    %v623 = vunpack.c.h.b16 %v131
    %v624 = vunpack.c.l.b16 %v132
    %v625 = vunpack.c.h.b16 %v132
    %v626 = vunpack.c.l.b16 %v133
    %v627 = vunpack.c.h.b16 %v133
    %v628 = vunpack.c.l.b16 %v134
    %v629 = vunpack.c.h.b16 %v134
    %v630 = vunpack.c.l.b16 %v135
    %v631 = vunpack.c.h.b16 %v135
    %v632 = vunpack.c.l.b16 %v136
    %v633 = vunpack.c.h.b16 %v136
    %v634 = vunpack.c.l.b16 %v137
    %v635 = vunpack.c.h.b16 %v137
    %v636 = vunpack.c.l.b16 %v138
    %v637 = vunpack.c.h.b16 %v138
    %v638 = vunpack.c.l.b16 %v139
    %v639 = vunpack.c.h.b16 %v139
    %v640 = vunpack.c.l.b16 %v140
    %v641 = vunpack.c.h.b16 %v140
    %v642 = vunpack.c.l.b16 %v141
    %v643 = vunpack.c.h.b16 %v141
    %v644 = vunpack.c.l.b16 %v142
    %v645 = vunpack.c.h.b16 %v142
    %v646 = vunpack.c.l.b16 %v143
    %v647 = vunpack.c.h.b16 %v143
    %v648 = vunpack.c.l.b16 %v144
    %v649 = vunpack.c.h.b16 %v144
    %v650 = vunpack.c.l.b16 %v145
    %v651 = vunpack.c.h.b16 %v145
    %v652 = vunpack.c.l.b16 %v146
    %v653 = vunpack.c.h.b16 %v146
    %v654 = vunpack.c.l.b16 %v147
    %v655 = vunpack.c.h.b16 %v147
    %v656 = vunpack.c.l.b16 %v148
    %v657 = vunpack.c.h.b16 %v148
    %v658 = vunpack.c.l.b16 %v149
    %v659 = vunpack.c.h.b16 %v149
    %v660 = vunpack.c.l.b16 %v150
    %v661 = vunpack.c.h.b16 %v150
    %v662 = vunpack.c.l.b16 %v151
    %v663 = vunpack.c.h.b16 %v151
    %v664 = vunpack.c.l.b16 %v152
    %v665 = vunpack.c.h.b16 %v152
    %v666 = vunpack.c.l.b16 %v153
    %v667 = vunpack.c.h.b16 %v153
    %v668 = vunpack.c.l.b16 %v154
    %v669 = vunpack.c.h.b16 %v154
    %v670 = vunpack.c.l.b16 %v155
    %v671 = vunpack.c.h.b16 %v155
    %v672 = vunpack.c.l.b16 %v156
    %v673 = vunpack.c.h.b16 %v156
    %v674 = vunpack.c.l.b16 %v157
    %v675 = vunpack.c.h.b16 %v157
    %v676 = vunpack.c.l.b16 %v158
    %v677 = vunpack.c.h.b16 %v158
    %v678 = vunpack.c.l.b16 %v159
    %v679 = vunpack.c.h.b16 %v159
    %v680 = vunpack.c.l.b16 %v160
    %v681 = vunpack.c.h.b16 %v160
    %v682 = vunpack.c.l.b16 %v161
    %v683 = vunpack.c.h.b16 %v161
    %v684 = vunpack.c.l.b16 %v162
    %v685 = vunpack.c.h.b16 %v162
    %v686 = vunpack.c.l.b16 %v163
    %v687 = vunpack.c.h.b16 %v163
    %v688 = vunpack.c.l.b16 %v164
    %v689 = vunpack.c.h.b16 %v164
    %v690 = vunpack.c.l.b16 %v165
    %v691 = vunpack.c.h.b16 %v165
    %v692 = vunpack.c.l.b16 %v166
    %v693 = vunpack.c.h.b16 %v166
    %v694 = vunpack.c.l.b16 %v167
    %v695 = vunpack.c.h.b16 %v167
    %v696 = vunpack.c.l.b16 %v168
    %v697 = vunpack.c.h.b16 %v168
    %v698 = vunpack.c.l.b16 %v169
    %v699 = vunpack.c.h.b16 %v169
    %v700 = vunpack.c.l.b16 %v170
    %v701 = vunpack.c.h.b16 %v170
    %v702 = vunpack.c.l.b16 %v171
    %v703 = vunpack.c.h.b16 %v171
    %v704 = vunpack.c.l.b16 %v172
    %v705 = vunpack.c.h.b16 %v172
    %v706 = vunpack.c.l.b16 %v173
    %v707 = vunpack.c.h.b16 %v173
    %v708 = vunpack.c.l.b16 %v174
    %v709 = vunpack.c.h.b16 %v174
    %v710 = vunpack.c.l.b16 %v175
    %v711 = vunpack.c.h.b16 %v175
    %v712 = vunpack.c.l.b16 %v176
    %v713 = vunpack.c.h.b16 %v176
    %v714 = vunpack.c.l.b16 %v177
    %v715 = vunpack.c.h.b16 %v177
    %v716 = vunpack.c.l.b16 %v178
    %v717 = vunpack.c.h.b16 %v178
    %v718 = vunpack.c.l.b16 %v179
    %v719 = vunpack.c.h.b16 %v179
    %v720 = vunpack.c.l.b16 %v180
    %v721 = vunpack.c.h.b16 %v180
    %v722 = vunpack.c.l.b16 %v181
    %v723 = vunpack.c.h.b16 %v181
    %v724 = vunpack.c.l.b16 %v182
    %v725 = vunpack.c.h.b16 %v182
    %v726 = vunpack.c.l.b16 %v183
    %v727 = vunpack.c.h.b16 %v183
    %v728 = vunpack.c.l.b16 %v184
    %v729 = vunpack.c.h.b16 %v184
    %v730 = vunpack.c.l.b16 %v185
    %v731 = vunpack.c.h.b16 %v185
    %v732 = vunpack.c.l.b16 %v186
    %v733 = vunpack.c.h.b16 %v186
    %v734 = vunpack.c.l.b16 %v187
    %v735 = vunpack.c.h.b16 %v187
    %v736 = vunpack.c.l.b16 %v188
    %v737 = vunpack.c.h.b16 %v188
    %v738 = vunpack.c.l.b16 %v189
    %v739 = vunpack.c.h.b16 %v189
    %v740 = vunpack.c.l.b16 %v190
    %v741 = vunpack.c.h.b16 %v190
    %v742 = vunpack.c.l.b16 %v191
    %v743 = vunpack.c.h.b16 %v191
    %v744 = vunpack.c.l.b16 %v192
    %v745 = vunpack.c.h.b16 %v192
    %v746 = vunpack.c.l.b16 %v193
    %v747 = vunpack.c.h.b16 %v193
    %v748 = vunpack.c.l.b16 %v194
    %v749 = vunpack.c.h.b16 %v194
    %v750 = vunpack.c.l.b16 %v195
    %v751 = vunpack.c.h.b16 %v195
    %v752 = vunpack.c.l.b16 %v196
    %v753 = vunpack.c.h.b16 %v196
    %v754 = vunpack.c.l.b16 %v197
    %v755 = vunpack.c.h.b16 %v197
    %v756 = vunpack.c.l.b16 %v198
    %v757 = vunpack.c.h.b16 %v198
    %v758 = vunpack.c.l.b16 %v199
    %v759 = vunpack.c.h.b16 %v199
    %v760 = vunpack.c.l.b16 %v200
    %v761 = vunpack.c.h.b16 %v200
    %v762 = vunpack.c.l.b16 %v201
    %v763 = vunpack.c.h.b16 %v201
    %v764 = vunpack.c.l.b16 %v202
    %v765 = vunpack.c.h.b16 %v202
    %v766 = vunpack.c.l.b16 %v203
    %v767 = vunpack.c.h.b16 %v203
    %v768 = vunpack.c.l.b16 %v204
    %v769 = vunpack.c.h.b16 %v204
    %v770 = vunpack.c.l.b16 %v205
    %v771 = vunpack.c.h.b16 %v205
    %v772 = vunpack.c.l.b16 %v206
    %v773 = vunpack.c.h.b16 %v206
    %v774 = vunpack.c.l.b16 %v207
    %v775 = vunpack.c.h.b16 %v207
    %v776 = vunpack.c.l.b16 %v208
    %v777 = vunpack.c.h.b16 %v208
    %v778 = vunpack.c.l.b16 %v209
    %v779 = vunpack.c.h.b16 %v209
    %v780 = vunpack.c.l.b16 %v210
    %v781 = vunpack.c.h.b16 %v210
    %v782 = vunpack.c.l.b16 %v211
    %v783 = vunpack.c.h.b16 %v211
    %v784 = vunpack.c.l.b16 %v212
    %v785 = vunpack.c.h.b16 %v212
    %v786 = vunpack.c.l.b16 %v213
    %v787 = vunpack.c.h.b16 %v213
    %v788 = vunpack.c.l.b16 %v214
    %v789 = vunpack.c.h.b16 %v214
    %v790 = vunpack.c.l.b16 %v215
    %v791 = vunpack.c.h.b16 %v215
    %v792 = vunpack.c.l.b16 %v216
    %v793 = vunpack.c.h.b16 %v216
    %v794 = vunpack.c.l.b16 %v217
    %v795 = vunpack.c.h.b16 %v217
    %v796 = vunpack.c.l.b16 %v218
    %v797 = vunpack.c.h.b16 %v218
    %v798 = vunpack.c.l.b16 %v219
    %v799 = vunpack.c.h.b16 %v219
    %v800 = vunpack.c.l.b16 %v220
    %v801 = vunpack.c.h.b16 %v220
    %v802 = vunpack.c.l.b16 %v221
    %v803 = vunpack.c.h.b16 %v221
    %v804 = vunpack.c.l.b16 %v222
    %v805 = vunpack.c.h.b16 %v222
    %v806 = vunpack.c.l.b16 %v223
    %v807 = vunpack.c.h.b16 %v223
    %v808 = vunpack.c.l.b16 %v224
    %v809 = vunpack.c.h.b16 %v224
    %v810 = vunpack.c.l.b16 %v225
    %v811 = vunpack.c.h.b16 %v225
    %v812 = vunpack.c.l.b16 %v226
    %v813 = vunpack.c.h.b16 %v226
    %v814 = vunpack.c.l.b16 %v227
    %v815 = vunpack.c.h.b16 %v227
    %v816 = vunpack.c.l.b16 %v228
    %v817 = vunpack.c.h.b16 %v228
    %v818 = vunpack.c.l.b16 %v229
    %v819 = vunpack.c.h.b16 %v229
    %v820 = vunpack.c.l.b16 %v230
    %v821 = vunpack.c.h.b16 %v230
    %v822 = vunpack.c.l.b16 %v231
    %v823 = vunpack.c.h.b16 %v231
    %v824 = vunpack.c.l.b16 %v232
    %v825 = vunpack.c.h.b16 %v232
    %v826 = vunpack.c.l.b16 %v233
    %v827 = vunpack.c.h.b16 %v233
    %v828 = vunpack.c.l.b16 %v234
    %v829 = vunpack.c.h.b16 %v234
    %v830 = vunpack.c.l.b16 %v235
    %v831 = vunpack.c.h.b16 %v235
    %v832 = vunpack.c.l.b16 %v236
    %v833 = vunpack.c.h.b16 %v236
    %v834 = vunpack.c.l.b16 %v237
    %v835 = vunpack.c.h.b16 %v237
    %v836 = vunpack.c.l.b16 %v238
    %v837 = vunpack.c.h.b16 %v238
    %v838 = vunpack.c.l.b16 %v239
    %v839 = vunpack.c.h.b16 %v239
    %v840 = vunpack.c.l.b16 %v240
    %v841 = vunpack.c.h.b16 %v240
    %v842 = vunpack.c.l.b16 %v241
    %v843 = vunpack.c.h.b16 %v241
    %v844 = vunpack.c.l.b16 %v242
    %v845 = vunpack.c.h.b16 %v242
    %v846 = vunpack.c.l.b16 %v243
    %v847 = vunpack.c.h.b16 %v243
    %v848 = vunpack.c.l.b16 %v244
    %v849 = vunpack.c.h.b16 %v244
    %v850 = vunpack.c.l.b16 %v245
    %v851 = vunpack.c.h.b16 %v245
    %v852 = vunpack.c.l.b16 %v246
    %v853 = vunpack.c.h.b16 %v246
    %v854 = vunpack.c.l.b16 %v247
    %v855 = vunpack.c.h.b16 %v247
    %v856 = vunpack.c.l.b16 %v248
    %v857 = vunpack.c.h.b16 %v248
    %v858 = vunpack.c.l.b16 %v249
    %v859 = vunpack.c.h.b16 %v249
    %v860 = vpack.c.b16 %v472, %v468
    %v861 = vpack.c.b16 %v473, %v469
    %v862 = vpack.c.b16 %v474, %v470
    %v863 = vpack.c.b16 %v475, %v471
    %v864 = vpack.c.b16 %v480, %v476
    %v865 = vpack.c.b16 %v481, %v477
    %v866 = vpack.c.b16 %v482, %v478
    %v867 = vpack.c.b16 %v483, %v479
    %v868 = vpack.c.b16 %v488, %v484
    %v869 = vpack.c.b16 %v489, %v485
    %v870 = vpack.c.b16 %v490, %v486
    %v871 = vpack.c.b16 %v491, %v487
    %v872 = vpack.c.b16 %v496, %v492
    %v873 = vpack.c.b16 %v497, %v493
    %v874 = vpack.c.b16 %v498, %v494
    %v875 = vpack.c.b16 %v499, %v495
    %v876 = vpack.c.b16 %v504, %v500
    %v877 = vpack.c.b16 %v505, %v501
    %v878 = vpack.c.b16 %v506, %v502
    %v879 = vpack.c.b16 %v507, %v503
    %v880 = vpack.c.b16 %v512, %v508
    %v881 = vpack.c.b16 %v513, %v509
    %v882 = vpack.c.b16 %v514, %v510
    %v883 = vpack.c.b16 %v515, %v511
    %v884 = vpack.c.b16 %v520, %v516
    %v885 = vpack.c.b16 %v521, %v517
    %v886 = vpack.c.b16 %v522, %v518
    %v887 = vpack.c.b16 %v523, %v519
    %v888 = vpack.c.b16 %v528, %v524
    %v889 = vpack.c.b16 %v529, %v525
    %v890 = vpack.c.b16 %v530, %v526
    %v891 = vpack.c.b16 %v531, %v527
    %v892 = vpack.c.b16 %v536, %v532
    %v893 = vpack.c.b16 %v537, %v533
    %v894 = vpack.c.b16 %v538, %v534
    %v895 = vpack.c.b16 %v539, %v535
    %v896 = vpack.c.b16 %v544, %v540
    %v897 = vpack.c.b16 %v545, %v541
    %v898 = vpack.c.b16 %v546, %v542
    %v899 = vpack.c.b16 %v547, %v543
    %v900 = vpack.c.b16 %v552, %v548
    %v901 = vpack.c.b16 %v553, %v549
    %v902 = vpack.c.b16 %v554, %v550
    %v903 = vpack.c.b16 %v555, %v551
    %v904 = vpack.c.b16 %v560, %v556
    %v905 = vpack.c.b16 %v561, %v557
    %v906 = vpack.c.b16 %v562, %v558
    %v907 = vpack.c.b16 %v563, %v559
    %v908 = vpack.c.b16 %v568, %v564
    %v909 = vpack.c.b16 %v569, %v565
    %v910 = vpack.c.b16 %v570, %v566
    %v911 = vpack.c.b16 %v571, %v567
    %v912 = vpack.c.b16 %v576, %v572
    %v913 = vpack.c.b16 %v577, %v573
    %v914 = vpack.c.b16 %v578, %v574
    %v915 = vpack.c.b16 %v579, %v575
    %v916 = vpack.c.b16 %v584, %v580
    %v917 = vpack.c.b16 %v585, %v581
    %v918 = vpack.c.b16 %v586, %v582
    %v919 = vpack.c.b16 %v587, %v583
    %v920 = vpack.c.b16 %v592, %v588
    %v921 = vpack.c.b16 %v593, %v589
    %v922 = vpack.c.b16 %v594, %v590
    %v923 = vpack.c.b16 %v595, %v591
    %v924 = vpack.c.b16 %v600, %v596
    %v925 = vpack.c.b16 %v601, %v597
    %v926 = vpack.c.b16 %v602, %v598
    %v927 = vpack.c.b16 %v603, %v599
    %v928 = vpack.c.b16 %v608, %v604
    %v929 = vpack.c.b16 %v609, %v605
    %v930 = vpack.c.b16 %v610, %v606
    %v931 = vpack.c.b16 %v611, %v607
    %v932 = vpack.c.b16 %v616, %v612
    %v933 = vpack.c.b16 %v617, %v613
    %v934 = vpack.c.b16 %v618, %v614
    %v935 = vpack.c.b16 %v619, %v615
    %v936 = vpack.c.b16 %v624, %v620
    %v937 = vpack.c.b16 %v625, %v621
    %v938 = vpack.c.b16 %v626, %v622
    %v939 = vpack.c.b16 %v627, %v623
    %v940 = vpack.c.b16 %v632, %v628
    %v941 = vpack.c.b16 %v633, %v629
    %v942 = vpack.c.b16 %v634, %v630
    %v943 = vpack.c.b16 %v635, %v631
    %v944 = vpack.c.b16 %v640, %v636
    %v945 = vpack.c.b16 %v641, %v637
    %v946 = vpack.c.b16 %v642, %v638
    %v947 = vpack.c.b16 %v643, %v639
    %v948 = vpack.c.b16 %v648, %v644
    %v949 = vpack.c.b16 %v649, %v645
    %v950 = vpack.c.b16 %v650, %v646
    %v951 = vpack.c.b16 %v651, %v647
    %v952 = vpack.c.b16 %v656, %v652
    %v953 = vpack.c.b16 %v657, %v653
    %v954 = vpack.c.b16 %v658, %v654
    %v955 = vpack.c.b16 %v659, %v655
    %v956 = vpack.c.b16 %v664, %v660
    %v957 = vpack.c.b16 %v665, %v661
    %v958 = vpack.c.b16 %v666, %v662
    %v959 = vpack.c.b16 %v667, %v663
    %v960 = vpack.c.b16 %v672, %v668
    %v961 = vpack.c.b16 %v673, %v669
    %v962 = vpack.c.b16 %v674, %v670
    %v963 = vpack.c.b16 %v675, %v671
    %v964 = vpack.c.b16 %v680, %v676
    %v965 = vpack.c.b16 %v681, %v677
    %v966 = vpack.c.b16 %v682, %v678
    %v967 = vpack.c.b16 %v683, %v679
    %v968 = vpack.c.b16 %v688, %v684
    %v969 = vpack.c.b16 %v689, %v685
    %v970 = vpack.c.b16 %v690, %v686
    %v971 = vpack.c.b16 %v691, %v687
    %v972 = vpack.c.b16 %v696, %v692
    %v973 = vpack.c.b16 %v697, %v693
    %v974 = vpack.c.b16 %v698, %v694
    %v975 = vpack.c.b16 %v699, %v695
    %v976 = vpack.c.b16 %v704, %v700
    %v977 = vpack.c.b16 %v705, %v701
    %v978 = vpack.c.b16 %v706, %v702
    %v979 = vpack.c.b16 %v707, %v703
    %v980 = vpack.c.b16 %v712, %v708
    %v981 = vpack.c.b16 %v713, %v709
    %v982 = vpack.c.b16 %v714, %v710
    %v983 = vpack.c.b16 %v715, %v711
    %v984 = vpack.c.b16 %v720, %v716
    %v985 = vpack.c.b16 %v721, %v717
    %v986 = vpack.c.b16 %v722, %v718
    %v987 = vpack.c.b16 %v723, %v719
    %v988 = vpack.c.b16 %v728, %v724
    %v989 = vpack.c.b16 %v729, %v725
    %v990 = vpack.c.b16 %v730, %v726
    %v991 = vpack.c.b16 %v731, %v727
    %v992 = vpack.c.b16 %v736, %v732
    %v993 = vpack.c.b16 %v737, %v733
    %v994 = vpack.c.b16 %v738, %v734
    %v995 = vpack.c.b16 %v739, %v735
    %v996 = vpack.c.b16 %v744, %v740
    %v997 = vpack.c.b16 %v745, %v741
    %v998 = vpack.c.b16 %v746, %v742
    %v999 = vpack.c.b16 %v747, %v743
    %v1000 = vpack.c.b16 %v752, %v748
    %v1001 = vpack.c.b16 %v753, %v749
    %v1002 = vpack.c.b16 %v754, %v750
    %v1003 = vpack.c.b16 %v755, %v751
    %v1004 = vpack.c.b16 %v760, %v756
    %v1005 = vpack.c.b16 %v761, %v757
    %v1006 = vpack.c.b16 %v762, %v758
    %v1007 = vpack.c.b16 %v763, %v759
    %v1008 = vpack.c.b16 %v768, %v764
    %v1009 = vpack.c.b16 %v769, %v765
    %v1010 = vpack.c.b16 %v770, %v766
    %v1011 = vpack.c.b16 %v771, %v767
    %v1012 = vpack.c.b16 %v776, %v772
    %v1013 = vpack.c.b16 %v777, %v773
    %v1014 = vpack.c.b16 %v778, %v774
    %v1015 = vpack.c.b16 %v779, %v775
    %v1016 = vpack.c.b16 %v784, %v780
    %v1017 = vpack.c.b16 %v785, %v781
    %v1018 = vpack.c.b16 %v786, %v782
    %v1019 = vpack.c.b16 %v787, %v783
    %v1020 = vpack.c.b16 %v792, %v788
    %v1021 = vpack.c.b16 %v793, %v789
    %v1022 = vpack.c.b16 %v794, %v790
    %v1023 = vpack.c.b16 %v795, %v791
    %v1024 = vpack.c.b16 %v800, %v796
    %v1025 = vpack.c.b16 %v801, %v797
    %v1026 = vpack.c.b16 %v802, %v798
    %v1027 = vpack.c.b16 %v803, %v799
    %v1028 = vpack.c.b16 %v808, %v804
    %v1029 = vpack.c.b16 %v809, %v805
    %v1030 = vpack.c.b16 %v810, %v806
    %v1031 = vpack.c.b16 %v811, %v807
    %v1032 = vpack.c.b16 %v816, %v812
    %v1033 = vpack.c.b16 %v817, %v813
    %v1034 = vpack.c.b16 %v818, %v814
    %v1035 = vpack.c.b16 %v819, %v815
    %v1036 = vpack.c.b16 %v824, %v820
    %v1037 = vpack.c.b16 %v825, %v821
    %v1038 = vpack.c.b16 %v826, %v822
    %v1039 = vpack.c.b16 %v827, %v823
    %v1040 = vpack.c.b16 %v832, %v828
    %v1041 = vpack.c.b16 %v833, %v829
    %v1042 = vpack.c.b16 %v834, %v830
    %v1043 = vpack.c.b16 %v835, %v831
    %v1044 = vpack.c.b16 %v840, %v836
    %v1045 = vpack.c.b16 %v841, %v837
    %v1046 = vpack.c.b16 %v842, %v838
    %v1047 = vpack.c.b16 %v843, %v839
    %v1048 = vpack.c.b16 %v848, %v844
    %v1049 = vpack.c.b16 %v849, %v845
    %v1050 = vpack.c.b16 %v850, %v846
    %v1051 = vpack.c.b16 %v851, %v847
    %v1052 = vpack.c.b16 %v856, %v852
    %v1053 = vpack.c.b16 %v857, %v853
    %v1054 = vpack.c.b16 %v858, %v854
    %v1055 = vpack.c.b16 %v859, %v855
    %vm1252 = vcmask 130048
    %v1254 = vsel %vm1252, %v53, 0
    %1256 = vmatprep.subr.bf16.mxu0 %v861
    %1257 = vmatpush1.bf16.msra.mxu0 %v860
    %1258 = vmatprep.subr.bf16.mxu0 %v865
    %1259 = vmatpush1.bf16.msra.mxu0 %v864
    %1260 = vmatprep.subr.bf16.mxu0 %v869
    %1261 = vmatpush1.bf16.msra.mxu0 %v868
    %1262 = vmatprep.subr.bf16.mxu0 %v873
    %1263 = vmatpush1.bf16.msra.mxu0 %v872
    %1264 = vmatprep.subr.bf16.mxu0 %v877
    %1265 = vmatpush1.bf16.msra.mxu0 %v876
    %1266 = vmatprep.subr.bf16.mxu0 %v881
    %1267 = vmatpush1.bf16.msra.mxu0 %v880
    %1268 = vmatprep.subr.bf16.mxu0 %v885
    %1269 = vmatpush1.bf16.msra.mxu0 %v884
    %1270 = vmatprep.subr.bf16.mxu0 %v889
    %1271 = vmatpush1.bf16.msra.mxu0 %v888
    %1272 = vmatprep.subr.bf16.mxu0 %v893
    %1273 = vmatpush1.bf16.msra.mxu0 %v892
    %1274 = vmatprep.subr.bf16.mxu0 %v897
    %1275 = vmatpush1.bf16.msra.mxu0 %v896
    %1276 = vmatprep.subr.bf16.mxu0 %v901
    %1277 = vmatpush1.bf16.msra.mxu0 %v900
    %1278 = vmatprep.subr.bf16.mxu0 %v905
    %1279 = vmatpush1.bf16.msra.mxu0 %v904
    %1280 = vmatprep.subr.bf16.mxu0 %v909
    %1281 = vmatpush1.bf16.msra.mxu0 %v908
    %1282 = vmatprep.subr.bf16.mxu0 %v913
    %1283 = vmatpush1.bf16.msra.mxu0 %v912
    %1284 = vmatprep.subr.bf16.mxu0 %v917
    %1285 = vmatpush1.bf16.msra.mxu0 %v916
    %1286 = vmatprep.subr.bf16.mxu0 %v921
    %1287 = vmatpush1.bf16.msra.mxu0 %v920
    %1288 = vmatprep.mubr.bf16.mxu0 %v48
    %1289 = vmatmul.mubr.bf16.gmra.mrb[0].mxu0 %v47
    %v1290 = vpop.f32.mrb[0].mxu0
    %v1291 = vadd.f32 %v255, %v1290
    %v1292 = vpop.f32.mrb[0].mxu0
    %v1293 = vadd.f32 %v259, %v1292
    %v1294 = vpop.f32.mrb[0].mxu0
    %v1295 = vpop.f32.mrb[0].mxu0
    %1296 = vdwg.mxu0
    %1297 = vmatprep.subr.bf16.mxu0 %v925
    %1298 = vmatpush1.bf16.msra.mxu0 %v924
    %1299 = vmatprep.subr.bf16.mxu0 %v929
    %1300 = vmatpush1.bf16.msra.mxu0 %v928
    %1301 = vmatprep.subr.bf16.mxu0 %v933
    %1302 = vmatpush1.bf16.msra.mxu0 %v932
    %1303 = vmatprep.subr.bf16.mxu0 %v937
    %1304 = vmatpush1.bf16.msra.mxu0 %v936
    %1305 = vmatprep.subr.bf16.mxu0 %v941
    %1306 = vmatpush1.bf16.msra.mxu0 %v940
    %1307 = vmatprep.subr.bf16.mxu0 %v945
    %1308 = vmatpush1.bf16.msra.mxu0 %v944
    %1309 = vmatprep.subr.bf16.mxu0 %v949
    %1310 = vmatpush1.bf16.msra.mxu0 %v948
    %1311 = vmatprep.subr.bf16.mxu0 %v953
    %1312 = vmatpush1.bf16.msra.mxu0 %v952
    %1313 = vmatprep.subr.bf16.mxu0 %v957
    %1314 = vmatpush1.bf16.msra.mxu0 %v956
    %1315 = vmatprep.subr.bf16.mxu0 %v961
    %1316 = vmatpush1.bf16.msra.mxu0 %v960
    %1317 = vmatprep.subr.bf16.mxu0 %v965
    %1318 = vmatpush1.bf16.msra.mxu0 %v964
    %1319 = vmatprep.subr.bf16.mxu0 %v969
    %1320 = vmatpush1.bf16.msra.mxu0 %v968
    %1321 = vmatprep.subr.bf16.mxu0 %v973
    %1322 = vmatpush1.bf16.msra.mxu0 %v972
    %1323 = vmatprep.subr.bf16.mxu0 %v977
    %1324 = vmatpush1.bf16.msra.mxu0 %v976
    %1325 = vmatprep.subr.bf16.mxu0 %v981
    %1326 = vmatpush1.bf16.msra.mxu0 %v980
    %1327 = vmatprep.subr.bf16.mxu0 %v985
    %1328 = vmatpush1.bf16.msra.mxu0 %v984
    %1329 = vmatprep.mubr.bf16.mxu0 %v50
    %1330 = vmatmul.mubr.bf16.gmra.mrb[0].mxu0 %v49
    %v1331 = vpop.f32.mrb[0].mxu0
    %v1332 = vadd.f32 %v1291, %v1331
    %v1333 = vpop.f32.mrb[0].mxu0
    %v1334 = vadd.f32 %v1293, %v1333
    %v1335 = vpop.f32.mrb[0].mxu0
    %v1336 = vpop.f32.mrb[0].mxu0
    %1337 = vdwg.mxu0
    %1338 = vmatprep.subr.bf16.mxu0 %v989
    %1339 = vmatpush1.bf16.msra.mxu0 %v988
    %1340 = vmatprep.subr.bf16.mxu0 %v993
    %1341 = vmatpush1.bf16.msra.mxu0 %v992
    %1342 = vmatprep.subr.bf16.mxu0 %v997
    %1343 = vmatpush1.bf16.msra.mxu0 %v996
    %1344 = vmatprep.subr.bf16.mxu0 %v1001
    %1345 = vmatpush1.bf16.msra.mxu0 %v1000
    %1346 = vmatprep.subr.bf16.mxu0 %v1005
    %1347 = vmatpush1.bf16.msra.mxu0 %v1004
    %1348 = vmatprep.subr.bf16.mxu0 %v1009
    %1349 = vmatpush1.bf16.msra.mxu0 %v1008
    %1350 = vmatprep.subr.bf16.mxu0 %v1013
    %1351 = vmatpush1.bf16.msra.mxu0 %v1012
    %1352 = vmatprep.subr.bf16.mxu0 %v1017
    %1353 = vmatpush1.bf16.msra.mxu0 %v1016
    %1354 = vmatprep.subr.bf16.mxu0 %v1021
    %1355 = vmatpush1.bf16.msra.mxu0 %v1020
    %1356 = vmatprep.subr.bf16.mxu0 %v1025
    %1357 = vmatpush1.bf16.msra.mxu0 %v1024
    %1358 = vmatprep.subr.bf16.mxu0 %v1029
    %1359 = vmatpush1.bf16.msra.mxu0 %v1028
    %1360 = vmatprep.subr.bf16.mxu0 %v1033
    %1361 = vmatpush1.bf16.msra.mxu0 %v1032
    %1362 = vmatprep.subr.bf16.mxu0 %v1037
    %1363 = vmatpush1.bf16.msra.mxu0 %v1036
    %1364 = vmatprep.subr.bf16.mxu0 %v1041
    %1365 = vmatpush1.bf16.msra.mxu0 %v1040
    %1366 = vmatprep.subr.bf16.mxu0 %v1045
    %1367 = vmatpush1.bf16.msra.mxu0 %v1044
    %1368 = vmatprep.subr.bf16.mxu0 %v1049
    %1369 = vmatpush1.bf16.msra.mxu0 %v1048
    %1370 = vmatprep.mubr.bf16.mxu0 %v52
    %1371 = vmatmul.mubr.bf16.gmra.mrb[0].mxu0 %v51
    %v1372 = vpop.f32.mrb[0].mxu0
    %v1373 = vadd.f32 %v1332, %v1372
    %v1374 = vpop.f32.mrb[0].mxu0
    %v1375 = vadd.f32 %v1334, %v1374
    %v1376 = vpop.f32.mrb[0].mxu0
    %v1377 = vpop.f32.mrb[0].mxu0
    %1378 = vdwg.mxu0
    %1379 = vmatprep.subr.bf16.mxu0 %v1053
    %1380 = vmatpush1.bf16.msra.mxu0 %v1052
    %1381 = vmatprep.subr.bf16.mxu0 0
    %1382 = vmatpush1.bf16.msra.mxu0 0
    %1383 = vmatprep.subr.bf16.mxu0 0
    %1384 = vmatpush1.bf16.msra.mxu0 0
    %1385 = vmatprep.subr.bf16.mxu0 0
    %1386 = vmatpush1.bf16.msra.mxu0 0
    %1387 = vmatprep.subr.bf16.mxu0 0
    %1388 = vmatpush1.bf16.msra.mxu0 0
    %1389 = vmatprep.subr.bf16.mxu0 0
    %1390 = vmatpush1.bf16.msra.mxu0 0
    %1391 = vmatprep.subr.bf16.mxu0 0
    %1392 = vmatpush1.bf16.msra.mxu0 0
    %1393 = vmatprep.subr.bf16.mxu0 0
    %1394 = vmatpush1.bf16.msra.mxu0 0
    %1395 = vmatprep.subr.bf16.mxu0 0
    %1396 = vmatpush1.bf16.msra.mxu0 0
    %1397 = vmatprep.subr.bf16.mxu0 0
    %1398 = vmatpush1.bf16.msra.mxu0 0
    %1399 = vmatprep.subr.bf16.mxu0 0
    %1400 = vmatpush1.bf16.msra.mxu0 0
    %1401 = vmatprep.subr.bf16.mxu0 0
    %1402 = vmatpush1.bf16.msra.mxu0 0
    %1403 = vmatprep.subr.bf16.mxu0 0
    %1404 = vmatpush1.bf16.msra.mxu0 0
    %1405 = vmatprep.subr.bf16.mxu0 0
    %1406 = vmatpush1.bf16.msra.mxu0 0
    %1407 = vmatprep.subr.bf16.mxu0 0
    %1408 = vmatpush1.bf16.msra.mxu0 0
    %1409 = vmatprep.subr.bf16.mxu0 0
    %1410 = vmatpush1.bf16.msra.mxu0 0
    %1411 = vmatprep.mubr.bf16.mxu0 0
    %1412 = vmatmul.mubr.bf16.gmra.mrb[0].mxu0 %v1254
    %v1413 = vpop.f32.mrb[0].mxu0
    %v1414 = vadd.f32 %v1373, %v1413
    %v1415 = vpop.f32.mrb[0].mxu0
    %v1416 = vadd.f32 %v1375, %v1415
    %v1417 = vpop.f32.mrb[0].mxu0
    %v1418 = vpop.f32.mrb[0].mxu0
    %1419 = vdwg.mxu0
    %1420 = vmatprep.subr.bf16.mxu0 %v863
    %1421 = vmatpush1.bf16.msra.mxu0 %v862
    %1422 = vmatprep.subr.bf16.mxu0 %v867
    %1423 = vmatpush1.bf16.msra.mxu0 %v866
    %1424 = vmatprep.subr.bf16.mxu0 %v871
    %1425 = vmatpush1.bf16.msra.mxu0 %v870
    %1426 = vmatprep.subr.bf16.mxu0 %v875
    %1427 = vmatpush1.bf16.msra.mxu0 %v874
    %1428 = vmatprep.subr.bf16.mxu0 %v879
    %1429 = vmatpush1.bf16.msra.mxu0 %v878
    %1430 = vmatprep.subr.bf16.mxu0 %v883
    %1431 = vmatpush1.bf16.msra.mxu0 %v882
    %1432 = vmatprep.subr.bf16.mxu0 %v887
    %1433 = vmatpush1.bf16.msra.mxu0 %v886
    %1434 = vmatprep.subr.bf16.mxu0 %v891
    %1435 = vmatpush1.bf16.msra.mxu0 %v890
    %1436 = vmatprep.subr.bf16.mxu0 %v895
    %1437 = vmatpush1.bf16.msra.mxu0 %v894
    %1438 = vmatprep.subr.bf16.mxu0 %v899
    %1439 = vmatpush1.bf16.msra.mxu0 %v898
    %1440 = vmatprep.subr.bf16.mxu0 %v903
    %1441 = vmatpush1.bf16.msra.mxu0 %v902
    %1442 = vmatprep.subr.bf16.mxu0 %v907
    %1443 = vmatpush1.bf16.msra.mxu0 %v906
    %1444 = vmatprep.subr.bf16.mxu0 %v911
    %1445 = vmatpush1.bf16.msra.mxu0 %v910
    %1446 = vmatprep.subr.bf16.mxu0 %v915
    %1447 = vmatpush1.bf16.msra.mxu0 %v914
    %1448 = vmatprep.subr.bf16.mxu0 %v919
    %1449 = vmatpush1.bf16.msra.mxu0 %v918
    %1450 = vmatprep.subr.bf16.mxu0 %v923
    %1451 = vmatpush1.bf16.msra.mxu0 %v922
    %1452 = vmatprep.mubr.bf16.mxu0 %v48
    %1453 = vmatmul.mubr.bf16.gmra.mrb[0].mxu0 %v47
    %v1454 = vpop.f32.mrb[0].mxu0
    %v1455 = vadd.f32 %v263, %v1454
    %v1456 = vpop.f32.mrb[0].mxu0
    %v1457 = vadd.f32 %v267, %v1456
    %v1458 = vpop.f32.mrb[0].mxu0
    %v1459 = vpop.f32.mrb[0].mxu0
    %1460 = vdwg.mxu0
    %1461 = vmatprep.subr.bf16.mxu0 %v927
    %1462 = vmatpush1.bf16.msra.mxu0 %v926
    %1463 = vmatprep.subr.bf16.mxu0 %v931
    %1464 = vmatpush1.bf16.msra.mxu0 %v930
    %1465 = vmatprep.subr.bf16.mxu0 %v935
    %1466 = vmatpush1.bf16.msra.mxu0 %v934
    %1467 = vmatprep.subr.bf16.mxu0 %v939
    %1468 = vmatpush1.bf16.msra.mxu0 %v938
    %1469 = vmatprep.subr.bf16.mxu0 %v943
    %1470 = vmatpush1.bf16.msra.mxu0 %v942
    %1471 = vmatprep.subr.bf16.mxu0 %v947
    %1472 = vmatpush1.bf16.msra.mxu0 %v946
    %1473 = vmatprep.subr.bf16.mxu0 %v951
    %1474 = vmatpush1.bf16.msra.mxu0 %v950
    %1475 = vmatprep.subr.bf16.mxu0 %v955
    %1476 = vmatpush1.bf16.msra.mxu0 %v954
    %1477 = vmatprep.subr.bf16.mxu0 %v959
    %1478 = vmatpush1.bf16.msra.mxu0 %v958
    %1479 = vmatprep.subr.bf16.mxu0 %v963
    %1480 = vmatpush1.bf16.msra.mxu0 %v962
    %1481 = vmatprep.subr.bf16.mxu0 %v967
    %1482 = vmatpush1.bf16.msra.mxu0 %v966
    %1483 = vmatprep.subr.bf16.mxu0 %v971
    %1484 = vmatpush1.bf16.msra.mxu0 %v970
    %1485 = vmatprep.subr.bf16.mxu0 %v975
    %1486 = vmatpush1.bf16.msra.mxu0 %v974
    %1487 = vmatprep.subr.bf16.mxu0 %v979
    %1488 = vmatpush1.bf16.msra.mxu0 %v978
    %1489 = vmatprep.subr.bf16.mxu0 %v983
    %1490 = vmatpush1.bf16.msra.mxu0 %v982
    %1491 = vmatprep.subr.bf16.mxu0 %v987
    %1492 = vmatpush1.bf16.msra.mxu0 %v986
    %1493 = vmatprep.mubr.bf16.mxu0 %v50
    %1494 = vmatmul.mubr.bf16.gmra.mrb[0].mxu0 %v49
    %v1495 = vpop.f32.mrb[0].mxu0
    %v1496 = vadd.f32 %v1455, %v1495
    %v1497 = vpop.f32.mrb[0].mxu0
    %v1498 = vadd.f32 %v1457, %v1497
    %v1499 = vpop.f32.mrb[0].mxu0
    %v1500 = vpop.f32.mrb[0].mxu0
    %1501 = vdwg.mxu0
    %1502 = vmatprep.subr.bf16.mxu0 %v991
    %1503 = vmatpush1.bf16.msra.mxu0 %v990
    %1504 = vmatprep.subr.bf16.mxu0 %v995
    %1505 = vmatpush1.bf16.msra.mxu0 %v994
    %1506 = vmatprep.subr.bf16.mxu0 %v999
    %1507 = vmatpush1.bf16.msra.mxu0 %v998
    %1508 = vmatprep.subr.bf16.mxu0 %v1003
    %1509 = vmatpush1.bf16.msra.mxu0 %v1002
    %1510 = vmatprep.subr.bf16.mxu0 %v1007
    %1511 = vmatpush1.bf16.msra.mxu0 %v1006
    %1512 = vmatprep.subr.bf16.mxu0 %v1011
    %1513 = vmatpush1.bf16.msra.mxu0 %v1010
    %1514 = vmatprep.subr.bf16.mxu0 %v1015
    %1515 = vmatpush1.bf16.msra.mxu0 %v1014
    %1516 = vmatprep.subr.bf16.mxu0 %v1019
    %1517 = vmatpush1.bf16.msra.mxu0 %v1018
    %1518 = vmatprep.subr.bf16.mxu0 %v1023
    %1519 = vmatpush1.bf16.msra.mxu0 %v1022
    %1520 = vmatprep.subr.bf16.mxu0 %v1027
    %1521 = vmatpush1.bf16.msra.mxu0 %v1026
    %1522 = vmatprep.subr.bf16.mxu0 %v1031
    %1523 = vmatpush1.bf16.msra.mxu0 %v1030
    %1524 = vmatprep.subr.bf16.mxu0 %v1035
    %1525 = vmatpush1.bf16.msra.mxu0 %v1034
    %1526 = vmatprep.subr.bf16.mxu0 %v1039
    %1527 = vmatpush1.bf16.msra.mxu0 %v1038
    %1528 = vmatprep.subr.bf16.mxu0 %v1043
    %1529 = vmatpush1.bf16.msra.mxu0 %v1042
    %1530 = vmatprep.subr.bf16.mxu0 %v1047
    %1531 = vmatpush1.bf16.msra.mxu0 %v1046
    %1532 = vmatprep.subr.bf16.mxu0 %v1051
    %1533 = vmatpush1.bf16.msra.mxu0 %v1050
    %1534 = vmatprep.mubr.bf16.mxu0 %v52
    %1535 = vmatmul.mubr.bf16.gmra.mrb[0].mxu0 %v51
    %v1536 = vpop.f32.mrb[0].mxu0
    %v1537 = vadd.f32 %v1496, %v1536
    %v1538 = vpop.f32.mrb[0].mxu0
    %v1539 = vadd.f32 %v1498, %v1538
    %v1540 = vpop.f32.mrb[0].mxu0
    %v1541 = vpop.f32.mrb[0].mxu0
    %1542 = vdwg.mxu0
    %1543 = vmatprep.subr.bf16.mxu0 %v1055
    %1544 = vmatpush1.bf16.msra.mxu0 %v1054
    %1545 = vmatprep.subr.bf16.mxu0 0
    %1546 = vmatpush1.bf16.msra.mxu0 0
    %1547 = vmatprep.subr.bf16.mxu0 0
    %1548 = vmatpush1.bf16.msra.mxu0 0
    %1549 = vmatprep.subr.bf16.mxu0 0
    %1550 = vmatpush1.bf16.msra.mxu0 0
    %1551 = vmatprep.subr.bf16.mxu0 0
    %1552 = vmatpush1.bf16.msra.mxu0 0
    %1553 = vmatprep.subr.bf16.mxu0 0
    %1554 = vmatpush1.bf16.msra.mxu0 0
    %1555 = vmatprep.subr.bf16.mxu0 0
    %1556 = vmatpush1.bf16.msra.mxu0 0
    %1557 = vmatprep.subr.bf16.mxu0 0
    %1558 = vmatpush1.bf16.msra.mxu0 0
    %1559 = vmatprep.subr.bf16.mxu0 0
    %1560 = vmatpush1.bf16.msra.mxu0 0
    %1561 = vmatprep.subr.bf16.mxu0 0
    %1562 = vmatpush1.bf16.msra.mxu0 0
    %1563 = vmatprep.subr.bf16.mxu0 0
    %1564 = vmatpush1.bf16.msra.mxu0 0
    %1565 = vmatprep.subr.bf16.mxu0 0
    %1566 = vmatpush1.bf16.msra.mxu0 0
    %1567 = vmatprep.subr.bf16.mxu0 0
    %1568 = vmatpush1.bf16.msra.mxu0 0
    %1569 = vmatprep.subr.bf16.mxu0 0
    %1570 = vmatpush1.bf16.msra.mxu0 0
    %1571 = vmatprep.subr.bf16.mxu0 0
    %1572 = vmatpush1.bf16.msra.mxu0 0
    %1573 = vmatprep.subr.bf16.mxu0 0
    %1574 = vmatpush1.bf16.msra.mxu0 0
    %1575 = vmatprep.mubr.bf16.mxu0 0
    %1576 = vmatmul.mubr.bf16.gmra.mrb[0].mxu0 %v1254
    %v1577 = vpop.f32.mrb[0].mxu0
    %v1578 = vadd.f32 %v1537, %v1577
    %v1579 = vpop.f32.mrb[0].mxu0
    %v1580 = vadd.f32 %v1539, %v1579
    %v1581 = vpop.f32.mrb[0].mxu0
    %v1582 = vpop.f32.mrb[0].mxu0
    %1583 = vdwg.mxu0
    %v1584 = vmax.f32 %v1414, 0.0
    %v1585 = vmax.f32 %v1416, 0.0
    %v1586 = vmax.f32 %v1578, 0.0
    %v1587 = vmax.f32 %v1580, 0.0
    %v1588 = vpack.c.bf16 %v1584, %v1584
    %v1589 = vpack.c.bf16 %v1585, %v1585
    %v1590 = vpack.c.bf16 %v1586, %v1586
    %v1591 = vpack.c.bf16 %v1587, %v1587
    %v1592 = vld [vmem:[%s4] sm:$0xf]
    %v1593 = vld [vmem:[%s4 + $0x4] sm:$0xf]
    %v1594 = vld [vmem:[%s4 + $0x8] sm:$0xf]
    %v1595 = vld [vmem:[%s4 + $0xc] sm:$0xf]
    %v1596 = vld [vmem:[%s4 + $0x10] sm:$0xf]
    %v1597 = vld [vmem:[%s4 + $0x14] sm:$0xf]
    %v1598 = vld [vmem:[%s4 + $0x18] sm:$0xf]
    %v1599 = vld [vmem:[%s4 + $0x1c] sm:$0xf]
    %v1600 = vld [vmem:[%s4 + $0x20] sm:$0xf]
    %v1601 = vld [vmem:[%s4 + $0x24] sm:$0xf]
    %v1602 = vld [vmem:[%s4 + $0x28] sm:$0xf]
    %v1603 = vld [vmem:[%s4 + $0x2c] sm:$0xf]
    %v1604 = vld [vmem:[%s4 + $0x30] sm:$0xf]
    %v1605 = vld [vmem:[%s4 + $0x34] sm:$0xf]
    %v1606 = vld [vmem:[%s4 + $0x38] sm:$0xf]
    %v1607 = vld [vmem:[%s4 + $0x3c] sm:$0xf]
    %v1608 = vld [vmem:[%s4 + $0x40] sm:$0xf]
    %v1609 = vld [vmem:[%s4 + $0x44] sm:$0xf]
    %v1610 = vld [vmem:[%s4 + $0x48] sm:$0xf]
    %v1611 = vld [vmem:[%s4 + $0x4c] sm:$0xf]
    %v1612 = vld [vmem:[%s4 + $0x50] sm:$0xf]
    %v1613 = vld [vmem:[%s4 + $0x54] sm:$0xf]
    %v1614 = vld [vmem:[%s4 + $0x58] sm:$0xf]
    %v1615 = vld [vmem:[%s4 + $0x5c] sm:$0xf]
    %v1616 = vld [vmem:[%s4 + $0x60] sm:$0xf]
    %v1617 = vld [vmem:[%s4 + $0x64] sm:$0xf]
    %v1618 = vld [vmem:[%s4 + $0x68] sm:$0xf]
    %v1619 = vld [vmem:[%s4 + $0x6c] sm:$0xf]
    %v1620 = vld [vmem:[%s4 + $0x70] sm:$0xf]
    %v1621 = vld [vmem:[%s4 + $0x74] sm:$0xf]
    %v1622 = vld [vmem:[%s4 + $0x78] sm:$0xf]
    %v1623 = vld [vmem:[%s4 + $0x7c] sm:$0xf]
    %v1624 = vld [vmem:[%s4 + $0x80] sm:$0xf]
    %v1625 = vld [vmem:[%s4 + $0x84] sm:$0xf]
    %v1626 = vld [vmem:[%s4 + $0x88] sm:$0xf]
    %v1627 = vld [vmem:[%s4 + $0x8c] sm:$0xf]
    %v1628 = vld [vmem:[%s4 + $0x90] sm:$0xf]
    %v1629 = vld [vmem:[%s4 + $0x94] sm:$0xf]
    %v1630 = vld [vmem:[%s4 + $0x98] sm:$0xf]
    %v1631 = vld [vmem:[%s4 + $0x9c] sm:$0xf]
    %v1632 = vld [vmem:[%s4 + $0xa0] sm:$0xf]
    %v1633 = vld [vmem:[%s4 + $0xa4] sm:$0xf]
    %v1634 = vld [vmem:[%s4 + $0xa8] sm:$0xf]
    %v1635 = vld [vmem:[%s4 + $0xac] sm:$0xf]
    %v1636 = vld [vmem:[%s4 + $0xb0] sm:$0xf]
    %v1637 = vld [vmem:[%s4 + $0xb4] sm:$0xf]
    %v1638 = vld [vmem:[%s4 + $0xb8] sm:$0xf]
    %v1639 = vld [vmem:[%s4 + $0xbc] sm:$0xf]
    %v1640 = vld [vmem:[%s4 + $0xc0] sm:$0xf]
    %v1641 = vld [vmem:[%s4 + $0xc4] sm:$0xf]
    %v1642 = vld [vmem:[%s4 + $0xc8] sm:$0xf]
    %v1643 = vld [vmem:[%s4 + $0xcc] sm:$0xf]
    %v1644 = vld [vmem:[%s4 + $0xd0] sm:$0xf]
    %v1645 = vld [vmem:[%s4 + $0xd4] sm:$0xf]
    %v1646 = vld [vmem:[%s4 + $0xd8] sm:$0xf]
    %v1647 = vld [vmem:[%s4 + $0xdc] sm:$0xf]
    %v1648 = vld [vmem:[%s4 + $0xe0] sm:$0xf]
    %v1649 = vld [vmem:[%s4 + $0xe4] sm:$0xf]
    %v1650 = vld [vmem:[%s4 + $0xe8] sm:$0xf]
    %v1651 = vld [vmem:[%s4 + $0xec] sm:$0xf]
    %v1652 = vld [vmem:[%s4 + $0xf0] sm:$0xf]
    %v1653 = vld [vmem:[%s4 + $0xf4] sm:$0xf]
    %v1654 = vld [vmem:[%s4 + $0xf8] sm:$0xf]
    %v1655 = vld [vmem:[%s4 + $0xfc] sm:$0xf]
    %v1656 = vld [vmem:[%s5] sm:$0x1]
    %v1658 = vlaneseq
    %v1659 = vshrl.u32 %v1658, 7
    %v1660 = vsub.s32 0, %v1659
    %v1661 = vrot.slane %v1656, %v1660
    %v1727 = vunpack.c.l.b16 %v1592
    %v1728 = vunpack.c.l.b16 %v1593
    %v1729 = vunpack.c.l.b16 %v1594
    %v1730 = vunpack.c.l.b16 %v1595
    %v1731 = vunpack.c.l.b16 %v1596
    %v1732 = vunpack.c.l.b16 %v1597
    %v1733 = vunpack.c.l.b16 %v1598
    %v1734 = vunpack.c.l.b16 %v1599
    %v1735 = vunpack.c.l.b16 %v1600
    %v1736 = vunpack.c.l.b16 %v1601
    %v1737 = vunpack.c.l.b16 %v1602
    %v1738 = vunpack.c.l.b16 %v1603
    %v1739 = vunpack.c.l.b16 %v1604
    %v1740 = vunpack.c.l.b16 %v1605
    %v1741 = vunpack.c.l.b16 %v1606
    %v1742 = vunpack.c.l.b16 %v1607
    %v1743 = vunpack.c.l.b16 %v1608
    %v1744 = vunpack.c.l.b16 %v1609
    %v1745 = vunpack.c.l.b16 %v1610
    %v1746 = vunpack.c.l.b16 %v1611
    %v1747 = vunpack.c.l.b16 %v1612
    %v1748 = vunpack.c.l.b16 %v1613
    %v1749 = vunpack.c.l.b16 %v1614
    %v1750 = vunpack.c.l.b16 %v1615
    %v1751 = vunpack.c.l.b16 %v1616
    %v1752 = vunpack.c.l.b16 %v1617
    %v1753 = vunpack.c.l.b16 %v1618
    %v1754 = vunpack.c.l.b16 %v1619
    %v1755 = vunpack.c.l.b16 %v1620
    %v1756 = vunpack.c.l.b16 %v1621
    %v1757 = vunpack.c.l.b16 %v1622
    %v1758 = vunpack.c.l.b16 %v1623
    %v1759 = vunpack.c.l.b16 %v1624
    %v1760 = vunpack.c.l.b16 %v1625
    %v1761 = vunpack.c.l.b16 %v1626
    %v1762 = vunpack.c.l.b16 %v1627
    %v1763 = vunpack.c.l.b16 %v1628
    %v1764 = vunpack.c.l.b16 %v1629
    %v1765 = vunpack.c.l.b16 %v1630
    %v1766 = vunpack.c.l.b16 %v1631
    %v1767 = vunpack.c.l.b16 %v1632
    %v1768 = vunpack.c.l.b16 %v1633
    %v1769 = vunpack.c.l.b16 %v1634
    %v1770 = vunpack.c.l.b16 %v1635
    %v1771 = vunpack.c.l.b16 %v1636
    %v1772 = vunpack.c.l.b16 %v1637
    %v1773 = vunpack.c.l.b16 %v1638
    %v1774 = vunpack.c.l.b16 %v1639
    %v1775 = vunpack.c.l.b16 %v1640
    %v1776 = vunpack.c.l.b16 %v1641
    %v1777 = vunpack.c.l.b16 %v1642
    %v1778 = vunpack.c.l.b16 %v1643
    %v1779 = vunpack.c.l.b16 %v1644
    %v1780 = vunpack.c.l.b16 %v1645
    %v1781 = vunpack.c.l.b16 %v1646
    %v1782 = vunpack.c.l.b16 %v1647
    %v1783 = vunpack.c.l.b16 %v1648
    %v1784 = vunpack.c.l.b16 %v1649
    %v1785 = vunpack.c.l.b16 %v1650
    %v1786 = vunpack.c.l.b16 %v1651
    %v1787 = vunpack.c.l.b16 %v1652
    %v1788 = vunpack.c.l.b16 %v1653
    %v1789 = vunpack.c.l.b16 %v1654
    %v1790 = vunpack.c.l.b16 %v1655
    %v1791 = vpack.c.b16 %v1728, %v1727
    %v1792 = vpack.c.b16 %v1730, %v1729
    %v1793 = vpack.c.b16 %v1732, %v1731
    %v1794 = vpack.c.b16 %v1734, %v1733
    %v1795 = vpack.c.b16 %v1736, %v1735
    %v1796 = vpack.c.b16 %v1738, %v1737
    %v1797 = vpack.c.b16 %v1740, %v1739
    %v1798 = vpack.c.b16 %v1742, %v1741
    %v1799 = vpack.c.b16 %v1744, %v1743
    %v1800 = vpack.c.b16 %v1746, %v1745
    %v1801 = vpack.c.b16 %v1748, %v1747
    %v1802 = vpack.c.b16 %v1750, %v1749
    %v1803 = vpack.c.b16 %v1752, %v1751
    %v1804 = vpack.c.b16 %v1754, %v1753
    %v1805 = vpack.c.b16 %v1756, %v1755
    %v1806 = vpack.c.b16 %v1758, %v1757
    %v1807 = vpack.c.b16 %v1760, %v1759
    %v1808 = vpack.c.b16 %v1762, %v1761
    %v1809 = vpack.c.b16 %v1764, %v1763
    %v1810 = vpack.c.b16 %v1766, %v1765
    %v1811 = vpack.c.b16 %v1768, %v1767
    %v1812 = vpack.c.b16 %v1770, %v1769
    %v1813 = vpack.c.b16 %v1772, %v1771
    %v1814 = vpack.c.b16 %v1774, %v1773
    %v1815 = vpack.c.b16 %v1776, %v1775
    %v1816 = vpack.c.b16 %v1778, %v1777
    %v1817 = vpack.c.b16 %v1780, %v1779
    %v1818 = vpack.c.b16 %v1782, %v1781
    %v1819 = vpack.c.b16 %v1784, %v1783
    %v1820 = vpack.c.b16 %v1786, %v1785
    %v1821 = vpack.c.b16 %v1788, %v1787
    %v1822 = vpack.c.b16 %v1790, %v1789
    %1855 = vmatprep.subr.bf16.mxu0 0
    %1856 = vmatpush1.bf16.msra.mxu0 %v1791
    %1857 = vmatprep.subr.bf16.mxu0 0
    %1858 = vmatpush1.bf16.msra.mxu0 %v1792
    %1859 = vmatprep.subr.bf16.mxu0 0
    %1860 = vmatpush1.bf16.msra.mxu0 %v1793
    %1861 = vmatprep.subr.bf16.mxu0 0
    %1862 = vmatpush1.bf16.msra.mxu0 %v1794
    %1863 = vmatprep.subr.bf16.mxu0 0
    %1864 = vmatpush1.bf16.msra.mxu0 %v1795
    %1865 = vmatprep.subr.bf16.mxu0 0
    %1866 = vmatpush1.bf16.msra.mxu0 %v1796
    %1867 = vmatprep.subr.bf16.mxu0 0
    %1868 = vmatpush1.bf16.msra.mxu0 %v1797
    %1869 = vmatprep.subr.bf16.mxu0 0
    %1870 = vmatpush1.bf16.msra.mxu0 %v1798
    %1871 = vmatprep.subr.bf16.mxu0 0
    %1872 = vmatpush1.bf16.msra.mxu0 %v1799
    %1873 = vmatprep.subr.bf16.mxu0 0
    %1874 = vmatpush1.bf16.msra.mxu0 %v1800
    %1875 = vmatprep.subr.bf16.mxu0 0
    %1876 = vmatpush1.bf16.msra.mxu0 %v1801
    %1877 = vmatprep.subr.bf16.mxu0 0
    %1878 = vmatpush1.bf16.msra.mxu0 %v1802
    %1879 = vmatprep.subr.bf16.mxu0 0
    %1880 = vmatpush1.bf16.msra.mxu0 %v1803
    %1881 = vmatprep.subr.bf16.mxu0 0
    %1882 = vmatpush1.bf16.msra.mxu0 %v1804
    %1883 = vmatprep.subr.bf16.mxu0 0
    %1884 = vmatpush1.bf16.msra.mxu0 %v1805
    %1885 = vmatprep.subr.bf16.mxu0 0
    %1886 = vmatpush1.bf16.msra.mxu0 %v1806
    %1887 = vmatprep.mubr.bf16.mxu0 %v1589
    %1888 = vmatmul.mubr.bf16.gmra.mrb[0].mxu0 %v1588
    %v1889 = vpop.f32.mrb[0].mxu0
    %v1890 = vadd.f32 %v1661, %v1889
    %v1891 = vpop.f32.mrb[0].mxu0
    %v1892 = vpop.f32.mrb[0].mxu0
    %v1893 = vpop.f32.mrb[0].mxu0
    %1894 = vdwg.mxu0
    %1895 = vmatprep.subr.bf16.mxu0 0
    %1896 = vmatpush1.bf16.msra.mxu0 %v1807
    %1897 = vmatprep.subr.bf16.mxu0 0
    %1898 = vmatpush1.bf16.msra.mxu0 %v1808
    %1899 = vmatprep.subr.bf16.mxu0 0
    %1900 = vmatpush1.bf16.msra.mxu0 %v1809
    %1901 = vmatprep.subr.bf16.mxu0 0
    %1902 = vmatpush1.bf16.msra.mxu0 %v1810
    %1903 = vmatprep.subr.bf16.mxu0 0
    %1904 = vmatpush1.bf16.msra.mxu0 %v1811
    %1905 = vmatprep.subr.bf16.mxu0 0
    %1906 = vmatpush1.bf16.msra.mxu0 %v1812
    %1907 = vmatprep.subr.bf16.mxu0 0
    %1908 = vmatpush1.bf16.msra.mxu0 %v1813
    %1909 = vmatprep.subr.bf16.mxu0 0
    %1910 = vmatpush1.bf16.msra.mxu0 %v1814
    %1911 = vmatprep.subr.bf16.mxu0 0
    %1912 = vmatpush1.bf16.msra.mxu0 %v1815
    %1913 = vmatprep.subr.bf16.mxu0 0
    %1914 = vmatpush1.bf16.msra.mxu0 %v1816
    %1915 = vmatprep.subr.bf16.mxu0 0
    %1916 = vmatpush1.bf16.msra.mxu0 %v1817
    %1917 = vmatprep.subr.bf16.mxu0 0
    %1918 = vmatpush1.bf16.msra.mxu0 %v1818
    %1919 = vmatprep.subr.bf16.mxu0 0
    %1920 = vmatpush1.bf16.msra.mxu0 %v1819
    %1921 = vmatprep.subr.bf16.mxu0 0
    %1922 = vmatpush1.bf16.msra.mxu0 %v1820
    %1923 = vmatprep.subr.bf16.mxu0 0
    %1924 = vmatpush1.bf16.msra.mxu0 %v1821
    %1925 = vmatprep.subr.bf16.mxu0 0
    %1926 = vmatpush1.bf16.msra.mxu0 %v1822
    %1927 = vmatprep.mubr.bf16.mxu0 %v1591
    %1928 = vmatmul.mubr.bf16.gmra.mrb[0].mxu0 %v1590
    %v1929 = vpop.f32.mrb[0].mxu0
    %v1930 = vadd.f32 %v1890, %v1929
    %v1931 = vpop.f32.mrb[0].mxu0
    %v1932 = vpop.f32.mrb[0].mxu0
    %v1933 = vpop.f32.mrb[0].mxu0
    %1934 = vdwg.mxu0
    %v1935 = vld [vmem:[%s1] sm:$0xff]
    %v1936 = vmul.f32 %v1930, 0.5
    %v1937 = vmul.f32 %v1936, 1.442695
    %v1938 = vpow.pop %v1937
    %1940 = vrot.lane.b32.xlu0 %v1938, 64
    %v1941 = vpop.permute.xlu0 %1940
    %v1943 = vmul.f32 %v1935, %v1941
    %v1944 = vadd.f32 %v1930, %v1943
    %v1945 = vpack.c.bf16 %v1944, %v1944
    %v1946 = vld [vmem:[%s6] sm:$0xff]
    %v1947 = vld [vmem:[%s6 + $0x8] sm:$0xff]
    %v1948 = vld [vmem:[%s6 + $0x10] sm:$0xff]
    %v1949 = vld [vmem:[%s6 + $0x18] sm:$0xff]
    %v1950 = vld [vmem:[%s6 + $0x20] sm:$0xff]
    %v1951 = vld [vmem:[%s6 + $0x28] sm:$0xff]
    %v1952 = vld [vmem:[%s6 + $0x30] sm:$0xff]
    %v1953 = vld [vmem:[%s6 + $0x38] sm:$0xff]
    %v1954 = vld [vmem:[%s6 + $0x40] sm:$0xff]
    %v1955 = vld [vmem:[%s6 + $0x48] sm:$0xff]
    %v1956 = vld [vmem:[%s6 + $0x50] sm:$0xff]
    %v1957 = vld [vmem:[%s6 + $0x58] sm:$0xff]
    %v1958 = vld [vmem:[%s6 + $0x60] sm:$0xff]
    %v1959 = vld [vmem:[%s6 + $0x68] sm:$0xff]
    %v1960 = vld [vmem:[%s6 + $0x70] sm:$0xff]
    %v1961 = vld [vmem:[%s6 + $0x78] sm:$0xff]
    %v1962 = vld [vmem:[%s7] sm:$0xf]
    %v1964 = vlaneseq
    %v1965 = vshrl.u32 %v1964, 7
    %v1966 = vsub.s32 0, %v1965
    %v1967 = vrot.slane %v1962, %v1966
    %v1968 = vlaneseq
    %v1969 = vshrl.u32 %v1968, 7
    %v1970 = vsub.s32 1, %v1969
    %v1971 = vrot.slane %v1962, %v1970
    %v1972 = vlaneseq
    %v1973 = vshrl.u32 %v1972, 7
    %v1974 = vsub.s32 2, %v1973
    %v1975 = vrot.slane %v1962, %v1974
    %v1976 = vlaneseq
    %v1977 = vshrl.u32 %v1976, 7
    %v1978 = vsub.s32 3, %v1977
    %v1979 = vrot.slane %v1962, %v1978
    %v2000 = vunpack.c.l.b16 %v1946
    %v2001 = vunpack.c.h.b16 %v1946
    %v2002 = vunpack.c.l.b16 %v1947
    %v2003 = vunpack.c.h.b16 %v1947
    %v2004 = vunpack.c.l.b16 %v1948
    %v2005 = vunpack.c.h.b16 %v1948
    %v2006 = vunpack.c.l.b16 %v1949
    %v2007 = vunpack.c.h.b16 %v1949
    %v2008 = vunpack.c.l.b16 %v1950
    %v2009 = vunpack.c.h.b16 %v1950
    %v2010 = vunpack.c.l.b16 %v1951
    %v2011 = vunpack.c.h.b16 %v1951
    %v2012 = vunpack.c.l.b16 %v1952
    %v2013 = vunpack.c.h.b16 %v1952
    %v2014 = vunpack.c.l.b16 %v1953
    %v2015 = vunpack.c.h.b16 %v1953
    %v2016 = vunpack.c.l.b16 %v1954
    %v2017 = vunpack.c.h.b16 %v1954
    %v2018 = vunpack.c.l.b16 %v1955
    %v2019 = vunpack.c.h.b16 %v1955
    %v2020 = vunpack.c.l.b16 %v1956
    %v2021 = vunpack.c.h.b16 %v1956
    %v2022 = vunpack.c.l.b16 %v1957
    %v2023 = vunpack.c.h.b16 %v1957
    %v2024 = vunpack.c.l.b16 %v1958
    %v2025 = vunpack.c.h.b16 %v1958
    %v2026 = vunpack.c.l.b16 %v1959
    %v2027 = vunpack.c.h.b16 %v1959
    %v2028 = vunpack.c.l.b16 %v1960
    %v2029 = vunpack.c.h.b16 %v1960
    %v2030 = vunpack.c.l.b16 %v1961
    %v2031 = vunpack.c.h.b16 %v1961
    %v2032 = vpack.c.b16 %v2004, %v2000
    %v2033 = vpack.c.b16 %v2005, %v2001
    %v2034 = vpack.c.b16 %v2006, %v2002
    %v2035 = vpack.c.b16 %v2007, %v2003
    %v2036 = vpack.c.b16 %v2012, %v2008
    %v2037 = vpack.c.b16 %v2013, %v2009
    %v2038 = vpack.c.b16 %v2014, %v2010
    %v2039 = vpack.c.b16 %v2015, %v2011
    %v2040 = vpack.c.b16 %v2020, %v2016
    %v2041 = vpack.c.b16 %v2021, %v2017
    %v2042 = vpack.c.b16 %v2022, %v2018
    %v2043 = vpack.c.b16 %v2023, %v2019
    %v2044 = vpack.c.b16 %v2028, %v2024
    %v2045 = vpack.c.b16 %v2029, %v2025
    %v2046 = vpack.c.b16 %v2030, %v2026
    %v2047 = vpack.c.b16 %v2031, %v2027
    %vm2064 = vcmask 523264
    %v2066 = vsel %vm2064, %v1945, 0
    %2068 = vmatprep.subr.bf16.mxu0 %v2033
    %2069 = vmatpush1.bf16.msra.mxu0 %v2032
    %2070 = vmatprep.subr.bf16.mxu0 %v2037
    %2071 = vmatpush1.bf16.msra.mxu0 %v2036
    %2072 = vmatprep.subr.bf16.mxu0 %v2041
    %2073 = vmatpush1.bf16.msra.mxu0 %v2040
    %2074 = vmatprep.subr.bf16.mxu0 %v2045
    %2075 = vmatpush1.bf16.msra.mxu0 %v2044
    %2076 = vmatprep.subr.bf16.mxu0 0
    %2077 = vmatpush1.bf16.msra.mxu0 0
    %2078 = vmatprep.subr.bf16.mxu0 0
    %2079 = vmatpush1.bf16.msra.mxu0 0
    %2080 = vmatprep.subr.bf16.mxu0 0
    %2081 = vmatpush1.bf16.msra.mxu0 0
    %2082 = vmatprep.subr.bf16.mxu0 0
    %2083 = vmatpush1.bf16.msra.mxu0 0
    %2084 = vmatprep.subr.bf16.mxu0 0
    %2085 = vmatpush1.bf16.msra.mxu0 0
    %2086 = vmatprep.subr.bf16.mxu0 0
    %2087 = vmatpush1.bf16.msra.mxu0 0
    %2088 = vmatprep.subr.bf16.mxu0 0
    %2089 = vmatpush1.bf16.msra.mxu0 0
    %2090 = vmatprep.subr.bf16.mxu0 0
    %2091 = vmatpush1.bf16.msra.mxu0 0
    %2092 = vmatprep.subr.bf16.mxu0 0
    %2093 = vmatpush1.bf16.msra.mxu0 0
    %2094 = vmatprep.subr.bf16.mxu0 0
    %2095 = vmatpush1.bf16.msra.mxu0 0
    %2096 = vmatprep.subr.bf16.mxu0 0
    %2097 = vmatpush1.bf16.msra.mxu0 0
    %2098 = vmatprep.subr.bf16.mxu0 0
    %2099 = vmatpush1.bf16.msra.mxu0 0
    %2100 = vmatprep.mubr.bf16.mxu0 0
    %2101 = vmatmul.mubr.bf16.gmra.mrb[0].mxu0 %v2066
    %v2102 = vpop.f32.mrb[0].mxu0
    %v2103 = vadd.f32 %v1967, %v2102
    %v2104 = vpop.f32.mrb[0].mxu0
    %v2105 = vadd.f32 %v1971, %v2104
    %v2106 = vpop.f32.mrb[0].mxu0
    %v2107 = vpop.f32.mrb[0].mxu0
    %2108 = vdwg.mxu0
    %2109 = vmatprep.subr.bf16.mxu0 %v2035
    %2110 = vmatpush1.bf16.msra.mxu0 %v2034
    %2111 = vmatprep.subr.bf16.mxu0 %v2039
    %2112 = vmatpush1.bf16.msra.mxu0 %v2038
    %2113 = vmatprep.subr.bf16.mxu0 %v2043
    %2114 = vmatpush1.bf16.msra.mxu0 %v2042
    %2115 = vmatprep.subr.bf16.mxu0 %v2047
    %2116 = vmatpush1.bf16.msra.mxu0 %v2046
    %2117 = vmatprep.subr.bf16.mxu0 0
    %2118 = vmatpush1.bf16.msra.mxu0 0
    %2119 = vmatprep.subr.bf16.mxu0 0
    %2120 = vmatpush1.bf16.msra.mxu0 0
    %2121 = vmatprep.subr.bf16.mxu0 0
    %2122 = vmatpush1.bf16.msra.mxu0 0
    %2123 = vmatprep.subr.bf16.mxu0 0
    %2124 = vmatpush1.bf16.msra.mxu0 0
    %2125 = vmatprep.subr.bf16.mxu0 0
    %2126 = vmatpush1.bf16.msra.mxu0 0
    %2127 = vmatprep.subr.bf16.mxu0 0
    %2128 = vmatpush1.bf16.msra.mxu0 0
    %2129 = vmatprep.subr.bf16.mxu0 0
    %2130 = vmatpush1.bf16.msra.mxu0 0
    %2131 = vmatprep.subr.bf16.mxu0 0
    %2132 = vmatpush1.bf16.msra.mxu0 0
    %2133 = vmatprep.subr.bf16.mxu0 0
    %2134 = vmatpush1.bf16.msra.mxu0 0
    %2135 = vmatprep.subr.bf16.mxu0 0
    %2136 = vmatpush1.bf16.msra.mxu0 0
    %2137 = vmatprep.subr.bf16.mxu0 0
    %2138 = vmatpush1.bf16.msra.mxu0 0
    %2139 = vmatprep.subr.bf16.mxu0 0
    %2140 = vmatpush1.bf16.msra.mxu0 0
    %2141 = vmatprep.mubr.bf16.mxu0 0
    %2142 = vmatmul.mubr.bf16.gmra.mrb[0].mxu0 %v2066
    %v2143 = vpop.f32.mrb[0].mxu0
    %v2144 = vadd.f32 %v1975, %v2143
    %v2145 = vpop.f32.mrb[0].mxu0
    %v2146 = vadd.f32 %v1979, %v2145
    %v2147 = vpop.f32.mrb[0].mxu0
    %v2148 = vpop.f32.mrb[0].mxu0
    %2149 = vdwg.mxu0
    %v2150 = vmax.f32 %v2103, 0.0
    %v2151 = vmax.f32 %v2105, 0.0
    %v2152 = vmax.f32 %v2144, 0.0
    %v2153 = vmax.f32 %v2146, 0.0
    %v2154 = vpack.c.bf16 %v2150, %v2150
    %v2155 = vpack.c.bf16 %v2151, %v2151
    %v2156 = vpack.c.bf16 %v2152, %v2152
    %v2157 = vpack.c.bf16 %v2153, %v2153
    %v2158 = vld [vmem:[%s8] sm:$0xff]
    %v2159 = vld [vmem:[%s8 + $0x8] sm:$0xff]
    %v2160 = vld [vmem:[%s8 + $0x10] sm:$0xff]
    %v2161 = vld [vmem:[%s8 + $0x18] sm:$0xf]
    %v2162 = vld [vmem:[%s8 + $0x1c] sm:$0xff]
    %v2163 = vld [vmem:[%s8 + $0x24] sm:$0xff]
    %v2164 = vld [vmem:[%s8 + $0x2c] sm:$0xff]
    %v2165 = vld [vmem:[%s8 + $0x34] sm:$0xf]
    %v2166 = vld [vmem:[%s8 + $0x38] sm:$0xff]
    %v2167 = vld [vmem:[%s8 + $0x40] sm:$0xff]
    %v2168 = vld [vmem:[%s8 + $0x48] sm:$0xff]
    %v2169 = vld [vmem:[%s8 + $0x50] sm:$0xf]
    %v2170 = vld [vmem:[%s8 + $0x54] sm:$0xff]
    %v2171 = vld [vmem:[%s8 + $0x5c] sm:$0xff]
    %v2172 = vld [vmem:[%s8 + $0x64] sm:$0xff]
    %v2173 = vld [vmem:[%s8 + $0x6c] sm:$0xf]
    %v2174 = vld [vmem:[%s8 + $0x70] sm:$0xff]
    %v2175 = vld [vmem:[%s8 + $0x78] sm:$0xff]
    %v2176 = vld [vmem:[%s8 + $0x80] sm:$0xff]
    %v2177 = vld [vmem:[%s8 + $0x88] sm:$0xf]
    %v2178 = vld [vmem:[%s8 + $0x8c] sm:$0xff]
    %v2179 = vld [vmem:[%s8 + $0x94] sm:$0xff]
    %v2180 = vld [vmem:[%s8 + $0x9c] sm:$0xff]
    %v2181 = vld [vmem:[%s8 + $0xa4] sm:$0xf]
    %v2182 = vld [vmem:[%s8 + $0xa8] sm:$0xff]
    %v2183 = vld [vmem:[%s8 + $0xb0] sm:$0xff]
    %v2184 = vld [vmem:[%s8 + $0xb8] sm:$0xff]
    %v2185 = vld [vmem:[%s8 + $0xc0] sm:$0xf]
    %v2186 = vld [vmem:[%s8 + $0xc4] sm:$0xff]
    %v2187 = vld [vmem:[%s8 + $0xcc] sm:$0xff]
    %v2188 = vld [vmem:[%s8 + $0xd4] sm:$0xff]
    %v2189 = vld [vmem:[%s8 + $0xdc] sm:$0xf]
    %v2190 = vld [vmem:[%s8 + $0xe0] sm:$0xff]
    %v2191 = vld [vmem:[%s8 + $0xe8] sm:$0xff]
    %v2192 = vld [vmem:[%s8 + $0xf0] sm:$0xff]
    %v2193 = vld [vmem:[%s8 + $0xf8] sm:$0xf]
    %v2194 = vld [vmem:[%s8 + $0xfc] sm:$0xff]
    %v2195 = vld [vmem:[%s8 + $0x104] sm:$0xff]
    %v2196 = vld [vmem:[%s8 + $0x10c] sm:$0xff]
    %v2197 = vld [vmem:[%s8 + $0x114] sm:$0xf]
    %v2198 = vld [vmem:[%s8 + $0x118] sm:$0xff]
    %v2199 = vld [vmem:[%s8 + $0x120] sm:$0xff]
    %v2200 = vld [vmem:[%s8 + $0x128] sm:$0xff]
    %v2201 = vld [vmem:[%s8 + $0x130] sm:$0xf]
    %v2202 = vld [vmem:[%s8 + $0x134] sm:$0xff]
    %v2203 = vld [vmem:[%s8 + $0x13c] sm:$0xff]
    %v2204 = vld [vmem:[%s8 + $0x144] sm:$0xff]
    %v2205 = vld [vmem:[%s8 + $0x14c] sm:$0xf]
    %v2206 = vld [vmem:[%s8 + $0x150] sm:$0xff]
    %v2207 = vld [vmem:[%s8 + $0x158] sm:$0xff]
    %v2208 = vld [vmem:[%s8 + $0x160] sm:$0xff]
    %v2209 = vld [vmem:[%s8 + $0x168] sm:$0xf]
    %v2210 = vld [vmem:[%s8 + $0x16c] sm:$0xff]
    %v2211 = vld [vmem:[%s8 + $0x174] sm:$0xff]
    %v2212 = vld [vmem:[%s8 + $0x17c] sm:$0xff]
    %v2213 = vld [vmem:[%s8 + $0x184] sm:$0xf]
    %v2214 = vld [vmem:[%s8 + $0x188] sm:$0xff]
    %v2215 = vld [vmem:[%s8 + $0x190] sm:$0xff]
    %v2216 = vld [vmem:[%s8 + $0x198] sm:$0xff]
    %v2217 = vld [vmem:[%s8 + $0x1a0] sm:$0xf]
    %v2218 = vld [vmem:[%s8 + $0x1a4] sm:$0xff]
    %v2219 = vld [vmem:[%s8 + $0x1ac] sm:$0xff]
    %v2220 = vld [vmem:[%s8 + $0x1b4] sm:$0xff]
    %v2221 = vld [vmem:[%s8 + $0x1bc] sm:$0xf]
    %v2222 = vld [vmem:[%s8 + $0x1c0] sm:$0xff]
    %v2223 = vld [vmem:[%s8 + $0x1c8] sm:$0xff]
    %v2224 = vld [vmem:[%s8 + $0x1d0] sm:$0xff]
    %v2225 = vld [vmem:[%s8 + $0x1d8] sm:$0xf]
    %v2226 = vld [vmem:[%s8 + $0x1dc] sm:$0xff]
    %v2227 = vld [vmem:[%s8 + $0x1e4] sm:$0xff]
    %v2228 = vld [vmem:[%s8 + $0x1ec] sm:$0xff]
    %v2229 = vld [vmem:[%s8 + $0x1f4] sm:$0xf]
    %v2230 = vld [vmem:[%s8 + $0x1f8] sm:$0xff]
    %v2231 = vld [vmem:[%s8 + $0x200] sm:$0xff]
    %v2232 = vld [vmem:[%s8 + $0x208] sm:$0xff]
    %v2233 = vld [vmem:[%s8 + $0x210] sm:$0xf]
    %v2234 = vld [vmem:[%s8 + $0x214] sm:$0xff]
    %v2235 = vld [vmem:[%s8 + $0x21c] sm:$0xff]
    %v2236 = vld [vmem:[%s8 + $0x224] sm:$0xff]
    %v2237 = vld [vmem:[%s8 + $0x22c] sm:$0xf]
    %v2238 = vld [vmem:[%s8 + $0x230] sm:$0xff]
    %v2239 = vld [vmem:[%s8 + $0x238] sm:$0xff]
    %v2240 = vld [vmem:[%s8 + $0x240] sm:$0xff]
    %v2241 = vld [vmem:[%s8 + $0x248] sm:$0xf]
    %v2242 = vld [vmem:[%s8 + $0x24c] sm:$0xff]
    %v2243 = vld [vmem:[%s8 + $0x254] sm:$0xff]
    %v2244 = vld [vmem:[%s8 + $0x25c] sm:$0xff]
    %v2245 = vld [vmem:[%s8 + $0x264] sm:$0xf]
    %v2246 = vld [vmem:[%s8 + $0x268] sm:$0xff]
    %v2247 = vld [vmem:[%s8 + $0x270] sm:$0xff]
    %v2248 = vld [vmem:[%s8 + $0x278] sm:$0xff]
    %v2249 = vld [vmem:[%s8 + $0x280] sm:$0xf]
    %v2250 = vld [vmem:[%s8 + $0x284] sm:$0xff]
    %v2251 = vld [vmem:[%s8 + $0x28c] sm:$0xff]
    %v2252 = vld [vmem:[%s8 + $0x294] sm:$0xff]
    %v2253 = vld [vmem:[%s8 + $0x29c] sm:$0xf]
    %v2254 = vld [vmem:[%s8 + $0x2a0] sm:$0xff]
    %v2255 = vld [vmem:[%s8 + $0x2a8] sm:$0xff]
    %v2256 = vld [vmem:[%s8 + $0x2b0] sm:$0xff]
    %v2257 = vld [vmem:[%s8 + $0x2b8] sm:$0xf]
    %v2258 = vld [vmem:[%s8 + $0x2bc] sm:$0xff]
    %v2259 = vld [vmem:[%s8 + $0x2c4] sm:$0xff]
    %v2260 = vld [vmem:[%s8 + $0x2cc] sm:$0xff]
    %v2261 = vld [vmem:[%s8 + $0x2d4] sm:$0xf]
    %v2262 = vld [vmem:[%s8 + $0x2d8] sm:$0xff]
    %v2263 = vld [vmem:[%s8 + $0x2e0] sm:$0xff]
    %v2264 = vld [vmem:[%s8 + $0x2e8] sm:$0xff]
    %v2265 = vld [vmem:[%s8 + $0x2f0] sm:$0xf]
    %v2266 = vld [vmem:[%s8 + $0x2f4] sm:$0xff]
    %v2267 = vld [vmem:[%s8 + $0x2fc] sm:$0xff]
    %v2268 = vld [vmem:[%s8 + $0x304] sm:$0xff]
    %v2269 = vld [vmem:[%s8 + $0x30c] sm:$0xf]
    %v2270 = vld [vmem:[%s8 + $0x310] sm:$0xff]
    %v2271 = vld [vmem:[%s8 + $0x318] sm:$0xff]
    %v2272 = vld [vmem:[%s8 + $0x320] sm:$0xff]
    %v2273 = vld [vmem:[%s8 + $0x328] sm:$0xf]
    %v2274 = vld [vmem:[%s8 + $0x32c] sm:$0xff]
    %v2275 = vld [vmem:[%s8 + $0x334] sm:$0xff]
    %v2276 = vld [vmem:[%s8 + $0x33c] sm:$0xff]
    %v2277 = vld [vmem:[%s8 + $0x344] sm:$0xf]
    %v2278 = vld [vmem:[%s8 + $0x348] sm:$0xff]
    %v2279 = vld [vmem:[%s8 + $0x350] sm:$0xff]
    %v2280 = vld [vmem:[%s8 + $0x358] sm:$0xff]
    %v2281 = vld [vmem:[%s8 + $0x360] sm:$0xf]
    %v2282 = vld [vmem:[%s8 + $0x364] sm:$0xff]
    %v2283 = vld [vmem:[%s8 + $0x36c] sm:$0xff]
    %v2284 = vld [vmem:[%s8 + $0x374] sm:$0xff]
    %v2285 = vld [vmem:[%s8 + $0x37c] sm:$0xf]
    %v2286 = vld [vmem:[%s8 + $0x380] sm:$0xff]
    %v2287 = vld [vmem:[%s8 + $0x388] sm:$0xff]
    %v2288 = vld [vmem:[%s8 + $0x390] sm:$0xff]
    %v2289 = vld [vmem:[%s8 + $0x398] sm:$0xf]
    %v2290 = vld [vmem:[%s8 + $0x39c] sm:$0xff]
    %v2291 = vld [vmem:[%s8 + $0x3a4] sm:$0xff]
    %v2292 = vld [vmem:[%s8 + $0x3ac] sm:$0xff]
    %v2293 = vld [vmem:[%s8 + $0x3b4] sm:$0xf]
    %v2294 = vld [vmem:[%s8 + $0x3b8] sm:$0xff]
    %v2295 = vld [vmem:[%s8 + $0x3c0] sm:$0xff]
    %v2296 = vld [vmem:[%s8 + $0x3c8] sm:$0xff]
    %v2297 = vld [vmem:[%s8 + $0x3d0] sm:$0xf]
    %v2298 = vld [vmem:[%s8 + $0x3d4] sm:$0xff]
    %v2299 = vld [vmem:[%s8 + $0x3dc] sm:$0xff]
    %v2300 = vld [vmem:[%s8 + $0x3e4] sm:$0xff]
    %v2301 = vld [vmem:[%s8 + $0x3ec] sm:$0xf]
    %v2302 = vld [vmem:[%s8 + $0x3f0] sm:$0xff]
    %v2303 = vld [vmem:[%s8 + $0x3f8] sm:$0xff]
    %v2304 = vld [vmem:[%s8 + $0x400] sm:$0xff]
    %v2305 = vld [vmem:[%s8 + $0x408] sm:$0xf]
    %v2306 = vld [vmem:[%s8 + $0x40c] sm:$0xff]
    %v2307 = vld [vmem:[%s8 + $0x414] sm:$0xff]
    %v2308 = vld [vmem:[%s8 + $0x41c] sm:$0xff]
    %v2309 = vld [vmem:[%s8 + $0x424] sm:$0xf]
    %v2310 = vld [vmem:[%s8 + $0x428] sm:$0xff]
    %v2311 = vld [vmem:[%s8 + $0x430] sm:$0xff]
    %v2312 = vld [vmem:[%s8 + $0x438] sm:$0xff]
    %v2313 = vld [vmem:[%s8 + $0x440] sm:$0xf]
    %v2314 = vld [vmem:[%s8 + $0x444] sm:$0xff]
    %v2315 = vld [vmem:[%s8 + $0x44c] sm:$0xff]
    %v2316 = vld [vmem:[%s8 + $0x454] sm:$0xff]
    %v2317 = vld [vmem:[%s8 + $0x45c] sm:$0xf]
    %v2318 = vld [vmem:[%s8 + $0x460] sm:$0xff]
    %v2319 = vld [vmem:[%s8 + $0x468] sm:$0xff]
    %v2320 = vld [vmem:[%s8 + $0x470] sm:$0xff]
    %v2321 = vld [vmem:[%s8 + $0x478] sm:$0xf]
    %v2322 = vld [vmem:[%s8 + $0x47c] sm:$0xff]
    %v2323 = vld [vmem:[%s8 + $0x484] sm:$0xff]
    %v2324 = vld [vmem:[%s8 + $0x48c] sm:$0xff]
    %v2325 = vld [vmem:[%s8 + $0x494] sm:$0xf]
    %v2326 = vld [vmem:[%s8 + $0x498] sm:$0xff]
    %v2327 = vld [vmem:[%s8 + $0x4a0] sm:$0xff]
    %v2328 = vld [vmem:[%s8 + $0x4a8] sm:$0xff]
    %v2329 = vld [vmem:[%s8 + $0x4b0] sm:$0xf]
    %v2330 = vld [vmem:[%s8 + $0x4b4] sm:$0xff]
    %v2331 = vld [vmem:[%s8 + $0x4bc] sm:$0xff]
    %v2332 = vld [vmem:[%s8 + $0x4c4] sm:$0xff]
    %v2333 = vld [vmem:[%s8 + $0x4cc] sm:$0xf]
    %v2334 = vld [vmem:[%s8 + $0x4d0] sm:$0xff]
    %v2335 = vld [vmem:[%s8 + $0x4d8] sm:$0xff]
    %v2336 = vld [vmem:[%s8 + $0x4e0] sm:$0xff]
    %v2337 = vld [vmem:[%s8 + $0x4e8] sm:$0xf]
    %v2338 = vld [vmem:[%s8 + $0x4ec] sm:$0xff]
    %v2339 = vld [vmem:[%s8 + $0x4f4] sm:$0xff]
    %v2340 = vld [vmem:[%s8 + $0x4fc] sm:$0xff]
    %v2341 = vld [vmem:[%s8 + $0x504] sm:$0xf]
    %v2342 = vld [vmem:[%s8 + $0x508] sm:$0xff]
    %v2343 = vld [vmem:[%s8 + $0x510] sm:$0xff]
    %v2344 = vld [vmem:[%s8 + $0x518] sm:$0xff]
    %v2345 = vld [vmem:[%s8 + $0x520] sm:$0xf]
    %v2346 = vld [vmem:[%s8 + $0x524] sm:$0xff]
    %v2347 = vld [vmem:[%s8 + $0x52c] sm:$0xff]
    %v2348 = vld [vmem:[%s8 + $0x534] sm:$0xff]
    %v2349 = vld [vmem:[%s8 + $0x53c] sm:$0xf]
    %v2350 = vld [vmem:[%s8 + $0x540] sm:$0xff]
    %v2351 = vld [vmem:[%s8 + $0x548] sm:$0xff]
    %v2352 = vld [vmem:[%s8 + $0x550] sm:$0xff]
    %v2353 = vld [vmem:[%s8 + $0x558] sm:$0xf]
    %v2354 = vld [vmem:[%s8 + $0x55c] sm:$0xff]
    %v2355 = vld [vmem:[%s8 + $0x564] sm:$0xff]
    %v2356 = vld [vmem:[%s8 + $0x56c] sm:$0xff]
    %v2357 = vld [vmem:[%s8 + $0x574] sm:$0xf]
    %v2358 = vld [vmem:[%s8 + $0x578] sm:$0xff]
    %v2359 = vld [vmem:[%s8 + $0x580] sm:$0xff]
    %v2360 = vld [vmem:[%s8 + $0x588] sm:$0xff]
    %v2361 = vld [vmem:[%s8 + $0x590] sm:$0xf]
    %v2362 = vld [vmem:[%s8 + $0x594] sm:$0xff]
    %v2363 = vld [vmem:[%s8 + $0x59c] sm:$0xff]
    %v2364 = vld [vmem:[%s8 + $0x5a4] sm:$0xff]
    %v2365 = vld [vmem:[%s8 + $0x5ac] sm:$0xf]
    %v2366 = vld [vmem:[%s8 + $0x5b0] sm:$0xff]
    %v2367 = vld [vmem:[%s8 + $0x5b8] sm:$0xff]
    %v2368 = vld [vmem:[%s8 + $0x5c0] sm:$0xff]
    %v2369 = vld [vmem:[%s8 + $0x5c8] sm:$0xf]
    %v2370 = vld [vmem:[%s8 + $0x5cc] sm:$0xff]
    %v2371 = vld [vmem:[%s8 + $0x5d4] sm:$0xff]
    %v2372 = vld [vmem:[%s8 + $0x5dc] sm:$0xff]
    %v2373 = vld [vmem:[%s8 + $0x5e4] sm:$0xf]
    %v2374 = vld [vmem:[%s8 + $0x5e8] sm:$0xff]
    %v2375 = vld [vmem:[%s8 + $0x5f0] sm:$0xff]
    %v2376 = vld [vmem:[%s8 + $0x5f8] sm:$0xff]
    %v2377 = vld [vmem:[%s8 + $0x600] sm:$0xf]
    %v2378 = vld [vmem:[%s8 + $0x604] sm:$0xff]
    %v2379 = vld [vmem:[%s8 + $0x60c] sm:$0xff]
    %v2380 = vld [vmem:[%s8 + $0x614] sm:$0xff]
    %v2381 = vld [vmem:[%s8 + $0x61c] sm:$0xf]
    %v2382 = vld [vmem:[%s8 + $0x620] sm:$0xff]
    %v2383 = vld [vmem:[%s8 + $0x628] sm:$0xff]
    %v2384 = vld [vmem:[%s8 + $0x630] sm:$0xff]
    %v2385 = vld [vmem:[%s8 + $0x638] sm:$0xf]
    %v2386 = vld [vmem:[%s8 + $0x63c] sm:$0xff]
    %v2387 = vld [vmem:[%s8 + $0x644] sm:$0xff]
    %v2388 = vld [vmem:[%s8 + $0x64c] sm:$0xff]
    %v2389 = vld [vmem:[%s8 + $0x654] sm:$0xf]
    %v2390 = vld [vmem:[%s8 + $0x658] sm:$0xff]
    %v2391 = vld [vmem:[%s8 + $0x660] sm:$0xff]
    %v2392 = vld [vmem:[%s8 + $0x668] sm:$0xff]
    %v2393 = vld [vmem:[%s8 + $0x670] sm:$0xf]
    %v2394 = vld [vmem:[%s8 + $0x674] sm:$0xff]
    %v2395 = vld [vmem:[%s8 + $0x67c] sm:$0xff]
    %v2396 = vld [vmem:[%s8 + $0x684] sm:$0xff]
    %v2397 = vld [vmem:[%s8 + $0x68c] sm:$0xf]
    %v2398 = vld [vmem:[%s8 + $0x690] sm:$0xff]
    %v2399 = vld [vmem:[%s8 + $0x698] sm:$0xff]
    %v2400 = vld [vmem:[%s8 + $0x6a0] sm:$0xff]
    %v2401 = vld [vmem:[%s8 + $0x6a8] sm:$0xf]
    %v2402 = vld [vmem:[%s8 + $0x6ac] sm:$0xff]
    %v2403 = vld [vmem:[%s8 + $0x6b4] sm:$0xff]
    %v2404 = vld [vmem:[%s8 + $0x6bc] sm:$0xff]
    %v2405 = vld [vmem:[%s8 + $0x6c4] sm:$0xf]
    %v2406 = vld [vmem:[%s8 + $0x6c8] sm:$0xff]
    %v2407 = vld [vmem:[%s8 + $0x6d0] sm:$0xff]
    %v2408 = vld [vmem:[%s8 + $0x6d8] sm:$0xff]
    %v2409 = vld [vmem:[%s8 + $0x6e0] sm:$0xf]
    %v2410 = vld [vmem:[%s8 + $0x6e4] sm:$0xff]
    %v2411 = vld [vmem:[%s8 + $0x6ec] sm:$0xff]
    %v2412 = vld [vmem:[%s8 + $0x6f4] sm:$0xff]
    %v2413 = vld [vmem:[%s8 + $0x6fc] sm:$0xf]
    %v2414 = vld [vmem:[%s9] sm:$0x7f]
    %v2416 = vlaneseq
    %v2417 = vshrl.u32 %v2416, 7
    %v2418 = vsub.s32 0, %v2417
    %v2419 = vrot.slane %v2414, %v2418
    %v2420 = vlaneseq
    %v2421 = vshrl.u32 %v2420, 7
    %v2422 = vsub.s32 1, %v2421
    %v2423 = vrot.slane %v2414, %v2422
    %v2424 = vlaneseq
    %v2425 = vshrl.u32 %v2424, 7
    %v2426 = vsub.s32 2, %v2425
    %v2427 = vrot.slane %v2414, %v2426
    %v2428 = vlaneseq
    %v2429 = vshrl.u32 %v2428, 7
    %v2430 = vsub.s32 3, %v2429
    %v2431 = vrot.slane %v2414, %v2430
    %v2432 = vlaneseq
    %v2433 = vshrl.u32 %v2432, 7
    %v2434 = vsub.s32 4, %v2433
    %v2435 = vrot.slane %v2414, %v2434
    %v2436 = vlaneseq
    %v2437 = vshrl.u32 %v2436, 7
    %v2438 = vsub.s32 5, %v2437
    %v2439 = vrot.slane %v2414, %v2438
    %v2440 = vlaneseq
    %v2441 = vshrl.u32 %v2440, 7
    %v2442 = vsub.s32 6, %v2441
    %v2443 = vrot.slane %v2414, %v2442
    %v2707 = vunpack.c.l.b16 %v2158
    %v2708 = vunpack.c.h.b16 %v2158
    %v2709 = vunpack.c.l.b16 %v2159
    %v2710 = vunpack.c.h.b16 %v2159
    %v2711 = vunpack.c.l.b16 %v2160
    %v2712 = vunpack.c.h.b16 %v2160
    %v2713 = vunpack.c.l.b16 %v2161
    %v2714 = vunpack.c.l.b16 %v2162
    %v2715 = vunpack.c.h.b16 %v2162
    %v2716 = vunpack.c.l.b16 %v2163
    %v2717 = vunpack.c.h.b16 %v2163
    %v2718 = vunpack.c.l.b16 %v2164
    %v2719 = vunpack.c.h.b16 %v2164
    %v2720 = vunpack.c.l.b16 %v2165
    %v2721 = vunpack.c.l.b16 %v2166
    %v2722 = vunpack.c.h.b16 %v2166
    %v2723 = vunpack.c.l.b16 %v2167
    %v2724 = vunpack.c.h.b16 %v2167
    %v2725 = vunpack.c.l.b16 %v2168
    %v2726 = vunpack.c.h.b16 %v2168
    %v2727 = vunpack.c.l.b16 %v2169
    %v2728 = vunpack.c.l.b16 %v2170
    %v2729 = vunpack.c.h.b16 %v2170
    %v2730 = vunpack.c.l.b16 %v2171
    %v2731 = vunpack.c.h.b16 %v2171
    %v2732 = vunpack.c.l.b16 %v2172
    %v2733 = vunpack.c.h.b16 %v2172
    %v2734 = vunpack.c.l.b16 %v2173
    %v2735 = vunpack.c.l.b16 %v2174
    %v2736 = vunpack.c.h.b16 %v2174
    %v2737 = vunpack.c.l.b16 %v2175
    %v2738 = vunpack.c.h.b16 %v2175
    %v2739 = vunpack.c.l.b16 %v2176
    %v2740 = vunpack.c.h.b16 %v2176
    %v2741 = vunpack.c.l.b16 %v2177
    %v2742 = vunpack.c.l.b16 %v2178
    %v2743 = vunpack.c.h.b16 %v2178
    %v2744 = vunpack.c.l.b16 %v2179
    %v2745 = vunpack.c.h.b16 %v2179
    %v2746 = vunpack.c.l.b16 %v2180
    %v2747 = vunpack.c.h.b16 %v2180
    %v2748 = vunpack.c.l.b16 %v2181
    %v2749 = vunpack.c.l.b16 %v2182
    %v2750 = vunpack.c.h.b16 %v2182
    %v2751 = vunpack.c.l.b16 %v2183
    %v2752 = vunpack.c.h.b16 %v2183
    %v2753 = vunpack.c.l.b16 %v2184
    %v2754 = vunpack.c.h.b16 %v2184
    %v2755 = vunpack.c.l.b16 %v2185
    %v2756 = vunpack.c.l.b16 %v2186
    %v2757 = vunpack.c.h.b16 %v2186
    %v2758 = vunpack.c.l.b16 %v2187
    %v2759 = vunpack.c.h.b16 %v2187
    %v2760 = vunpack.c.l.b16 %v2188
    %v2761 = vunpack.c.h.b16 %v2188
    %v2762 = vunpack.c.l.b16 %v2189
    %v2763 = vunpack.c.l.b16 %v2190
    %v2764 = vunpack.c.h.b16 %v2190
    %v2765 = vunpack.c.l.b16 %v2191
    %v2766 = vunpack.c.h.b16 %v2191
    %v2767 = vunpack.c.l.b16 %v2192
    %v2768 = vunpack.c.h.b16 %v2192
    %v2769 = vunpack.c.l.b16 %v2193
    %v2770 = vunpack.c.l.b16 %v2194
    %v2771 = vunpack.c.h.b16 %v2194
    %v2772 = vunpack.c.l.b16 %v2195
    %v2773 = vunpack.c.h.b16 %v2195
    %v2774 = vunpack.c.l.b16 %v2196
    %v2775 = vunpack.c.h.b16 %v2196
    %v2776 = vunpack.c.l.b16 %v2197
    %v2777 = vunpack.c.l.b16 %v2198
    %v2778 = vunpack.c.h.b16 %v2198
    %v2779 = vunpack.c.l.b16 %v2199
    %v2780 = vunpack.c.h.b16 %v2199
    %v2781 = vunpack.c.l.b16 %v2200
    %v2782 = vunpack.c.h.b16 %v2200
    %v2783 = vunpack.c.l.b16 %v2201
    %v2784 = vunpack.c.l.b16 %v2202
    %v2785 = vunpack.c.h.b16 %v2202
    %v2786 = vunpack.c.l.b16 %v2203
    %v2787 = vunpack.c.h.b16 %v2203
    %v2788 = vunpack.c.l.b16 %v2204
    %v2789 = vunpack.c.h.b16 %v2204
    %v2790 = vunpack.c.l.b16 %v2205
    %v2791 = vunpack.c.l.b16 %v2206
    %v2792 = vunpack.c.h.b16 %v2206
    %v2793 = vunpack.c.l.b16 %v2207
    %v2794 = vunpack.c.h.b16 %v2207
    %v2795 = vunpack.c.l.b16 %v2208
    %v2796 = vunpack.c.h.b16 %v2208
    %v2797 = vunpack.c.l.b16 %v2209
    %v2798 = vunpack.c.l.b16 %v2210
    %v2799 = vunpack.c.h.b16 %v2210
    %v2800 = vunpack.c.l.b16 %v2211
    %v2801 = vunpack.c.h.b16 %v2211
    %v2802 = vunpack.c.l.b16 %v2212
    %v2803 = vunpack.c.h.b16 %v2212
    %v2804 = vunpack.c.l.b16 %v2213
    %v2805 = vunpack.c.l.b16 %v2214
    %v2806 = vunpack.c.h.b16 %v2214
    %v2807 = vunpack.c.l.b16 %v2215
    %v2808 = vunpack.c.h.b16 %v2215
    %v2809 = vunpack.c.l.b16 %v2216
    %v2810 = vunpack.c.h.b16 %v2216
    %v2811 = vunpack.c.l.b16 %v2217
    %v2812 = vunpack.c.l.b16 %v2218
    %v2813 = vunpack.c.h.b16 %v2218
    %v2814 = vunpack.c.l.b16 %v2219
    %v2815 = vunpack.c.h.b16 %v2219
    %v2816 = vunpack.c.l.b16 %v2220
    %v2817 = vunpack.c.h.b16 %v2220
    %v2818 = vunpack.c.l.b16 %v2221
    %v2819 = vunpack.c.l.b16 %v2222
    %v2820 = vunpack.c.h.b16 %v2222
    %v2821 = vunpack.c.l.b16 %v2223
    %v2822 = vunpack.c.h.b16 %v2223
    %v2823 = vunpack.c.l.b16 %v2224
    %v2824 = vunpack.c.h.b16 %v2224
    %v2825 = vunpack.c.l.b16 %v2225
    %v2826 = vunpack.c.l.b16 %v2226
    %v2827 = vunpack.c.h.b16 %v2226
    %v2828 = vunpack.c.l.b16 %v2227
    %v2829 = vunpack.c.h.b16 %v2227
    %v2830 = vunpack.c.l.b16 %v2228
    %v2831 = vunpack.c.h.b16 %v2228
    %v2832 = vunpack.c.l.b16 %v2229
    %v2833 = vunpack.c.l.b16 %v2230
    %v2834 = vunpack.c.h.b16 %v2230
    %v2835 = vunpack.c.l.b16 %v2231
    %v2836 = vunpack.c.h.b16 %v2231
    %v2837 = vunpack.c.l.b16 %v2232
    %v2838 = vunpack.c.h.b16 %v2232
    %v2839 = vunpack.c.l.b16 %v2233
    %v2840 = vunpack.c.l.b16 %v2234
    %v2841 = vunpack.c.h.b16 %v2234
    %v2842 = vunpack.c.l.b16 %v2235
    %v2843 = vunpack.c.h.b16 %v2235
    %v2844 = vunpack.c.l.b16 %v2236
    %v2845 = vunpack.c.h.b16 %v2236
    %v2846 = vunpack.c.l.b16 %v2237
    %v2847 = vunpack.c.l.b16 %v2238
    %v2848 = vunpack.c.h.b16 %v2238
    %v2849 = vunpack.c.l.b16 %v2239
    %v2850 = vunpack.c.h.b16 %v2239
    %v2851 = vunpack.c.l.b16 %v2240
    %v2852 = vunpack.c.h.b16 %v2240
    %v2853 = vunpack.c.l.b16 %v2241
    %v2854 = vunpack.c.l.b16 %v2242
    %v2855 = vunpack.c.h.b16 %v2242
    %v2856 = vunpack.c.l.b16 %v2243
    %v2857 = vunpack.c.h.b16 %v2243
    %v2858 = vunpack.c.l.b16 %v2244
    %v2859 = vunpack.c.h.b16 %v2244
    %v2860 = vunpack.c.l.b16 %v2245
    %v2861 = vunpack.c.l.b16 %v2246
    %v2862 = vunpack.c.h.b16 %v2246
    %v2863 = vunpack.c.l.b16 %v2247
    %v2864 = vunpack.c.h.b16 %v2247
    %v2865 = vunpack.c.l.b16 %v2248
    %v2866 = vunpack.c.h.b16 %v2248
    %v2867 = vunpack.c.l.b16 %v2249
    %v2868 = vunpack.c.l.b16 %v2250
    %v2869 = vunpack.c.h.b16 %v2250
    %v2870 = vunpack.c.l.b16 %v2251
    %v2871 = vunpack.c.h.b16 %v2251
    %v2872 = vunpack.c.l.b16 %v2252
    %v2873 = vunpack.c.h.b16 %v2252
    %v2874 = vunpack.c.l.b16 %v2253
    %v2875 = vunpack.c.l.b16 %v2254
    %v2876 = vunpack.c.h.b16 %v2254
    %v2877 = vunpack.c.l.b16 %v2255
    %v2878 = vunpack.c.h.b16 %v2255
    %v2879 = vunpack.c.l.b16 %v2256
    %v2880 = vunpack.c.h.b16 %v2256
    %v2881 = vunpack.c.l.b16 %v2257
    %v2882 = vunpack.c.l.b16 %v2258
    %v2883 = vunpack.c.h.b16 %v2258
    %v2884 = vunpack.c.l.b16 %v2259
    %v2885 = vunpack.c.h.b16 %v2259
    %v2886 = vunpack.c.l.b16 %v2260
    %v2887 = vunpack.c.h.b16 %v2260
    %v2888 = vunpack.c.l.b16 %v2261
    %v2889 = vunpack.c.l.b16 %v2262
    %v2890 = vunpack.c.h.b16 %v2262
    %v2891 = vunpack.c.l.b16 %v2263
    %v2892 = vunpack.c.h.b16 %v2263
    %v2893 = vunpack.c.l.b16 %v2264
    %v2894 = vunpack.c.h.b16 %v2264
    %v2895 = vunpack.c.l.b16 %v2265
    %v2896 = vunpack.c.l.b16 %v2266
    %v2897 = vunpack.c.h.b16 %v2266
    %v2898 = vunpack.c.l.b16 %v2267
    %v2899 = vunpack.c.h.b16 %v2267
    %v2900 = vunpack.c.l.b16 %v2268
    %v2901 = vunpack.c.h.b16 %v2268
    %v2902 = vunpack.c.l.b16 %v2269
    %v2903 = vunpack.c.l.b16 %v2270
    %v2904 = vunpack.c.h.b16 %v2270
    %v2905 = vunpack.c.l.b16 %v2271
    %v2906 = vunpack.c.h.b16 %v2271
    %v2907 = vunpack.c.l.b16 %v2272
    %v2908 = vunpack.c.h.b16 %v2272
    %v2909 = vunpack.c.l.b16 %v2273
    %v2910 = vunpack.c.l.b16 %v2274
    %v2911 = vunpack.c.h.b16 %v2274
    %v2912 = vunpack.c.l.b16 %v2275
    %v2913 = vunpack.c.h.b16 %v2275
    %v2914 = vunpack.c.l.b16 %v2276
    %v2915 = vunpack.c.h.b16 %v2276
    %v2916 = vunpack.c.l.b16 %v2277
    %v2917 = vunpack.c.l.b16 %v2278
    %v2918 = vunpack.c.h.b16 %v2278
    %v2919 = vunpack.c.l.b16 %v2279
    %v2920 = vunpack.c.h.b16 %v2279
    %v2921 = vunpack.c.l.b16 %v2280
    %v2922 = vunpack.c.h.b16 %v2280
    %v2923 = vunpack.c.l.b16 %v2281
    %v2924 = vunpack.c.l.b16 %v2282
    %v2925 = vunpack.c.h.b16 %v2282
    %v2926 = vunpack.c.l.b16 %v2283
    %v2927 = vunpack.c.h.b16 %v2283
    %v2928 = vunpack.c.l.b16 %v2284
    %v2929 = vunpack.c.h.b16 %v2284
    %v2930 = vunpack.c.l.b16 %v2285
    %v2931 = vunpack.c.l.b16 %v2286
    %v2932 = vunpack.c.h.b16 %v2286
    %v2933 = vunpack.c.l.b16 %v2287
    %v2934 = vunpack.c.h.b16 %v2287
    %v2935 = vunpack.c.l.b16 %v2288
    %v2936 = vunpack.c.h.b16 %v2288
    %v2937 = vunpack.c.l.b16 %v2289
    %v2938 = vunpack.c.l.b16 %v2290
    %v2939 = vunpack.c.h.b16 %v2290
    %v2940 = vunpack.c.l.b16 %v2291
    %v2941 = vunpack.c.h.b16 %v2291
    %v2942 = vunpack.c.l.b16 %v2292
    %v2943 = vunpack.c.h.b16 %v2292
    %v2944 = vunpack.c.l.b16 %v2293
    %v2945 = vunpack.c.l.b16 %v2294
    %v2946 = vunpack.c.h.b16 %v2294
    %v2947 = vunpack.c.l.b16 %v2295
    %v2948 = vunpack.c.h.b16 %v2295
    %v2949 = vunpack.c.l.b16 %v2296
    %v2950 = vunpack.c.h.b16 %v2296
    %v2951 = vunpack.c.l.b16 %v2297
    %v2952 = vunpack.c.l.b16 %v2298
    %v2953 = vunpack.c.h.b16 %v2298
    %v2954 = vunpack.c.l.b16 %v2299
    %v2955 = vunpack.c.h.b16 %v2299
    %v2956 = vunpack.c.l.b16 %v2300
    %v2957 = vunpack.c.h.b16 %v2300
    %v2958 = vunpack.c.l.b16 %v2301
    %v2959 = vunpack.c.l.b16 %v2302
    %v2960 = vunpack.c.h.b16 %v2302
    %v2961 = vunpack.c.l.b16 %v2303
    %v2962 = vunpack.c.h.b16 %v2303
    %v2963 = vunpack.c.l.b16 %v2304
    %v2964 = vunpack.c.h.b16 %v2304
    %v2965 = vunpack.c.l.b16 %v2305
    %v2966 = vunpack.c.l.b16 %v2306
    %v2967 = vunpack.c.h.b16 %v2306
    %v2968 = vunpack.c.l.b16 %v2307
    %v2969 = vunpack.c.h.b16 %v2307
    %v2970 = vunpack.c.l.b16 %v2308
    %v2971 = vunpack.c.h.b16 %v2308
    %v2972 = vunpack.c.l.b16 %v2309
    %v2973 = vunpack.c.l.b16 %v2310
    %v2974 = vunpack.c.h.b16 %v2310
    %v2975 = vunpack.c.l.b16 %v2311
    %v2976 = vunpack.c.h.b16 %v2311
    %v2977 = vunpack.c.l.b16 %v2312
    %v2978 = vunpack.c.h.b16 %v2312
    %v2979 = vunpack.c.l.b16 %v2313
    %v2980 = vunpack.c.l.b16 %v2314
    %v2981 = vunpack.c.h.b16 %v2314
    %v2982 = vunpack.c.l.b16 %v2315
    %v2983 = vunpack.c.h.b16 %v2315
    %v2984 = vunpack.c.l.b16 %v2316
    %v2985 = vunpack.c.h.b16 %v2316
    %v2986 = vunpack.c.l.b16 %v2317
    %v2987 = vunpack.c.l.b16 %v2318
    %v2988 = vunpack.c.h.b16 %v2318
    %v2989 = vunpack.c.l.b16 %v2319
    %v2990 = vunpack.c.h.b16 %v2319
    %v2991 = vunpack.c.l.b16 %v2320
    %v2992 = vunpack.c.h.b16 %v2320
    %v2993 = vunpack.c.l.b16 %v2321
    %v2994 = vunpack.c.l.b16 %v2322
    %v2995 = vunpack.c.h.b16 %v2322
    %v2996 = vunpack.c.l.b16 %v2323
    %v2997 = vunpack.c.h.b16 %v2323
    %v2998 = vunpack.c.l.b16 %v2324
    %v2999 = vunpack.c.h.b16 %v2324
    %v3000 = vunpack.c.l.b16 %v2325
    %v3001 = vunpack.c.l.b16 %v2326
    %v3002 = vunpack.c.h.b16 %v2326
    %v3003 = vunpack.c.l.b16 %v2327
    %v3004 = vunpack.c.h.b16 %v2327
    %v3005 = vunpack.c.l.b16 %v2328
    %v3006 = vunpack.c.h.b16 %v2328
    %v3007 = vunpack.c.l.b16 %v2329
    %v3008 = vunpack.c.l.b16 %v2330
    %v3009 = vunpack.c.h.b16 %v2330
    %v3010 = vunpack.c.l.b16 %v2331
    %v3011 = vunpack.c.h.b16 %v2331
    %v3012 = vunpack.c.l.b16 %v2332
    %v3013 = vunpack.c.h.b16 %v2332
    %v3014 = vunpack.c.l.b16 %v2333
    %v3015 = vunpack.c.l.b16 %v2334
    %v3016 = vunpack.c.h.b16 %v2334
    %v3017 = vunpack.c.l.b16 %v2335
    %v3018 = vunpack.c.h.b16 %v2335
    %v3019 = vunpack.c.l.b16 %v2336
    %v3020 = vunpack.c.h.b16 %v2336
    %v3021 = vunpack.c.l.b16 %v2337
    %v3022 = vunpack.c.l.b16 %v2338
    %v3023 = vunpack.c.h.b16 %v2338
    %v3024 = vunpack.c.l.b16 %v2339
    %v3025 = vunpack.c.h.b16 %v2339
    %v3026 = vunpack.c.l.b16 %v2340
    %v3027 = vunpack.c.h.b16 %v2340
    %v3028 = vunpack.c.l.b16 %v2341
    %v3029 = vunpack.c.l.b16 %v2342
    %v3030 = vunpack.c.h.b16 %v2342
    %v3031 = vunpack.c.l.b16 %v2343
    %v3032 = vunpack.c.h.b16 %v2343
    %v3033 = vunpack.c.l.b16 %v2344
    %v3034 = vunpack.c.h.b16 %v2344
    %v3035 = vunpack.c.l.b16 %v2345
    %v3036 = vunpack.c.l.b16 %v2346
    %v3037 = vunpack.c.h.b16 %v2346
    %v3038 = vunpack.c.l.b16 %v2347
    %v3039 = vunpack.c.h.b16 %v2347
    %v3040 = vunpack.c.l.b16 %v2348
    %v3041 = vunpack.c.h.b16 %v2348
    %v3042 = vunpack.c.l.b16 %v2349
    %v3043 = vunpack.c.l.b16 %v2350
    %v3044 = vunpack.c.h.b16 %v2350
    %v3045 = vunpack.c.l.b16 %v2351
    %v3046 = vunpack.c.h.b16 %v2351
    %v3047 = vunpack.c.l.b16 %v2352
    %v3048 = vunpack.c.h.b16 %v2352
    %v3049 = vunpack.c.l.b16 %v2353
    %v3050 = vunpack.c.l.b16 %v2354
    %v3051 = vunpack.c.h.b16 %v2354
    %v3052 = vunpack.c.l.b16 %v2355
    %v3053 = vunpack.c.h.b16 %v2355
    %v3054 = vunpack.c.l.b16 %v2356
    %v3055 = vunpack.c.h.b16 %v2356
    %v3056 = vunpack.c.l.b16 %v2357
    %v3057 = vunpack.c.l.b16 %v2358
    %v3058 = vunpack.c.h.b16 %v2358
    %v3059 = vunpack.c.l.b16 %v2359
    %v3060 = vunpack.c.h.b16 %v2359
    %v3061 = vunpack.c.l.b16 %v2360
    %v3062 = vunpack.c.h.b16 %v2360
    %v3063 = vunpack.c.l.b16 %v2361
    %v3064 = vunpack.c.l.b16 %v2362
    %v3065 = vunpack.c.h.b16 %v2362
    %v3066 = vunpack.c.l.b16 %v2363
    %v3067 = vunpack.c.h.b16 %v2363
    %v3068 = vunpack.c.l.b16 %v2364
    %v3069 = vunpack.c.h.b16 %v2364
    %v3070 = vunpack.c.l.b16 %v2365
    %v3071 = vunpack.c.l.b16 %v2366
    %v3072 = vunpack.c.h.b16 %v2366
    %v3073 = vunpack.c.l.b16 %v2367
    %v3074 = vunpack.c.h.b16 %v2367
    %v3075 = vunpack.c.l.b16 %v2368
    %v3076 = vunpack.c.h.b16 %v2368
    %v3077 = vunpack.c.l.b16 %v2369
    %v3078 = vunpack.c.l.b16 %v2370
    %v3079 = vunpack.c.h.b16 %v2370
    %v3080 = vunpack.c.l.b16 %v2371
    %v3081 = vunpack.c.h.b16 %v2371
    %v3082 = vunpack.c.l.b16 %v2372
    %v3083 = vunpack.c.h.b16 %v2372
    %v3084 = vunpack.c.l.b16 %v2373
    %v3085 = vunpack.c.l.b16 %v2374
    %v3086 = vunpack.c.h.b16 %v2374
    %v3087 = vunpack.c.l.b16 %v2375
    %v3088 = vunpack.c.h.b16 %v2375
    %v3089 = vunpack.c.l.b16 %v2376
    %v3090 = vunpack.c.h.b16 %v2376
    %v3091 = vunpack.c.l.b16 %v2377
    %v3092 = vunpack.c.l.b16 %v2378
    %v3093 = vunpack.c.h.b16 %v2378
    %v3094 = vunpack.c.l.b16 %v2379
    %v3095 = vunpack.c.h.b16 %v2379
    %v3096 = vunpack.c.l.b16 %v2380
    %v3097 = vunpack.c.h.b16 %v2380
    %v3098 = vunpack.c.l.b16 %v2381
    %v3099 = vunpack.c.l.b16 %v2382
    %v3100 = vunpack.c.h.b16 %v2382
    %v3101 = vunpack.c.l.b16 %v2383
    %v3102 = vunpack.c.h.b16 %v2383
    %v3103 = vunpack.c.l.b16 %v2384
    %v3104 = vunpack.c.h.b16 %v2384
    %v3105 = vunpack.c.l.b16 %v2385
    %v3106 = vunpack.c.l.b16 %v2386
    %v3107 = vunpack.c.h.b16 %v2386
    %v3108 = vunpack.c.l.b16 %v2387
    %v3109 = vunpack.c.h.b16 %v2387
    %v3110 = vunpack.c.l.b16 %v2388
    %v3111 = vunpack.c.h.b16 %v2388
    %v3112 = vunpack.c.l.b16 %v2389
    %v3113 = vunpack.c.l.b16 %v2390
    %v3114 = vunpack.c.h.b16 %v2390
    %v3115 = vunpack.c.l.b16 %v2391
    %v3116 = vunpack.c.h.b16 %v2391
    %v3117 = vunpack.c.l.b16 %v2392
    %v3118 = vunpack.c.h.b16 %v2392
    %v3119 = vunpack.c.l.b16 %v2393
    %v3120 = vunpack.c.l.b16 %v2394
    %v3121 = vunpack.c.h.b16 %v2394
    %v3122 = vunpack.c.l.b16 %v2395
    %v3123 = vunpack.c.h.b16 %v2395
    %v3124 = vunpack.c.l.b16 %v2396
    %v3125 = vunpack.c.h.b16 %v2396
    %v3126 = vunpack.c.l.b16 %v2397
    %v3127 = vunpack.c.l.b16 %v2398
    %v3128 = vunpack.c.h.b16 %v2398
    %v3129 = vunpack.c.l.b16 %v2399
    %v3130 = vunpack.c.h.b16 %v2399
    %v3131 = vunpack.c.l.b16 %v2400
    %v3132 = vunpack.c.h.b16 %v2400
    %v3133 = vunpack.c.l.b16 %v2401
    %v3134 = vunpack.c.l.b16 %v2402
    %v3135 = vunpack.c.h.b16 %v2402
    %v3136 = vunpack.c.l.b16 %v2403
    %v3137 = vunpack.c.h.b16 %v2403
    %v3138 = vunpack.c.l.b16 %v2404
    %v3139 = vunpack.c.h.b16 %v2404
    %v3140 = vunpack.c.l.b16 %v2405
    %v3141 = vunpack.c.l.b16 %v2406
    %v3142 = vunpack.c.h.b16 %v2406
    %v3143 = vunpack.c.l.b16 %v2407
    %v3144 = vunpack.c.h.b16 %v2407
    %v3145 = vunpack.c.l.b16 %v2408
    %v3146 = vunpack.c.h.b16 %v2408
    %v3147 = vunpack.c.l.b16 %v2409
    %v3148 = vunpack.c.l.b16 %v2410
    %v3149 = vunpack.c.h.b16 %v2410
    %v3150 = vunpack.c.l.b16 %v2411
    %v3151 = vunpack.c.h.b16 %v2411
    %v3152 = vunpack.c.l.b16 %v2412
    %v3153 = vunpack.c.h.b16 %v2412
    %v3154 = vunpack.c.l.b16 %v2413
    %v3155 = vpack.c.b16 %v2714, %v2707
    %v3156 = vpack.c.b16 %v2715, %v2708
    %v3157 = vpack.c.b16 %v2716, %v2709
    %v3158 = vpack.c.b16 %v2717, %v2710
    %v3159 = vpack.c.b16 %v2718, %v2711
    %v3160 = vpack.c.b16 %v2719, %v2712
    %v3161 = vpack.c.b16 %v2720, %v2713
    %v3162 = vpack.c.b16 %v2728, %v2721
    %v3163 = vpack.c.b16 %v2729, %v2722
    %v3164 = vpack.c.b16 %v2730, %v2723
    %v3165 = vpack.c.b16 %v2731, %v2724
    %v3166 = vpack.c.b16 %v2732, %v2725
    %v3167 = vpack.c.b16 %v2733, %v2726
    %v3168 = vpack.c.b16 %v2734, %v2727
    %v3169 = vpack.c.b16 %v2742, %v2735
    %v3170 = vpack.c.b16 %v2743, %v2736
    %v3171 = vpack.c.b16 %v2744, %v2737
    %v3172 = vpack.c.b16 %v2745, %v2738
    %v3173 = vpack.c.b16 %v2746, %v2739
    %v3174 = vpack.c.b16 %v2747, %v2740
    %v3175 = vpack.c.b16 %v2748, %v2741
    %v3176 = vpack.c.b16 %v2756, %v2749
    %v3177 = vpack.c.b16 %v2757, %v2750
    %v3178 = vpack.c.b16 %v2758, %v2751
    %v3179 = vpack.c.b16 %v2759, %v2752
    %v3180 = vpack.c.b16 %v2760, %v2753
    %v3181 = vpack.c.b16 %v2761, %v2754
    %v3182 = vpack.c.b16 %v2762, %v2755
    %v3183 = vpack.c.b16 %v2770, %v2763
    %v3184 = vpack.c.b16 %v2771, %v2764
    %v3185 = vpack.c.b16 %v2772, %v2765
    %v3186 = vpack.c.b16 %v2773, %v2766
    %v3187 = vpack.c.b16 %v2774, %v2767
    %v3188 = vpack.c.b16 %v2775, %v2768
    %v3189 = vpack.c.b16 %v2776, %v2769
    %v3190 = vpack.c.b16 %v2784, %v2777
    %v3191 = vpack.c.b16 %v2785, %v2778
    %v3192 = vpack.c.b16 %v2786, %v2779
    %v3193 = vpack.c.b16 %v2787, %v2780
    %v3194 = vpack.c.b16 %v2788, %v2781
    %v3195 = vpack.c.b16 %v2789, %v2782
    %v3196 = vpack.c.b16 %v2790, %v2783
    %v3197 = vpack.c.b16 %v2798, %v2791
    %v3198 = vpack.c.b16 %v2799, %v2792
    %v3199 = vpack.c.b16 %v2800, %v2793
    %v3200 = vpack.c.b16 %v2801, %v2794
    %v3201 = vpack.c.b16 %v2802, %v2795
    %v3202 = vpack.c.b16 %v2803, %v2796
    %v3203 = vpack.c.b16 %v2804, %v2797
    %v3204 = vpack.c.b16 %v2812, %v2805
    %v3205 = vpack.c.b16 %v2813, %v2806
    %v3206 = vpack.c.b16 %v2814, %v2807
    %v3207 = vpack.c.b16 %v2815, %v2808
    %v3208 = vpack.c.b16 %v2816, %v2809
    %v3209 = vpack.c.b16 %v2817, %v2810
    %v3210 = vpack.c.b16 %v2818, %v2811
    %v3211 = vpack.c.b16 %v2826, %v2819
    %v3212 = vpack.c.b16 %v2827, %v2820
    %v3213 = vpack.c.b16 %v2828, %v2821
    %v3214 = vpack.c.b16 %v2829, %v2822
    %v3215 = vpack.c.b16 %v2830, %v2823
    %v3216 = vpack.c.b16 %v2831, %v2824
    %v3217 = vpack.c.b16 %v2832, %v2825
    %v3218 = vpack.c.b16 %v2840, %v2833
    %v3219 = vpack.c.b16 %v2841, %v2834
    %v3220 = vpack.c.b16 %v2842, %v2835
    %v3221 = vpack.c.b16 %v2843, %v2836
    %v3222 = vpack.c.b16 %v2844, %v2837
    %v3223 = vpack.c.b16 %v2845, %v2838
    %v3224 = vpack.c.b16 %v2846, %v2839
    %v3225 = vpack.c.b16 %v2854, %v2847
    %v3226 = vpack.c.b16 %v2855, %v2848
    %v3227 = vpack.c.b16 %v2856, %v2849
    %v3228 = vpack.c.b16 %v2857, %v2850
    %v3229 = vpack.c.b16 %v2858, %v2851
    %v3230 = vpack.c.b16 %v2859, %v2852
    %v3231 = vpack.c.b16 %v2860, %v2853
    %v3232 = vpack.c.b16 %v2868, %v2861
    %v3233 = vpack.c.b16 %v2869, %v2862
    %v3234 = vpack.c.b16 %v2870, %v2863
    %v3235 = vpack.c.b16 %v2871, %v2864
    %v3236 = vpack.c.b16 %v2872, %v2865
    %v3237 = vpack.c.b16 %v2873, %v2866
    %v3238 = vpack.c.b16 %v2874, %v2867
    %v3239 = vpack.c.b16 %v2882, %v2875
    %v3240 = vpack.c.b16 %v2883, %v2876
    %v3241 = vpack.c.b16 %v2884, %v2877
    %v3242 = vpack.c.b16 %v2885, %v2878
    %v3243 = vpack.c.b16 %v2886, %v2879
    %v3244 = vpack.c.b16 %v2887, %v2880
    %v3245 = vpack.c.b16 %v2888, %v2881
    %v3246 = vpack.c.b16 %v2896, %v2889
    %v3247 = vpack.c.b16 %v2897, %v2890
    %v3248 = vpack.c.b16 %v2898, %v2891
    %v3249 = vpack.c.b16 %v2899, %v2892
    %v3250 = vpack.c.b16 %v2900, %v2893
    %v3251 = vpack.c.b16 %v2901, %v2894
    %v3252 = vpack.c.b16 %v2902, %v2895
    %v3253 = vpack.c.b16 %v2910, %v2903
    %v3254 = vpack.c.b16 %v2911, %v2904
    %v3255 = vpack.c.b16 %v2912, %v2905
    %v3256 = vpack.c.b16 %v2913, %v2906
    %v3257 = vpack.c.b16 %v2914, %v2907
    %v3258 = vpack.c.b16 %v2915, %v2908
    %v3259 = vpack.c.b16 %v2916, %v2909
    %v3260 = vpack.c.b16 %v2924, %v2917
    %v3261 = vpack.c.b16 %v2925, %v2918
    %v3262 = vpack.c.b16 %v2926, %v2919
    %v3263 = vpack.c.b16 %v2927, %v2920
    %v3264 = vpack.c.b16 %v2928, %v2921
    %v3265 = vpack.c.b16 %v2929, %v2922
    %v3266 = vpack.c.b16 %v2930, %v2923
    %v3267 = vpack.c.b16 %v2938, %v2931
    %v3268 = vpack.c.b16 %v2939, %v2932
    %v3269 = vpack.c.b16 %v2940, %v2933
    %v3270 = vpack.c.b16 %v2941, %v2934
    %v3271 = vpack.c.b16 %v2942, %v2935
    %v3272 = vpack.c.b16 %v2943, %v2936
    %v3273 = vpack.c.b16 %v2944, %v2937
    %v3274 = vpack.c.b16 %v2952, %v2945
    %v3275 = vpack.c.b16 %v2953, %v2946
    %v3276 = vpack.c.b16 %v2954, %v2947
    %v3277 = vpack.c.b16 %v2955, %v2948
    %v3278 = vpack.c.b16 %v2956, %v2949
    %v3279 = vpack.c.b16 %v2957, %v2950
    %v3280 = vpack.c.b16 %v2958, %v2951
    %v3281 = vpack.c.b16 %v2966, %v2959
    %v3282 = vpack.c.b16 %v2967, %v2960
    %v3283 = vpack.c.b16 %v2968, %v2961
    %v3284 = vpack.c.b16 %v2969, %v2962
    %v3285 = vpack.c.b16 %v2970, %v2963
    %v3286 = vpack.c.b16 %v2971, %v2964
    %v3287 = vpack.c.b16 %v2972, %v2965
    %v3288 = vpack.c.b16 %v2980, %v2973
    %v3289 = vpack.c.b16 %v2981, %v2974
    %v3290 = vpack.c.b16 %v2982, %v2975
    %v3291 = vpack.c.b16 %v2983, %v2976
    %v3292 = vpack.c.b16 %v2984, %v2977
    %v3293 = vpack.c.b16 %v2985, %v2978
    %v3294 = vpack.c.b16 %v2986, %v2979
    %v3295 = vpack.c.b16 %v2994, %v2987
    %v3296 = vpack.c.b16 %v2995, %v2988
    %v3297 = vpack.c.b16 %v2996, %v2989
    %v3298 = vpack.c.b16 %v2997, %v2990
    %v3299 = vpack.c.b16 %v2998, %v2991
    %v3300 = vpack.c.b16 %v2999, %v2992
    %v3301 = vpack.c.b16 %v3000, %v2993
    %v3302 = vpack.c.b16 %v3008, %v3001
    %v3303 = vpack.c.b16 %v3009, %v3002
    %v3304 = vpack.c.b16 %v3010, %v3003
    %v3305 = vpack.c.b16 %v3011, %v3004
    %v3306 = vpack.c.b16 %v3012, %v3005
    %v3307 = vpack.c.b16 %v3013, %v3006
    %v3308 = vpack.c.b16 %v3014, %v3007
    %v3309 = vpack.c.b16 %v3022, %v3015
    %v3310 = vpack.c.b16 %v3023, %v3016
    %v3311 = vpack.c.b16 %v3024, %v3017
    %v3312 = vpack.c.b16 %v3025, %v3018
    %v3313 = vpack.c.b16 %v3026, %v3019
    %v3314 = vpack.c.b16 %v3027, %v3020
    %v3315 = vpack.c.b16 %v3028, %v3021
    %v3316 = vpack.c.b16 %v3036, %v3029
    %v3317 = vpack.c.b16 %v3037, %v3030
    %v3318 = vpack.c.b16 %v3038, %v3031
    %v3319 = vpack.c.b16 %v3039, %v3032
    %v3320 = vpack.c.b16 %v3040, %v3033
    %v3321 = vpack.c.b16 %v3041, %v3034
    %v3322 = vpack.c.b16 %v3042, %v3035
    %v3323 = vpack.c.b16 %v3050, %v3043
    %v3324 = vpack.c.b16 %v3051, %v3044
    %v3325 = vpack.c.b16 %v3052, %v3045
    %v3326 = vpack.c.b16 %v3053, %v3046
    %v3327 = vpack.c.b16 %v3054, %v3047
    %v3328 = vpack.c.b16 %v3055, %v3048
    %v3329 = vpack.c.b16 %v3056, %v3049
    %v3330 = vpack.c.b16 %v3064, %v3057
    %v3331 = vpack.c.b16 %v3065, %v3058
    %v3332 = vpack.c.b16 %v3066, %v3059
    %v3333 = vpack.c.b16 %v3067, %v3060
    %v3334 = vpack.c.b16 %v3068, %v3061
    %v3335 = vpack.c.b16 %v3069, %v3062
    %v3336 = vpack.c.b16 %v3070, %v3063
    %v3337 = vpack.c.b16 %v3078, %v3071
    %v3338 = vpack.c.b16 %v3079, %v3072
    %v3339 = vpack.c.b16 %v3080, %v3073
    %v3340 = vpack.c.b16 %v3081, %v3074
    %v3341 = vpack.c.b16 %v3082, %v3075
    %v3342 = vpack.c.b16 %v3083, %v3076
    %v3343 = vpack.c.b16 %v3084, %v3077
    %v3344 = vpack.c.b16 %v3092, %v3085
    %v3345 = vpack.c.b16 %v3093, %v3086
    %v3346 = vpack.c.b16 %v3094, %v3087
    %v3347 = vpack.c.b16 %v3095, %v3088
    %v3348 = vpack.c.b16 %v3096, %v3089
    %v3349 = vpack.c.b16 %v3097, %v3090
    %v3350 = vpack.c.b16 %v3098, %v3091
    %v3351 = vpack.c.b16 %v3106, %v3099
    %v3352 = vpack.c.b16 %v3107, %v3100
    %v3353 = vpack.c.b16 %v3108, %v3101
    %v3354 = vpack.c.b16 %v3109, %v3102
    %v3355 = vpack.c.b16 %v3110, %v3103
    %v3356 = vpack.c.b16 %v3111, %v3104
    %v3357 = vpack.c.b16 %v3112, %v3105
    %v3358 = vpack.c.b16 %v3120, %v3113
    %v3359 = vpack.c.b16 %v3121, %v3114
    %v3360 = vpack.c.b16 %v3122, %v3115
    %v3361 = vpack.c.b16 %v3123, %v3116
    %v3362 = vpack.c.b16 %v3124, %v3117
    %v3363 = vpack.c.b16 %v3125, %v3118
    %v3364 = vpack.c.b16 %v3126, %v3119
    %v3365 = vpack.c.b16 %v3134, %v3127
    %v3366 = vpack.c.b16 %v3135, %v3128
    %v3367 = vpack.c.b16 %v3136, %v3129
    %v3368 = vpack.c.b16 %v3137, %v3130
    %v3369 = vpack.c.b16 %v3138, %v3131
    %v3370 = vpack.c.b16 %v3139, %v3132
    %v3371 = vpack.c.b16 %v3140, %v3133
    %v3372 = vpack.c.b16 %v3148, %v3141
    %v3373 = vpack.c.b16 %v3149, %v3142
    %v3374 = vpack.c.b16 %v3150, %v3143
    %v3375 = vpack.c.b16 %v3151, %v3144
    %v3376 = vpack.c.b16 %v3152, %v3145
    %v3377 = vpack.c.b16 %v3153, %v3146
    %v3378 = vpack.c.b16 %v3154, %v3147
    %3603 = vmatprep.subr.bf16.mxu0 %v3156
    %3604 = vmatpush1.bf16.msra.mxu0 %v3155
    %3605 = vmatprep.subr.bf16.mxu0 %v3163
    %3606 = vmatpush1.bf16.msra.mxu0 %v3162
    %3607 = vmatprep.subr.bf16.mxu0 %v3170
    %3608 = vmatpush1.bf16.msra.mxu0 %v3169
    %3609 = vmatprep.subr.bf16.mxu0 %v3177
    %3610 = vmatpush1.bf16.msra.mxu0 %v3176
    %3611 = vmatprep.subr.bf16.mxu0 %v3184
    %3612 = vmatpush1.bf16.msra.mxu0 %v3183
    %3613 = vmatprep.subr.bf16.mxu0 %v3191
    %3614 = vmatpush1.bf16.msra.mxu0 %v3190
    %3615 = vmatprep.subr.bf16.mxu0 %v3198
    %3616 = vmatpush1.bf16.msra.mxu0 %v3197
    %3617 = vmatprep.subr.bf16.mxu0 %v3205
    %3618 = vmatpush1.bf16.msra.mxu0 %v3204
    %3619 = vmatprep.subr.bf16.mxu0 %v3212
    %3620 = vmatpush1.bf16.msra.mxu0 %v3211
    %3621 = vmatprep.subr.bf16.mxu0 %v3219
    %3622 = vmatpush1.bf16.msra.mxu0 %v3218
    %3623 = vmatprep.subr.bf16.mxu0 %v3226
    %3624 = vmatpush1.bf16.msra.mxu0 %v3225
    %3625 = vmatprep.subr.bf16.mxu0 %v3233
    %3626 = vmatpush1.bf16.msra.mxu0 %v3232
    %3627 = vmatprep.subr.bf16.mxu0 %v3240
    %3628 = vmatpush1.bf16.msra.mxu0 %v3239
    %3629 = vmatprep.subr.bf16.mxu0 %v3247
    %3630 = vmatpush1.bf16.msra.mxu0 %v3246
    %3631 = vmatprep.subr.bf16.mxu0 %v3254
    %3632 = vmatpush1.bf16.msra.mxu0 %v3253
    %3633 = vmatprep.subr.bf16.mxu0 %v3261
    %3634 = vmatpush1.bf16.msra.mxu0 %v3260
    %3635 = vmatprep.mubr.bf16.mxu0 %v2155
    %3636 = vmatmul.mubr.bf16.gmra.mrb[0].mxu0 %v2154
    %v3637 = vpop.f32.mrb[0].mxu0
    %v3638 = vadd.f32 %v2419, %v3637
    %v3639 = vpop.f32.mrb[0].mxu0
    %v3640 = vadd.f32 %v2423, %v3639
    %v3641 = vpop.f32.mrb[0].mxu0
    %v3642 = vpop.f32.mrb[0].mxu0
    %3643 = vdwg.mxu0
    %3644 = vmatprep.subr.bf16.mxu0 %v3268
    %3645 = vmatpush1.bf16.msra.mxu0 %v3267
    %3646 = vmatprep.subr.bf16.mxu0 %v3275
    %3647 = vmatpush1.bf16.msra.mxu0 %v3274
    %3648 = vmatprep.subr.bf16.mxu0 %v3282
    %3649 = vmatpush1.bf16.msra.mxu0 %v3281
    %3650 = vmatprep.subr.bf16.mxu0 %v3289
    %3651 = vmatpush1.bf16.msra.mxu0 %v3288
    %3652 = vmatprep.subr.bf16.mxu0 %v3296
    %3653 = vmatpush1.bf16.msra.mxu0 %v3295
    %3654 = vmatprep.subr.bf16.mxu0 %v3303
    %3655 = vmatpush1.bf16.msra.mxu0 %v3302
    %3656 = vmatprep.subr.bf16.mxu0 %v3310
    %3657 = vmatpush1.bf16.msra.mxu0 %v3309
    %3658 = vmatprep.subr.bf16.mxu0 %v3317
    %3659 = vmatpush1.bf16.msra.mxu0 %v3316
    %3660 = vmatprep.subr.bf16.mxu0 %v3324
    %3661 = vmatpush1.bf16.msra.mxu0 %v3323
    %3662 = vmatprep.subr.bf16.mxu0 %v3331
    %3663 = vmatpush1.bf16.msra.mxu0 %v3330
    %3664 = vmatprep.subr.bf16.mxu0 %v3338
    %3665 = vmatpush1.bf16.msra.mxu0 %v3337
    %3666 = vmatprep.subr.bf16.mxu0 %v3345
    %3667 = vmatpush1.bf16.msra.mxu0 %v3344
    %3668 = vmatprep.subr.bf16.mxu0 %v3352
    %3669 = vmatpush1.bf16.msra.mxu0 %v3351
    %3670 = vmatprep.subr.bf16.mxu0 %v3359
    %3671 = vmatpush1.bf16.msra.mxu0 %v3358
    %3672 = vmatprep.subr.bf16.mxu0 %v3366
    %3673 = vmatpush1.bf16.msra.mxu0 %v3365
    %3674 = vmatprep.subr.bf16.mxu0 %v3373
    %3675 = vmatpush1.bf16.msra.mxu0 %v3372
    %3676 = vmatprep.mubr.bf16.mxu0 %v2157
    %3677 = vmatmul.mubr.bf16.gmra.mrb[0].mxu0 %v2156
    %v3678 = vpop.f32.mrb[0].mxu0
    %v3679 = vadd.f32 %v3638, %v3678
    %v3680 = vpop.f32.mrb[0].mxu0
    %v3681 = vadd.f32 %v3640, %v3680
    %v3682 = vpop.f32.mrb[0].mxu0
    %v3683 = vpop.f32.mrb[0].mxu0
    %3684 = vdwg.mxu0
    %3685 = vmatprep.subr.bf16.mxu0 %v3158
    %3686 = vmatpush1.bf16.msra.mxu0 %v3157
    %3687 = vmatprep.subr.bf16.mxu0 %v3165
    %3688 = vmatpush1.bf16.msra.mxu0 %v3164
    %3689 = vmatprep.subr.bf16.mxu0 %v3172
    %3690 = vmatpush1.bf16.msra.mxu0 %v3171
    %3691 = vmatprep.subr.bf16.mxu0 %v3179
    %3692 = vmatpush1.bf16.msra.mxu0 %v3178
    %3693 = vmatprep.subr.bf16.mxu0 %v3186
    %3694 = vmatpush1.bf16.msra.mxu0 %v3185
    %3695 = vmatprep.subr.bf16.mxu0 %v3193
    %3696 = vmatpush1.bf16.msra.mxu0 %v3192
    %3697 = vmatprep.subr.bf16.mxu0 %v3200
    %3698 = vmatpush1.bf16.msra.mxu0 %v3199
    %3699 = vmatprep.subr.bf16.mxu0 %v3207
    %3700 = vmatpush1.bf16.msra.mxu0 %v3206
    %3701 = vmatprep.subr.bf16.mxu0 %v3214
    %3702 = vmatpush1.bf16.msra.mxu0 %v3213
    %3703 = vmatprep.subr.bf16.mxu0 %v3221
    %3704 = vmatpush1.bf16.msra.mxu0 %v3220
    %3705 = vmatprep.subr.bf16.mxu0 %v3228
    %3706 = vmatpush1.bf16.msra.mxu0 %v3227
    %3707 = vmatprep.subr.bf16.mxu0 %v3235
    %3708 = vmatpush1.bf16.msra.mxu0 %v3234
    %3709 = vmatprep.subr.bf16.mxu0 %v3242
    %3710 = vmatpush1.bf16.msra.mxu0 %v3241
    %3711 = vmatprep.subr.bf16.mxu0 %v3249
    %3712 = vmatpush1.bf16.msra.mxu0 %v3248
    %3713 = vmatprep.subr.bf16.mxu0 %v3256
    %3714 = vmatpush1.bf16.msra.mxu0 %v3255
    %3715 = vmatprep.subr.bf16.mxu0 %v3263
    %3716 = vmatpush1.bf16.msra.mxu0 %v3262
    %3717 = vmatprep.mubr.bf16.mxu0 %v2155
    %3718 = vmatmul.mubr.bf16.gmra.mrb[0].mxu0 %v2154
    %v3719 = vpop.f32.mrb[0].mxu0
    %v3720 = vadd.f32 %v2427, %v3719
    %v3721 = vpop.f32.mrb[0].mxu0
    %v3722 = vadd.f32 %v2431, %v3721
    %v3723 = vpop.f32.mrb[0].mxu0
    %v3724 = vpop.f32.mrb[0].mxu0
    %3725 = vdwg.mxu0
    %3726 = vmatprep.subr.bf16.mxu0 %v3270
    %3727 = vmatpush1.bf16.msra.mxu0 %v3269
    %3728 = vmatprep.subr.bf16.mxu0 %v3277
    %3729 = vmatpush1.bf16.msra.mxu0 %v3276
    %3730 = vmatprep.subr.bf16.mxu0 %v3284
    %3731 = vmatpush1.bf16.msra.mxu0 %v3283
    %3732 = vmatprep.subr.bf16.mxu0 %v3291
    %3733 = vmatpush1.bf16.msra.mxu0 %v3290
    %3734 = vmatprep.subr.bf16.mxu0 %v3298
    %3735 = vmatpush1.bf16.msra.mxu0 %v3297
    %3736 = vmatprep.subr.bf16.mxu0 %v3305
    %3737 = vmatpush1.bf16.msra.mxu0 %v3304
    %3738 = vmatprep.subr.bf16.mxu0 %v3312
    %3739 = vmatpush1.bf16.msra.mxu0 %v3311
    %3740 = vmatprep.subr.bf16.mxu0 %v3319
    %3741 = vmatpush1.bf16.msra.mxu0 %v3318
    %3742 = vmatprep.subr.bf16.mxu0 %v3326
    %3743 = vmatpush1.bf16.msra.mxu0 %v3325
    %3744 = vmatprep.subr.bf16.mxu0 %v3333
    %3745 = vmatpush1.bf16.msra.mxu0 %v3332
    %3746 = vmatprep.subr.bf16.mxu0 %v3340
    %3747 = vmatpush1.bf16.msra.mxu0 %v3339
    %3748 = vmatprep.subr.bf16.mxu0 %v3347
    %3749 = vmatpush1.bf16.msra.mxu0 %v3346
    %3750 = vmatprep.subr.bf16.mxu0 %v3354
    %3751 = vmatpush1.bf16.msra.mxu0 %v3353
    %3752 = vmatprep.subr.bf16.mxu0 %v3361
    %3753 = vmatpush1.bf16.msra.mxu0 %v3360
    %3754 = vmatprep.subr.bf16.mxu0 %v3368
    %3755 = vmatpush1.bf16.msra.mxu0 %v3367
    %3756 = vmatprep.subr.bf16.mxu0 %v3375
    %3757 = vmatpush1.bf16.msra.mxu0 %v3374
    %3758 = vmatprep.mubr.bf16.mxu0 %v2157
    %3759 = vmatmul.mubr.bf16.gmra.mrb[0].mxu0 %v2156
    %v3760 = vpop.f32.mrb[0].mxu0
    %v3761 = vadd.f32 %v3720, %v3760
    %v3762 = vpop.f32.mrb[0].mxu0
    %v3763 = vadd.f32 %v3722, %v3762
    %v3764 = vpop.f32.mrb[0].mxu0
    %v3765 = vpop.f32.mrb[0].mxu0
    %3766 = vdwg.mxu0
    %3767 = vmatprep.subr.bf16.mxu0 %v3160
    %3768 = vmatpush1.bf16.msra.mxu0 %v3159
    %3769 = vmatprep.subr.bf16.mxu0 %v3167
    %3770 = vmatpush1.bf16.msra.mxu0 %v3166
    %3771 = vmatprep.subr.bf16.mxu0 %v3174
    %3772 = vmatpush1.bf16.msra.mxu0 %v3173
    %3773 = vmatprep.subr.bf16.mxu0 %v3181
    %3774 = vmatpush1.bf16.msra.mxu0 %v3180
    %3775 = vmatprep.subr.bf16.mxu0 %v3188
    %3776 = vmatpush1.bf16.msra.mxu0 %v3187
    %3777 = vmatprep.subr.bf16.mxu0 %v3195
    %3778 = vmatpush1.bf16.msra.mxu0 %v3194
    %3779 = vmatprep.subr.bf16.mxu0 %v3202
    %3780 = vmatpush1.bf16.msra.mxu0 %v3201
    %3781 = vmatprep.subr.bf16.mxu0 %v3209
    %3782 = vmatpush1.bf16.msra.mxu0 %v3208
    %3783 = vmatprep.subr.bf16.mxu0 %v3216
    %3784 = vmatpush1.bf16.msra.mxu0 %v3215
    %3785 = vmatprep.subr.bf16.mxu0 %v3223
    %3786 = vmatpush1.bf16.msra.mxu0 %v3222
    %3787 = vmatprep.subr.bf16.mxu0 %v3230
    %3788 = vmatpush1.bf16.msra.mxu0 %v3229
    %3789 = vmatprep.subr.bf16.mxu0 %v3237
    %3790 = vmatpush1.bf16.msra.mxu0 %v3236
    %3791 = vmatprep.subr.bf16.mxu0 %v3244
    %3792 = vmatpush1.bf16.msra.mxu0 %v3243
    %3793 = vmatprep.subr.bf16.mxu0 %v3251
    %3794 = vmatpush1.bf16.msra.mxu0 %v3250
    %3795 = vmatprep.subr.bf16.mxu0 %v3258
    %3796 = vmatpush1.bf16.msra.mxu0 %v3257
    %3797 = vmatprep.subr.bf16.mxu0 %v3265
    %3798 = vmatpush1.bf16.msra.mxu0 %v3264
    %3799 = vmatprep.mubr.bf16.mxu0 %v2155
    %3800 = vmatmul.mubr.bf16.gmra.mrb[0].mxu0 %v2154
    %v3801 = vpop.f32.mrb[0].mxu0
    %v3802 = vadd.f32 %v2435, %v3801
    %v3803 = vpop.f32.mrb[0].mxu0
    %v3804 = vadd.f32 %v2439, %v3803
    %v3805 = vpop.f32.mrb[0].mxu0
    %v3806 = vpop.f32.mrb[0].mxu0
    %3807 = vdwg.mxu0
    %3808 = vmatprep.subr.bf16.mxu0 %v3272
    %3809 = vmatpush1.bf16.msra.mxu0 %v3271
    %3810 = vmatprep.subr.bf16.mxu0 %v3279
    %3811 = vmatpush1.bf16.msra.mxu0 %v3278
    %3812 = vmatprep.subr.bf16.mxu0 %v3286
    %3813 = vmatpush1.bf16.msra.mxu0 %v3285
    %3814 = vmatprep.subr.bf16.mxu0 %v3293
    %3815 = vmatpush1.bf16.msra.mxu0 %v3292
    %3816 = vmatprep.subr.bf16.mxu0 %v3300
    %3817 = vmatpush1.bf16.msra.mxu0 %v3299
    %3818 = vmatprep.subr.bf16.mxu0 %v3307
    %3819 = vmatpush1.bf16.msra.mxu0 %v3306
    %3820 = vmatprep.subr.bf16.mxu0 %v3314
    %3821 = vmatpush1.bf16.msra.mxu0 %v3313
    %3822 = vmatprep.subr.bf16.mxu0 %v3321
    %3823 = vmatpush1.bf16.msra.mxu0 %v3320
    %3824 = vmatprep.subr.bf16.mxu0 %v3328
    %3825 = vmatpush1.bf16.msra.mxu0 %v3327
    %3826 = vmatprep.subr.bf16.mxu0 %v3335
    %3827 = vmatpush1.bf16.msra.mxu0 %v3334
    %3828 = vmatprep.subr.bf16.mxu0 %v3342
    %3829 = vmatpush1.bf16.msra.mxu0 %v3341
    %3830 = vmatprep.subr.bf16.mxu0 %v3349
    %3831 = vmatpush1.bf16.msra.mxu0 %v3348
    %3832 = vmatprep.subr.bf16.mxu0 %v3356
    %3833 = vmatpush1.bf16.msra.mxu0 %v3355
    %3834 = vmatprep.subr.bf16.mxu0 %v3363
    %3835 = vmatpush1.bf16.msra.mxu0 %v3362
    %3836 = vmatprep.subr.bf16.mxu0 %v3370
    %3837 = vmatpush1.bf16.msra.mxu0 %v3369
    %3838 = vmatprep.subr.bf16.mxu0 %v3377
    %3839 = vmatpush1.bf16.msra.mxu0 %v3376
    %3840 = vmatprep.mubr.bf16.mxu0 %v2157
    %3841 = vmatmul.mubr.bf16.gmra.mrb[0].mxu0 %v2156
    %v3842 = vpop.f32.mrb[0].mxu0
    %v3843 = vadd.f32 %v3802, %v3842
    %v3844 = vpop.f32.mrb[0].mxu0
    %v3845 = vadd.f32 %v3804, %v3844
    %v3846 = vpop.f32.mrb[0].mxu0
    %v3847 = vpop.f32.mrb[0].mxu0
    %3848 = vdwg.mxu0
    %3849 = vmatprep.subr.bf16.mxu0 0
    %3850 = vmatpush1.bf16.msra.mxu0 %v3161
    %3851 = vmatprep.subr.bf16.mxu0 0
    %3852 = vmatpush1.bf16.msra.mxu0 %v3168
    %3853 = vmatprep.subr.bf16.mxu0 0
    %3854 = vmatpush1.bf16.msra.mxu0 %v3175
    %3855 = vmatprep.subr.bf16.mxu0 0
    %3856 = vmatpush1.bf16.msra.mxu0 %v3182
    %3857 = vmatprep.subr.bf16.mxu0 0
    %3858 = vmatpush1.bf16.msra.mxu0 %v3189
    %3859 = vmatprep.subr.bf16.mxu0 0
    %3860 = vmatpush1.bf16.msra.mxu0 %v3196
    %3861 = vmatprep.subr.bf16.mxu0 0
    %3862 = vmatpush1.bf16.msra.mxu0 %v3203
    %3863 = vmatprep.subr.bf16.mxu0 0
    %3864 = vmatpush1.bf16.msra.mxu0 %v3210
    %3865 = vmatprep.subr.bf16.mxu0 0
    %3866 = vmatpush1.bf16.msra.mxu0 %v3217
    %3867 = vmatprep.subr.bf16.mxu0 0
    %3868 = vmatpush1.bf16.msra.mxu0 %v3224
    %3869 = vmatprep.subr.bf16.mxu0 0
    %3870 = vmatpush1.bf16.msra.mxu0 %v3231
    %3871 = vmatprep.subr.bf16.mxu0 0
    %3872 = vmatpush1.bf16.msra.mxu0 %v3238
    %3873 = vmatprep.subr.bf16.mxu0 0
    %3874 = vmatpush1.bf16.msra.mxu0 %v3245
    %3875 = vmatprep.subr.bf16.mxu0 0
    %3876 = vmatpush1.bf16.msra.mxu0 %v3252
    %3877 = vmatprep.subr.bf16.mxu0 0
    %3878 = vmatpush1.bf16.msra.mxu0 %v3259
    %3879 = vmatprep.subr.bf16.mxu0 0
    %3880 = vmatpush1.bf16.msra.mxu0 %v3266
    %3881 = vmatprep.mubr.bf16.mxu0 %v2155
    %3882 = vmatmul.mubr.bf16.gmra.mrb[0].mxu0 %v2154
    %v3883 = vpop.f32.mrb[0].mxu0
    %v3884 = vadd.f32 %v2443, %v3883
    %v3885 = vpop.f32.mrb[0].mxu0
    %v3886 = vpop.f32.mrb[0].mxu0
    %v3887 = vpop.f32.mrb[0].mxu0
    %3888 = vdwg.mxu0
    %3889 = vmatprep.subr.bf16.mxu0 0
    %3890 = vmatpush1.bf16.msra.mxu0 %v3273
    %3891 = vmatprep.subr.bf16.mxu0 0
    %3892 = vmatpush1.bf16.msra.mxu0 %v3280
    %3893 = vmatprep.subr.bf16.mxu0 0
    %3894 = vmatpush1.bf16.msra.mxu0 %v3287
    %3895 = vmatprep.subr.bf16.mxu0 0
    %3896 = vmatpush1.bf16.msra.mxu0 %v3294
    %3897 = vmatprep.subr.bf16.mxu0 0
    %3898 = vmatpush1.bf16.msra.mxu0 %v3301
    %3899 = vmatprep.subr.bf16.mxu0 0
    %3900 = vmatpush1.bf16.msra.mxu0 %v3308
    %3901 = vmatprep.subr.bf16.mxu0 0
    %3902 = vmatpush1.bf16.msra.mxu0 %v3315
    %3903 = vmatprep.subr.bf16.mxu0 0
    %3904 = vmatpush1.bf16.msra.mxu0 %v3322
    %3905 = vmatprep.subr.bf16.mxu0 0
    %3906 = vmatpush1.bf16.msra.mxu0 %v3329
    %3907 = vmatprep.subr.bf16.mxu0 0
    %3908 = vmatpush1.bf16.msra.mxu0 %v3336
    %3909 = vmatprep.subr.bf16.mxu0 0
    %3910 = vmatpush1.bf16.msra.mxu0 %v3343
    %3911 = vmatprep.subr.bf16.mxu0 0
    %3912 = vmatpush1.bf16.msra.mxu0 %v3350
    %3913 = vmatprep.subr.bf16.mxu0 0
    %3914 = vmatpush1.bf16.msra.mxu0 %v3357
    %3915 = vmatprep.subr.bf16.mxu0 0
    %3916 = vmatpush1.bf16.msra.mxu0 %v3364
    %3917 = vmatprep.subr.bf16.mxu0 0
    %3918 = vmatpush1.bf16.msra.mxu0 %v3371
    %3919 = vmatprep.subr.bf16.mxu0 0
    %3920 = vmatpush1.bf16.msra.mxu0 %v3378
    %3921 = vmatprep.mubr.bf16.mxu0 %v2157
    %3922 = vmatmul.mubr.bf16.gmra.mrb[0].mxu0 %v2156
    %v3923 = vpop.f32.mrb[0].mxu0
    %v3924 = vadd.f32 %v3884, %v3923
    %v3925 = vpop.f32.mrb[0].mxu0
    %v3926 = vpop.f32.mrb[0].mxu0
    %v3927 = vpop.f32.mrb[0].mxu0
    %3928 = vdwg.mxu0
    %v3929 = vsub.f32 0.0, %v3679
    %v3930 = vsub.f32 0.0, %v3681
    %v3931 = vsub.f32 0.0, %v3761
    %v3932 = vsub.f32 0.0, %v3763
    %v3933 = vsub.f32 0.0, %v3843
    %v3934 = vsub.f32 0.0, %v3845
    %v3935 = vsub.f32 0.0, %v3924
    %v3936 = vmul.f32 %v3929, 1.442695
    %v3937 = vpow.pop %v3936
    %v3938 = vmul.f32 %v3930, 1.442695
    %v3939 = vpow.pop %v3938
    %v3940 = vmul.f32 %v3931, 1.442695
    %v3941 = vpow.pop %v3940
    %v3942 = vmul.f32 %v3932, 1.442695
    %v3943 = vpow.pop %v3942
    %v3944 = vmul.f32 %v3933, 1.442695
    %v3945 = vpow.pop %v3944
    %v3946 = vmul.f32 %v3934, 1.442695
    %v3947 = vpow.pop %v3946
    %v3948 = vmul.f32 %v3935, 1.442695
    %v3949 = vpow.pop %v3948
    %v3950 = vadd.f32 %v3937, 1.0
    %v3951 = vadd.f32 %v3939, 1.0
    %v3952 = vadd.f32 %v3941, 1.0
    %v3953 = vadd.f32 %v3943, 1.0
    %v3954 = vadd.f32 %v3945, 1.0
    %v3955 = vadd.f32 %v3947, 1.0
    %v3956 = vadd.f32 %v3949, 1.0
    %v3957 = vrcp.pop %v3950
    %v3958 = vrcp.pop %v3951
    %v3959 = vrcp.pop %v3952
    %v3960 = vrcp.pop %v3953
    %v3961 = vrcp.pop %v3954
    %v3962 = vrcp.pop %v3955
    %v3963 = vrcp.pop %v3956
    %v3964 = vpack.c.bf16 %v3957, %v3957
    %v3965 = vpack.c.bf16 %v3958, %v3958
    %v3966 = vpack.c.bf16 %v3959, %v3959
    %v3967 = vpack.c.bf16 %v3960, %v3960
    %v3968 = vpack.c.bf16 %v3961, %v3961
    %v3969 = vpack.c.bf16 %v3962, %v3962
    %v3970 = vpack.c.bf16 %v3963, %v3963
    %v3978 = vunpack.c.l.b16 %v3964
    %v3979 = vunpack.c.l.b16 %v3965
    %v3980 = vunpack.c.l.b16 %v3966
    %v3981 = vunpack.c.l.b16 %v3967
    %v3982 = vunpack.c.l.b16 %v3968
    %v3983 = vunpack.c.l.b16 %v3969
    %v3984 = vunpack.c.l.b16 %v3970
    %v3985 = vpack.c.b16 %v3979, %v3978
    %v3986 = vpack.c.b16 %v3981, %v3980
    %v3987 = vpack.c.b16 %v3983, %v3982
    %v3988 = vpack.c.b16 %v3984, %v3984
    %3993 = vst [vmem:[#allocation2] sm:$0xff] %v3985
    %3994 = vst [vmem:[#allocation2 + $0x8] sm:$0xff] %v3986
    %3995 = vst [vmem:[#allocation2 + $0x10] sm:$0xff] %v3987
    %vm3996 = vcmask 125952
    %3997 = vst.msk [vmem:[#allocation2 + $0x18] sm:$0xf] %vm3996, %v3988
    %3998 = vst [vmem:[#allocation4] sm:$0xff] %v1930
    // Predicated region
    $region42: #{tpu_custom_call.1} parent=1 // pred_check
      _
    $region43: #{tpu_custom_call.1} parent=1 // pred_check_branch
      %4000 = sbr.rel (0) target = $region45
    $region44: #{tpu_custom_call.1} parent=1 // pred_region
      %s4002 = ssub.s32 448, 448
      %4003 = vsyncadd [#allocation3], %s4002
      %s4005 = sshll.u32 [#allocation2], 4
      %s4006 = int_to_ptr.vmem [resolvable:$true] %s4005
      %4008 = dma.vmem_to_hbm [thread:$0]  %s4006, 448, %s10, [#allocation3]
    $region45: #{tpu_custom_call.1} parent=1 // pred_fallthru
      _
    // Predicated region
    $region46: #{tpu_custom_call.1} parent=1 // pred_check
      _
    $region47: #{tpu_custom_call.1} parent=1 // pred_check_branch
      %4010 = sbr.rel (0) target = $region49
    $region48: #{tpu_custom_call.1} parent=1 // pred_region
      %s4012 = ssub.s32 128, 128
      %4013 = vsyncadd [#allocation5], %s4012
      %s4015 = sshll.u32 [#allocation4], 4
      %s4016 = int_to_ptr.vmem [resolvable:$true] %s4015
      %4018 = dma.vmem_to_hbm [thread:$0]  %s4016, 128, %s11, [#allocation5]
    $region49: #{tpu_custom_call.1} parent=1 // pred_fallthru
      _
    // Predicated region
    $region50: #{tpu_custom_call.1} parent=1 // pred_check
      _
    $region51: #{tpu_custom_call.1} parent=1 // pred_check_branch
      %4020 = sbr.rel (0) target = $region53
    $region52: #{tpu_custom_call.1} parent=1 // pred_region
      %4021 = dma.done [#allocation3], 448
    $region53: #{tpu_custom_call.1} parent=1 // pred_fallthru
      _
    // Predicated region
    $region54: #{tpu_custom_call.1} parent=1 // pred_check
      _
    $region55: #{tpu_custom_call.1} parent=1 // pred_check_branch
      %4023 = sbr.rel (0) target = $region57
    $region56: #{tpu_custom_call.1} parent=1 // pred_region
      %4024 = dma.done [#allocation5], 128
    $region57: #{tpu_custom_call.1} parent=1 // pred_fallthru
      _
    %4025 = vsyncpa [#allocation3], 1
    %4026 = vsyncpa [#allocation5], 1

// kernel: tpu_custom_call.1
$region0: #{tpu_custom_call.1}
  #allocation0 [shape = 'u32[]', space=smem, size = 0x4, offset = 0x4, fixed_abs, tag = 'smem constant byte address 0x4 - core index']
  #allocation1 [shape = 'u32[144,128]{1,0:T(1,128)}', space=vmem, size = 0x12000, scoped, tag = 'internal scratch']
  %s0 = inlined_call_operand.vmem [shape: f32[8,784], index: 0, kind: input, shape index: {}]
  %s1 = inlined_call_operand.vmem [shape: f32[8,64], index: 1, kind: input, shape index: {}]
  %s2 = inlined_call_operand.vmem [shape: bf16[784,512], index: 2, kind: input, shape index: {}]
  %s3 = inlined_call_operand.vmem [shape: f32[1,512], index: 3, kind: input, shape index: {}]
  %s4 = inlined_call_operand.vmem [shape: bf16[512,128], index: 4, kind: input, shape index: {}]
  %s5 = inlined_call_operand.vmem [shape: f32[1,128], index: 5, kind: input, shape index: {}]
  %s6 = inlined_call_operand.vmem [shape: bf16[64,512], index: 6, kind: input, shape index: {}]
  %s7 = inlined_call_operand.vmem [shape: f32[1,512], index: 7, kind: input, shape index: {}]
  %s8 = inlined_call_operand.vmem [shape: bf16[512,784], index: 8, kind: input, shape index: {}]
  %s9 = inlined_call_operand.vmem [shape: f32[1,784], index: 9, kind: input, shape index: {}]
  %s10 = inlined_call_operand.hbm [shape: bf16[8,784], index: 10, kind: output, shape index: {0}]
  %s11 = inlined_call_operand.hbm [shape: f32[8,128], index: 11, kind: output, shape index: {1}]
  %12 = xla_tuple %s10, %s11
  %s13 = sld [smem:[#allocation0]]
  $region58: #{tpu_custom_call.1} parent=0
    _
  %s15 = ssub.s32 1, %s13
  %s16 = scalar_select 0, %s15, %s13
  $region1: #{tpu_custom_call.1} parent=0
    #allocation2 [shape = 'u8[14336]{0}', space=vmem, size = 0x3800, scoped, tag = 'output window, operand 0, single buffered']
    #allocation3 [shape = 's32[1]{0}', space=sflag, size = 0x4, scoped, tag = 'scoped memory for tpu_custom_call.1']
    #allocation4 [shape = 'u8[4096]{0}', space=vmem, size = 0x1000, scoped, tag = 'output window, operand 1, single buffered']
    #allocation5 [shape = 's32[1]{0}', space=sflag, size = 0x4, scoped, tag = 'scoped memory for tpu_custom_call.1']
    %17 = vsyncpa [#allocation3], 0
    %18 = vsyncpa [#allocation5], 0
    // Predicated region
    $region2: #{tpu_custom_call.1} parent=1 // pred_check
      _
    $region3: #{tpu_custom_call.1} parent=1 // pred_check_branch
      %20 = sbr.rel (0) target = $region5
    $region4: #{tpu_custom_call.1} parent=1 // pred_region
      _
    $region5: #{tpu_custom_call.1} parent=1 // pred_fallthru
      _
    // Predicated region
    $region6: #{tpu_custom_call.1} parent=1 // pred_check
      _
    $region7: #{tpu_custom_call.1} parent=1 // pred_check_branch
      %22 = sbr.rel (0) target = $region9
    $region8: #{tpu_custom_call.1} parent=1 // pred_region
      _
    $region9: #{tpu_custom_call.1} parent=1 // pred_fallthru
      _
    // Predicated region
    $region10: #{tpu_custom_call.1} parent=1 // pred_check
      _
    $region11: #{tpu_custom_call.1} parent=1 // pred_check_branch
      %24 = sbr.rel (0) target = $region13
    $region12: #{tpu_custom_call.1} parent=1 // pred_region
      _
    $region13: #{tpu_custom_call.1} parent=1 // pred_fallthru
      _
    // Predicated region
    $region14: #{tpu_custom_call.1} parent=1 // pred_check
      _
    $region15: #{tpu_custom_call.1} parent=1 // pred_check_branch
      %26 = sbr.rel (0) target = $region17
    $region16: #{tpu_custom_call.1} parent=1 // pred_region
      _
    $region17: #{tpu_custom_call.1} parent=1 // pred_fallthru
      _
    // Predicated region
    $region18: #{tpu_custom_call.1} parent=1 // pred_check
      _
    $region19: #{tpu_custom_call.1} parent=1 // pred_check_branch
      %28 = sbr.rel (0) target = $region21
    $region20: #{tpu_custom_call.1} parent=1 // pred_region
      _
    $region21: #{tpu_custom_call.1} parent=1 // pred_fallthru
      _
    // Predicated region
    $region22: #{tpu_custom_call.1} parent=1 // pred_check
      _
    $region23: #{tpu_custom_call.1} parent=1 // pred_check_branch
      %30 = sbr.rel (0) target = $region25
    $region24: #{tpu_custom_call.1} parent=1 // pred_region
      _
    $region25: #{tpu_custom_call.1} parent=1 // pred_fallthru
      _
    // Predicated region
    $region26: #{tpu_custom_call.1} parent=1 // pred_check
      _
    $region27: #{tpu_custom_call.1} parent=1 // pred_check_branch
      %32 = sbr.rel (0) target = $region29
    $region28: #{tpu_custom_call.1} parent=1 // pred_region
      _
    $region29: #{tpu_custom_call.1} parent=1 // pred_fallthru
      _
    // Predicated region
    $region30: #{tpu_custom_call.1} parent=1 // pred_check
      _
    $region31: #{tpu_custom_call.1} parent=1 // pred_check_branch
      %34 = sbr.rel (0) target = $region33
    $region32: #{tpu_custom_call.1} parent=1 // pred_region
      _
    $region33: #{tpu_custom_call.1} parent=1 // pred_fallthru
      _
    // Predicated region
    $region34: #{tpu_custom_call.1} parent=1 // pred_check
      _
    $region35: #{tpu_custom_call.1} parent=1 // pred_check_branch
      %36 = sbr.rel (0) target = $region37
    $region36: #{tpu_custom_call.1} parent=1 // pred_region
      _
    $region37: #{tpu_custom_call.1} parent=1 // pred_fallthru
      _
    // Predicated region
    $region38: #{tpu_custom_call.1} parent=1 // pred_check
      _
    $region39: #{tpu_custom_call.1} parent=1 // pred_check_branch
      %38 = sbr.rel (0) target = $region41
    $region40: #{tpu_custom_call.1} parent=1 // pred_region
      _
    $region41: #{tpu_custom_call.1} parent=1 // pred_fallthru
      _
    %v40 = vld [vmem:[%s0] sm:$0xff]
    %v41 = vld [vmem:[%s0 + $0x8] sm:$0xff]
    %v42 = vld [vmem:[%s0 + $0x10] sm:$0xff]
    %v43 = vld [vmem:[%s0 + $0x18] sm:$0xff]
    %v44 = vld [vmem:[%s0 + $0x20] sm:$0xff]
    %v45 = vld [vmem:[%s0 + $0x28] sm:$0xff]
    %v46 = vld [vmem:[%s0 + $0x30] sm:$0xff]
    %v47 = vpack.c.bf16 %v40, %v40
    %v48 = vpack.c.bf16 %v41, %v41
    %v49 = vpack.c.bf16 %v42, %v42
    %v50 = vpack.c.bf16 %v43, %v43
    %v51 = vpack.c.bf16 %v44, %v44
    %v52 = vpack.c.bf16 %v45, %v45
    %v53 = vpack.c.bf16 %v46, %v46
    %v54 = vld [vmem:[%s2] sm:$0xff]
    %v55 = vld [vmem:[%s2 + $0x8] sm:$0xff]
    %v56 = vld [vmem:[%s2 + $0x10] sm:$0xff]
    %v57 = vld [vmem:[%s2 + $0x18] sm:$0xff]
    %v58 = vld [vmem:[%s2 + $0x20] sm:$0xff]
    %v59 = vld [vmem:[%s2 + $0x28] sm:$0xff]
    %v60 = vld [vmem:[%s2 + $0x30] sm:$0xff]
    %v61 = vld [vmem:[%s2 + $0x38] sm:$0xff]
    %v62 = vld [vmem:[%s2 + $0x40] sm:$0xff]
    %v63 = vld [vmem:[%s2 + $0x48] sm:$0xff]
    %v64 = vld [vmem:[%s2 + $0x50] sm:$0xff]
    %v65 = vld [vmem:[%s2 + $0x58] sm:$0xff]
    %v66 = vld [vmem:[%s2 + $0x60] sm:$0xff]
    %v67 = vld [vmem:[%s2 + $0x68] sm:$0xff]
    %v68 = vld [vmem:[%s2 + $0x70] sm:$0xff]
    %v69 = vld [vmem:[%s2 + $0x78] sm:$0xff]
    %v70 = vld [vmem:[%s2 + $0x80] sm:$0xff]
    %v71 = vld [vmem:[%s2 + $0x88] sm:$0xff]
    %v72 = vld [vmem:[%s2 + $0x90] sm:$0xff]
    %v73 = vld [vmem:[%s2 + $0x98] sm:$0xff]
    %v74 = vld [vmem:[%s2 + $0xa0] sm:$0xff]
    %v75 = vld [vmem:[%s2 + $0xa8] sm:$0xff]
    %v76 = vld [vmem:[%s2 + $0xb0] sm:$0xff]
    %v77 = vld [vmem:[%s2 + $0xb8] sm:$0xff]
    %v78 = vld [vmem:[%s2 + $0xc0] sm:$0xff]
    %v79 = vld [vmem:[%s2 + $0xc8] sm:$0xff]
    %v80 = vld [vmem:[%s2 + $0xd0] sm:$0xff]
    %v81 = vld [vmem:[%s2 + $0xd8] sm:$0xff]
    %v82 = vld [vmem:[%s2 + $0xe0] sm:$0xff]
    %v83 = vld [vmem:[%s2 + $0xe8] sm:$0xff]
    %v84 = vld [vmem:[%s2 + $0xf0] sm:$0xff]
    %v85 = vld [vmem:[%s2 + $0xf8] sm:$0xff]
    %v86 = vld [vmem:[%s2 + $0x100] sm:$0xff]
    %v87 = vld [vmem:[%s2 + $0x108] sm:$0xff]
    %v88 = vld [vmem:[%s2 + $0x110] sm:$0xff]
    %v89 = vld [vmem:[%s2 + $0x118] sm:$0xff]
    %v90 = vld [vmem:[%s2 + $0x120] sm:$0xff]
    %v91 = vld [vmem:[%s2 + $0x128] sm:$0xff]
    %v92 = vld [vmem:[%s2 + $0x130] sm:$0xff]
    %v93 = vld [vmem:[%s2 + $0x138] sm:$0xff]
    %v94 = vld [vmem:[%s2 + $0x140] sm:$0xff]
    %v95 = vld [vmem:[%s2 + $0x148] sm:$0xff]
    %v96 = vld [vmem:[%s2 + $0x150] sm:$0xff]
    %v97 = vld [vmem:[%s2 + $0x158] sm:$0xff]
    %v98 = vld [vmem:[%s2 + $0x160] sm:$0xff]
    %v99 = vld [vmem:[%s2 + $0x168] sm:$0xff]
    %v100 = vld [vmem:[%s2 + $0x170] sm:$0xff]
    %v101 = vld [vmem:[%s2 + $0x178] sm:$0xff]
    %v102 = vld [vmem:[%s2 + $0x180] sm:$0xff]
    %v103 = vld [vmem:[%s2 + $0x188] sm:$0xff]
    %v104 = vld [vmem:[%s2 + $0x190] sm:$0xff]
    %v105 = vld [vmem:[%s2 + $0x198] sm:$0xff]
    %v106 = vld [vmem:[%s2 + $0x1a0] sm:$0xff]
    %v107 = vld [vmem:[%s2 + $0x1a8] sm:$0xff]
    %v108 = vld [vmem:[%s2 + $0x1b0] sm:$0xff]
    %v109 = vld [vmem:[%s2 + $0x1b8] sm:$0xff]
    %v110 = vld [vmem:[%s2 + $0x1c0] sm:$0xff]
    %v111 = vld [vmem:[%s2 + $0x1c8] sm:$0xff]
    %v112 = vld [vmem:[%s2 + $0x1d0] sm:$0xff]
    %v113 = vld [vmem:[%s2 + $0x1d8] sm:$0xff]
    %v114 = vld [vmem:[%s2 + $0x1e0] sm:$0xff]
    %v115 = vld [vmem:[%s2 + $0x1e8] sm:$0xff]
    %v116 = vld [vmem:[%s2 + $0x1f0] sm:$0xff]
    %v117 = vld [vmem:[%s2 + $0x1f8] sm:$0xff]
    %v118 = vld [vmem:[%s2 + $0x200] sm:$0xff]
    %v119 = vld [vmem:[%s2 + $0x208] sm:$0xff]
    %v120 = vld [vmem:[%s2 + $0x210] sm:$0xff]
    %v121 = vld [vmem:[%s2 + $0x218] sm:$0xff]
    %v122 = vld [vmem:[%s2 + $0x220] sm:$0xff]
    %v123 = vld [vmem:[%s2 + $0x228] sm:$0xff]
    %v124 = vld [vmem:[%s2 + $0x230] sm:$0xff]
    %v125 = vld [vmem:[%s2 + $0x238] sm:$0xff]
    %v126 = vld [vmem:[%s2 + $0x240] sm:$0xff]
    %v127 = vld [vmem:[%s2 + $0x248] sm:$0xff]
    %v128 = vld [vmem:[%s2 + $0x250] sm:$0xff]
    %v129 = vld [vmem:[%s2 + $0x258] sm:$0xff]
    %v130 = vld [vmem:[%s2 + $0x260] sm:$0xff]
    %v131 = vld [vmem:[%s2 + $0x268] sm:$0xff]
    %v132 = vld [vmem:[%s2 + $0x270] sm:$0xff]
    %v133 = vld [vmem:[%s2 + $0x278] sm:$0xff]
    %v134 = vld [vmem:[%s2 + $0x280] sm:$0xff]
    %v135 = vld [vmem:[%s2 + $0x288] sm:$0xff]
    %v136 = vld [vmem:[%s2 + $0x290] sm:$0xff]
    %v137 = vld [vmem:[%s2 + $0x298] sm:$0xff]
    %v138 = vld [vmem:[%s2 + $0x2a0] sm:$0xff]
    %v139 = vld [vmem:[%s2 + $0x2a8] sm:$0xff]
    %v140 = vld [vmem:[%s2 + $0x2b0] sm:$0xff]
    %v141 = vld [vmem:[%s2 + $0x2b8] sm:$0xff]
    %v142 = vld [vmem:[%s2 + $0x2c0] sm:$0xff]
    %v143 = vld [vmem:[%s2 + $0x2c8] sm:$0xff]
    %v144 = vld [vmem:[%s2 + $0x2d0] sm:$0xff]
    %v145 = vld [vmem:[%s2 + $0x2d8] sm:$0xff]
    %v146 = vld [vmem:[%s2 + $0x2e0] sm:$0xff]
    %v147 = vld [vmem:[%s2 + $0x2e8] sm:$0xff]
    %v148 = vld [vmem:[%s2 + $0x2f0] sm:$0xff]
    %v149 = vld [vmem:[%s2 + $0x2f8] sm:$0xff]
    %v150 = vld [vmem:[%s2 + $0x300] sm:$0xff]
    %v151 = vld [vmem:[%s2 + $0x308] sm:$0xff]
    %v152 = vld [vmem:[%s2 + $0x310] sm:$0xff]
    %v153 = vld [vmem:[%s2 + $0x318] sm:$0xff]
    %v154 = vld [vmem:[%s2 + $0x320] sm:$0xff]
    %v155 = vld [vmem:[%s2 + $0x328] sm:$0xff]
    %v156 = vld [vmem:[%s2 + $0x330] sm:$0xff]
    %v157 = vld [vmem:[%s2 + $0x338] sm:$0xff]
    %v158 = vld [vmem:[%s2 + $0x340] sm:$0xff]
    %v159 = vld [vmem:[%s2 + $0x348] sm:$0xff]
    %v160 = vld [vmem:[%s2 + $0x350] sm:$0xff]
    %v161 = vld [vmem:[%s2 + $0x358] sm:$0xff]
    %v162 = vld [vmem:[%s2 + $0x360] sm:$0xff]
    %v163 = vld [vmem:[%s2 + $0x368] sm:$0xff]
    %v164 = vld [vmem:[%s2 + $0x370] sm:$0xff]
    %v165 = vld [vmem:[%s2 + $0x378] sm:$0xff]
    %v166 = vld [vmem:[%s2 + $0x380] sm:$0xff]
    %v167 = vld [vmem:[%s2 + $0x388] sm:$0xff]
    %v168 = vld [vmem:[%s2 + $0x390] sm:$0xff]
    %v169 = vld [vmem:[%s2 + $0x398] sm:$0xff]
    %v170 = vld [vmem:[%s2 + $0x3a0] sm:$0xff]
    %v171 = vld [vmem:[%s2 + $0x3a8] sm:$0xff]
    %v172 = vld [vmem:[%s2 + $0x3b0] sm:$0xff]
    %v173 = vld [vmem:[%s2 + $0x3b8] sm:$0xff]
    %v174 = vld [vmem:[%s2 + $0x3c0] sm:$0xff]
    %v175 = vld [vmem:[%s2 + $0x3c8] sm:$0xff]
    %v176 = vld [vmem:[%s2 + $0x3d0] sm:$0xff]
    %v177 = vld [vmem:[%s2 + $0x3d8] sm:$0xff]
    %v178 = vld [vmem:[%s2 + $0x3e0] sm:$0xff]
    %v179 = vld [vmem:[%s2 + $0x3e8] sm:$0xff]
    %v180 = vld [vmem:[%s2 + $0x3f0] sm:$0xff]
    %v181 = vld [vmem:[%s2 + $0x3f8] sm:$0xff]
    %v182 = vld [vmem:[%s2 + $0x400] sm:$0xff]
    %v183 = vld [vmem:[%s2 + $0x408] sm:$0xff]
    %v184 = vld [vmem:[%s2 + $0x410] sm:$0xff]
    %v185 = vld [vmem:[%s2 + $0x418] sm:$0xff]
    %v186 = vld [vmem:[%s2 + $0x420] sm:$0xff]
    %v187 = vld [vmem:[%s2 + $0x428] sm:$0xff]
    %v188 = vld [vmem:[%s2 + $0x430] sm:$0xff]
    %v189 = vld [vmem:[%s2 + $0x438] sm:$0xff]
    %v190 = vld [vmem:[%s2 + $0x440] sm:$0xff]
    %v191 = vld [vmem:[%s2 + $0x448] sm:$0xff]
    %v192 = vld [vmem:[%s2 + $0x450] sm:$0xff]
    %v193 = vld [vmem:[%s2 + $0x458] sm:$0xff]
    %v194 = vld [vmem:[%s2 + $0x460] sm:$0xff]
    %v195 = vld [vmem:[%s2 + $0x468] sm:$0xff]
    %v196 = vld [vmem:[%s2 + $0x470] sm:$0xff]
    %v197 = vld [vmem:[%s2 + $0x478] sm:$0xff]
    %v198 = vld [vmem:[%s2 + $0x480] sm:$0xff]
    %v199 = vld [vmem:[%s2 + $0x488] sm:$0xff]
    %v200 = vld [vmem:[%s2 + $0x490] sm:$0xff]
    %v201 = vld [vmem:[%s2 + $0x498] sm:$0xff]
    %v202 = vld [vmem:[%s2 + $0x4a0] sm:$0xff]
    %v203 = vld [vmem:[%s2 + $0x4a8] sm:$0xff]
    %v204 = vld [vmem:[%s2 + $0x4b0] sm:$0xff]
    %v205 = vld [vmem:[%s2 + $0x4b8] sm:$0xff]
    %v206 = vld [vmem:[%s2 + $0x4c0] sm:$0xff]
    %v207 = vld [vmem:[%s2 + $0x4c8] sm:$0xff]
    %v208 = vld [vmem:[%s2 + $0x4d0] sm:$0xff]
    %v209 = vld [vmem:[%s2 + $0x4d8] sm:$0xff]
    %v210 = vld [vmem:[%s2 + $0x4e0] sm:$0xff]
    %v211 = vld [vmem:[%s2 + $0x4e8] sm:$0xff]
    %v212 = vld [vmem:[%s2 + $0x4f0] sm:$0xff]
    %v213 = vld [vmem:[%s2 + $0x4f8] sm:$0xff]
    %v214 = vld [vmem:[%s2 + $0x500] sm:$0xff]
    %v215 = vld [vmem:[%s2 + $0x508] sm:$0xff]
    %v216 = vld [vmem:[%s2 + $0x510] sm:$0xff]
    %v217 = vld [vmem:[%s2 + $0x518] sm:$0xff]
    %v218 = vld [vmem:[%s2 + $0x520] sm:$0xff]
    %v219 = vld [vmem:[%s2 + $0x528] sm:$0xff]
    %v220 = vld [vmem:[%s2 + $0x530] sm:$0xff]
    %v221 = vld [vmem:[%s2 + $0x538] sm:$0xff]
    %v222 = vld [vmem:[%s2 + $0x540] sm:$0xff]
    %v223 = vld [vmem:[%s2 + $0x548] sm:$0xff]
    %v224 = vld [vmem:[%s2 + $0x550] sm:$0xff]
    %v225 = vld [vmem:[%s2 + $0x558] sm:$0xff]
    %v226 = vld [vmem:[%s2 + $0x560] sm:$0xff]
    %v227 = vld [vmem:[%s2 + $0x568] sm:$0xff]
    %v228 = vld [vmem:[%s2 + $0x570] sm:$0xff]
    %v229 = vld [vmem:[%s2 + $0x578] sm:$0xff]
    %v230 = vld [vmem:[%s2 + $0x580] sm:$0xff]
    %v231 = vld [vmem:[%s2 + $0x588] sm:$0xff]
    %v232 = vld [vmem:[%s2 + $0x590] sm:$0xff]
    %v233 = vld [vmem:[%s2 + $0x598] sm:$0xff]
    %v234 = vld [vmem:[%s2 + $0x5a0] sm:$0xff]
    %v235 = vld [vmem:[%s2 + $0x5a8] sm:$0xff]
    %v236 = vld [vmem:[%s2 + $0x5b0] sm:$0xff]
    %v237 = vld [vmem:[%s2 + $0x5b8] sm:$0xff]
    %v238 = vld [vmem:[%s2 + $0x5c0] sm:$0xff]
    %v239 = vld [vmem:[%s2 + $0x5c8] sm:$0xff]
    %v240 = vld [vmem:[%s2 + $0x5d0] sm:$0xff]
    %v241 = vld [vmem:[%s2 + $0x5d8] sm:$0xff]
    %v242 = vld [vmem:[%s2 + $0x5e0] sm:$0xff]
    %v243 = vld [vmem:[%s2 + $0x5e8] sm:$0xff]
    %v244 = vld [vmem:[%s2 + $0x5f0] sm:$0xff]
    %v245 = vld [vmem:[%s2 + $0x5f8] sm:$0xff]
    %v246 = vld [vmem:[%s2 + $0x600] sm:$0xff]
    %v247 = vld [vmem:[%s2 + $0x608] sm:$0xff]
    %v248 = vld [vmem:[%s2 + $0x610] sm:$0xff]
    %v249 = vld [vmem:[%s2 + $0x618] sm:$0xff]
    %v250 = vld [vmem:[%s3] sm:$0xf]
    %v252 = vlaneseq
    %v253 = vshrl.u32 %v252, 7
    %v254 = vsub.s32 0, %v253
    %v255 = vrot.slane %v250, %v254
    %v256 = vlaneseq
    %v257 = vshrl.u32 %v256, 7
    %v258 = vsub.s32 1, %v257
    %v259 = vrot.slane %v250, %v258
    %v260 = vlaneseq
    %v261 = vshrl.u32 %v260, 7
    %v262 = vsub.s32 2, %v261
    %v263 = vrot.slane %v250, %v262
    %v264 = vlaneseq
    %v265 = vshrl.u32 %v264, 7
    %v266 = vsub.s32 3, %v265
    %v267 = vrot.slane %v250, %v266
    %v468 = vunpack.c.l.b16 %v54
    %v469 = vunpack.c.h.b16 %v54
    %v470 = vunpack.c.l.b16 %v55
    %v471 = vunpack.c.h.b16 %v55
    %v472 = vunpack.c.l.b16 %v56
    %v473 = vunpack.c.h.b16 %v56
    %v474 = vunpack.c.l.b16 %v57
    %v475 = vunpack.c.h.b16 %v57
    %v476 = vunpack.c.l.b16 %v58
    %v477 = vunpack.c.h.b16 %v58
    %v478 = vunpack.c.l.b16 %v59
    %v479 = vunpack.c.h.b16 %v59
    %v480 = vunpack.c.l.b16 %v60
    %v481 = vunpack.c.h.b16 %v60
    %v482 = vunpack.c.l.b16 %v61
    %v483 = vunpack.c.h.b16 %v61
    %v484 = vunpack.c.l.b16 %v62
    %v485 = vunpack.c.h.b16 %v62
    %v486 = vunpack.c.l.b16 %v63
    %v487 = vunpack.c.h.b16 %v63
    %v488 = vunpack.c.l.b16 %v64
    %v489 = vunpack.c.h.b16 %v64
    %v490 = vunpack.c.l.b16 %v65
    %v491 = vunpack.c.h.b16 %v65
    %v492 = vunpack.c.l.b16 %v66
    %v493 = vunpack.c.h.b16 %v66
    %v494 = vunpack.c.l.b16 %v67
    %v495 = vunpack.c.h.b16 %v67
    %v496 = vunpack.c.l.b16 %v68
    %v497 = vunpack.c.h.b16 %v68
    %v498 = vunpack.c.l.b16 %v69
    %v499 = vunpack.c.h.b16 %v69
    %v500 = vunpack.c.l.b16 %v70
    %v501 = vunpack.c.h.b16 %v70
    %v502 = vunpack.c.l.b16 %v71
    %v503 = vunpack.c.h.b16 %v71
    %v504 = vunpack.c.l.b16 %v72
    %v505 = vunpack.c.h.b16 %v72
    %v506 = vunpack.c.l.b16 %v73
    %v507 = vunpack.c.h.b16 %v73
    %v508 = vunpack.c.l.b16 %v74
    %v509 = vunpack.c.h.b16 %v74
    %v510 = vunpack.c.l.b16 %v75
    %v511 = vunpack.c.h.b16 %v75
    %v512 = vunpack.c.l.b16 %v76
    %v513 = vunpack.c.h.b16 %v76
    %v514 = vunpack.c.l.b16 %v77
    %v515 = vunpack.c.h.b16 %v77
    %v516 = vunpack.c.l.b16 %v78
    %v517 = vunpack.c.h.b16 %v78
    %v518 = vunpack.c.l.b16 %v79
    %v519 = vunpack.c.h.b16 %v79
    %v520 = vunpack.c.l.b16 %v80
    %v521 = vunpack.c.h.b16 %v80
    %v522 = vunpack.c.l.b16 %v81
    %v523 = vunpack.c.h.b16 %v81
    %v524 = vunpack.c.l.b16 %v82
    %v525 = vunpack.c.h.b16 %v82
    %v526 = vunpack.c.l.b16 %v83
    %v527 = vunpack.c.h.b16 %v83
    %v528 = vunpack.c.l.b16 %v84
    %v529 = vunpack.c.h.b16 %v84
    %v530 = vunpack.c.l.b16 %v85
    %v531 = vunpack.c.h.b16 %v85
    %v532 = vunpack.c.l.b16 %v86
    %v533 = vunpack.c.h.b16 %v86
    %v534 = vunpack.c.l.b16 %v87
    %v535 = vunpack.c.h.b16 %v87
    %v536 = vunpack.c.l.b16 %v88
    %v537 = vunpack.c.h.b16 %v88
    %v538 = vunpack.c.l.b16 %v89
    %v539 = vunpack.c.h.b16 %v89
    %v540 = vunpack.c.l.b16 %v90
    %v541 = vunpack.c.h.b16 %v90
    %v542 = vunpack.c.l.b16 %v91
    %v543 = vunpack.c.h.b16 %v91
    %v544 = vunpack.c.l.b16 %v92
    %v545 = vunpack.c.h.b16 %v92
    %v546 = vunpack.c.l.b16 %v93
    %v547 = vunpack.c.h.b16 %v93
    %v548 = vunpack.c.l.b16 %v94
    %v549 = vunpack.c.h.b16 %v94
    %v550 = vunpack.c.l.b16 %v95
    %v551 = vunpack.c.h.b16 %v95
    %v552 = vunpack.c.l.b16 %v96
    %v553 = vunpack.c.h.b16 %v96
    %v554 = vunpack.c.l.b16 %v97
    %v555 = vunpack.c.h.b16 %v97
    %v556 = vunpack.c.l.b16 %v98
    %v557 = vunpack.c.h.b16 %v98
    %v558 = vunpack.c.l.b16 %v99
    %v559 = vunpack.c.h.b16 %v99
    %v560 = vunpack.c.l.b16 %v100
    %v561 = vunpack.c.h.b16 %v100
    %v562 = vunpack.c.l.b16 %v101
    %v563 = vunpack.c.h.b16 %v101
    %v564 = vunpack.c.l.b16 %v102
    %v565 = vunpack.c.h.b16 %v102
    %v566 = vunpack.c.l.b16 %v103
    %v567 = vunpack.c.h.b16 %v103
    %v568 = vunpack.c.l.b16 %v104
    %v569 = vunpack.c.h.b16 %v104
    %v570 = vunpack.c.l.b16 %v105
    %v571 = vunpack.c.h.b16 %v105
    %v572 = vunpack.c.l.b16 %v106
    %v573 = vunpack.c.h.b16 %v106
    %v574 = vunpack.c.l.b16 %v107
    %v575 = vunpack.c.h.b16 %v107
    %v576 = vunpack.c.l.b16 %v108
    %v577 = vunpack.c.h.b16 %v108
    %v578 = vunpack.c.l.b16 %v109
    %v579 = vunpack.c.h.b16 %v109
    %v580 = vunpack.c.l.b16 %v110
    %v581 = vunpack.c.h.b16 %v110
    %v582 = vunpack.c.l.b16 %v111
    %v583 = vunpack.c.h.b16 %v111
    %v584 = vunpack.c.l.b16 %v112
    %v585 = vunpack.c.h.b16 %v112
    %v586 = vunpack.c.l.b16 %v113
    %v587 = vunpack.c.h.b16 %v113
    %v588 = vunpack.c.l.b16 %v114
    %v589 = vunpack.c.h.b16 %v114
    %v590 = vunpack.c.l.b16 %v115
    %v591 = vunpack.c.h.b16 %v115
    %v592 = vunpack.c.l.b16 %v116
    %v593 = vunpack.c.h.b16 %v116
    %v594 = vunpack.c.l.b16 %v117
    %v595 = vunpack.c.h.b16 %v117
    %v596 = vunpack.c.l.b16 %v118
    %v597 = vunpack.c.h.b16 %v118
    %v598 = vunpack.c.l.b16 %v119
    %v599 = vunpack.c.h.b16 %v119
    %v600 = vunpack.c.l.b16 %v120
    %v601 = vunpack.c.h.b16 %v120
    %v602 = vunpack.c.l.b16 %v121
    %v603 = vunpack.c.h.b16 %v121
    %v604 = vunpack.c.l.b16 %v122
    %v605 = vunpack.c.h.b16 %v122
    %v606 = vunpack.c.l.b16 %v123
    %v607 = vunpack.c.h.b16 %v123
    %v608 = vunpack.c.l.b16 %v124
    %v609 = vunpack.c.h.b16 %v124
    %v610 = vunpack.c.l.b16 %v125
    %v611 = vunpack.c.h.b16 %v125
    %v612 = vunpack.c.l.b16 %v126
    %v613 = vunpack.c.h.b16 %v126
    %v614 = vunpack.c.l.b16 %v127
    %v615 = vunpack.c.h.b16 %v127
    %v616 = vunpack.c.l.b16 %v128
    %v617 = vunpack.c.h.b16 %v128
    %v618 = vunpack.c.l.b16 %v129
    %v619 = vunpack.c.h.b16 %v129
    %v620 = vunpack.c.l.b16 %v130
    %v621 = vunpack.c.h.b16 %v130
    %v622 = vunpack.c.l.b16 %v131
    %v623 = vunpack.c.h.b16 %v131
    %v624 = vunpack.c.l.b16 %v132
    %v625 = vunpack.c.h.b16 %v132
    %v626 = vunpack.c.l.b16 %v133
    %v627 = vunpack.c.h.b16 %v133
    %v628 = vunpack.c.l.b16 %v134
    %v629 = vunpack.c.h.b16 %v134
    %v630 = vunpack.c.l.b16 %v135
    %v631 = vunpack.c.h.b16 %v135
    %v632 = vunpack.c.l.b16 %v136
    %v633 = vunpack.c.h.b16 %v136
    %v634 = vunpack.c.l.b16 %v137
    %v635 = vunpack.c.h.b16 %v137
    %v636 = vunpack.c.l.b16 %v138
    %v637 = vunpack.c.h.b16 %v138
    %v638 = vunpack.c.l.b16 %v139
    %v639 = vunpack.c.h.b16 %v139
    %v640 = vunpack.c.l.b16 %v140
    %v641 = vunpack.c.h.b16 %v140
    %v642 = vunpack.c.l.b16 %v141
    %v643 = vunpack.c.h.b16 %v141
    %v644 = vunpack.c.l.b16 %v142
    %v645 = vunpack.c.h.b16 %v142
    %v646 = vunpack.c.l.b16 %v143
    %v647 = vunpack.c.h.b16 %v143
    %v648 = vunpack.c.l.b16 %v144
    %v649 = vunpack.c.h.b16 %v144
    %v650 = vunpack.c.l.b16 %v145
    %v651 = vunpack.c.h.b16 %v145
    %v652 = vunpack.c.l.b16 %v146
    %v653 = vunpack.c.h.b16 %v146
    %v654 = vunpack.c.l.b16 %v147
    %v655 = vunpack.c.h.b16 %v147
    %v656 = vunpack.c.l.b16 %v148
    %v657 = vunpack.c.h.b16 %v148
    %v658 = vunpack.c.l.b16 %v149
    %v659 = vunpack.c.h.b16 %v149
    %v660 = vunpack.c.l.b16 %v150
    %v661 = vunpack.c.h.b16 %v150
    %v662 = vunpack.c.l.b16 %v151
    %v663 = vunpack.c.h.b16 %v151
    %v664 = vunpack.c.l.b16 %v152
    %v665 = vunpack.c.h.b16 %v152
    %v666 = vunpack.c.l.b16 %v153
    %v667 = vunpack.c.h.b16 %v153
    %v668 = vunpack.c.l.b16 %v154
    %v669 = vunpack.c.h.b16 %v154
    %v670 = vunpack.c.l.b16 %v155
    %v671 = vunpack.c.h.b16 %v155
    %v672 = vunpack.c.l.b16 %v156
    %v673 = vunpack.c.h.b16 %v156
    %v674 = vunpack.c.l.b16 %v157
    %v675 = vunpack.c.h.b16 %v157
    %v676 = vunpack.c.l.b16 %v158
    %v677 = vunpack.c.h.b16 %v158
    %v678 = vunpack.c.l.b16 %v159
    %v679 = vunpack.c.h.b16 %v159
    %v680 = vunpack.c.l.b16 %v160
    %v681 = vunpack.c.h.b16 %v160
    %v682 = vunpack.c.l.b16 %v161
    %v683 = vunpack.c.h.b16 %v161
    %v684 = vunpack.c.l.b16 %v162
    %v685 = vunpack.c.h.b16 %v162
    %v686 = vunpack.c.l.b16 %v163
    %v687 = vunpack.c.h.b16 %v163
    %v688 = vunpack.c.l.b16 %v164
    %v689 = vunpack.c.h.b16 %v164
    %v690 = vunpack.c.l.b16 %v165
    %v691 = vunpack.c.h.b16 %v165
    %v692 = vunpack.c.l.b16 %v166
    %v693 = vunpack.c.h.b16 %v166
    %v694 = vunpack.c.l.b16 %v167
    %v695 = vunpack.c.h.b16 %v167
    %v696 = vunpack.c.l.b16 %v168
    %v697 = vunpack.c.h.b16 %v168
    %v698 = vunpack.c.l.b16 %v169
    %v699 = vunpack.c.h.b16 %v169
    %v700 = vunpack.c.l.b16 %v170
    %v701 = vunpack.c.h.b16 %v170
    %v702 = vunpack.c.l.b16 %v171
    %v703 = vunpack.c.h.b16 %v171
    %v704 = vunpack.c.l.b16 %v172
    %v705 = vunpack.c.h.b16 %v172
    %v706 = vunpack.c.l.b16 %v173
    %v707 = vunpack.c.h.b16 %v173
    %v708 = vunpack.c.l.b16 %v174
    %v709 = vunpack.c.h.b16 %v174
    %v710 = vunpack.c.l.b16 %v175
    %v711 = vunpack.c.h.b16 %v175
    %v712 = vunpack.c.l.b16 %v176
    %v713 = vunpack.c.h.b16 %v176
    %v714 = vunpack.c.l.b16 %v177
    %v715 = vunpack.c.h.b16 %v177
    %v716 = vunpack.c.l.b16 %v178
    %v717 = vunpack.c.h.b16 %v178
    %v718 = vunpack.c.l.b16 %v179
    %v719 = vunpack.c.h.b16 %v179
    %v720 = vunpack.c.l.b16 %v180
    %v721 = vunpack.c.h.b16 %v180
    %v722 = vunpack.c.l.b16 %v181
    %v723 = vunpack.c.h.b16 %v181
    %v724 = vunpack.c.l.b16 %v182
    %v725 = vunpack.c.h.b16 %v182
    %v726 = vunpack.c.l.b16 %v183
    %v727 = vunpack.c.h.b16 %v183
    %v728 = vunpack.c.l.b16 %v184
    %v729 = vunpack.c.h.b16 %v184
    %v730 = vunpack.c.l.b16 %v185
    %v731 = vunpack.c.h.b16 %v185
    %v732 = vunpack.c.l.b16 %v186
    %v733 = vunpack.c.h.b16 %v186
    %v734 = vunpack.c.l.b16 %v187
    %v735 = vunpack.c.h.b16 %v187
    %v736 = vunpack.c.l.b16 %v188
    %v737 = vunpack.c.h.b16 %v188
    %v738 = vunpack.c.l.b16 %v189
    %v739 = vunpack.c.h.b16 %v189
    %v740 = vunpack.c.l.b16 %v190
    %v741 = vunpack.c.h.b16 %v190
    %v742 = vunpack.c.l.b16 %v191
    %v743 = vunpack.c.h.b16 %v191
    %v744 = vunpack.c.l.b16 %v192
    %v745 = vunpack.c.h.b16 %v192
    %v746 = vunpack.c.l.b16 %v193
    %v747 = vunpack.c.h.b16 %v193
    %v748 = vunpack.c.l.b16 %v194
    %v749 = vunpack.c.h.b16 %v194
    %v750 = vunpack.c.l.b16 %v195
    %v751 = vunpack.c.h.b16 %v195
    %v752 = vunpack.c.l.b16 %v196
    %v753 = vunpack.c.h.b16 %v196
    %v754 = vunpack.c.l.b16 %v197
    %v755 = vunpack.c.h.b16 %v197
    %v756 = vunpack.c.l.b16 %v198
    %v757 = vunpack.c.h.b16 %v198
    %v758 = vunpack.c.l.b16 %v199
    %v759 = vunpack.c.h.b16 %v199
    %v760 = vunpack.c.l.b16 %v200
    %v761 = vunpack.c.h.b16 %v200
    %v762 = vunpack.c.l.b16 %v201
    %v763 = vunpack.c.h.b16 %v201
    %v764 = vunpack.c.l.b16 %v202
    %v765 = vunpack.c.h.b16 %v202
    %v766 = vunpack.c.l.b16 %v203
    %v767 = vunpack.c.h.b16 %v203
    %v768 = vunpack.c.l.b16 %v204
    %v769 = vunpack.c.h.b16 %v204
    %v770 = vunpack.c.l.b16 %v205
    %v771 = vunpack.c.h.b16 %v205
    %v772 = vunpack.c.l.b16 %v206
    %v773 = vunpack.c.h.b16 %v206
    %v774 = vunpack.c.l.b16 %v207
    %v775 = vunpack.c.h.b16 %v207
    %v776 = vunpack.c.l.b16 %v208
    %v777 = vunpack.c.h.b16 %v208
    %v778 = vunpack.c.l.b16 %v209
    %v779 = vunpack.c.h.b16 %v209
    %v780 = vunpack.c.l.b16 %v210
    %v781 = vunpack.c.h.b16 %v210
    %v782 = vunpack.c.l.b16 %v211
    %v783 = vunpack.c.h.b16 %v211
    %v784 = vunpack.c.l.b16 %v212
    %v785 = vunpack.c.h.b16 %v212
    %v786 = vunpack.c.l.b16 %v213
    %v787 = vunpack.c.h.b16 %v213
    %v788 = vunpack.c.l.b16 %v214
    %v789 = vunpack.c.h.b16 %v214
    %v790 = vunpack.c.l.b16 %v215
    %v791 = vunpack.c.h.b16 %v215
    %v792 = vunpack.c.l.b16 %v216
    %v793 = vunpack.c.h.b16 %v216
    %v794 = vunpack.c.l.b16 %v217
    %v795 = vunpack.c.h.b16 %v217
    %v796 = vunpack.c.l.b16 %v218
    %v797 = vunpack.c.h.b16 %v218
    %v798 = vunpack.c.l.b16 %v219
    %v799 = vunpack.c.h.b16 %v219
    %v800 = vunpack.c.l.b16 %v220
    %v801 = vunpack.c.h.b16 %v220
    %v802 = vunpack.c.l.b16 %v221
    %v803 = vunpack.c.h.b16 %v221
    %v804 = vunpack.c.l.b16 %v222
    %v805 = vunpack.c.h.b16 %v222
    %v806 = vunpack.c.l.b16 %v223
    %v807 = vunpack.c.h.b16 %v223
    %v808 = vunpack.c.l.b16 %v224
    %v809 = vunpack.c.h.b16 %v224
    %v810 = vunpack.c.l.b16 %v225
    %v811 = vunpack.c.h.b16 %v225
    %v812 = vunpack.c.l.b16 %v226
    %v813 = vunpack.c.h.b16 %v226
    %v814 = vunpack.c.l.b16 %v227
    %v815 = vunpack.c.h.b16 %v227
    %v816 = vunpack.c.l.b16 %v228
    %v817 = vunpack.c.h.b16 %v228
    %v818 = vunpack.c.l.b16 %v229
    %v819 = vunpack.c.h.b16 %v229
    %v820 = vunpack.c.l.b16 %v230
    %v821 = vunpack.c.h.b16 %v230
    %v822 = vunpack.c.l.b16 %v231
    %v823 = vunpack.c.h.b16 %v231
    %v824 = vunpack.c.l.b16 %v232
    %v825 = vunpack.c.h.b16 %v232
    %v826 = vunpack.c.l.b16 %v233
    %v827 = vunpack.c.h.b16 %v233
    %v828 = vunpack.c.l.b16 %v234
    %v829 = vunpack.c.h.b16 %v234
    %v830 = vunpack.c.l.b16 %v235
    %v831 = vunpack.c.h.b16 %v235
    %v832 = vunpack.c.l.b16 %v236
    %v833 = vunpack.c.h.b16 %v236
    %v834 = vunpack.c.l.b16 %v237
    %v835 = vunpack.c.h.b16 %v237
    %v836 = vunpack.c.l.b16 %v238
    %v837 = vunpack.c.h.b16 %v238
    %v838 = vunpack.c.l.b16 %v239
    %v839 = vunpack.c.h.b16 %v239
    %v840 = vunpack.c.l.b16 %v240
    %v841 = vunpack.c.h.b16 %v240
    %v842 = vunpack.c.l.b16 %v241
    %v843 = vunpack.c.h.b16 %v241
    %v844 = vunpack.c.l.b16 %v242
    %v845 = vunpack.c.h.b16 %v242
    %v846 = vunpack.c.l.b16 %v243
    %v847 = vunpack.c.h.b16 %v243
    %v848 = vunpack.c.l.b16 %v244
    %v849 = vunpack.c.h.b16 %v244
    %v850 = vunpack.c.l.b16 %v245
    %v851 = vunpack.c.h.b16 %v245
    %v852 = vunpack.c.l.b16 %v246
    %v853 = vunpack.c.h.b16 %v246
    %v854 = vunpack.c.l.b16 %v247
    %v855 = vunpack.c.h.b16 %v247
    %v856 = vunpack.c.l.b16 %v248
    %v857 = vunpack.c.h.b16 %v248
    %v858 = vunpack.c.l.b16 %v249
    %v859 = vunpack.c.h.b16 %v249
    %v860 = vpack.c.b16 %v472, %v468
    %v861 = vpack.c.b16 %v473, %v469
    %v862 = vpack.c.b16 %v474, %v470
    %v863 = vpack.c.b16 %v475, %v471
    %v864 = vpack.c.b16 %v480, %v476
    %v865 = vpack.c.b16 %v481, %v477
    %v866 = vpack.c.b16 %v482, %v478
    %v867 = vpack.c.b16 %v483, %v479
    %v868 = vpack.c.b16 %v488, %v484
    %v869 = vpack.c.b16 %v489, %v485
    %v870 = vpack.c.b16 %v490, %v486
    %v871 = vpack.c.b16 %v491, %v487
    %v872 = vpack.c.b16 %v496, %v492
    %v873 = vpack.c.b16 %v497, %v493
    %v874 = vpack.c.b16 %v498, %v494
    %v875 = vpack.c.b16 %v499, %v495
    %v876 = vpack.c.b16 %v504, %v500
    %v877 = vpack.c.b16 %v505, %v501
    %v878 = vpack.c.b16 %v506, %v502
    %v879 = vpack.c.b16 %v507, %v503
    %v880 = vpack.c.b16 %v512, %v508
    %v881 = vpack.c.b16 %v513, %v509
    %v882 = vpack.c.b16 %v514, %v510
    %v883 = vpack.c.b16 %v515, %v511
    %v884 = vpack.c.b16 %v520, %v516
    %v885 = vpack.c.b16 %v521, %v517
    %v886 = vpack.c.b16 %v522, %v518
    %v887 = vpack.c.b16 %v523, %v519
    %v888 = vpack.c.b16 %v528, %v524
    %v889 = vpack.c.b16 %v529, %v525
    %v890 = vpack.c.b16 %v530, %v526
    %v891 = vpack.c.b16 %v531, %v527
    %v892 = vpack.c.b16 %v536, %v532
    %v893 = vpack.c.b16 %v537, %v533
    %v894 = vpack.c.b16 %v538, %v534
    %v895 = vpack.c.b16 %v539, %v535
    %v896 = vpack.c.b16 %v544, %v540
    %v897 = vpack.c.b16 %v545, %v541
    %v898 = vpack.c.b16 %v546, %v542
    %v899 = vpack.c.b16 %v547, %v543
    %v900 = vpack.c.b16 %v552, %v548
    %v901 = vpack.c.b16 %v553, %v549
    %v902 = vpack.c.b16 %v554, %v550
    %v903 = vpack.c.b16 %v555, %v551
    %v904 = vpack.c.b16 %v560, %v556
    %v905 = vpack.c.b16 %v561, %v557
    %v906 = vpack.c.b16 %v562, %v558
    %v907 = vpack.c.b16 %v563, %v559
    %v908 = vpack.c.b16 %v568, %v564
    %v909 = vpack.c.b16 %v569, %v565
    %v910 = vpack.c.b16 %v570, %v566
    %v911 = vpack.c.b16 %v571, %v567
    %v912 = vpack.c.b16 %v576, %v572
    %v913 = vpack.c.b16 %v577, %v573
    %v914 = vpack.c.b16 %v578, %v574
    %v915 = vpack.c.b16 %v579, %v575
    %v916 = vpack.c.b16 %v584, %v580
    %v917 = vpack.c.b16 %v585, %v581
    %v918 = vpack.c.b16 %v586, %v582
    %v919 = vpack.c.b16 %v587, %v583
    %v920 = vpack.c.b16 %v592, %v588
    %v921 = vpack.c.b16 %v593, %v589
    %v922 = vpack.c.b16 %v594, %v590
    %v923 = vpack.c.b16 %v595, %v591
    %v924 = vpack.c.b16 %v600, %v596
    %v925 = vpack.c.b16 %v601, %v597
    %v926 = vpack.c.b16 %v602, %v598
    %v927 = vpack.c.b16 %v603, %v599
    %v928 = vpack.c.b16 %v608, %v604
    %v929 = vpack.c.b16 %v609, %v605
    %v930 = vpack.c.b16 %v610, %v606
    %v931 = vpack.c.b16 %v611, %v607
    %v932 = vpack.c.b16 %v616, %v612
    %v933 = vpack.c.b16 %v617, %v613
    %v934 = vpack.c.b16 %v618, %v614
    %v935 = vpack.c.b16 %v619, %v615
    %v936 = vpack.c.b16 %v624, %v620
    %v937 = vpack.c.b16 %v625, %v621
    %v938 = vpack.c.b16 %v626, %v622
    %v939 = vpack.c.b16 %v627, %v623
    %v940 = vpack.c.b16 %v632, %v628
    %v941 = vpack.c.b16 %v633, %v629
    %v942 = vpack.c.b16 %v634, %v630
    %v943 = vpack.c.b16 %v635, %v631
    %v944 = vpack.c.b16 %v640, %v636
    %v945 = vpack.c.b16 %v641, %v637
    %v946 = vpack.c.b16 %v642, %v638
    %v947 = vpack.c.b16 %v643, %v639
    %v948 = vpack.c.b16 %v648, %v644
    %v949 = vpack.c.b16 %v649, %v645
    %v950 = vpack.c.b16 %v650, %v646
    %v951 = vpack.c.b16 %v651, %v647
    %v952 = vpack.c.b16 %v656, %v652
    %v953 = vpack.c.b16 %v657, %v653
    %v954 = vpack.c.b16 %v658, %v654
    %v955 = vpack.c.b16 %v659, %v655
    %v956 = vpack.c.b16 %v664, %v660
    %v957 = vpack.c.b16 %v665, %v661
    %v958 = vpack.c.b16 %v666, %v662
    %v959 = vpack.c.b16 %v667, %v663
    %v960 = vpack.c.b16 %v672, %v668
    %v961 = vpack.c.b16 %v673, %v669
    %v962 = vpack.c.b16 %v674, %v670
    %v963 = vpack.c.b16 %v675, %v671
    %v964 = vpack.c.b16 %v680, %v676
    %v965 = vpack.c.b16 %v681, %v677
    %v966 = vpack.c.b16 %v682, %v678
    %v967 = vpack.c.b16 %v683, %v679
    %v968 = vpack.c.b16 %v688, %v684
    %v969 = vpack.c.b16 %v689, %v685
    %v970 = vpack.c.b16 %v690, %v686
    %v971 = vpack.c.b16 %v691, %v687
    %v972 = vpack.c.b16 %v696, %v692
    %v973 = vpack.c.b16 %v697, %v693
    %v974 = vpack.c.b16 %v698, %v694
    %v975 = vpack.c.b16 %v699, %v695
    %v976 = vpack.c.b16 %v704, %v700
    %v977 = vpack.c.b16 %v705, %v701
    %v978 = vpack.c.b16 %v706, %v702
    %v979 = vpack.c.b16 %v707, %v703
    %v980 = vpack.c.b16 %v712, %v708
    %v981 = vpack.c.b16 %v713, %v709
    %v982 = vpack.c.b16 %v714, %v710
    %v983 = vpack.c.b16 %v715, %v711
    %v984 = vpack.c.b16 %v720, %v716
    %v985 = vpack.c.b16 %v721, %v717
    %v986 = vpack.c.b16 %v722, %v718
    %v987 = vpack.c.b16 %v723, %v719
    %v988 = vpack.c.b16 %v728, %v724
    %v989 = vpack.c.b16 %v729, %v725
    %v990 = vpack.c.b16 %v730, %v726
    %v991 = vpack.c.b16 %v731, %v727
    %v992 = vpack.c.b16 %v736, %v732
    %v993 = vpack.c.b16 %v737, %v733
    %v994 = vpack.c.b16 %v738, %v734
    %v995 = vpack.c.b16 %v739, %v735
    %v996 = vpack.c.b16 %v744, %v740
    %v997 = vpack.c.b16 %v745, %v741
    %v998 = vpack.c.b16 %v746, %v742
    %v999 = vpack.c.b16 %v747, %v743
    %v1000 = vpack.c.b16 %v752, %v748
    %v1001 = vpack.c.b16 %v753, %v749
    %v1002 = vpack.c.b16 %v754, %v750
    %v1003 = vpack.c.b16 %v755, %v751
    %v1004 = vpack.c.b16 %v760, %v756
    %v1005 = vpack.c.b16 %v761, %v757
    %v1006 = vpack.c.b16 %v762, %v758
    %v1007 = vpack.c.b16 %v763, %v759
    %v1008 = vpack.c.b16 %v768, %v764
    %v1009 = vpack.c.b16 %v769, %v765
    %v1010 = vpack.c.b16 %v770, %v766
    %v1011 = vpack.c.b16 %v771, %v767
    %v1012 = vpack.c.b16 %v776, %v772
    %v1013 = vpack.c.b16 %v777, %v773
    %v1014 = vpack.c.b16 %v778, %v774
    %v1015 = vpack.c.b16 %v779, %v775
    %v1016 = vpack.c.b16 %v784, %v780
    %v1017 = vpack.c.b16 %v785, %v781
    %v1018 = vpack.c.b16 %v786, %v782
    %v1019 = vpack.c.b16 %v787, %v783
    %v1020 = vpack.c.b16 %v792, %v788
    %v1021 = vpack.c.b16 %v793, %v789
    %v1022 = vpack.c.b16 %v794, %v790
    %v1023 = vpack.c.b16 %v795, %v791
    %v1024 = vpack.c.b16 %v800, %v796
    %v1025 = vpack.c.b16 %v801, %v797
    %v1026 = vpack.c.b16 %v802, %v798
    %v1027 = vpack.c.b16 %v803, %v799
    %v1028 = vpack.c.b16 %v808, %v804
    %v1029 = vpack.c.b16 %v809, %v805
    %v1030 = vpack.c.b16 %v810, %v806
    %v1031 = vpack.c.b16 %v811, %v807
    %v1032 = vpack.c.b16 %v816, %v812
    %v1033 = vpack.c.b16 %v817, %v813
    %v1034 = vpack.c.b16 %v818, %v814
    %v1035 = vpack.c.b16 %v819, %v815
    %v1036 = vpack.c.b16 %v824, %v820
    %v1037 = vpack.c.b16 %v825, %v821
    %v1038 = vpack.c.b16 %v826, %v822
    %v1039 = vpack.c.b16 %v827, %v823
    %v1040 = vpack.c.b16 %v832, %v828
    %v1041 = vpack.c.b16 %v833, %v829
    %v1042 = vpack.c.b16 %v834, %v830
    %v1043 = vpack.c.b16 %v835, %v831
    %v1044 = vpack.c.b16 %v840, %v836
    %v1045 = vpack.c.b16 %v841, %v837
    %v1046 = vpack.c.b16 %v842, %v838
    %v1047 = vpack.c.b16 %v843, %v839
    %v1048 = vpack.c.b16 %v848, %v844
    %v1049 = vpack.c.b16 %v849, %v845
    %v1050 = vpack.c.b16 %v850, %v846
    %v1051 = vpack.c.b16 %v851, %v847
    %v1052 = vpack.c.b16 %v856, %v852
    %v1053 = vpack.c.b16 %v857, %v853
    %v1054 = vpack.c.b16 %v858, %v854
    %v1055 = vpack.c.b16 %v859, %v855
    %vm1252 = vcmask 130048
    %v1254 = vsel %vm1252, %v53, 0
    %1256 = vmatprep.subr.bf16.mxu0 %v861
    %1257 = vmatpush1.bf16.msra.mxu0 %v860
    %1258 = vmatprep.subr.bf16.mxu0 %v865
    %1259 = vmatpush1.bf16.msra.mxu0 %v864
    %1260 = vmatprep.subr.bf16.mxu0 %v869
    %1261 = vmatpush1.bf16.msra.mxu0 %v868
    %1262 = vmatprep.subr.bf16.mxu0 %v873
    %1263 = vmatpush1.bf16.msra.mxu0 %v872
    %1264 = vmatprep.subr.bf16.mxu0 %v877
    %1265 = vmatpush1.bf16.msra.mxu0 %v876
    %1266 = vmatprep.subr.bf16.mxu0 %v881
    %1267 = vmatpush1.bf16.msra.mxu0 %v880
    %1268 = vmatprep.subr.bf16.mxu0 %v885
    %1269 = vmatpush1.bf16.msra.mxu0 %v884
    %1270 = vmatprep.subr.bf16.mxu0 %v889
    %1271 = vmatpush1.bf16.msra.mxu0 %v888
    %1272 = vmatprep.subr.bf16.mxu0 %v893
    %1273 = vmatpush1.bf16.msra.mxu0 %v892
    %1274 = vmatprep.subr.bf16.mxu0 %v897
    %1275 = vmatpush1.bf16.msra.mxu0 %v896
    %1276 = vmatprep.subr.bf16.mxu0 %v901
    %1277 = vmatpush1.bf16.msra.mxu0 %v900
    %1278 = vmatprep.subr.bf16.mxu0 %v905
    %1279 = vmatpush1.bf16.msra.mxu0 %v904
    %1280 = vmatprep.subr.bf16.mxu0 %v909
    %1281 = vmatpush1.bf16.msra.mxu0 %v908
    %1282 = vmatprep.subr.bf16.mxu0 %v913
    %1283 = vmatpush1.bf16.msra.mxu0 %v912
    %1284 = vmatprep.subr.bf16.mxu0 %v917
    %1285 = vmatpush1.bf16.msra.mxu0 %v916
    %1286 = vmatprep.subr.bf16.mxu0 %v921
    %1287 = vmatpush1.bf16.msra.mxu0 %v920
    %1288 = vmatprep.mubr.bf16.mxu0 %v48
    %1289 = vmatmul.mubr.bf16.gmra.mrb[0].mxu0 %v47
    %v1290 = vpop.f32.mrb[0].mxu0
    %v1291 = vadd.f32 %v255, %v1290
    %v1292 = vpop.f32.mrb[0].mxu0
    %v1293 = vadd.f32 %v259, %v1292
    %v1294 = vpop.f32.mrb[0].mxu0
    %v1295 = vpop.f32.mrb[0].mxu0
    %1296 = vdwg.mxu0
    %1297 = vmatprep.subr.bf16.mxu0 %v925
    %1298 = vmatpush1.bf16.msra.mxu0 %v924
    %1299 = vmatprep.subr.bf16.mxu0 %v929
    %1300 = vmatpush1.bf16.msra.mxu0 %v928
    %1301 = vmatprep.subr.bf16.mxu0 %v933
    %1302 = vmatpush1.bf16.msra.mxu0 %v932
    %1303 = vmatprep.subr.bf16.mxu0 %v937
    %1304 = vmatpush1.bf16.msra.mxu0 %v936
    %1305 = vmatprep.subr.bf16.mxu0 %v941
    %1306 = vmatpush1.bf16.msra.mxu0 %v940
    %1307 = vmatprep.subr.bf16.mxu0 %v945
    %1308 = vmatpush1.bf16.msra.mxu0 %v944
    %1309 = vmatprep.subr.bf16.mxu0 %v949
    %1310 = vmatpush1.bf16.msra.mxu0 %v948
    %1311 = vmatprep.subr.bf16.mxu0 %v953
    %1312 = vmatpush1.bf16.msra.mxu0 %v952
    %1313 = vmatprep.subr.bf16.mxu0 %v957
    %1314 = vmatpush1.bf16.msra.mxu0 %v956
    %1315 = vmatprep.subr.bf16.mxu0 %v961
    %1316 = vmatpush1.bf16.msra.mxu0 %v960
    %1317 = vmatprep.subr.bf16.mxu0 %v965
    %1318 = vmatpush1.bf16.msra.mxu0 %v964
    %1319 = vmatprep.subr.bf16.mxu0 %v969
    %1320 = vmatpush1.bf16.msra.mxu0 %v968
    %1321 = vmatprep.subr.bf16.mxu0 %v973
    %1322 = vmatpush1.bf16.msra.mxu0 %v972
    %1323 = vmatprep.subr.bf16.mxu0 %v977
    %1324 = vmatpush1.bf16.msra.mxu0 %v976
    %1325 = vmatprep.subr.bf16.mxu0 %v981
    %1326 = vmatpush1.bf16.msra.mxu0 %v980
    %1327 = vmatprep.subr.bf16.mxu0 %v985
    %1328 = vmatpush1.bf16.msra.mxu0 %v984
    %1329 = vmatprep.mubr.bf16.mxu0 %v50
    %1330 = vmatmul.mubr.bf16.gmra.mrb[0].mxu0 %v49
    %v1331 = vpop.f32.mrb[0].mxu0
    %v1332 = vadd.f32 %v1291, %v1331
    %v1333 = vpop.f32.mrb[0].mxu0
    %v1334 = vadd.f32 %v1293, %v1333
    %v1335 = vpop.f32.mrb[0].mxu0
    %v1336 = vpop.f32.mrb[0].mxu0
    %1337 = vdwg.mxu0
    %1338 = vmatprep.subr.bf16.mxu0 %v989
    %1339 = vmatpush1.bf16.msra.mxu0 %v988
    %1340 = vmatprep.subr.bf16.mxu0 %v993
    %1341 = vmatpush1.bf16.msra.mxu0 %v992
    %1342 = vmatprep.subr.bf16.mxu0 %v997
    %1343 = vmatpush1.bf16.msra.mxu0 %v996
    %1344 = vmatprep.subr.bf16.mxu0 %v1001
    %1345 = vmatpush1.bf16.msra.mxu0 %v1000
    %1346 = vmatprep.subr.bf16.mxu0 %v1005
    %1347 = vmatpush1.bf16.msra.mxu0 %v1004
    %1348 = vmatprep.subr.bf16.mxu0 %v1009
    %1349 = vmatpush1.bf16.msra.mxu0 %v1008
    %1350 = vmatprep.subr.bf16.mxu0 %v1013
    %1351 = vmatpush1.bf16.msra.mxu0 %v1012
    %1352 = vmatprep.subr.bf16.mxu0 %v1017
    %1353 = vmatpush1.bf16.msra.mxu0 %v1016
    %1354 = vmatprep.subr.bf16.mxu0 %v1021
    %1355 = vmatpush1.bf16.msra.mxu0 %v1020
    %1356 = vmatprep.subr.bf16.mxu0 %v1025
    %1357 = vmatpush1.bf16.msra.mxu0 %v1024
    %1358 = vmatprep.subr.bf16.mxu0 %v1029
    %1359 = vmatpush1.bf16.msra.mxu0 %v1028
    %1360 = vmatprep.subr.bf16.mxu0 %v1033
    %1361 = vmatpush1.bf16.msra.mxu0 %v1032
    %1362 = vmatprep.subr.bf16.mxu0 %v1037
    %1363 = vmatpush1.bf16.msra.mxu0 %v1036
    %1364 = vmatprep.subr.bf16.mxu0 %v1041
    %1365 = vmatpush1.bf16.msra.mxu0 %v1040
    %1366 = vmatprep.subr.bf16.mxu0 %v1045
    %1367 = vmatpush1.bf16.msra.mxu0 %v1044
    %1368 = vmatprep.subr.bf16.mxu0 %v1049
    %1369 = vmatpush1.bf16.msra.mxu0 %v1048
    %1370 = vmatprep.mubr.bf16.mxu0 %v52
    %1371 = vmatmul.mubr.bf16.gmra.mrb[0].mxu0 %v51
    %v1372 = vpop.f32.mrb[0].mxu0
    %v1373 = vadd.f32 %v1332, %v1372
    %v1374 = vpop.f32.mrb[0].mxu0
    %v1375 = vadd.f32 %v1334, %v1374
    %v1376 = vpop.f32.mrb[0].mxu0
    %v1377 = vpop.f32.mrb[0].mxu0
    %1378 = vdwg.mxu0
    %1379 = vmatprep.subr.bf16.mxu0 %v1053
    %1380 = vmatpush1.bf16.msra.mxu0 %v1052
    %1381 = vmatprep.subr.bf16.mxu0 0
    %1382 = vmatpush1.bf16.msra.mxu0 0
    %1383 = vmatprep.subr.bf16.mxu0 0
    %1384 = vmatpush1.bf16.msra.mxu0 0
    %1385 = vmatprep.subr.bf16.mxu0 0
    %1386 = vmatpush1.bf16.msra.mxu0 0
    %1387 = vmatprep.subr.bf16.mxu0 0
    %1388 = vmatpush1.bf16.msra.mxu0 0
    %1389 = vmatprep.subr.bf16.mxu0 0
    %1390 = vmatpush1.bf16.msra.mxu0 0
    %1391 = vmatprep.subr.bf16.mxu0 0
    %1392 = vmatpush1.bf16.msra.mxu0 0
    %1393 = vmatprep.subr.bf16.mxu0 0
    %1394 = vmatpush1.bf16.msra.mxu0 0
    %1395 = vmatprep.subr.bf16.mxu0 0
    %1396 = vmatpush1.bf16.msra.mxu0 0
    %1397 = vmatprep.subr.bf16.mxu0 0
    %1398 = vmatpush1.bf16.msra.mxu0 0
    %1399 = vmatprep.subr.bf16.mxu0 0
    %1400 = vmatpush1.bf16.msra.mxu0 0
    %1401 = vmatprep.subr.bf16.mxu0 0
    %1402 = vmatpush1.bf16.msra.mxu0 0
    %1403 = vmatprep.subr.bf16.mxu0 0
    %1404 = vmatpush1.bf16.msra.mxu0 0
    %1405 = vmatprep.subr.bf16.mxu0 0
    %1406 = vmatpush1.bf16.msra.mxu0 0
    %1407 = vmatprep.subr.bf16.mxu0 0
    %1408 = vmatpush1.bf16.msra.mxu0 0
    %1409 = vmatprep.subr.bf16.mxu0 0
    %1410 = vmatpush1.bf16.msra.mxu0 0
    %1411 = vmatprep.mubr.bf16.mxu0 0
    %1412 = vmatmul.mubr.bf16.gmra.mrb[0].mxu0 %v1254
    %v1413 = vpop.f32.mrb[0].mxu0
    %v1414 = vadd.f32 %v1373, %v1413
    %v1415 = vpop.f32.mrb[0].mxu0
    %v1416 = vadd.f32 %v1375, %v1415
    %v1417 = vpop.f32.mrb[0].mxu0
    %v1418 = vpop.f32.mrb[0].mxu0
    %1419 = vdwg.mxu0
    %1420 = vmatprep.subr.bf16.mxu0 %v863
    %1421 = vmatpush1.bf16.msra.mxu0 %v862
    %1422 = vmatprep.subr.bf16.mxu0 %v867
    %1423 = vmatpush1.bf16.msra.mxu0 %v866
    %1424 = vmatprep.subr.bf16.mxu0 %v871
    %1425 = vmatpush1.bf16.msra.mxu0 %v870
    %1426 = vmatprep.subr.bf16.mxu0 %v875
    %1427 = vmatpush1.bf16.msra.mxu0 %v874
    %1428 = vmatprep.subr.bf16.mxu0 %v879
    %1429 = vmatpush1.bf16.msra.mxu0 %v878
    %1430 = vmatprep.subr.bf16.mxu0 %v883
    %1431 = vmatpush1.bf16.msra.mxu0 %v882
    %1432 = vmatprep.subr.bf16.mxu0 %v887
    %1433 = vmatpush1.bf16.msra.mxu0 %v886
    %1434 = vmatprep.subr.bf16.mxu0 %v891
    %1435 = vmatpush1.bf16.msra.mxu0 %v890
    %1436 = vmatprep.subr.bf16.mxu0 %v895
    %1437 = vmatpush1.bf16.msra.mxu0 %v894
    %1438 = vmatprep.subr.bf16.mxu0 %v899
    %1439 = vmatpush1.bf16.msra.mxu0 %v898
    %1440 = vmatprep.subr.bf16.mxu0 %v903
    %1441 = vmatpush1.bf16.msra.mxu0 %v902
    %1442 = vmatprep.subr.bf16.mxu0 %v907
    %1443 = vmatpush1.bf16.msra.mxu0 %v906
    %1444 = vmatprep.subr.bf16.mxu0 %v911
    %1445 = vmatpush1.bf16.msra.mxu0 %v910
    %1446 = vmatprep.subr.bf16.mxu0 %v915
    %1447 = vmatpush1.bf16.msra.mxu0 %v914
    %1448 = vmatprep.subr.bf16.mxu0 %v919
    %1449 = vmatpush1.bf16.msra.mxu0 %v918
    %1450 = vmatprep.subr.bf16.mxu0 %v923
    %1451 = vmatpush1.bf16.msra.mxu0 %v922
    %1452 = vmatprep.mubr.bf16.mxu0 %v48
    %1453 = vmatmul.mubr.bf16.gmra.mrb[0].mxu0 %v47
    %v1454 = vpop.f32.mrb[0].mxu0
    %v1455 = vadd.f32 %v263, %v1454
    %v1456 = vpop.f32.mrb[0].mxu0
    %v1457 = vadd.f32 %v267, %v1456
    %v1458 = vpop.f32.mrb[0].mxu0
    %v1459 = vpop.f32.mrb[0].mxu0
    %1460 = vdwg.mxu0
    %1461 = vmatprep.subr.bf16.mxu0 %v927
    %1462 = vmatpush1.bf16.msra.mxu0 %v926
    %1463 = vmatprep.subr.bf16.mxu0 %v931
    %1464 = vmatpush1.bf16.msra.mxu0 %v930
    %1465 = vmatprep.subr.bf16.mxu0 %v935
    %1466 = vmatpush1.bf16.msra.mxu0 %v934
    %1467 = vmatprep.subr.bf16.mxu0 %v939
    %1468 = vmatpush1.bf16.msra.mxu0 %v938
    %1469 = vmatprep.subr.bf16.mxu0 %v943
    %1470 = vmatpush1.bf16.msra.mxu0 %v942
    %1471 = vmatprep.subr.bf16.mxu0 %v947
    %1472 = vmatpush1.bf16.msra.mxu0 %v946
    %1473 = vmatprep.subr.bf16.mxu0 %v951
    %1474 = vmatpush1.bf16.msra.mxu0 %v950
    %1475 = vmatprep.subr.bf16.mxu0 %v955
    %1476 = vmatpush1.bf16.msra.mxu0 %v954
    %1477 = vmatprep.subr.bf16.mxu0 %v959
    %1478 = vmatpush1.bf16.msra.mxu0 %v958
    %1479 = vmatprep.subr.bf16.mxu0 %v963
    %1480 = vmatpush1.bf16.msra.mxu0 %v962
    %1481 = vmatprep.subr.bf16.mxu0 %v967
    %1482 = vmatpush1.bf16.msra.mxu0 %v966
    %1483 = vmatprep.subr.bf16.mxu0 %v971
    %1484 = vmatpush1.bf16.msra.mxu0 %v970
    %1485 = vmatprep.subr.bf16.mxu0 %v975
    %1486 = vmatpush1.bf16.msra.mxu0 %v974
    %1487 = vmatprep.subr.bf16.mxu0 %v979
    %1488 = vmatpush1.bf16.msra.mxu0 %v978
    %1489 = vmatprep.subr.bf16.mxu0 %v983
    %1490 = vmatpush1.bf16.msra.mxu0 %v982
    %1491 = vmatprep.subr.bf16.mxu0 %v987
    %1492 = vmatpush1.bf16.msra.mxu0 %v986
    %1493 = vmatprep.mubr.bf16.mxu0 %v50
    %1494 = vmatmul.mubr.bf16.gmra.mrb[0].mxu0 %v49
    %v1495 = vpop.f32.mrb[0].mxu0
    %v1496 = vadd.f32 %v1455, %v1495
    %v1497 = vpop.f32.mrb[0].mxu0
    %v1498 = vadd.f32 %v1457, %v1497
    %v1499 = vpop.f32.mrb[0].mxu0
    %v1500 = vpop.f32.mrb[0].mxu0
    %1501 = vdwg.mxu0
    %1502 = vmatprep.subr.bf16.mxu0 %v991
    %1503 = vmatpush1.bf16.msra.mxu0 %v990
    %1504 = vmatprep.subr.bf16.mxu0 %v995
    %1505 = vmatpush1.bf16.msra.mxu0 %v994
    %1506 = vmatprep.subr.bf16.mxu0 %v999
    %1507 = vmatpush1.bf16.msra.mxu0 %v998
    %1508 = vmatprep.subr.bf16.mxu0 %v1003
    %1509 = vmatpush1.bf16.msra.mxu0 %v1002
    %1510 = vmatprep.subr.bf16.mxu0 %v1007
    %1511 = vmatpush1.bf16.msra.mxu0 %v1006
    %1512 = vmatprep.subr.bf16.mxu0 %v1011
    %1513 = vmatpush1.bf16.msra.mxu0 %v1010
    %1514 = vmatprep.subr.bf16.mxu0 %v1015
    %1515 = vmatpush1.bf16.msra.mxu0 %v1014
    %1516 = vmatprep.subr.bf16.mxu0 %v1019
    %1517 = vmatpush1.bf16.msra.mxu0 %v1018
    %1518 = vmatprep.subr.bf16.mxu0 %v1023
    %1519 = vmatpush1.bf16.msra.mxu0 %v1022
    %1520 = vmatprep.subr.bf16.mxu0 %v1027
    %1521 = vmatpush1.bf16.msra.mxu0 %v1026
    %1522 = vmatprep.subr.bf16.mxu0 %v1031
    %1523 = vmatpush1.bf16.msra.mxu0 %v1030
    %1524 = vmatprep.subr.bf16.mxu0 %v1035
    %1525 = vmatpush1.bf16.msra.mxu0 %v1034
    %1526 = vmatprep.subr.bf16.mxu0 %v1039
    %1527 = vmatpush1.bf16.msra.mxu0 %v1038
    %1528 = vmatprep.subr.bf16.mxu0 %v1043
    %1529 = vmatpush1.bf16.msra.mxu0 %v1042
    %1530 = vmatprep.subr.bf16.mxu0 %v1047
    %1531 = vmatpush1.bf16.msra.mxu0 %v1046
    %1532 = vmatprep.subr.bf16.mxu0 %v1051
    %1533 = vmatpush1.bf16.msra.mxu0 %v1050
    %1534 = vmatprep.mubr.bf16.mxu0 %v52
    %1535 = vmatmul.mubr.bf16.gmra.mrb[0].mxu0 %v51
    %v1536 = vpop.f32.mrb[0].mxu0
    %v1537 = vadd.f32 %v1496, %v1536
    %v1538 = vpop.f32.mrb[0].mxu0
    %v1539 = vadd.f32 %v1498, %v1538
    %v1540 = vpop.f32.mrb[0].mxu0
    %v1541 = vpop.f32.mrb[0].mxu0
    %1542 = vdwg.mxu0
    %1543 = vmatprep.subr.bf16.mxu0 %v1055
    %1544 = vmatpush1.bf16.msra.mxu0 %v1054
    %1545 = vmatprep.subr.bf16.mxu0 0
    %1546 = vmatpush1.bf16.msra.mxu0 0
    %1547 = vmatprep.subr.bf16.mxu0 0
    %1548 = vmatpush1.bf16.msra.mxu0 0
    %1549 = vmatprep.subr.bf16.mxu0 0
    %1550 = vmatpush1.bf16.msra.mxu0 0
    %1551 = vmatprep.subr.bf16.mxu0 0
    %1552 = vmatpush1.bf16.msra.mxu0 0
    %1553 = vmatprep.subr.bf16.mxu0 0
    %1554 = vmatpush1.bf16.msra.mxu0 0
    %1555 = vmatprep.subr.bf16.mxu0 0
    %1556 = vmatpush1.bf16.msra.mxu0 0
    %1557 = vmatprep.subr.bf16.mxu0 0
    %1558 = vmatpush1.bf16.msra.mxu0 0
    %1559 = vmatprep.subr.bf16.mxu0 0
    %1560 = vmatpush1.bf16.msra.mxu0 0
    %1561 = vmatprep.subr.bf16.mxu0 0
    %1562 = vmatpush1.bf16.msra.mxu0 0
    %1563 = vmatprep.subr.bf16.mxu0 0
    %1564 = vmatpush1.bf16.msra.mxu0 0
    %1565 = vmatprep.subr.bf16.mxu0 0
    %1566 = vmatpush1.bf16.msra.mxu0 0
    %1567 = vmatprep.subr.bf16.mxu0 0
    %1568 = vmatpush1.bf16.msra.mxu0 0
    %1569 = vmatprep.subr.bf16.mxu0 0
    %1570 = vmatpush1.bf16.msra.mxu0 0
    %1571 = vmatprep.subr.bf16.mxu0 0
    %1572 = vmatpush1.bf16.msra.mxu0 0
    %1573 = vmatprep.subr.bf16.mxu0 0
    %1574 = vmatpush1.bf16.msra.mxu0 0
    %1575 = vmatprep.mubr.bf16.mxu0 0
    %1576 = vmatmul.mubr.bf16.gmra.mrb[0].mxu0 %v1254
    %v1577 = vpop.f32.mrb[0].mxu0
    %v1578 = vadd.f32 %v1537, %v1577
    %v1579 = vpop.f32.mrb[0].mxu0
    %v1580 = vadd.f32 %v1539, %v1579
    %v1581 = vpop.f32.mrb[0].mxu0
    %v1582 = vpop.f32.mrb[0].mxu0
    %1583 = vdwg.mxu0
    %v1584 = vmax.f32 %v1414, 0.0
    %v1585 = vmax.f32 %v1416, 0.0
    %v1586 = vmax.f32 %v1578, 0.0
    %v1587 = vmax.f32 %v1580, 0.0
    %v1588 = vpack.c.bf16 %v1584, %v1584
    %v1589 = vpack.c.bf16 %v1585, %v1585
    %v1590 = vpack.c.bf16 %v1586, %v1586
    %v1591 = vpack.c.bf16 %v1587, %v1587
    %v1592 = vld [vmem:[%s4] sm:$0xf]
    %v1593 = vld [vmem:[%s4 + $0x4] sm:$0xf]
    %v1594 = vld [vmem:[%s4 + $0x8] sm:$0xf]
    %v1595 = vld [vmem:[%s4 + $0xc] sm:$0xf]
    %v1596 = vld [vmem:[%s4 + $0x10] sm:$0xf]
    %v1597 = vld [vmem:[%s4 + $0x14] sm:$0xf]
    %v1598 = vld [vmem:[%s4 + $0x18] sm:$0xf]
    %v1599 = vld [vmem:[%s4 + $0x1c] sm:$0xf]
    %v1600 = vld [vmem:[%s4 + $0x20] sm:$0xf]
    %v1601 = vld [vmem:[%s4 + $0x24] sm:$0xf]
    %v1602 = vld [vmem:[%s4 + $0x28] sm:$0xf]
    %v1603 = vld [vmem:[%s4 + $0x2c] sm:$0xf]
    %v1604 = vld [vmem:[%s4 + $0x30] sm:$0xf]
    %v1605 = vld [vmem:[%s4 + $0x34] sm:$0xf]
    %v1606 = vld [vmem:[%s4 + $0x38] sm:$0xf]
    %v1607 = vld [vmem:[%s4 + $0x3c] sm:$0xf]
    %v1608 = vld [vmem:[%s4 + $0x40] sm:$0xf]
    %v1609 = vld [vmem:[%s4 + $0x44] sm:$0xf]
    %v1610 = vld [vmem:[%s4 + $0x48] sm:$0xf]
    %v1611 = vld [vmem:[%s4 + $0x4c] sm:$0xf]
    %v1612 = vld [vmem:[%s4 + $0x50] sm:$0xf]
    %v1613 = vld [vmem:[%s4 + $0x54] sm:$0xf]
    %v1614 = vld [vmem:[%s4 + $0x58] sm:$0xf]
    %v1615 = vld [vmem:[%s4 + $0x5c] sm:$0xf]
    %v1616 = vld [vmem:[%s4 + $0x60] sm:$0xf]
    %v1617 = vld [vmem:[%s4 + $0x64] sm:$0xf]
    %v1618 = vld [vmem:[%s4 + $0x68] sm:$0xf]
    %v1619 = vld [vmem:[%s4 + $0x6c] sm:$0xf]
    %v1620 = vld [vmem:[%s4 + $0x70] sm:$0xf]
    %v1621 = vld [vmem:[%s4 + $0x74] sm:$0xf]
    %v1622 = vld [vmem:[%s4 + $0x78] sm:$0xf]
    %v1623 = vld [vmem:[%s4 + $0x7c] sm:$0xf]
    %v1624 = vld [vmem:[%s4 + $0x80] sm:$0xf]
    %v1625 = vld [vmem:[%s4 + $0x84] sm:$0xf]
    %v1626 = vld [vmem:[%s4 + $0x88] sm:$0xf]
    %v1627 = vld [vmem:[%s4 + $0x8c] sm:$0xf]
    %v1628 = vld [vmem:[%s4 + $0x90] sm:$0xf]
    %v1629 = vld [vmem:[%s4 + $0x94] sm:$0xf]
    %v1630 = vld [vmem:[%s4 + $0x98] sm:$0xf]
    %v1631 = vld [vmem:[%s4 + $0x9c] sm:$0xf]
    %v1632 = vld [vmem:[%s4 + $0xa0] sm:$0xf]
    %v1633 = vld [vmem:[%s4 + $0xa4] sm:$0xf]
    %v1634 = vld [vmem:[%s4 + $0xa8] sm:$0xf]
    %v1635 = vld [vmem:[%s4 + $0xac] sm:$0xf]
    %v1636 = vld [vmem:[%s4 + $0xb0] sm:$0xf]
    %v1637 = vld [vmem:[%s4 + $0xb4] sm:$0xf]
    %v1638 = vld [vmem:[%s4 + $0xb8] sm:$0xf]
    %v1639 = vld [vmem:[%s4 + $0xbc] sm:$0xf]
    %v1640 = vld [vmem:[%s4 + $0xc0] sm:$0xf]
    %v1641 = vld [vmem:[%s4 + $0xc4] sm:$0xf]
    %v1642 = vld [vmem:[%s4 + $0xc8] sm:$0xf]
    %v1643 = vld [vmem:[%s4 + $0xcc] sm:$0xf]
    %v1644 = vld [vmem:[%s4 + $0xd0] sm:$0xf]
    %v1645 = vld [vmem:[%s4 + $0xd4] sm:$0xf]
    %v1646 = vld [vmem:[%s4 + $0xd8] sm:$0xf]
    %v1647 = vld [vmem:[%s4 + $0xdc] sm:$0xf]
    %v1648 = vld [vmem:[%s4 + $0xe0] sm:$0xf]
    %v1649 = vld [vmem:[%s4 + $0xe4] sm:$0xf]
    %v1650 = vld [vmem:[%s4 + $0xe8] sm:$0xf]
    %v1651 = vld [vmem:[%s4 + $0xec] sm:$0xf]
    %v1652 = vld [vmem:[%s4 + $0xf0] sm:$0xf]
    %v1653 = vld [vmem:[%s4 + $0xf4] sm:$0xf]
    %v1654 = vld [vmem:[%s4 + $0xf8] sm:$0xf]
    %v1655 = vld [vmem:[%s4 + $0xfc] sm:$0xf]
    %v1656 = vld [vmem:[%s5] sm:$0x1]
    %v1658 = vlaneseq
    %v1659 = vshrl.u32 %v1658, 7
    %v1660 = vsub.s32 0, %v1659
    %v1661 = vrot.slane %v1656, %v1660
    %v1727 = vunpack.c.l.b16 %v1592
    %v1728 = vunpack.c.l.b16 %v1593
    %v1729 = vunpack.c.l.b16 %v1594
    %v1730 = vunpack.c.l.b16 %v1595
    %v1731 = vunpack.c.l.b16 %v1596
    %v1732 = vunpack.c.l.b16 %v1597
    %v1733 = vunpack.c.l.b16 %v1598
    %v1734 = vunpack.c.l.b16 %v1599
    %v1735 = vunpack.c.l.b16 %v1600
    %v1736 = vunpack.c.l.b16 %v1601
    %v1737 = vunpack.c.l.b16 %v1602
    %v1738 = vunpack.c.l.b16 %v1603
    %v1739 = vunpack.c.l.b16 %v1604
    %v1740 = vunpack.c.l.b16 %v1605
    %v1741 = vunpack.c.l.b16 %v1606
    %v1742 = vunpack.c.l.b16 %v1607
    %v1743 = vunpack.c.l.b16 %v1608
    %v1744 = vunpack.c.l.b16 %v1609
    %v1745 = vunpack.c.l.b16 %v1610
    %v1746 = vunpack.c.l.b16 %v1611
    %v1747 = vunpack.c.l.b16 %v1612
    %v1748 = vunpack.c.l.b16 %v1613
    %v1749 = vunpack.c.l.b16 %v1614
    %v1750 = vunpack.c.l.b16 %v1615
    %v1751 = vunpack.c.l.b16 %v1616
    %v1752 = vunpack.c.l.b16 %v1617
    %v1753 = vunpack.c.l.b16 %v1618
    %v1754 = vunpack.c.l.b16 %v1619
    %v1755 = vunpack.c.l.b16 %v1620
    %v1756 = vunpack.c.l.b16 %v1621
    %v1757 = vunpack.c.l.b16 %v1622
    %v1758 = vunpack.c.l.b16 %v1623
    %v1759 = vunpack.c.l.b16 %v1624
    %v1760 = vunpack.c.l.b16 %v1625
    %v1761 = vunpack.c.l.b16 %v1626
    %v1762 = vunpack.c.l.b16 %v1627
    %v1763 = vunpack.c.l.b16 %v1628
    %v1764 = vunpack.c.l.b16 %v1629
    %v1765 = vunpack.c.l.b16 %v1630
    %v1766 = vunpack.c.l.b16 %v1631
    %v1767 = vunpack.c.l.b16 %v1632
    %v1768 = vunpack.c.l.b16 %v1633
    %v1769 = vunpack.c.l.b16 %v1634
    %v1770 = vunpack.c.l.b16 %v1635
    %v1771 = vunpack.c.l.b16 %v1636
    %v1772 = vunpack.c.l.b16 %v1637
    %v1773 = vunpack.c.l.b16 %v1638
    %v1774 = vunpack.c.l.b16 %v1639
    %v1775 = vunpack.c.l.b16 %v1640
    %v1776 = vunpack.c.l.b16 %v1641
    %v1777 = vunpack.c.l.b16 %v1642
    %v1778 = vunpack.c.l.b16 %v1643
    %v1779 = vunpack.c.l.b16 %v1644
    %v1780 = vunpack.c.l.b16 %v1645
    %v1781 = vunpack.c.l.b16 %v1646
    %v1782 = vunpack.c.l.b16 %v1647
    %v1783 = vunpack.c.l.b16 %v1648
    %v1784 = vunpack.c.l.b16 %v1649
    %v1785 = vunpack.c.l.b16 %v1650
    %v1786 = vunpack.c.l.b16 %v1651
    %v1787 = vunpack.c.l.b16 %v1652
    %v1788 = vunpack.c.l.b16 %v1653
    %v1789 = vunpack.c.l.b16 %v1654
    %v1790 = vunpack.c.l.b16 %v1655
    %v1791 = vpack.c.b16 %v1728, %v1727
    %v1792 = vpack.c.b16 %v1730, %v1729
    %v1793 = vpack.c.b16 %v1732, %v1731
    %v1794 = vpack.c.b16 %v1734, %v1733
    %v1795 = vpack.c.b16 %v1736, %v1735
    %v1796 = vpack.c.b16 %v1738, %v1737
    %v1797 = vpack.c.b16 %v1740, %v1739
    %v1798 = vpack.c.b16 %v1742, %v1741
    %v1799 = vpack.c.b16 %v1744, %v1743
    %v1800 = vpack.c.b16 %v1746, %v1745
    %v1801 = vpack.c.b16 %v1748, %v1747
    %v1802 = vpack.c.b16 %v1750, %v1749
    %v1803 = vpack.c.b16 %v1752, %v1751
    %v1804 = vpack.c.b16 %v1754, %v1753
    %v1805 = vpack.c.b16 %v1756, %v1755
    %v1806 = vpack.c.b16 %v1758, %v1757
    %v1807 = vpack.c.b16 %v1760, %v1759
    %v1808 = vpack.c.b16 %v1762, %v1761
    %v1809 = vpack.c.b16 %v1764, %v1763
    %v1810 = vpack.c.b16 %v1766, %v1765
    %v1811 = vpack.c.b16 %v1768, %v1767
    %v1812 = vpack.c.b16 %v1770, %v1769
    %v1813 = vpack.c.b16 %v1772, %v1771
    %v1814 = vpack.c.b16 %v1774, %v1773
    %v1815 = vpack.c.b16 %v1776, %v1775
    %v1816 = vpack.c.b16 %v1778, %v1777
    %v1817 = vpack.c.b16 %v1780, %v1779
    %v1818 = vpack.c.b16 %v1782, %v1781
    %v1819 = vpack.c.b16 %v1784, %v1783
    %v1820 = vpack.c.b16 %v1786, %v1785
    %v1821 = vpack.c.b16 %v1788, %v1787
    %v1822 = vpack.c.b16 %v1790, %v1789
    %1855 = vmatprep.subr.bf16.mxu0 0
    %1856 = vmatpush1.bf16.msra.mxu0 %v1791
    %1857 = vmatprep.subr.bf16.mxu0 0
    %1858 = vmatpush1.bf16.msra.mxu0 %v1792
    %1859 = vmatprep.subr.bf16.mxu0 0
    %1860 = vmatpush1.bf16.msra.mxu0 %v1793
    %1861 = vmatprep.subr.bf16.mxu0 0
    %1862 = vmatpush1.bf16.msra.mxu0 %v1794
    %1863 = vmatprep.subr.bf16.mxu0 0
    %1864 = vmatpush1.bf16.msra.mxu0 %v1795
    %1865 = vmatprep.subr.bf16.mxu0 0
    %1866 = vmatpush1.bf16.msra.mxu0 %v1796
    %1867 = vmatprep.subr.bf16.mxu0 0
    %1868 = vmatpush1.bf16.msra.mxu0 %v1797
    %1869 = vmatprep.subr.bf16.mxu0 0
    %1870 = vmatpush1.bf16.msra.mxu0 %v1798
    %1871 = vmatprep.subr.bf16.mxu0 0
    %1872 = vmatpush1.bf16.msra.mxu0 %v1799
    %1873 = vmatprep.subr.bf16.mxu0 0
    %1874 = vmatpush1.bf16.msra.mxu0 %v1800
    %1875 = vmatprep.subr.bf16.mxu0 0
    %1876 = vmatpush1.bf16.msra.mxu0 %v1801
    %1877 = vmatprep.subr.bf16.mxu0 0
    %1878 = vmatpush1.bf16.msra.mxu0 %v1802
    %1879 = vmatprep.subr.bf16.mxu0 0
    %1880 = vmatpush1.bf16.msra.mxu0 %v1803
    %1881 = vmatprep.subr.bf16.mxu0 0
    %1882 = vmatpush1.bf16.msra.mxu0 %v1804
    %1883 = vmatprep.subr.bf16.mxu0 0
    %1884 = vmatpush1.bf16.msra.mxu0 %v1805
    %1885 = vmatprep.subr.bf16.mxu0 0
    %1886 = vmatpush1.bf16.msra.mxu0 %v1806
    %1887 = vmatprep.mubr.bf16.mxu0 %v1589
    %1888 = vmatmul.mubr.bf16.gmra.mrb[0].mxu0 %v1588
    %v1889 = vpop.f32.mrb[0].mxu0
    %v1890 = vadd.f32 %v1661, %v1889
    %v1891 = vpop.f32.mrb[0].mxu0
    %v1892 = vpop.f32.mrb[0].mxu0
    %v1893 = vpop.f32.mrb[0].mxu0
    %1894 = vdwg.mxu0
    %1895 = vmatprep.subr.bf16.mxu0 0
    %1896 = vmatpush1.bf16.msra.mxu0 %v1807
    %1897 = vmatprep.subr.bf16.mxu0 0
    %1898 = vmatpush1.bf16.msra.mxu0 %v1808
    %1899 = vmatprep.subr.bf16.mxu0 0
    %1900 = vmatpush1.bf16.msra.mxu0 %v1809
    %1901 = vmatprep.subr.bf16.mxu0 0
    %1902 = vmatpush1.bf16.msra.mxu0 %v1810
    %1903 = vmatprep.subr.bf16.mxu0 0
    %1904 = vmatpush1.bf16.msra.mxu0 %v1811
    %1905 = vmatprep.subr.bf16.mxu0 0
    %1906 = vmatpush1.bf16.msra.mxu0 %v1812
    %1907 = vmatprep.subr.bf16.mxu0 0
    %1908 = vmatpush1.bf16.msra.mxu0 %v1813
    %1909 = vmatprep.subr.bf16.mxu0 0
    %1910 = vmatpush1.bf16.msra.mxu0 %v1814
    %1911 = vmatprep.subr.bf16.mxu0 0
    %1912 = vmatpush1.bf16.msra.mxu0 %v1815
    %1913 = vmatprep.subr.bf16.mxu0 0
    %1914 = vmatpush1.bf16.msra.mxu0 %v1816
    %1915 = vmatprep.subr.bf16.mxu0 0
    %1916 = vmatpush1.bf16.msra.mxu0 %v1817
    %1917 = vmatprep.subr.bf16.mxu0 0
    %1918 = vmatpush1.bf16.msra.mxu0 %v1818
    %1919 = vmatprep.subr.bf16.mxu0 0
    %1920 = vmatpush1.bf16.msra.mxu0 %v1819
    %1921 = vmatprep.subr.bf16.mxu0 0
    %1922 = vmatpush1.bf16.msra.mxu0 %v1820
    %1923 = vmatprep.subr.bf16.mxu0 0
    %1924 = vmatpush1.bf16.msra.mxu0 %v1821
    %1925 = vmatprep.subr.bf16.mxu0 0
    %1926 = vmatpush1.bf16.msra.mxu0 %v1822
    %1927 = vmatprep.mubr.bf16.mxu0 %v1591
    %1928 = vmatmul.mubr.bf16.gmra.mrb[0].mxu0 %v1590
    %v1929 = vpop.f32.mrb[0].mxu0
    %v1930 = vadd.f32 %v1890, %v1929
    %v1931 = vpop.f32.mrb[0].mxu0
    %v1932 = vpop.f32.mrb[0].mxu0
    %v1933 = vpop.f32.mrb[0].mxu0
    %1934 = vdwg.mxu0
    %v1935 = vld [vmem:[%s1] sm:$0xff]
    %v1936 = vmul.f32 %v1930, 0.5
    %v1937 = vmul.f32 %v1936, 1.442695
    %v1938 = vpow.pop %v1937
    %1940 = vrot.lane.b32.xlu0 %v1938, 64
    %v1941 = vpop.permute.xlu0 %1940
    %v1943 = vmul.f32 %v1935, %v1941
    %v1944 = vadd.f32 %v1930, %v1943
    %v1945 = vpack.c.bf16 %v1944, %v1944
    %v1946 = vld [vmem:[%s6] sm:$0xff]
    %v1947 = vld [vmem:[%s6 + $0x8] sm:$0xff]
    %v1948 = vld [vmem:[%s6 + $0x10] sm:$0xff]
    %v1949 = vld [vmem:[%s6 + $0x18] sm:$0xff]
    %v1950 = vld [vmem:[%s6 + $0x20] sm:$0xff]
    %v1951 = vld [vmem:[%s6 + $0x28] sm:$0xff]
    %v1952 = vld [vmem:[%s6 + $0x30] sm:$0xff]
    %v1953 = vld [vmem:[%s6 + $0x38] sm:$0xff]
    %v1954 = vld [vmem:[%s6 + $0x40] sm:$0xff]
    %v1955 = vld [vmem:[%s6 + $0x48] sm:$0xff]
    %v1956 = vld [vmem:[%s6 + $0x50] sm:$0xff]
    %v1957 = vld [vmem:[%s6 + $0x58] sm:$0xff]
    %v1958 = vld [vmem:[%s6 + $0x60] sm:$0xff]
    %v1959 = vld [vmem:[%s6 + $0x68] sm:$0xff]
    %v1960 = vld [vmem:[%s6 + $0x70] sm:$0xff]
    %v1961 = vld [vmem:[%s6 + $0x78] sm:$0xff]
    %v1962 = vld [vmem:[%s7] sm:$0xf]
    %v1964 = vlaneseq
    %v1965 = vshrl.u32 %v1964, 7
    %v1966 = vsub.s32 0, %v1965
    %v1967 = vrot.slane %v1962, %v1966
    %v1968 = vlaneseq
    %v1969 = vshrl.u32 %v1968, 7
    %v1970 = vsub.s32 1, %v1969
    %v1971 = vrot.slane %v1962, %v1970
    %v1972 = vlaneseq
    %v1973 = vshrl.u32 %v1972, 7
    %v1974 = vsub.s32 2, %v1973
    %v1975 = vrot.slane %v1962, %v1974
    %v1976 = vlaneseq
    %v1977 = vshrl.u32 %v1976, 7
    %v1978 = vsub.s32 3, %v1977
    %v1979 = vrot.slane %v1962, %v1978
    %v2000 = vunpack.c.l.b16 %v1946
    %v2001 = vunpack.c.h.b16 %v1946
    %v2002 = vunpack.c.l.b16 %v1947
    %v2003 = vunpack.c.h.b16 %v1947
    %v2004 = vunpack.c.l.b16 %v1948
    %v2005 = vunpack.c.h.b16 %v1948
    %v2006 = vunpack.c.l.b16 %v1949
    %v2007 = vunpack.c.h.b16 %v1949
    %v2008 = vunpack.c.l.b16 %v1950
    %v2009 = vunpack.c.h.b16 %v1950
    %v2010 = vunpack.c.l.b16 %v1951
    %v2011 = vunpack.c.h.b16 %v1951
    %v2012 = vunpack.c.l.b16 %v1952
    %v2013 = vunpack.c.h.b16 %v1952
    %v2014 = vunpack.c.l.b16 %v1953
    %v2015 = vunpack.c.h.b16 %v1953
    %v2016 = vunpack.c.l.b16 %v1954
    %v2017 = vunpack.c.h.b16 %v1954
    %v2018 = vunpack.c.l.b16 %v1955
    %v2019 = vunpack.c.h.b16 %v1955
    %v2020 = vunpack.c.l.b16 %v1956
    %v2021 = vunpack.c.h.b16 %v1956
    %v2022 = vunpack.c.l.b16 %v1957
    %v2023 = vunpack.c.h.b16 %v1957
    %v2024 = vunpack.c.l.b16 %v1958
    %v2025 = vunpack.c.h.b16 %v1958
    %v2026 = vunpack.c.l.b16 %v1959
    %v2027 = vunpack.c.h.b16 %v1959
    %v2028 = vunpack.c.l.b16 %v1960
    %v2029 = vunpack.c.h.b16 %v1960
    %v2030 = vunpack.c.l.b16 %v1961
    %v2031 = vunpack.c.h.b16 %v1961
    %v2032 = vpack.c.b16 %v2004, %v2000
    %v2033 = vpack.c.b16 %v2005, %v2001
    %v2034 = vpack.c.b16 %v2006, %v2002
    %v2035 = vpack.c.b16 %v2007, %v2003
    %v2036 = vpack.c.b16 %v2012, %v2008
    %v2037 = vpack.c.b16 %v2013, %v2009
    %v2038 = vpack.c.b16 %v2014, %v2010
    %v2039 = vpack.c.b16 %v2015, %v2011
    %v2040 = vpack.c.b16 %v2020, %v2016
    %v2041 = vpack.c.b16 %v2021, %v2017
    %v2042 = vpack.c.b16 %v2022, %v2018
    %v2043 = vpack.c.b16 %v2023, %v2019
    %v2044 = vpack.c.b16 %v2028, %v2024
    %v2045 = vpack.c.b16 %v2029, %v2025
    %v2046 = vpack.c.b16 %v2030, %v2026
    %v2047 = vpack.c.b16 %v2031, %v2027
    %vm2064 = vcmask 523264
    %v2066 = vsel %vm2064, %v1945, 0
    %2068 = vmatprep.subr.bf16.mxu0 %v2033
    %2069 = vmatpush1.bf16.msra.mxu0 %v2032
    %2070 = vmatprep.subr.bf16.mxu0 %v2037
    %2071 = vmatpush1.bf16.msra.mxu0 %v2036
    %2072 = vmatprep.subr.bf16.mxu0 %v2041
    %2073 = vmatpush1.bf16.msra.mxu0 %v2040
    %2074 = vmatprep.subr.bf16.mxu0 %v2045
    %2075 = vmatpush1.bf16.msra.mxu0 %v2044
    %2076 = vmatprep.subr.bf16.mxu0 0
    %2077 = vmatpush1.bf16.msra.mxu0 0
    %2078 = vmatprep.subr.bf16.mxu0 0
    %2079 = vmatpush1.bf16.msra.mxu0 0
    %2080 = vmatprep.subr.bf16.mxu0 0
    %2081 = vmatpush1.bf16.msra.mxu0 0
    %2082 = vmatprep.subr.bf16.mxu0 0
    %2083 = vmatpush1.bf16.msra.mxu0 0
    %2084 = vmatprep.subr.bf16.mxu0 0
    %2085 = vmatpush1.bf16.msra.mxu0 0
    %2086 = vmatprep.subr.bf16.mxu0 0
    %2087 = vmatpush1.bf16.msra.mxu0 0
    %2088 = vmatprep.subr.bf16.mxu0 0
    %2089 = vmatpush1.bf16.msra.mxu0 0
    %2090 = vmatprep.subr.bf16.mxu0 0
    %2091 = vmatpush1.bf16.msra.mxu0 0
    %2092 = vmatprep.subr.bf16.mxu0 0
    %2093 = vmatpush1.bf16.msra.mxu0 0
    %2094 = vmatprep.subr.bf16.mxu0 0
    %2095 = vmatpush1.bf16.msra.mxu0 0
    %2096 = vmatprep.subr.bf16.mxu0 0
    %2097 = vmatpush1.bf16.msra.mxu0 0
    %2098 = vmatprep.subr.bf16.mxu0 0
    %2099 = vmatpush1.bf16.msra.mxu0 0
    %2100 = vmatprep.mubr.bf16.mxu0 0
    %2101 = vmatmul.mubr.bf16.gmra.mrb[0].mxu0 %v2066
    %v2102 = vpop.f32.mrb[0].mxu0
    %v2103 = vadd.f32 %v1967, %v2102
    %v2104 = vpop.f32.mrb[0].mxu0
    %v2105 = vadd.f32 %v1971, %v2104
    %v2106 = vpop.f32.mrb[0].mxu0
    %v2107 = vpop.f32.mrb[0].mxu0
    %2108 = vdwg.mxu0
    %2109 = vmatprep.subr.bf16.mxu0 %v2035
    %2110 = vmatpush1.bf16.msra.mxu0 %v2034
    %2111 = vmatprep.subr.bf16.mxu0 %v2039
    %2112 = vmatpush1.bf16.msra.mxu0 %v2038
    %2113 = vmatprep.subr.bf16.mxu0 %v2043
    %2114 = vmatpush1.bf16.msra.mxu0 %v2042
    %2115 = vmatprep.subr.bf16.mxu0 %v2047
    %2116 = vmatpush1.bf16.msra.mxu0 %v2046
    %2117 = vmatprep.subr.bf16.mxu0 0
    %2118 = vmatpush1.bf16.msra.mxu0 0
    %2119 = vmatprep.subr.bf16.mxu0 0
    %2120 = vmatpush1.bf16.msra.mxu0 0
    %2121 = vmatprep.subr.bf16.mxu0 0
    %2122 = vmatpush1.bf16.msra.mxu0 0
    %2123 = vmatprep.subr.bf16.mxu0 0
    %2124 = vmatpush1.bf16.msra.mxu0 0
    %2125 = vmatprep.subr.bf16.mxu0 0
    %2126 = vmatpush1.bf16.msra.mxu0 0
    %2127 = vmatprep.subr.bf16.mxu0 0
    %2128 = vmatpush1.bf16.msra.mxu0 0
    %2129 = vmatprep.subr.bf16.mxu0 0
    %2130 = vmatpush1.bf16.msra.mxu0 0
    %2131 = vmatprep.subr.bf16.mxu0 0
    %2132 = vmatpush1.bf16.msra.mxu0 0
    %2133 = vmatprep.subr.bf16.mxu0 0
    %2134 = vmatpush1.bf16.msra.mxu0 0
    %2135 = vmatprep.subr.bf16.mxu0 0
    %2136 = vmatpush1.bf16.msra.mxu0 0
    %2137 = vmatprep.subr.bf16.mxu0 0
    %2138 = vmatpush1.bf16.msra.mxu0 0
    %2139 = vmatprep.subr.bf16.mxu0 0
    %2140 = vmatpush1.bf16.msra.mxu0 0
    %2141 = vmatprep.mubr.bf16.mxu0 0
    %2142 = vmatmul.mubr.bf16.gmra.mrb[0].mxu0 %v2066
    %v2143 = vpop.f32.mrb[0].mxu0
    %v2144 = vadd.f32 %v1975, %v2143
    %v2145 = vpop.f32.mrb[0].mxu0
    %v2146 = vadd.f32 %v1979, %v2145
    %v2147 = vpop.f32.mrb[0].mxu0
    %v2148 = vpop.f32.mrb[0].mxu0
    %2149 = vdwg.mxu0
    %v2150 = vmax.f32 %v2103, 0.0
    %v2151 = vmax.f32 %v2105, 0.0
    %v2152 = vmax.f32 %v2144, 0.0
    %v2153 = vmax.f32 %v2146, 0.0
    %v2154 = vpack.c.bf16 %v2150, %v2150
    %v2155 = vpack.c.bf16 %v2151, %v2151
    %v2156 = vpack.c.bf16 %v2152, %v2152
    %v2157 = vpack.c.bf16 %v2153, %v2153
    %v2158 = vld [vmem:[%s8] sm:$0xff]
    %v2159 = vld [vmem:[%s8 + $0x8] sm:$0xff]
    %v2160 = vld [vmem:[%s8 + $0x10] sm:$0xff]
    %v2161 = vld [vmem:[%s8 + $0x18] sm:$0xf]
    %v2162 = vld [vmem:[%s8 + $0x1c] sm:$0xff]
    %v2163 = vld [vmem:[%s8 + $0x24] sm:$0xff]
    %v2164 = vld [vmem:[%s8 + $0x2c] sm:$0xff]
    %v2165 = vld [vmem:[%s8 + $0x34] sm:$0xf]
    %v2166 = vld [vmem:[%s8 + $0x38] sm:$0xff]
    %v2167 = vld [vmem:[%s8 + $0x40] sm:$0xff]
    %v2168 = vld [vmem:[%s8 + $0x48] sm:$0xff]
    %v2169 = vld [vmem:[%s8 + $0x50] sm:$0xf]
    %v2170 = vld [vmem:[%s8 + $0x54] sm:$0xff]
    %v2171 = vld [vmem:[%s8 + $0x5c] sm:$0xff]
    %v2172 = vld [vmem:[%s8 + $0x64] sm:$0xff]
    %v2173 = vld [vmem:[%s8 + $0x6c] sm:$0xf]
    %v2174 = vld [vmem:[%s8 + $0x70] sm:$0xff]
    %v2175 = vld [vmem:[%s8 + $0x78] sm:$0xff]
    %v2176 = vld [vmem:[%s8 + $0x80] sm:$0xff]
    %v2177 = vld [vmem:[%s8 + $0x88] sm:$0xf]
    %v2178 = vld [vmem:[%s8 + $0x8c] sm:$0xff]
    %v2179 = vld [vmem:[%s8 + $0x94] sm:$0xff]
    %v2180 = vld [vmem:[%s8 + $0x9c] sm:$0xff]
    %v2181 = vld [vmem:[%s8 + $0xa4] sm:$0xf]
    %v2182 = vld [vmem:[%s8 + $0xa8] sm:$0xff]
    %v2183 = vld [vmem:[%s8 + $0xb0] sm:$0xff]
    %v2184 = vld [vmem:[%s8 + $0xb8] sm:$0xff]
    %v2185 = vld [vmem:[%s8 + $0xc0] sm:$0xf]
    %v2186 = vld [vmem:[%s8 + $0xc4] sm:$0xff]
    %v2187 = vld [vmem:[%s8 + $0xcc] sm:$0xff]
    %v2188 = vld [vmem:[%s8 + $0xd4] sm:$0xff]
    %v2189 = vld [vmem:[%s8 + $0xdc] sm:$0xf]
    %v2190 = vld [vmem:[%s8 + $0xe0] sm:$0xff]
    %v2191 = vld [vmem:[%s8 + $0xe8] sm:$0xff]
    %v2192 = vld [vmem:[%s8 + $0xf0] sm:$0xff]
    %v2193 = vld [vmem:[%s8 + $0xf8] sm:$0xf]
    %v2194 = vld [vmem:[%s8 + $0xfc] sm:$0xff]
    %v2195 = vld [vmem:[%s8 + $0x104] sm:$0xff]
    %v2196 = vld [vmem:[%s8 + $0x10c] sm:$0xff]
    %v2197 = vld [vmem:[%s8 + $0x114] sm:$0xf]
    %v2198 = vld [vmem:[%s8 + $0x118] sm:$0xff]
    %v2199 = vld [vmem:[%s8 + $0x120] sm:$0xff]
    %v2200 = vld [vmem:[%s8 + $0x128] sm:$0xff]
    %v2201 = vld [vmem:[%s8 + $0x130] sm:$0xf]
    %v2202 = vld [vmem:[%s8 + $0x134] sm:$0xff]
    %v2203 = vld [vmem:[%s8 + $0x13c] sm:$0xff]
    %v2204 = vld [vmem:[%s8 + $0x144] sm:$0xff]
    %v2205 = vld [vmem:[%s8 + $0x14c] sm:$0xf]
    %v2206 = vld [vmem:[%s8 + $0x150] sm:$0xff]
    %v2207 = vld [vmem:[%s8 + $0x158] sm:$0xff]
    %v2208 = vld [vmem:[%s8 + $0x160] sm:$0xff]
    %v2209 = vld [vmem:[%s8 + $0x168] sm:$0xf]
    %v2210 = vld [vmem:[%s8 + $0x16c] sm:$0xff]
    %v2211 = vld [vmem:[%s8 + $0x174] sm:$0xff]
    %v2212 = vld [vmem:[%s8 + $0x17c] sm:$0xff]
    %v2213 = vld [vmem:[%s8 + $0x184] sm:$0xf]
    %v2214 = vld [vmem:[%s8 + $0x188] sm:$0xff]
    %v2215 = vld [vmem:[%s8 + $0x190] sm:$0xff]
    %v2216 = vld [vmem:[%s8 + $0x198] sm:$0xff]
    %v2217 = vld [vmem:[%s8 + $0x1a0] sm:$0xf]
    %v2218 = vld [vmem:[%s8 + $0x1a4] sm:$0xff]
    %v2219 = vld [vmem:[%s8 + $0x1ac] sm:$0xff]
    %v2220 = vld [vmem:[%s8 + $0x1b4] sm:$0xff]
    %v2221 = vld [vmem:[%s8 + $0x1bc] sm:$0xf]
    %v2222 = vld [vmem:[%s8 + $0x1c0] sm:$0xff]
    %v2223 = vld [vmem:[%s8 + $0x1c8] sm:$0xff]
    %v2224 = vld [vmem:[%s8 + $0x1d0] sm:$0xff]
    %v2225 = vld [vmem:[%s8 + $0x1d8] sm:$0xf]
    %v2226 = vld [vmem:[%s8 + $0x1dc] sm:$0xff]
    %v2227 = vld [vmem:[%s8 + $0x1e4] sm:$0xff]
    %v2228 = vld [vmem:[%s8 + $0x1ec] sm:$0xff]
    %v2229 = vld [vmem:[%s8 + $0x1f4] sm:$0xf]
    %v2230 = vld [vmem:[%s8 + $0x1f8] sm:$0xff]
    %v2231 = vld [vmem:[%s8 + $0x200] sm:$0xff]
    %v2232 = vld [vmem:[%s8 + $0x208] sm:$0xff]
    %v2233 = vld [vmem:[%s8 + $0x210] sm:$0xf]
    %v2234 = vld [vmem:[%s8 + $0x214] sm:$0xff]
    %v2235 = vld [vmem:[%s8 + $0x21c] sm:$0xff]
    %v2236 = vld [vmem:[%s8 + $0x224] sm:$0xff]
    %v2237 = vld [vmem:[%s8 + $0x22c] sm:$0xf]
    %v2238 = vld [vmem:[%s8 + $0x230] sm:$0xff]
    %v2239 = vld [vmem:[%s8 + $0x238] sm:$0xff]
    %v2240 = vld [vmem:[%s8 + $0x240] sm:$0xff]
    %v2241 = vld [vmem:[%s8 + $0x248] sm:$0xf]
    %v2242 = vld [vmem:[%s8 + $0x24c] sm:$0xff]
    %v2243 = vld [vmem:[%s8 + $0x254] sm:$0xff]
    %v2244 = vld [vmem:[%s8 + $0x25c] sm:$0xff]
    %v2245 = vld [vmem:[%s8 + $0x264] sm:$0xf]
    %v2246 = vld [vmem:[%s8 + $0x268] sm:$0xff]
    %v2247 = vld [vmem:[%s8 + $0x270] sm:$0xff]
    %v2248 = vld [vmem:[%s8 + $0x278] sm:$0xff]
    %v2249 = vld [vmem:[%s8 + $0x280] sm:$0xf]
    %v2250 = vld [vmem:[%s8 + $0x284] sm:$0xff]
    %v2251 = vld [vmem:[%s8 + $0x28c] sm:$0xff]
    %v2252 = vld [vmem:[%s8 + $0x294] sm:$0xff]
    %v2253 = vld [vmem:[%s8 + $0x29c] sm:$0xf]
    %v2254 = vld [vmem:[%s8 + $0x2a0] sm:$0xff]
    %v2255 = vld [vmem:[%s8 + $0x2a8] sm:$0xff]
    %v2256 = vld [vmem:[%s8 + $0x2b0] sm:$0xff]
    %v2257 = vld [vmem:[%s8 + $0x2b8] sm:$0xf]
    %v2258 = vld [vmem:[%s8 + $0x2bc] sm:$0xff]
    %v2259 = vld [vmem:[%s8 + $0x2c4] sm:$0xff]
    %v2260 = vld [vmem:[%s8 + $0x2cc] sm:$0xff]
    %v2261 = vld [vmem:[%s8 + $0x2d4] sm:$0xf]
    %v2262 = vld [vmem:[%s8 + $0x2d8] sm:$0xff]
    %v2263 = vld [vmem:[%s8 + $0x2e0] sm:$0xff]
    %v2264 = vld [vmem:[%s8 + $0x2e8] sm:$0xff]
    %v2265 = vld [vmem:[%s8 + $0x2f0] sm:$0xf]
    %v2266 = vld [vmem:[%s8 + $0x2f4] sm:$0xff]
    %v2267 = vld [vmem:[%s8 + $0x2fc] sm:$0xff]
    %v2268 = vld [vmem:[%s8 + $0x304] sm:$0xff]
    %v2269 = vld [vmem:[%s8 + $0x30c] sm:$0xf]
    %v2270 = vld [vmem:[%s8 + $0x310] sm:$0xff]
    %v2271 = vld [vmem:[%s8 + $0x318] sm:$0xff]
    %v2272 = vld [vmem:[%s8 + $0x320] sm:$0xff]
    %v2273 = vld [vmem:[%s8 + $0x328] sm:$0xf]
    %v2274 = vld [vmem:[%s8 + $0x32c] sm:$0xff]
    %v2275 = vld [vmem:[%s8 + $0x334] sm:$0xff]
    %v2276 = vld [vmem:[%s8 + $0x33c] sm:$0xff]
    %v2277 = vld [vmem:[%s8 + $0x344] sm:$0xf]
    %v2278 = vld [vmem:[%s8 + $0x348] sm:$0xff]
    %v2279 = vld [vmem:[%s8 + $0x350] sm:$0xff]
    %v2280 = vld [vmem:[%s8 + $0x358] sm:$0xff]
    %v2281 = vld [vmem:[%s8 + $0x360] sm:$0xf]
    %v2282 = vld [vmem:[%s8 + $0x364] sm:$0xff]
    %v2283 = vld [vmem:[%s8 + $0x36c] sm:$0xff]
    %v2284 = vld [vmem:[%s8 + $0x374] sm:$0xff]
    %v2285 = vld [vmem:[%s8 + $0x37c] sm:$0xf]
    %v2286 = vld [vmem:[%s8 + $0x380] sm:$0xff]
    %v2287 = vld [vmem:[%s8 + $0x388] sm:$0xff]
    %v2288 = vld [vmem:[%s8 + $0x390] sm:$0xff]
    %v2289 = vld [vmem:[%s8 + $0x398] sm:$0xf]
    %v2290 = vld [vmem:[%s8 + $0x39c] sm:$0xff]
    %v2291 = vld [vmem:[%s8 + $0x3a4] sm:$0xff]
    %v2292 = vld [vmem:[%s8 + $0x3ac] sm:$0xff]
    %v2293 = vld [vmem:[%s8 + $0x3b4] sm:$0xf]
    %v2294 = vld [vmem:[%s8 + $0x3b8] sm:$0xff]
    %v2295 = vld [vmem:[%s8 + $0x3c0] sm:$0xff]
    %v2296 = vld [vmem:[%s8 + $0x3c8] sm:$0xff]
    %v2297 = vld [vmem:[%s8 + $0x3d0] sm:$0xf]
    %v2298 = vld [vmem:[%s8 + $0x3d4] sm:$0xff]
    %v2299 = vld [vmem:[%s8 + $0x3dc] sm:$0xff]
    %v2300 = vld [vmem:[%s8 + $0x3e4] sm:$0xff]
    %v2301 = vld [vmem:[%s8 + $0x3ec] sm:$0xf]
    %v2302 = vld [vmem:[%s8 + $0x3f0] sm:$0xff]
    %v2303 = vld [vmem:[%s8 + $0x3f8] sm:$0xff]
    %v2304 = vld [vmem:[%s8 + $0x400] sm:$0xff]
    %v2305 = vld [vmem:[%s8 + $0x408] sm:$0xf]
    %v2306 = vld [vmem:[%s8 + $0x40c] sm:$0xff]
    %v2307 = vld [vmem:[%s8 + $0x414] sm:$0xff]
    %v2308 = vld [vmem:[%s8 + $0x41c] sm:$0xff]
    %v2309 = vld [vmem:[%s8 + $0x424] sm:$0xf]
    %v2310 = vld [vmem:[%s8 + $0x428] sm:$0xff]
    %v2311 = vld [vmem:[%s8 + $0x430] sm:$0xff]
    %v2312 = vld [vmem:[%s8 + $0x438] sm:$0xff]
    %v2313 = vld [vmem:[%s8 + $0x440] sm:$0xf]
    %v2314 = vld [vmem:[%s8 + $0x444] sm:$0xff]
    %v2315 = vld [vmem:[%s8 + $0x44c] sm:$0xff]
    %v2316 = vld [vmem:[%s8 + $0x454] sm:$0xff]
    %v2317 = vld [vmem:[%s8 + $0x45c] sm:$0xf]
    %v2318 = vld [vmem:[%s8 + $0x460] sm:$0xff]
    %v2319 = vld [vmem:[%s8 + $0x468] sm:$0xff]
    %v2320 = vld [vmem:[%s8 + $0x470] sm:$0xff]
    %v2321 = vld [vmem:[%s8 + $0x478] sm:$0xf]
    %v2322 = vld [vmem:[%s8 + $0x47c] sm:$0xff]
    %v2323 = vld [vmem:[%s8 + $0x484] sm:$0xff]
    %v2324 = vld [vmem:[%s8 + $0x48c] sm:$0xff]
    %v2325 = vld [vmem:[%s8 + $0x494] sm:$0xf]
    %v2326 = vld [vmem:[%s8 + $0x498] sm:$0xff]
    %v2327 = vld [vmem:[%s8 + $0x4a0] sm:$0xff]
    %v2328 = vld [vmem:[%s8 + $0x4a8] sm:$0xff]
    %v2329 = vld [vmem:[%s8 + $0x4b0] sm:$0xf]
    %v2330 = vld [vmem:[%s8 + $0x4b4] sm:$0xff]
    %v2331 = vld [vmem:[%s8 + $0x4bc] sm:$0xff]
    %v2332 = vld [vmem:[%s8 + $0x4c4] sm:$0xff]
    %v2333 = vld [vmem:[%s8 + $0x4cc] sm:$0xf]
    %v2334 = vld [vmem:[%s8 + $0x4d0] sm:$0xff]
    %v2335 = vld [vmem:[%s8 + $0x4d8] sm:$0xff]
    %v2336 = vld [vmem:[%s8 + $0x4e0] sm:$0xff]
    %v2337 = vld [vmem:[%s8 + $0x4e8] sm:$0xf]
    %v2338 = vld [vmem:[%s8 + $0x4ec] sm:$0xff]
    %v2339 = vld [vmem:[%s8 + $0x4f4] sm:$0xff]
    %v2340 = vld [vmem:[%s8 + $0x4fc] sm:$0xff]
    %v2341 = vld [vmem:[%s8 + $0x504] sm:$0xf]
    %v2342 = vld [vmem:[%s8 + $0x508] sm:$0xff]
    %v2343 = vld [vmem:[%s8 + $0x510] sm:$0xff]
    %v2344 = vld [vmem:[%s8 + $0x518] sm:$0xff]
    %v2345 = vld [vmem:[%s8 + $0x520] sm:$0xf]
    %v2346 = vld [vmem:[%s8 + $0x524] sm:$0xff]
    %v2347 = vld [vmem:[%s8 + $0x52c] sm:$0xff]
    %v2348 = vld [vmem:[%s8 + $0x534] sm:$0xff]
    %v2349 = vld [vmem:[%s8 + $0x53c] sm:$0xf]
    %v2350 = vld [vmem:[%s8 + $0x540] sm:$0xff]
    %v2351 = vld [vmem:[%s8 + $0x548] sm:$0xff]
    %v2352 = vld [vmem:[%s8 + $0x550] sm:$0xff]
    %v2353 = vld [vmem:[%s8 + $0x558] sm:$0xf]
    %v2354 = vld [vmem:[%s8 + $0x55c] sm:$0xff]
    %v2355 = vld [vmem:[%s8 + $0x564] sm:$0xff]
    %v2356 = vld [vmem:[%s8 + $0x56c] sm:$0xff]
    %v2357 = vld [vmem:[%s8 + $0x574] sm:$0xf]
    %v2358 = vld [vmem:[%s8 + $0x578] sm:$0xff]
    %v2359 = vld [vmem:[%s8 + $0x580] sm:$0xff]
    %v2360 = vld [vmem:[%s8 + $0x588] sm:$0xff]
    %v2361 = vld [vmem:[%s8 + $0x590] sm:$0xf]
    %v2362 = vld [vmem:[%s8 + $0x594] sm:$0xff]
    %v2363 = vld [vmem:[%s8 + $0x59c] sm:$0xff]
    %v2364 = vld [vmem:[%s8 + $0x5a4] sm:$0xff]
    %v2365 = vld [vmem:[%s8 + $0x5ac] sm:$0xf]
    %v2366 = vld [vmem:[%s8 + $0x5b0] sm:$0xff]
    %v2367 = vld [vmem:[%s8 + $0x5b8] sm:$0xff]
    %v2368 = vld [vmem:[%s8 + $0x5c0] sm:$0xff]
    %v2369 = vld [vmem:[%s8 + $0x5c8] sm:$0xf]
    %v2370 = vld [vmem:[%s8 + $0x5cc] sm:$0xff]
    %v2371 = vld [vmem:[%s8 + $0x5d4] sm:$0xff]
    %v2372 = vld [vmem:[%s8 + $0x5dc] sm:$0xff]
    %v2373 = vld [vmem:[%s8 + $0x5e4] sm:$0xf]
    %v2374 = vld [vmem:[%s8 + $0x5e8] sm:$0xff]
    %v2375 = vld [vmem:[%s8 + $0x5f0] sm:$0xff]
    %v2376 = vld [vmem:[%s8 + $0x5f8] sm:$0xff]
    %v2377 = vld [vmem:[%s8 + $0x600] sm:$0xf]
    %v2378 = vld [vmem:[%s8 + $0x604] sm:$0xff]
    %v2379 = vld [vmem:[%s8 + $0x60c] sm:$0xff]
    %v2380 = vld [vmem:[%s8 + $0x614] sm:$0xff]
    %v2381 = vld [vmem:[%s8 + $0x61c] sm:$0xf]
    %v2382 = vld [vmem:[%s8 + $0x620] sm:$0xff]
    %v2383 = vld [vmem:[%s8 + $0x628] sm:$0xff]
    %v2384 = vld [vmem:[%s8 + $0x630] sm:$0xff]
    %v2385 = vld [vmem:[%s8 + $0x638] sm:$0xf]
    %v2386 = vld [vmem:[%s8 + $0x63c] sm:$0xff]
    %v2387 = vld [vmem:[%s8 + $0x644] sm:$0xff]
    %v2388 = vld [vmem:[%s8 + $0x64c] sm:$0xff]
    %v2389 = vld [vmem:[%s8 + $0x654] sm:$0xf]
    %v2390 = vld [vmem:[%s8 + $0x658] sm:$0xff]
    %v2391 = vld [vmem:[%s8 + $0x660] sm:$0xff]
    %v2392 = vld [vmem:[%s8 + $0x668] sm:$0xff]
    %v2393 = vld [vmem:[%s8 + $0x670] sm:$0xf]
    %v2394 = vld [vmem:[%s8 + $0x674] sm:$0xff]
    %v2395 = vld [vmem:[%s8 + $0x67c] sm:$0xff]
    %v2396 = vld [vmem:[%s8 + $0x684] sm:$0xff]
    %v2397 = vld [vmem:[%s8 + $0x68c] sm:$0xf]
    %v2398 = vld [vmem:[%s8 + $0x690] sm:$0xff]
    %v2399 = vld [vmem:[%s8 + $0x698] sm:$0xff]
    %v2400 = vld [vmem:[%s8 + $0x6a0] sm:$0xff]
    %v2401 = vld [vmem:[%s8 + $0x6a8] sm:$0xf]
    %v2402 = vld [vmem:[%s8 + $0x6ac] sm:$0xff]
    %v2403 = vld [vmem:[%s8 + $0x6b4] sm:$0xff]
    %v2404 = vld [vmem:[%s8 + $0x6bc] sm:$0xff]
    %v2405 = vld [vmem:[%s8 + $0x6c4] sm:$0xf]
    %v2406 = vld [vmem:[%s8 + $0x6c8] sm:$0xff]
    %v2407 = vld [vmem:[%s8 + $0x6d0] sm:$0xff]
    %v2408 = vld [vmem:[%s8 + $0x6d8] sm:$0xff]
    %v2409 = vld [vmem:[%s8 + $0x6e0] sm:$0xf]
    %v2410 = vld [vmem:[%s8 + $0x6e4] sm:$0xff]
    %v2411 = vld [vmem:[%s8 + $0x6ec] sm:$0xff]
    %v2412 = vld [vmem:[%s8 + $0x6f4] sm:$0xff]
    %v2413 = vld [vmem:[%s8 + $0x6fc] sm:$0xf]
    %v2414 = vld [vmem:[%s9] sm:$0x7f]
    %v2416 = vlaneseq
    %v2417 = vshrl.u32 %v2416, 7
    %v2418 = vsub.s32 0, %v2417
    %v2419 = vrot.slane %v2414, %v2418
    %v2420 = vlaneseq
    %v2421 = vshrl.u32 %v2420, 7
    %v2422 = vsub.s32 1, %v2421
    %v2423 = vrot.slane %v2414, %v2422
    %v2424 = vlaneseq
    %v2425 = vshrl.u32 %v2424, 7
    %v2426 = vsub.s32 2, %v2425
    %v2427 = vrot.slane %v2414, %v2426
    %v2428 = vlaneseq
    %v2429 = vshrl.u32 %v2428, 7
    %v2430 = vsub.s32 3, %v2429
    %v2431 = vrot.slane %v2414, %v2430
    %v2432 = vlaneseq
    %v2433 = vshrl.u32 %v2432, 7
    %v2434 = vsub.s32 4, %v2433
    %v2435 = vrot.slane %v2414, %v2434
    %v2436 = vlaneseq
    %v2437 = vshrl.u32 %v2436, 7
    %v2438 = vsub.s32 5, %v2437
    %v2439 = vrot.slane %v2414, %v2438
    %v2440 = vlaneseq
    %v2441 = vshrl.u32 %v2440, 7
    %v2442 = vsub.s32 6, %v2441
    %v2443 = vrot.slane %v2414, %v2442
    %v2707 = vunpack.c.l.b16 %v2158
    %v2708 = vunpack.c.h.b16 %v2158
    %v2709 = vunpack.c.l.b16 %v2159
    %v2710 = vunpack.c.h.b16 %v2159
    %v2711 = vunpack.c.l.b16 %v2160
    %v2712 = vunpack.c.h.b16 %v2160
    %v2713 = vunpack.c.l.b16 %v2161
    %v2714 = vunpack.c.l.b16 %v2162
    %v2715 = vunpack.c.h.b16 %v2162
    %v2716 = vunpack.c.l.b16 %v2163
    %v2717 = vunpack.c.h.b16 %v2163
    %v2718 = vunpack.c.l.b16 %v2164
    %v2719 = vunpack.c.h.b16 %v2164
    %v2720 = vunpack.c.l.b16 %v2165
    %v2721 = vunpack.c.l.b16 %v2166
    %v2722 = vunpack.c.h.b16 %v2166
    %v2723 = vunpack.c.l.b16 %v2167
    %v2724 = vunpack.c.h.b16 %v2167
    %v2725 = vunpack.c.l.b16 %v2168
    %v2726 = vunpack.c.h.b16 %v2168
    %v2727 = vunpack.c.l.b16 %v2169
    %v2728 = vunpack.c.l.b16 %v2170
    %v2729 = vunpack.c.h.b16 %v2170
    %v2730 = vunpack.c.l.b16 %v2171
    %v2731 = vunpack.c.h.b16 %v2171
    %v2732 = vunpack.c.l.b16 %v2172
    %v2733 = vunpack.c.h.b16 %v2172
    %v2734 = vunpack.c.l.b16 %v2173
    %v2735 = vunpack.c.l.b16 %v2174
    %v2736 = vunpack.c.h.b16 %v2174
    %v2737 = vunpack.c.l.b16 %v2175
    %v2738 = vunpack.c.h.b16 %v2175
    %v2739 = vunpack.c.l.b16 %v2176
    %v2740 = vunpack.c.h.b16 %v2176
    %v2741 = vunpack.c.l.b16 %v2177
    %v2742 = vunpack.c.l.b16 %v2178
    %v2743 = vunpack.c.h.b16 %v2178
    %v2744 = vunpack.c.l.b16 %v2179
    %v2745 = vunpack.c.h.b16 %v2179
    %v2746 = vunpack.c.l.b16 %v2180
    %v2747 = vunpack.c.h.b16 %v2180
    %v2748 = vunpack.c.l.b16 %v2181
    %v2749 = vunpack.c.l.b16 %v2182
    %v2750 = vunpack.c.h.b16 %v2182
    %v2751 = vunpack.c.l.b16 %v2183
    %v2752 = vunpack.c.h.b16 %v2183
    %v2753 = vunpack.c.l.b16 %v2184
    %v2754 = vunpack.c.h.b16 %v2184
    %v2755 = vunpack.c.l.b16 %v2185
    %v2756 = vunpack.c.l.b16 %v2186
    %v2757 = vunpack.c.h.b16 %v2186
    %v2758 = vunpack.c.l.b16 %v2187
    %v2759 = vunpack.c.h.b16 %v2187
    %v2760 = vunpack.c.l.b16 %v2188
    %v2761 = vunpack.c.h.b16 %v2188
    %v2762 = vunpack.c.l.b16 %v2189
    %v2763 = vunpack.c.l.b16 %v2190
    %v2764 = vunpack.c.h.b16 %v2190
    %v2765 = vunpack.c.l.b16 %v2191
    %v2766 = vunpack.c.h.b16 %v2191
    %v2767 = vunpack.c.l.b16 %v2192
    %v2768 = vunpack.c.h.b16 %v2192
    %v2769 = vunpack.c.l.b16 %v2193
    %v2770 = vunpack.c.l.b16 %v2194
    %v2771 = vunpack.c.h.b16 %v2194
    %v2772 = vunpack.c.l.b16 %v2195
    %v2773 = vunpack.c.h.b16 %v2195
    %v2774 = vunpack.c.l.b16 %v2196
    %v2775 = vunpack.c.h.b16 %v2196
    %v2776 = vunpack.c.l.b16 %v2197
    %v2777 = vunpack.c.l.b16 %v2198
    %v2778 = vunpack.c.h.b16 %v2198
    %v2779 = vunpack.c.l.b16 %v2199
    %v2780 = vunpack.c.h.b16 %v2199
    %v2781 = vunpack.c.l.b16 %v2200
    %v2782 = vunpack.c.h.b16 %v2200
    %v2783 = vunpack.c.l.b16 %v2201
    %v2784 = vunpack.c.l.b16 %v2202
    %v2785 = vunpack.c.h.b16 %v2202
    %v2786 = vunpack.c.l.b16 %v2203
    %v2787 = vunpack.c.h.b16 %v2203
    %v2788 = vunpack.c.l.b16 %v2204
    %v2789 = vunpack.c.h.b16 %v2204
    %v2790 = vunpack.c.l.b16 %v2205
    %v2791 = vunpack.c.l.b16 %v2206
    %v2792 = vunpack.c.h.b16 %v2206
    %v2793 = vunpack.c.l.b16 %v2207
    %v2794 = vunpack.c.h.b16 %v2207
    %v2795 = vunpack.c.l.b16 %v2208
    %v2796 = vunpack.c.h.b16 %v2208
    %v2797 = vunpack.c.l.b16 %v2209
    %v2798 = vunpack.c.l.b16 %v2210
    %v2799 = vunpack.c.h.b16 %v2210
    %v2800 = vunpack.c.l.b16 %v2211
    %v2801 = vunpack.c.h.b16 %v2211
    %v2802 = vunpack.c.l.b16 %v2212
    %v2803 = vunpack.c.h.b16 %v2212
    %v2804 = vunpack.c.l.b16 %v2213
    %v2805 = vunpack.c.l.b16 %v2214
    %v2806 = vunpack.c.h.b16 %v2214
    %v2807 = vunpack.c.l.b16 %v2215
    %v2808 = vunpack.c.h.b16 %v2215
    %v2809 = vunpack.c.l.b16 %v2216
    %v2810 = vunpack.c.h.b16 %v2216
    %v2811 = vunpack.c.l.b16 %v2217
    %v2812 = vunpack.c.l.b16 %v2218
    %v2813 = vunpack.c.h.b16 %v2218
    %v2814 = vunpack.c.l.b16 %v2219
    %v2815 = vunpack.c.h.b16 %v2219
    %v2816 = vunpack.c.l.b16 %v2220
    %v2817 = vunpack.c.h.b16 %v2220
    %v2818 = vunpack.c.l.b16 %v2221
    %v2819 = vunpack.c.l.b16 %v2222
    %v2820 = vunpack.c.h.b16 %v2222
    %v2821 = vunpack.c.l.b16 %v2223
    %v2822 = vunpack.c.h.b16 %v2223
    %v2823 = vunpack.c.l.b16 %v2224
    %v2824 = vunpack.c.h.b16 %v2224
    %v2825 = vunpack.c.l.b16 %v2225
    %v2826 = vunpack.c.l.b16 %v2226
    %v2827 = vunpack.c.h.b16 %v2226
    %v2828 = vunpack.c.l.b16 %v2227
    %v2829 = vunpack.c.h.b16 %v2227
    %v2830 = vunpack.c.l.b16 %v2228
    %v2831 = vunpack.c.h.b16 %v2228
    %v2832 = vunpack.c.l.b16 %v2229
    %v2833 = vunpack.c.l.b16 %v2230
    %v2834 = vunpack.c.h.b16 %v2230
    %v2835 = vunpack.c.l.b16 %v2231
    %v2836 = vunpack.c.h.b16 %v2231
    %v2837 = vunpack.c.l.b16 %v2232
    %v2838 = vunpack.c.h.b16 %v2232
    %v2839 = vunpack.c.l.b16 %v2233
    %v2840 = vunpack.c.l.b16 %v2234
    %v2841 = vunpack.c.h.b16 %v2234
    %v2842 = vunpack.c.l.b16 %v2235
    %v2843 = vunpack.c.h.b16 %v2235
    %v2844 = vunpack.c.l.b16 %v2236
    %v2845 = vunpack.c.h.b16 %v2236
    %v2846 = vunpack.c.l.b16 %v2237
    %v2847 = vunpack.c.l.b16 %v2238
    %v2848 = vunpack.c.h.b16 %v2238
    %v2849 = vunpack.c.l.b16 %v2239
    %v2850 = vunpack.c.h.b16 %v2239
    %v2851 = vunpack.c.l.b16 %v2240
    %v2852 = vunpack.c.h.b16 %v2240
    %v2853 = vunpack.c.l.b16 %v2241
    %v2854 = vunpack.c.l.b16 %v2242
    %v2855 = vunpack.c.h.b16 %v2242
    %v2856 = vunpack.c.l.b16 %v2243
    %v2857 = vunpack.c.h.b16 %v2243
    %v2858 = vunpack.c.l.b16 %v2244
    %v2859 = vunpack.c.h.b16 %v2244
    %v2860 = vunpack.c.l.b16 %v2245
    %v2861 = vunpack.c.l.b16 %v2246
    %v2862 = vunpack.c.h.b16 %v2246
    %v2863 = vunpack.c.l.b16 %v2247
    %v2864 = vunpack.c.h.b16 %v2247
    %v2865 = vunpack.c.l.b16 %v2248
    %v2866 = vunpack.c.h.b16 %v2248
    %v2867 = vunpack.c.l.b16 %v2249
    %v2868 = vunpack.c.l.b16 %v2250
    %v2869 = vunpack.c.h.b16 %v2250
    %v2870 = vunpack.c.l.b16 %v2251
    %v2871 = vunpack.c.h.b16 %v2251
    %v2872 = vunpack.c.l.b16 %v2252
    %v2873 = vunpack.c.h.b16 %v2252
    %v2874 = vunpack.c.l.b16 %v2253
    %v2875 = vunpack.c.l.b16 %v2254
    %v2876 = vunpack.c.h.b16 %v2254
    %v2877 = vunpack.c.l.b16 %v2255
    %v2878 = vunpack.c.h.b16 %v2255
    %v2879 = vunpack.c.l.b16 %v2256
    %v2880 = vunpack.c.h.b16 %v2256
    %v2881 = vunpack.c.l.b16 %v2257
    %v2882 = vunpack.c.l.b16 %v2258
    %v2883 = vunpack.c.h.b16 %v2258
    %v2884 = vunpack.c.l.b16 %v2259
    %v2885 = vunpack.c.h.b16 %v2259
    %v2886 = vunpack.c.l.b16 %v2260
    %v2887 = vunpack.c.h.b16 %v2260
    %v2888 = vunpack.c.l.b16 %v2261
    %v2889 = vunpack.c.l.b16 %v2262
    %v2890 = vunpack.c.h.b16 %v2262
    %v2891 = vunpack.c.l.b16 %v2263
    %v2892 = vunpack.c.h.b16 %v2263
    %v2893 = vunpack.c.l.b16 %v2264
    %v2894 = vunpack.c.h.b16 %v2264
    %v2895 = vunpack.c.l.b16 %v2265
    %v2896 = vunpack.c.l.b16 %v2266
    %v2897 = vunpack.c.h.b16 %v2266
    %v2898 = vunpack.c.l.b16 %v2267
    %v2899 = vunpack.c.h.b16 %v2267
    %v2900 = vunpack.c.l.b16 %v2268
    %v2901 = vunpack.c.h.b16 %v2268
    %v2902 = vunpack.c.l.b16 %v2269
    %v2903 = vunpack.c.l.b16 %v2270
    %v2904 = vunpack.c.h.b16 %v2270
    %v2905 = vunpack.c.l.b16 %v2271
    %v2906 = vunpack.c.h.b16 %v2271
    %v2907 = vunpack.c.l.b16 %v2272
    %v2908 = vunpack.c.h.b16 %v2272
    %v2909 = vunpack.c.l.b16 %v2273
    %v2910 = vunpack.c.l.b16 %v2274
    %v2911 = vunpack.c.h.b16 %v2274
    %v2912 = vunpack.c.l.b16 %v2275
    %v2913 = vunpack.c.h.b16 %v2275
    %v2914 = vunpack.c.l.b16 %v2276
    %v2915 = vunpack.c.h.b16 %v2276
    %v2916 = vunpack.c.l.b16 %v2277
    %v2917 = vunpack.c.l.b16 %v2278
    %v2918 = vunpack.c.h.b16 %v2278
    %v2919 = vunpack.c.l.b16 %v2279
    %v2920 = vunpack.c.h.b16 %v2279
    %v2921 = vunpack.c.l.b16 %v2280
    %v2922 = vunpack.c.h.b16 %v2280
    %v2923 = vunpack.c.l.b16 %v2281
    %v2924 = vunpack.c.l.b16 %v2282
    %v2925 = vunpack.c.h.b16 %v2282
    %v2926 = vunpack.c.l.b16 %v2283
    %v2927 = vunpack.c.h.b16 %v2283
    %v2928 = vunpack.c.l.b16 %v2284
    %v2929 = vunpack.c.h.b16 %v2284
    %v2930 = vunpack.c.l.b16 %v2285
    %v2931 = vunpack.c.l.b16 %v2286
    %v2932 = vunpack.c.h.b16 %v2286
    %v2933 = vunpack.c.l.b16 %v2287
    %v2934 = vunpack.c.h.b16 %v2287
    %v2935 = vunpack.c.l.b16 %v2288
    %v2936 = vunpack.c.h.b16 %v2288
    %v2937 = vunpack.c.l.b16 %v2289
    %v2938 = vunpack.c.l.b16 %v2290
    %v2939 = vunpack.c.h.b16 %v2290
    %v2940 = vunpack.c.l.b16 %v2291
    %v2941 = vunpack.c.h.b16 %v2291
    %v2942 = vunpack.c.l.b16 %v2292
    %v2943 = vunpack.c.h.b16 %v2292
    %v2944 = vunpack.c.l.b16 %v2293
    %v2945 = vunpack.c.l.b16 %v2294
    %v2946 = vunpack.c.h.b16 %v2294
    %v2947 = vunpack.c.l.b16 %v2295
    %v2948 = vunpack.c.h.b16 %v2295
    %v2949 = vunpack.c.l.b16 %v2296
    %v2950 = vunpack.c.h.b16 %v2296
    %v2951 = vunpack.c.l.b16 %v2297
    %v2952 = vunpack.c.l.b16 %v2298
    %v2953 = vunpack.c.h.b16 %v2298
    %v2954 = vunpack.c.l.b16 %v2299
    %v2955 = vunpack.c.h.b16 %v2299
    %v2956 = vunpack.c.l.b16 %v2300
    %v2957 = vunpack.c.h.b16 %v2300
    %v2958 = vunpack.c.l.b16 %v2301
    %v2959 = vunpack.c.l.b16 %v2302
    %v2960 = vunpack.c.h.b16 %v2302
    %v2961 = vunpack.c.l.b16 %v2303
    %v2962 = vunpack.c.h.b16 %v2303
    %v2963 = vunpack.c.l.b16 %v2304
    %v2964 = vunpack.c.h.b16 %v2304
    %v2965 = vunpack.c.l.b16 %v2305
    %v2966 = vunpack.c.l.b16 %v2306
    %v2967 = vunpack.c.h.b16 %v2306
    %v2968 = vunpack.c.l.b16 %v2307
    %v2969 = vunpack.c.h.b16 %v2307
    %v2970 = vunpack.c.l.b16 %v2308
    %v2971 = vunpack.c.h.b16 %v2308
    %v2972 = vunpack.c.l.b16 %v2309
    %v2973 = vunpack.c.l.b16 %v2310
    %v2974 = vunpack.c.h.b16 %v2310
    %v2975 = vunpack.c.l.b16 %v2311
    %v2976 = vunpack.c.h.b16 %v2311
    %v2977 = vunpack.c.l.b16 %v2312
    %v2978 = vunpack.c.h.b16 %v2312
    %v2979 = vunpack.c.l.b16 %v2313
    %v2980 = vunpack.c.l.b16 %v2314
    %v2981 = vunpack.c.h.b16 %v2314
    %v2982 = vunpack.c.l.b16 %v2315
    %v2983 = vunpack.c.h.b16 %v2315
    %v2984 = vunpack.c.l.b16 %v2316
    %v2985 = vunpack.c.h.b16 %v2316
    %v2986 = vunpack.c.l.b16 %v2317
    %v2987 = vunpack.c.l.b16 %v2318
    %v2988 = vunpack.c.h.b16 %v2318
    %v2989 = vunpack.c.l.b16 %v2319
    %v2990 = vunpack.c.h.b16 %v2319
    %v2991 = vunpack.c.l.b16 %v2320
    %v2992 = vunpack.c.h.b16 %v2320
    %v2993 = vunpack.c.l.b16 %v2321
    %v2994 = vunpack.c.l.b16 %v2322
    %v2995 = vunpack.c.h.b16 %v2322
    %v2996 = vunpack.c.l.b16 %v2323
    %v2997 = vunpack.c.h.b16 %v2323
    %v2998 = vunpack.c.l.b16 %v2324
    %v2999 = vunpack.c.h.b16 %v2324
    %v3000 = vunpack.c.l.b16 %v2325
    %v3001 = vunpack.c.l.b16 %v2326
    %v3002 = vunpack.c.h.b16 %v2326
    %v3003 = vunpack.c.l.b16 %v2327
    %v3004 = vunpack.c.h.b16 %v2327
    %v3005 = vunpack.c.l.b16 %v2328
    %v3006 = vunpack.c.h.b16 %v2328
    %v3007 = vunpack.c.l.b16 %v2329
    %v3008 = vunpack.c.l.b16 %v2330
    %v3009 = vunpack.c.h.b16 %v2330
    %v3010 = vunpack.c.l.b16 %v2331
    %v3011 = vunpack.c.h.b16 %v2331
    %v3012 = vunpack.c.l.b16 %v2332
    %v3013 = vunpack.c.h.b16 %v2332
    %v3014 = vunpack.c.l.b16 %v2333
    %v3015 = vunpack.c.l.b16 %v2334
    %v3016 = vunpack.c.h.b16 %v2334
    %v3017 = vunpack.c.l.b16 %v2335
    %v3018 = vunpack.c.h.b16 %v2335
    %v3019 = vunpack.c.l.b16 %v2336
    %v3020 = vunpack.c.h.b16 %v2336
    %v3021 = vunpack.c.l.b16 %v2337
    %v3022 = vunpack.c.l.b16 %v2338
    %v3023 = vunpack.c.h.b16 %v2338
    %v3024 = vunpack.c.l.b16 %v2339
    %v3025 = vunpack.c.h.b16 %v2339
    %v3026 = vunpack.c.l.b16 %v2340
    %v3027 = vunpack.c.h.b16 %v2340
    %v3028 = vunpack.c.l.b16 %v2341
    %v3029 = vunpack.c.l.b16 %v2342
    %v3030 = vunpack.c.h.b16 %v2342
    %v3031 = vunpack.c.l.b16 %v2343
    %v3032 = vunpack.c.h.b16 %v2343
    %v3033 = vunpack.c.l.b16 %v2344
    %v3034 = vunpack.c.h.b16 %v2344
    %v3035 = vunpack.c.l.b16 %v2345
    %v3036 = vunpack.c.l.b16 %v2346
    %v3037 = vunpack.c.h.b16 %v2346
    %v3038 = vunpack.c.l.b16 %v2347
    %v3039 = vunpack.c.h.b16 %v2347
    %v3040 = vunpack.c.l.b16 %v2348
    %v3041 = vunpack.c.h.b16 %v2348
    %v3042 = vunpack.c.l.b16 %v2349
    %v3043 = vunpack.c.l.b16 %v2350
    %v3044 = vunpack.c.h.b16 %v2350
    %v3045 = vunpack.c.l.b16 %v2351
    %v3046 = vunpack.c.h.b16 %v2351
    %v3047 = vunpack.c.l.b16 %v2352
    %v3048 = vunpack.c.h.b16 %v2352
    %v3049 = vunpack.c.l.b16 %v2353
    %v3050 = vunpack.c.l.b16 %v2354
    %v3051 = vunpack.c.h.b16 %v2354
    %v3052 = vunpack.c.l.b16 %v2355
    %v3053 = vunpack.c.h.b16 %v2355
    %v3054 = vunpack.c.l.b16 %v2356
    %v3055 = vunpack.c.h.b16 %v2356
    %v3056 = vunpack.c.l.b16 %v2357
    %v3057 = vunpack.c.l.b16 %v2358
    %v3058 = vunpack.c.h.b16 %v2358
    %v3059 = vunpack.c.l.b16 %v2359
    %v3060 = vunpack.c.h.b16 %v2359
    %v3061 = vunpack.c.l.b16 %v2360
    %v3062 = vunpack.c.h.b16 %v2360
    %v3063 = vunpack.c.l.b16 %v2361
    %v3064 = vunpack.c.l.b16 %v2362
    %v3065 = vunpack.c.h.b16 %v2362
    %v3066 = vunpack.c.l.b16 %v2363
    %v3067 = vunpack.c.h.b16 %v2363
    %v3068 = vunpack.c.l.b16 %v2364
    %v3069 = vunpack.c.h.b16 %v2364
    %v3070 = vunpack.c.l.b16 %v2365
    %v3071 = vunpack.c.l.b16 %v2366
    %v3072 = vunpack.c.h.b16 %v2366
    %v3073 = vunpack.c.l.b16 %v2367
    %v3074 = vunpack.c.h.b16 %v2367
    %v3075 = vunpack.c.l.b16 %v2368
    %v3076 = vunpack.c.h.b16 %v2368
    %v3077 = vunpack.c.l.b16 %v2369
    %v3078 = vunpack.c.l.b16 %v2370
    %v3079 = vunpack.c.h.b16 %v2370
    %v3080 = vunpack.c.l.b16 %v2371
    %v3081 = vunpack.c.h.b16 %v2371
    %v3082 = vunpack.c.l.b16 %v2372
    %v3083 = vunpack.c.h.b16 %v2372
    %v3084 = vunpack.c.l.b16 %v2373
    %v3085 = vunpack.c.l.b16 %v2374
    %v3086 = vunpack.c.h.b16 %v2374
    %v3087 = vunpack.c.l.b16 %v2375
    %v3088 = vunpack.c.h.b16 %v2375
    %v3089 = vunpack.c.l.b16 %v2376
    %v3090 = vunpack.c.h.b16 %v2376
    %v3091 = vunpack.c.l.b16 %v2377
    %v3092 = vunpack.c.l.b16 %v2378
    %v3093 = vunpack.c.h.b16 %v2378
    %v3094 = vunpack.c.l.b16 %v2379
    %v3095 = vunpack.c.h.b16 %v2379
    %v3096 = vunpack.c.l.b16 %v2380
    %v3097 = vunpack.c.h.b16 %v2380
    %v3098 = vunpack.c.l.b16 %v2381
    %v3099 = vunpack.c.l.b16 %v2382
    %v3100 = vunpack.c.h.b16 %v2382
    %v3101 = vunpack.c.l.b16 %v2383
    %v3102 = vunpack.c.h.b16 %v2383
    %v3103 = vunpack.c.l.b16 %v2384
    %v3104 = vunpack.c.h.b16 %v2384
    %v3105 = vunpack.c.l.b16 %v2385
    %v3106 = vunpack.c.l.b16 %v2386
    %v3107 = vunpack.c.h.b16 %v2386
    %v3108 = vunpack.c.l.b16 %v2387
    %v3109 = vunpack.c.h.b16 %v2387
    %v3110 = vunpack.c.l.b16 %v2388
    %v3111 = vunpack.c.h.b16 %v2388
    %v3112 = vunpack.c.l.b16 %v2389
    %v3113 = vunpack.c.l.b16 %v2390
    %v3114 = vunpack.c.h.b16 %v2390
    %v3115 = vunpack.c.l.b16 %v2391
    %v3116 = vunpack.c.h.b16 %v2391
    %v3117 = vunpack.c.l.b16 %v2392
    %v3118 = vunpack.c.h.b16 %v2392
    %v3119 = vunpack.c.l.b16 %v2393
    %v3120 = vunpack.c.l.b16 %v2394
    %v3121 = vunpack.c.h.b16 %v2394
    %v3122 = vunpack.c.l.b16 %v2395
    %v3123 = vunpack.c.h.b16 %v2395
    %v3124 = vunpack.c.l.b16 %v2396
    %v3125 = vunpack.c.h.b16 %v2396
    %v3126 = vunpack.c.l.b16 %v2397
    %v3127 = vunpack.c.l.b16 %v2398
    %v3128 = vunpack.c.h.b16 %v2398
    %v3129 = vunpack.c.l.b16 %v2399
    %v3130 = vunpack.c.h.b16 %v2399
    %v3131 = vunpack.c.l.b16 %v2400
    %v3132 = vunpack.c.h.b16 %v2400
    %v3133 = vunpack.c.l.b16 %v2401
    %v3134 = vunpack.c.l.b16 %v2402
    %v3135 = vunpack.c.h.b16 %v2402
    %v3136 = vunpack.c.l.b16 %v2403
    %v3137 = vunpack.c.h.b16 %v2403
    %v3138 = vunpack.c.l.b16 %v2404
    %v3139 = vunpack.c.h.b16 %v2404
    %v3140 = vunpack.c.l.b16 %v2405
    %v3141 = vunpack.c.l.b16 %v2406
    %v3142 = vunpack.c.h.b16 %v2406
    %v3143 = vunpack.c.l.b16 %v2407
    %v3144 = vunpack.c.h.b16 %v2407
    %v3145 = vunpack.c.l.b16 %v2408
    %v3146 = vunpack.c.h.b16 %v2408
    %v3147 = vunpack.c.l.b16 %v2409
    %v3148 = vunpack.c.l.b16 %v2410
    %v3149 = vunpack.c.h.b16 %v2410
    %v3150 = vunpack.c.l.b16 %v2411
    %v3151 = vunpack.c.h.b16 %v2411
    %v3152 = vunpack.c.l.b16 %v2412
    %v3153 = vunpack.c.h.b16 %v2412
    %v3154 = vunpack.c.l.b16 %v2413
    %v3155 = vpack.c.b16 %v2714, %v2707
    %v3156 = vpack.c.b16 %v2715, %v2708
    %v3157 = vpack.c.b16 %v2716, %v2709
    %v3158 = vpack.c.b16 %v2717, %v2710
    %v3159 = vpack.c.b16 %v2718, %v2711
    %v3160 = vpack.c.b16 %v2719, %v2712
    %v3161 = vpack.c.b16 %v2720, %v2713
    %v3162 = vpack.c.b16 %v2728, %v2721
    %v3163 = vpack.c.b16 %v2729, %v2722
    %v3164 = vpack.c.b16 %v2730, %v2723
    %v3165 = vpack.c.b16 %v2731, %v2724
    %v3166 = vpack.c.b16 %v2732, %v2725
    %v3167 = vpack.c.b16 %v2733, %v2726
    %v3168 = vpack.c.b16 %v2734, %v2727
    %v3169 = vpack.c.b16 %v2742, %v2735
    %v3170 = vpack.c.b16 %v2743, %v2736
    %v3171 = vpack.c.b16 %v2744, %v2737
    %v3172 = vpack.c.b16 %v2745, %v2738
    %v3173 = vpack.c.b16 %v2746, %v2739
    %v3174 = vpack.c.b16 %v2747, %v2740
    %v3175 = vpack.c.b16 %v2748, %v2741
    %v3176 = vpack.c.b16 %v2756, %v2749
    %v3177 = vpack.c.b16 %v2757, %v2750
    %v3178 = vpack.c.b16 %v2758, %v2751
    %v3179 = vpack.c.b16 %v2759, %v2752
    %v3180 = vpack.c.b16 %v2760, %v2753
    %v3181 = vpack.c.b16 %v2761, %v2754
    %v3182 = vpack.c.b16 %v2762, %v2755
    %v3183 = vpack.c.b16 %v2770, %v2763
    %v3184 = vpack.c.b16 %v2771, %v2764
    %v3185 = vpack.c.b16 %v2772, %v2765
    %v3186 = vpack.c.b16 %v2773, %v2766
    %v3187 = vpack.c.b16 %v2774, %v2767
    %v3188 = vpack.c.b16 %v2775, %v2768
    %v3189 = vpack.c.b16 %v2776, %v2769
    %v3190 = vpack.c.b16 %v2784, %v2777
    %v3191 = vpack.c.b16 %v2785, %v2778
    %v3192 = vpack.c.b16 %v2786, %v2779
    %v3193 = vpack.c.b16 %v2787, %v2780
    %v3194 = vpack.c.b16 %v2788, %v2781
    %v3195 = vpack.c.b16 %v2789, %v2782
    %v3196 = vpack.c.b16 %v2790, %v2783
    %v3197 = vpack.c.b16 %v2798, %v2791
    %v3198 = vpack.c.b16 %v2799, %v2792
    %v3199 = vpack.c.b16 %v2800, %v2793
    %v3200 = vpack.c.b16 %v2801, %v2794
    %v3201 = vpack.c.b16 %v2802, %v2795
    %v3202 = vpack.c.b16 %v2803, %v2796
    %v3203 = vpack.c.b16 %v2804, %v2797
    %v3204 = vpack.c.b16 %v2812, %v2805
    %v3205 = vpack.c.b16 %v2813, %v2806
    %v3206 = vpack.c.b16 %v2814, %v2807
    %v3207 = vpack.c.b16 %v2815, %v2808
    %v3208 = vpack.c.b16 %v2816, %v2809
    %v3209 = vpack.c.b16 %v2817, %v2810
    %v3210 = vpack.c.b16 %v2818, %v2811
    %v3211 = vpack.c.b16 %v2826, %v2819
    %v3212 = vpack.c.b16 %v2827, %v2820
    %v3213 = vpack.c.b16 %v2828, %v2821
    %v3214 = vpack.c.b16 %v2829, %v2822
    %v3215 = vpack.c.b16 %v2830, %v2823
    %v3216 = vpack.c.b16 %v2831, %v2824
    %v3217 = vpack.c.b16 %v2832, %v2825
    %v3218 = vpack.c.b16 %v2840, %v2833
    %v3219 = vpack.c.b16 %v2841, %v2834
    %v3220 = vpack.c.b16 %v2842, %v2835
    %v3221 = vpack.c.b16 %v2843, %v2836
    %v3222 = vpack.c.b16 %v2844, %v2837
    %v3223 = vpack.c.b16 %v2845, %v2838
    %v3224 = vpack.c.b16 %v2846, %v2839
    %v3225 = vpack.c.b16 %v2854, %v2847
    %v3226 = vpack.c.b16 %v2855, %v2848
    %v3227 = vpack.c.b16 %v2856, %v2849
    %v3228 = vpack.c.b16 %v2857, %v2850
    %v3229 = vpack.c.b16 %v2858, %v2851
    %v3230 = vpack.c.b16 %v2859, %v2852
    %v3231 = vpack.c.b16 %v2860, %v2853
    %v3232 = vpack.c.b16 %v2868, %v2861
    %v3233 = vpack.c.b16 %v2869, %v2862
    %v3234 = vpack.c.b16 %v2870, %v2863
    %v3235 = vpack.c.b16 %v2871, %v2864
    %v3236 = vpack.c.b16 %v2872, %v2865
    %v3237 = vpack.c.b16 %v2873, %v2866
    %v3238 = vpack.c.b16 %v2874, %v2867
    %v3239 = vpack.c.b16 %v2882, %v2875
    %v3240 = vpack.c.b16 %v2883, %v2876
    %v3241 = vpack.c.b16 %v2884, %v2877
    %v3242 = vpack.c.b16 %v2885, %v2878
    %v3243 = vpack.c.b16 %v2886, %v2879
    %v3244 = vpack.c.b16 %v2887, %v2880
    %v3245 = vpack.c.b16 %v2888, %v2881
    %v3246 = vpack.c.b16 %v2896, %v2889
    %v3247 = vpack.c.b16 %v2897, %v2890
    %v3248 = vpack.c.b16 %v2898, %v2891
    %v3249 = vpack.c.b16 %v2899, %v2892
    %v3250 = vpack.c.b16 %v2900, %v2893
    %v3251 = vpack.c.b16 %v2901, %v2894
    %v3252 = vpack.c.b16 %v2902, %v2895
    %v3253 = vpack.c.b16 %v2910, %v2903
    %v3254 = vpack.c.b16 %v2911, %v2904
    %v3255 = vpack.c.b16 %v2912, %v2905
    %v3256 = vpack.c.b16 %v2913, %v2906
    %v3257 = vpack.c.b16 %v2914, %v2907
    %v3258 = vpack.c.b16 %v2915, %v2908
    %v3259 = vpack.c.b16 %v2916, %v2909
    %v3260 = vpack.c.b16 %v2924, %v2917
    %v3261 = vpack.c.b16 %v2925, %v2918
    %v3262 = vpack.c.b16 %v2926, %v2919
    %v3263 = vpack.c.b16 %v2927, %v2920
    %v3264 = vpack.c.b16 %v2928, %v2921
    %v3265 = vpack.c.b16 %v2929, %v2922
    %v3266 = vpack.c.b16 %v2930, %v2923
    %v3267 = vpack.c.b16 %v2938, %v2931
    %v3268 = vpack.c.b16 %v2939, %v2932
    %v3269 = vpack.c.b16 %v2940, %v2933
    %v3270 = vpack.c.b16 %v2941, %v2934
    %v3271 = vpack.c.b16 %v2942, %v2935
    %v3272 = vpack.c.b16 %v2943, %v2936
    %v3273 = vpack.c.b16 %v2944, %v2937
    %v3274 = vpack.c.b16 %v2952, %v2945
    %v3275 = vpack.c.b16 %v2953, %v2946
    %v3276 = vpack.c.b16 %v2954, %v2947
    %v3277 = vpack.c.b16 %v2955, %v2948
    %v3278 = vpack.c.b16 %v2956, %v2949
    %v3279 = vpack.c.b16 %v2957, %v2950
    %v3280 = vpack.c.b16 %v2958, %v2951
    %v3281 = vpack.c.b16 %v2966, %v2959
    %v3282 = vpack.c.b16 %v2967, %v2960
    %v3283 = vpack.c.b16 %v2968, %v2961
    %v3284 = vpack.c.b16 %v2969, %v2962
    %v3285 = vpack.c.b16 %v2970, %v2963
    %v3286 = vpack.c.b16 %v2971, %v2964
    %v3287 = vpack.c.b16 %v2972, %v2965
    %v3288 = vpack.c.b16 %v2980, %v2973
    %v3289 = vpack.c.b16 %v2981, %v2974
    %v3290 = vpack.c.b16 %v2982, %v2975
    %v3291 = vpack.c.b16 %v2983, %v2976
    %v3292 = vpack.c.b16 %v2984, %v2977
    %v3293 = vpack.c.b16 %v2985, %v2978
    %v3294 = vpack.c.b16 %v2986, %v2979
    %v3295 = vpack.c.b16 %v2994, %v2987
    %v3296 = vpack.c.b16 %v2995, %v2988
    %v3297 = vpack.c.b16 %v2996, %v2989
    %v3298 = vpack.c.b16 %v2997, %v2990
    %v3299 = vpack.c.b16 %v2998, %v2991
    %v3300 = vpack.c.b16 %v2999, %v2992
    %v3301 = vpack.c.b16 %v3000, %v2993
    %v3302 = vpack.c.b16 %v3008, %v3001
    %v3303 = vpack.c.b16 %v3009, %v3002
    %v3304 = vpack.c.b16 %v3010, %v3003
    %v3305 = vpack.c.b16 %v3011, %v3004
    %v3306 = vpack.c.b16 %v3012, %v3005
    %v3307 = vpack.c.b16 %v3013, %v3006
    %v3308 = vpack.c.b16 %v3014, %v3007
    %v3309 = vpack.c.b16 %v3022, %v3015
    %v3310 = vpack.c.b16 %v3023, %v3016
    %v3311 = vpack.c.b16 %v3024, %v3017
    %v3312 = vpack.c.b16 %v3025, %v3018
    %v3313 = vpack.c.b16 %v3026, %v3019
    %v3314 = vpack.c.b16 %v3027, %v3020
    %v3315 = vpack.c.b16 %v3028, %v3021
    %v3316 = vpack.c.b16 %v3036, %v3029
    %v3317 = vpack.c.b16 %v3037, %v3030
    %v3318 = vpack.c.b16 %v3038, %v3031
    %v3319 = vpack.c.b16 %v3039, %v3032
    %v3320 = vpack.c.b16 %v3040, %v3033
    %v3321 = vpack.c.b16 %v3041, %v3034
    %v3322 = vpack.c.b16 %v3042, %v3035
    %v3323 = vpack.c.b16 %v3050, %v3043
    %v3324 = vpack.c.b16 %v3051, %v3044
    %v3325 = vpack.c.b16 %v3052, %v3045
    %v3326 = vpack.c.b16 %v3053, %v3046
    %v3327 = vpack.c.b16 %v3054, %v3047
    %v3328 = vpack.c.b16 %v3055, %v3048
    %v3329 = vpack.c.b16 %v3056, %v3049
    %v3330 = vpack.c.b16 %v3064, %v3057
    %v3331 = vpack.c.b16 %v3065, %v3058
    %v3332 = vpack.c.b16 %v3066, %v3059
    %v3333 = vpack.c.b16 %v3067, %v3060
    %v3334 = vpack.c.b16 %v3068, %v3061
    %v3335 = vpack.c.b16 %v3069, %v3062
    %v3336 = vpack.c.b16 %v3070, %v3063
    %v3337 = vpack.c.b16 %v3078, %v3071
    %v3338 = vpack.c.b16 %v3079, %v3072
    %v3339 = vpack.c.b16 %v3080, %v3073
    %v3340 = vpack.c.b16 %v3081, %v3074
    %v3341 = vpack.c.b16 %v3082, %v3075
    %v3342 = vpack.c.b16 %v3083, %v3076
    %v3343 = vpack.c.b16 %v3084, %v3077
    %v3344 = vpack.c.b16 %v3092, %v3085
    %v3345 = vpack.c.b16 %v3093, %v3086
    %v3346 = vpack.c.b16 %v3094, %v3087
    %v3347 = vpack.c.b16 %v3095, %v3088
    %v3348 = vpack.c.b16 %v3096, %v3089
    %v3349 = vpack.c.b16 %v3097, %v3090
    %v3350 = vpack.c.b16 %v3098, %v3091
    %v3351 = vpack.c.b16 %v3106, %v3099
    %v3352 = vpack.c.b16 %v3107, %v3100
    %v3353 = vpack.c.b16 %v3108, %v3101
    %v3354 = vpack.c.b16 %v3109, %v3102
    %v3355 = vpack.c.b16 %v3110, %v3103
    %v3356 = vpack.c.b16 %v3111, %v3104
    %v3357 = vpack.c.b16 %v3112, %v3105
    %v3358 = vpack.c.b16 %v3120, %v3113
    %v3359 = vpack.c.b16 %v3121, %v3114
    %v3360 = vpack.c.b16 %v3122, %v3115
    %v3361 = vpack.c.b16 %v3123, %v3116
    %v3362 = vpack.c.b16 %v3124, %v3117
    %v3363 = vpack.c.b16 %v3125, %v3118
    %v3364 = vpack.c.b16 %v3126, %v3119
    %v3365 = vpack.c.b16 %v3134, %v3127
    %v3366 = vpack.c.b16 %v3135, %v3128
    %v3367 = vpack.c.b16 %v3136, %v3129
    %v3368 = vpack.c.b16 %v3137, %v3130
    %v3369 = vpack.c.b16 %v3138, %v3131
    %v3370 = vpack.c.b16 %v3139, %v3132
    %v3371 = vpack.c.b16 %v3140, %v3133
    %v3372 = vpack.c.b16 %v3148, %v3141
    %v3373 = vpack.c.b16 %v3149, %v3142
    %v3374 = vpack.c.b16 %v3150, %v3143
    %v3375 = vpack.c.b16 %v3151, %v3144
    %v3376 = vpack.c.b16 %v3152, %v3145
    %v3377 = vpack.c.b16 %v3153, %v3146
    %v3378 = vpack.c.b16 %v3154, %v3147
    %3603 = vmatprep.subr.bf16.mxu0 %v3156
    %3604 = vmatpush1.bf16.msra.mxu0 %v3155
    %3605 = vmatprep.subr.bf16.mxu0 %v3163
    %3606 = vmatpush1.bf16.msra.mxu0 %v3162
    %3607 = vmatprep.subr.bf16.mxu0 %v3170
    %3608 = vmatpush1.bf16.msra.mxu0 %v3169
    %3609 = vmatprep.subr.bf16.mxu0 %v3177
    %3610 = vmatpush1.bf16.msra.mxu0 %v3176
    %3611 = vmatprep.subr.bf16.mxu0 %v3184
    %3612 = vmatpush1.bf16.msra.mxu0 %v3183
    %3613 = vmatprep.subr.bf16.mxu0 %v3191
    %3614 = vmatpush1.bf16.msra.mxu0 %v3190
    %3615 = vmatprep.subr.bf16.mxu0 %v3198
    %3616 = vmatpush1.bf16.msra.mxu0 %v3197
    %3617 = vmatprep.subr.bf16.mxu0 %v3205
    %3618 = vmatpush1.bf16.msra.mxu0 %v3204
    %3619 = vmatprep.subr.bf16.mxu0 %v3212
    %3620 = vmatpush1.bf16.msra.mxu0 %v3211
    %3621 = vmatprep.subr.bf16.mxu0 %v3219
    %3622 = vmatpush1.bf16.msra.mxu0 %v3218
    %3623 = vmatprep.subr.bf16.mxu0 %v3226
    %3624 = vmatpush1.bf16.msra.mxu0 %v3225
    %3625 = vmatprep.subr.bf16.mxu0 %v3233
    %3626 = vmatpush1.bf16.msra.mxu0 %v3232
    %3627 = vmatprep.subr.bf16.mxu0 %v3240
    %3628 = vmatpush1.bf16.msra.mxu0 %v3239
    %3629 = vmatprep.subr.bf16.mxu0 %v3247
    %3630 = vmatpush1.bf16.msra.mxu0 %v3246
    %3631 = vmatprep.subr.bf16.mxu0 %v3254
    %3632 = vmatpush1.bf16.msra.mxu0 %v3253
    %3633 = vmatprep.subr.bf16.mxu0 %v3261
    %3634 = vmatpush1.bf16.msra.mxu0 %v3260
    %3635 = vmatprep.mubr.bf16.mxu0 %v2155
    %3636 = vmatmul.mubr.bf16.gmra.mrb[0].mxu0 %v2154
    %v3637 = vpop.f32.mrb[0].mxu0
    %v3638 = vadd.f32 %v2419, %v3637
    %v3639 = vpop.f32.mrb[0].mxu0
    %v3640 = vadd.f32 %v2423, %v3639
    %v3641 = vpop.f32.mrb[0].mxu0
    %v3642 = vpop.f32.mrb[0].mxu0
    %3643 = vdwg.mxu0
    %3644 = vmatprep.subr.bf16.mxu0 %v3268
    %3645 = vmatpush1.bf16.msra.mxu0 %v3267
    %3646 = vmatprep.subr.bf16.mxu0 %v3275
    %3647 = vmatpush1.bf16.msra.mxu0 %v3274
    %3648 = vmatprep.subr.bf16.mxu0 %v3282
    %3649 = vmatpush1.bf16.msra.mxu0 %v3281
    %3650 = vmatprep.subr.bf16.mxu0 %v3289
    %3651 = vmatpush1.bf16.msra.mxu0 %v3288
    %3652 = vmatprep.subr.bf16.mxu0 %v3296
    %3653 = vmatpush1.bf16.msra.mxu0 %v3295
    %3654 = vmatprep.subr.bf16.mxu0 %v3303
    %3655 = vmatpush1.bf16.msra.mxu0 %v3302
    %3656 = vmatprep.subr.bf16.mxu0 %v3310
    %3657 = vmatpush1.bf16.msra.mxu0 %v3309
    %3658 = vmatprep.subr.bf16.mxu0 %v3317
    %3659 = vmatpush1.bf16.msra.mxu0 %v3316
    %3660 = vmatprep.subr.bf16.mxu0 %v3324
    %3661 = vmatpush1.bf16.msra.mxu0 %v3323
    %3662 = vmatprep.subr.bf16.mxu0 %v3331
    %3663 = vmatpush1.bf16.msra.mxu0 %v3330
    %3664 = vmatprep.subr.bf16.mxu0 %v3338
    %3665 = vmatpush1.bf16.msra.mxu0 %v3337
    %3666 = vmatprep.subr.bf16.mxu0 %v3345
    %3667 = vmatpush1.bf16.msra.mxu0 %v3344
    %3668 = vmatprep.subr.bf16.mxu0 %v3352
    %3669 = vmatpush1.bf16.msra.mxu0 %v3351
    %3670 = vmatprep.subr.bf16.mxu0 %v3359
    %3671 = vmatpush1.bf16.msra.mxu0 %v3358
    %3672 = vmatprep.subr.bf16.mxu0 %v3366
    %3673 = vmatpush1.bf16.msra.mxu0 %v3365
    %3674 = vmatprep.subr.bf16.mxu0 %v3373
    %3675 = vmatpush1.bf16.msra.mxu0 %v3372
    %3676 = vmatprep.mubr.bf16.mxu0 %v2157
    %3677 = vmatmul.mubr.bf16.gmra.mrb[0].mxu0 %v2156
    %v3678 = vpop.f32.mrb[0].mxu0
    %v3679 = vadd.f32 %v3638, %v3678
    %v3680 = vpop.f32.mrb[0].mxu0
    %v3681 = vadd.f32 %v3640, %v3680
    %v3682 = vpop.f32.mrb[0].mxu0
    %v3683 = vpop.f32.mrb[0].mxu0
    %3684 = vdwg.mxu0
    %3685 = vmatprep.subr.bf16.mxu0 %v3158
    %3686 = vmatpush1.bf16.msra.mxu0 %v3157
    %3687 = vmatprep.subr.bf16.mxu0 %v3165
    %3688 = vmatpush1.bf16.msra.mxu0 %v3164
    %3689 = vmatprep.subr.bf16.mxu0 %v3172
    %3690 = vmatpush1.bf16.msra.mxu0 %v3171
    %3691 = vmatprep.subr.bf16.mxu0 %v3179
    %3692 = vmatpush1.bf16.msra.mxu0 %v3178
    %3693 = vmatprep.subr.bf16.mxu0 %v3186
    %3694 = vmatpush1.bf16.msra.mxu0 %v3185
    %3695 = vmatprep.subr.bf16.mxu0 %v3193
    %3696 = vmatpush1.bf16.msra.mxu0 %v3192
    %3697 = vmatprep.subr.bf16.mxu0 %v3200
    %3698 = vmatpush1.bf16.msra.mxu0 %v3199
    %3699 = vmatprep.subr.bf16.mxu0 %v3207
    %3700 = vmatpush1.bf16.msra.mxu0 %v3206
    %3701 = vmatprep.subr.bf16.mxu0 %v3214
    %3702 = vmatpush1.bf16.msra.mxu0 %v3213
    %3703 = vmatprep.subr.bf16.mxu0 %v3221
    %3704 = vmatpush1.bf16.msra.mxu0 %v3220
    %3705 = vmatprep.subr.bf16.mxu0 %v3228
    %3706 = vmatpush1.bf16.msra.mxu0 %v3227
    %3707 = vmatprep.subr.bf16.mxu0 %v3235
    %3708 = vmatpush1.bf16.msra.mxu0 %v3234
    %3709 = vmatprep.subr.bf16.mxu0 %v3242
    %3710 = vmatpush1.bf16.msra.mxu0 %v3241
    %3711 = vmatprep.subr.bf16.mxu0 %v3249
    %3712 = vmatpush1.bf16.msra.mxu0 %v3248
    %3713 = vmatprep.subr.bf16.mxu0 %v3256
    %3714 = vmatpush1.bf16.msra.mxu0 %v3255
    %3715 = vmatprep.subr.bf16.mxu0 %v3263
    %3716 = vmatpush1.bf16.msra.mxu0 %v3262
    %3717 = vmatprep.mubr.bf16.mxu0 %v2155
    %3718 = vmatmul.mubr.bf16.gmra.mrb[0].mxu0 %v2154
    %v3719 = vpop.f32.mrb[0].mxu0
    %v3720 = vadd.f32 %v2427, %v3719
    %v3721 = vpop.f32.mrb[0].mxu0
    %v3722 = vadd.f32 %v2431, %v3721
    %v3723 = vpop.f32.mrb[0].mxu0
    %v3724 = vpop.f32.mrb[0].mxu0
    %3725 = vdwg.mxu0
    %3726 = vmatprep.subr.bf16.mxu0 %v3270
    %3727 = vmatpush1.bf16.msra.mxu0 %v3269
    %3728 = vmatprep.subr.bf16.mxu0 %v3277
    %3729 = vmatpush1.bf16.msra.mxu0 %v3276
    %3730 = vmatprep.subr.bf16.mxu0 %v3284
    %3731 = vmatpush1.bf16.msra.mxu0 %v3283
    %3732 = vmatprep.subr.bf16.mxu0 %v3291
    %3733 = vmatpush1.bf16.msra.mxu0 %v3290
    %3734 = vmatprep.subr.bf16.mxu0 %v3298
    %3735 = vmatpush1.bf16.msra.mxu0 %v3297
    %3736 = vmatprep.subr.bf16.mxu0 %v3305
    %3737 = vmatpush1.bf16.msra.mxu0 %v3304
    %3738 = vmatprep.subr.bf16.mxu0 %v3312
    %3739 = vmatpush1.bf16.msra.mxu0 %v3311
    %3740 = vmatprep.subr.bf16.mxu0 %v3319
    %3741 = vmatpush1.bf16.msra.mxu0 %v3318
    %3742 = vmatprep.subr.bf16.mxu0 %v3326
    %3743 = vmatpush1.bf16.msra.mxu0 %v3325
    %3744 = vmatprep.subr.bf16.mxu0 %v3333
    %3745 = vmatpush1.bf16.msra.mxu0 %v3332
    %3746 = vmatprep.subr.bf16.mxu0 %v3340
    %3747 = vmatpush1.bf16.msra.mxu0 %v3339
    %3748 = vmatprep.subr.bf16.mxu0 %v3347
    %3749 = vmatpush1.bf16.msra.mxu0 %v3346
    %3750 = vmatprep.subr.bf16.mxu0 %v3354
    %3751 = vmatpush1.bf16.msra.mxu0 %v3353
    %3752 = vmatprep.subr.bf16.mxu0 %v3361
    %3753 = vmatpush1.bf16.msra.mxu0 %v3360
    %3754 = vmatprep.subr.bf16.mxu0 %v3368
    %3755 = vmatpush1.bf16.msra.mxu0 %v3367
    %3756 = vmatprep.subr.bf16.mxu0 %v3375
    %3757 = vmatpush1.bf16.msra.mxu0 %v3374
    %3758 = vmatprep.mubr.bf16.mxu0 %v2157
    %3759 = vmatmul.mubr.bf16.gmra.mrb[0].mxu0 %v2156
    %v3760 = vpop.f32.mrb[0].mxu0
    %v3761 = vadd.f32 %v3720, %v3760
    %v3762 = vpop.f32.mrb[0].mxu0
    %v3763 = vadd.f32 %v3722, %v3762
    %v3764 = vpop.f32.mrb[0].mxu0
    %v3765 = vpop.f32.mrb[0].mxu0
    %3766 = vdwg.mxu0
    %3767 = vmatprep.subr.bf16.mxu0 %v3160
    %3768 = vmatpush1.bf16.msra.mxu0 %v3159
    %3769 = vmatprep.subr.bf16.mxu0 %v3167
    %3770 = vmatpush1.bf16.msra.mxu0 %v3166
    %3771 = vmatprep.subr.bf16.mxu0 %v3174
    %3772 = vmatpush1.bf16.msra.mxu0 %v3173
    %3773 = vmatprep.subr.bf16.mxu0 %v3181
    %3774 = vmatpush1.bf16.msra.mxu0 %v3180
    %3775 = vmatprep.subr.bf16.mxu0 %v3188
    %3776 = vmatpush1.bf16.msra.mxu0 %v3187
    %3777 = vmatprep.subr.bf16.mxu0 %v3195
    %3778 = vmatpush1.bf16.msra.mxu0 %v3194
    %3779 = vmatprep.subr.bf16.mxu0 %v3202
    %3780 = vmatpush1.bf16.msra.mxu0 %v3201
    %3781 = vmatprep.subr.bf16.mxu0 %v3209
    %3782 = vmatpush1.bf16.msra.mxu0 %v3208
    %3783 = vmatprep.subr.bf16.mxu0 %v3216
    %3784 = vmatpush1.bf16.msra.mxu0 %v3215
    %3785 = vmatprep.subr.bf16.mxu0 %v3223
    %3786 = vmatpush1.bf16.msra.mxu0 %v3222
    %3787 = vmatprep.subr.bf16.mxu0 %v3230
    %3788 = vmatpush1.bf16.msra.mxu0 %v3229
    %3789 = vmatprep.subr.bf16.mxu0 %v3237
    %3790 = vmatpush1.bf16.msra.mxu0 %v3236
    %3791 = vmatprep.subr.bf16.mxu0 %v3244
    %3792 = vmatpush1.bf16.msra.mxu0 %v3243
    %3793 = vmatprep.subr.bf16.mxu0 %v3251
    %3794 = vmatpush1.bf16.msra.mxu0 %v3250
    %3795 = vmatprep.subr.bf16.mxu0 %v3258
    %3796 = vmatpush1.bf16.msra.mxu0 %v3257
    %3797 = vmatprep.subr.bf16.mxu0 %v3265
    %3798 = vmatpush1.bf16.msra.mxu0 %v3264
    %3799 = vmatprep.mubr.bf16.mxu0 %v2155
    %3800 = vmatmul.mubr.bf16.gmra.mrb[0].mxu0 %v2154
    %v3801 = vpop.f32.mrb[0].mxu0
    %v3802 = vadd.f32 %v2435, %v3801
    %v3803 = vpop.f32.mrb[0].mxu0
    %v3804 = vadd.f32 %v2439, %v3803
    %v3805 = vpop.f32.mrb[0].mxu0
    %v3806 = vpop.f32.mrb[0].mxu0
    %3807 = vdwg.mxu0
    %3808 = vmatprep.subr.bf16.mxu0 %v3272
    %3809 = vmatpush1.bf16.msra.mxu0 %v3271
    %3810 = vmatprep.subr.bf16.mxu0 %v3279
    %3811 = vmatpush1.bf16.msra.mxu0 %v3278
    %3812 = vmatprep.subr.bf16.mxu0 %v3286
    %3813 = vmatpush1.bf16.msra.mxu0 %v3285
    %3814 = vmatprep.subr.bf16.mxu0 %v3293
    %3815 = vmatpush1.bf16.msra.mxu0 %v3292
    %3816 = vmatprep.subr.bf16.mxu0 %v3300
    %3817 = vmatpush1.bf16.msra.mxu0 %v3299
    %3818 = vmatprep.subr.bf16.mxu0 %v3307
    %3819 = vmatpush1.bf16.msra.mxu0 %v3306
    %3820 = vmatprep.subr.bf16.mxu0 %v3314
    %3821 = vmatpush1.bf16.msra.mxu0 %v3313
    %3822 = vmatprep.subr.bf16.mxu0 %v3321
    %3823 = vmatpush1.bf16.msra.mxu0 %v3320
    %3824 = vmatprep.subr.bf16.mxu0 %v3328
    %3825 = vmatpush1.bf16.msra.mxu0 %v3327
    %3826 = vmatprep.subr.bf16.mxu0 %v3335
    %3827 = vmatpush1.bf16.msra.mxu0 %v3334
    %3828 = vmatprep.subr.bf16.mxu0 %v3342
    %3829 = vmatpush1.bf16.msra.mxu0 %v3341
    %3830 = vmatprep.subr.bf16.mxu0 %v3349
    %3831 = vmatpush1.bf16.msra.mxu0 %v3348
    %3832 = vmatprep.subr.bf16.mxu0 %v3356
    %3833 = vmatpush1.bf16.msra.mxu0 %v3355
    %3834 = vmatprep.subr.bf16.mxu0 %v3363
    %3835 = vmatpush1.bf16.msra.mxu0 %v3362
    %3836 = vmatprep.subr.bf16.mxu0 %v3370
    %3837 = vmatpush1.bf16.msra.mxu0 %v3369
    %3838 = vmatprep.subr.bf16.mxu0 %v3377
    %3839 = vmatpush1.bf16.msra.mxu0 %v3376
    %3840 = vmatprep.mubr.bf16.mxu0 %v2157
    %3841 = vmatmul.mubr.bf16.gmra.mrb[0].mxu0 %v2156
    %v3842 = vpop.f32.mrb[0].mxu0
    %v3843 = vadd.f32 %v3802, %v3842
    %v3844 = vpop.f32.mrb[0].mxu0
    %v3845 = vadd.f32 %v3804, %v3844
    %v3846 = vpop.f32.mrb[0].mxu0
    %v3847 = vpop.f32.mrb[0].mxu0
    %3848 = vdwg.mxu0
    %3849 = vmatprep.subr.bf16.mxu0 0
    %3850 = vmatpush1.bf16.msra.mxu0 %v3161
    %3851 = vmatprep.subr.bf16.mxu0 0
    %3852 = vmatpush1.bf16.msra.mxu0 %v3168
    %3853 = vmatprep.subr.bf16.mxu0 0
    %3854 = vmatpush1.bf16.msra.mxu0 %v3175
    %3855 = vmatprep.subr.bf16.mxu0 0
    %3856 = vmatpush1.bf16.msra.mxu0 %v3182
    %3857 = vmatprep.subr.bf16.mxu0 0
    %3858 = vmatpush1.bf16.msra.mxu0 %v3189
    %3859 = vmatprep.subr.bf16.mxu0 0
    %3860 = vmatpush1.bf16.msra.mxu0 %v3196
    %3861 = vmatprep.subr.bf16.mxu0 0
    %3862 = vmatpush1.bf16.msra.mxu0 %v3203
    %3863 = vmatprep.subr.bf16.mxu0 0
    %3864 = vmatpush1.bf16.msra.mxu0 %v3210
    %3865 = vmatprep.subr.bf16.mxu0 0
    %3866 = vmatpush1.bf16.msra.mxu0 %v3217
    %3867 = vmatprep.subr.bf16.mxu0 0
    %3868 = vmatpush1.bf16.msra.mxu0 %v3224
    %3869 = vmatprep.subr.bf16.mxu0 0
    %3870 = vmatpush1.bf16.msra.mxu0 %v3231
    %3871 = vmatprep.subr.bf16.mxu0 0
    %3872 = vmatpush1.bf16.msra.mxu0 %v3238
    %3873 = vmatprep.subr.bf16.mxu0 0
    %3874 = vmatpush1.bf16.msra.mxu0 %v3245
    %3875 = vmatprep.subr.bf16.mxu0 0
    %3876 = vmatpush1.bf16.msra.mxu0 %v3252
    %3877 = vmatprep.subr.bf16.mxu0 0
    %3878 = vmatpush1.bf16.msra.mxu0 %v3259
    %3879 = vmatprep.subr.bf16.mxu0 0
    %3880 = vmatpush1.bf16.msra.mxu0 %v3266
    %3881 = vmatprep.mubr.bf16.mxu0 %v2155
    %3882 = vmatmul.mubr.bf16.gmra.mrb[0].mxu0 %v2154
    %v3883 = vpop.f32.mrb[0].mxu0
    %v3884 = vadd.f32 %v2443, %v3883
    %v3885 = vpop.f32.mrb[0].mxu0
    %v3886 = vpop.f32.mrb[0].mxu0
    %v3887 = vpop.f32.mrb[0].mxu0
    %3888 = vdwg.mxu0
    %3889 = vmatprep.subr.bf16.mxu0 0
    %3890 = vmatpush1.bf16.msra.mxu0 %v3273
    %3891 = vmatprep.subr.bf16.mxu0 0
    %3892 = vmatpush1.bf16.msra.mxu0 %v3280
    %3893 = vmatprep.subr.bf16.mxu0 0
    %3894 = vmatpush1.bf16.msra.mxu0 %v3287
    %3895 = vmatprep.subr.bf16.mxu0 0
    %3896 = vmatpush1.bf16.msra.mxu0 %v3294
    %3897 = vmatprep.subr.bf16.mxu0 0
    %3898 = vmatpush1.bf16.msra.mxu0 %v3301
    %3899 = vmatprep.subr.bf16.mxu0 0
    %3900 = vmatpush1.bf16.msra.mxu0 %v3308
    %3901 = vmatprep.subr.bf16.mxu0 0
    %3902 = vmatpush1.bf16.msra.mxu0 %v3315
    %3903 = vmatprep.subr.bf16.mxu0 0
    %3904 = vmatpush1.bf16.msra.mxu0 %v3322
    %3905 = vmatprep.subr.bf16.mxu0 0
    %3906 = vmatpush1.bf16.msra.mxu0 %v3329
    %3907 = vmatprep.subr.bf16.mxu0 0
    %3908 = vmatpush1.bf16.msra.mxu0 %v3336
    %3909 = vmatprep.subr.bf16.mxu0 0
    %3910 = vmatpush1.bf16.msra.mxu0 %v3343
    %3911 = vmatprep.subr.bf16.mxu0 0
    %3912 = vmatpush1.bf16.msra.mxu0 %v3350
    %3913 = vmatprep.subr.bf16.mxu0 0
    %3914 = vmatpush1.bf16.msra.mxu0 %v3357
    %3915 = vmatprep.subr.bf16.mxu0 0
    %3916 = vmatpush1.bf16.msra.mxu0 %v3364
    %3917 = vmatprep.subr.bf16.mxu0 0
    %3918 = vmatpush1.bf16.msra.mxu0 %v3371
    %3919 = vmatprep.subr.bf16.mxu0 0
    %3920 = vmatpush1.bf16.msra.mxu0 %v3378
    %3921 = vmatprep.mubr.bf16.mxu0 %v2157
    %3922 = vmatmul.mubr.bf16.gmra.mrb[0].mxu0 %v2156
    %v3923 = vpop.f32.mrb[0].mxu0
    %v3924 = vadd.f32 %v3884, %v3923
    %v3925 = vpop.f32.mrb[0].mxu0
    %v3926 = vpop.f32.mrb[0].mxu0
    %v3927 = vpop.f32.mrb[0].mxu0
    %3928 = vdwg.mxu0
    %v3929 = vsub.f32 0.0, %v3679
    %v3930 = vsub.f32 0.0, %v3681
    %v3931 = vsub.f32 0.0, %v3761
    %v3932 = vsub.f32 0.0, %v3763
    %v3933 = vsub.f32 0.0, %v3843
    %v3934 = vsub.f32 0.0, %v3845
    %v3935 = vsub.f32 0.0, %v3924
    %v3936 = vmul.f32 %v3929, 1.442695
    %v3937 = vpow.pop %v3936
    %v3938 = vmul.f32 %v3930, 1.442695
    %v3939 = vpow.pop %v3938
    %v3940 = vmul.f32 %v3931, 1.442695
    %v3941 = vpow.pop %v3940
    %v3942 = vmul.f32 %v3932, 1.442695
    %v3943 = vpow.pop %v3942
    %v3944 = vmul.f32 %v3933, 1.442695
    %v3945 = vpow.pop %v3944
    %v3946 = vmul.f32 %v3934, 1.442695
    %v3947 = vpow.pop %v3946
    %v3948 = vmul.f32 %v3935, 1.442695
    %v3949 = vpow.pop %v3948
    %v3950 = vadd.f32 %v3937, 1.0
    %v3951 = vadd.f32 %v3939, 1.0
    %v3952 = vadd.f32 %v3941, 1.0
    %v3953 = vadd.f32 %v3943, 1.0
    %v3954 = vadd.f32 %v3945, 1.0
    %v3955 = vadd.f32 %v3947, 1.0
    %v3956 = vadd.f32 %v3949, 1.0
    %v3957 = vrcp.pop %v3950
    %v3958 = vrcp.pop %v3951
    %v3959 = vrcp.pop %v3952
    %v3960 = vrcp.pop %v3953
    %v3961 = vrcp.pop %v3954
    %v3962 = vrcp.pop %v3955
    %v3963 = vrcp.pop %v3956
    %v3964 = vpack.c.bf16 %v3957, %v3957
    %v3965 = vpack.c.bf16 %v3958, %v3958
    %v3966 = vpack.c.bf16 %v3959, %v3959
    %v3967 = vpack.c.bf16 %v3960, %v3960
    %v3968 = vpack.c.bf16 %v3961, %v3961
    %v3969 = vpack.c.bf16 %v3962, %v3962
    %v3970 = vpack.c.bf16 %v3963, %v3963
    %v3978 = vunpack.c.l.b16 %v3964
    %v3979 = vunpack.c.l.b16 %v3965
    %v3980 = vunpack.c.l.b16 %v3966
    %v3981 = vunpack.c.l.b16 %v3967
    %v3982 = vunpack.c.l.b16 %v3968
    %v3983 = vunpack.c.l.b16 %v3969
    %v3984 = vunpack.c.l.b16 %v3970
    %v3985 = vpack.c.b16 %v3979, %v3978
    %v3986 = vpack.c.b16 %v3981, %v3980
    %v3987 = vpack.c.b16 %v3983, %v3982
    %v3988 = vpack.c.b16 %v3984, %v3984
    %3993 = vst [vmem:[#allocation2] sm:$0xff] %v3985
    %3994 = vst [vmem:[#allocation2 + $0x8] sm:$0xff] %v3986
    %3995 = vst [vmem:[#allocation2 + $0x10] sm:$0xff] %v3987
    %vm3996 = vcmask 125952
    %3997 = vst.msk [vmem:[#allocation2 + $0x18] sm:$0xf] %vm3996, %v3988
    %3998 = vst [vmem:[#allocation4] sm:$0xff] %v1930
    // Predicated region
    $region42: #{tpu_custom_call.1} parent=1 // pred_check
      _
    $region43: #{tpu_custom_call.1} parent=1 // pred_check_branch
      %4000 = sbr.rel (0) target = $region45
    $region44: #{tpu_custom_call.1} parent=1 // pred_region
      %s4002 = ssub.s32 448, 448
      %4003 = vsyncadd [#allocation3], %s4002
      %s4005 = sshll.u32 [#allocation2], 4
      %s4006 = int_to_ptr.vmem [resolvable:$true] %s4005
      %4008 = dma.vmem_to_hbm [thread:$0]  %s4006, 448, %s10, [#allocation3]
    $region45: #{tpu_custom_call.1} parent=1 // pred_fallthru
      _
    // Predicated region
    $region46: #{tpu_custom_call.1} parent=1 // pred_check
      _
    $region47: #{tpu_custom_call.1} parent=1 // pred_check_branch
      %4010 = sbr.rel (0) target = $region49
    $region48: #{tpu_custom_call.1} parent=1 // pred_region
      %s4012 = ssub.s32 128, 128
      %4013 = vsyncadd [#allocation5], %s4012
      %s4015 = sshll.u32 [#allocation4], 4
      %s4016 = int_to_ptr.vmem [resolvable:$true] %s4015
      %4018 = dma.vmem_to_hbm [thread:$0]  %s4016, 128, %s11, [#allocation5]
    $region49: #{tpu_custom_call.1} parent=1 // pred_fallthru
      _
    // Predicated region
    $region50: #{tpu_custom_call.1} parent=1 // pred_check
      _
    $region51: #{tpu_custom_call.1} parent=1 // pred_check_branch
      %4020 = sbr.rel (0) target = $region53
    $region52: #{tpu_custom_call.1} parent=1 // pred_region
      %4021 = dma.done [#allocation3], 448
    $region53: #{tpu_custom_call.1} parent=1 // pred_fallthru
      _
    // Predicated region
    $region54: #{tpu_custom_call.1} parent=1 // pred_check
      _
    $region55: #{tpu_custom_call.1} parent=1 // pred_check_branch
      %4023 = sbr.rel (0) target = $region57
    $region56: #{tpu_custom_call.1} parent=1 // pred_region
      %4024 = dma.done [#allocation5], 128
    $region57: #{tpu_custom_call.1} parent=1 // pred_fallthru
      _
    %4025 = vsyncpa [#allocation3], 1
    %4026 = vsyncpa [#allocation5], 1

</llo_original>
